<compile_context>
chip_gen: v7x
topology: tpu7x:2x2x1
jax: 0.10.0
libtpu: 0.0.40
codegen_flags: <defaults>
</compile_context>

<pallas_src>
import functools

import jax
import jax.numpy as jnp
from jax import lax
from jax.experimental import pallas as pl
from jax.experimental.pallas import tpu as pltpu

# ----------------- hyper-parameters consistent with origCLIP -----------------
EMBED_DIM = 32
IMAGE_RES = 16
VISION_LAYERS = 2          # int -> VisionTransformer branch in origCLIP.__init__
VISION_WIDTH = 64
VISION_PATCH = 8
CONTEXT_LEN = 8
VOCAB_SIZE = 100
TXT_WIDTH = 64
TXT_HEADS = 2
TXT_LAYERS = 2
VISION_HEADS = max(VISION_WIDTH // 64, 1)    # = 1 (as in CLIP: vision_width // 64)
LN_EPS = 1e-5
NEG_INF = -1e30            # stand-in for float('-inf'); exp() underflows to exactly 0

# order of the per-layer stacked weight refs fed to the fused tower kernels
TOWER_KEYS = ("ln1_g", "ln1_b", "wq", "bq", "wk", "bk", "wv", "bv",
              "wo", "bo", "ln2_g", "ln2_b", "wfc", "bfc", "wpj", "bpj")


# --------------------------- in-kernel building blocks ---------------------------
def _ln(x, g, b, eps=LN_EPS):
    """Row-wise LayerNorm; g, b are (1, D)."""
    mu = jnp.mean(x, axis=-1, keepdims=True)
    xc = x - mu
    var = jnp.mean(xc * xc, axis=-1, keepdims=True)
    return xc * lax.rsqrt(var + eps) * g + b


def _transformer_stack(x, r, *, layers, heads, causal):
    """CLIP residual attention blocks on a single (L, E) sequence, weights from refs."""
    L, E = x.shape
    dh = E // heads
    scale = float(dh) ** -0.5
    for l in range(layers):
        # ---- pre-LN multi-head attention ----
        h_in = _ln(x, r["ln1_g"][l], r["ln1_b"][l])
        attn = r["bo"][l]                                   # (1, E) bias, broadcasts
        for h in range(heads):
            i = l * heads + h                               # stacked (layers*heads, ...)
            q = jnp.dot(h_in, r["wq"][i], preferred_element_type=jnp.float32) + r["bq"][i]
            k = jnp.dot(h_in, r["wk"][i], preferred_element_type=jnp.float32) + r["bk"][i]
            v = jnp.dot(h_in, r["wv"][i], preferred_element_type=jnp.float32) + r["bv"][i]
            # q @ k.T via NT contraction (no in-kernel transpose)
            s = lax.dot_general(q, k, (((1,), (1,)), ((), ())),
                                preferred_element_type=jnp.float32) * scale
            if causal:
                rowi = lax.broadcasted_iota(jnp.int32, (L, L), 0)
                coli = lax.broadcasted_iota(jnp.int32, (L, L), 1)
                s = jnp.where(coli > rowi, jnp.float32(NEG_INF), s)
            s = s - jnp.max(s, axis=-1, keepdims=True)
            p = jnp.exp(s)
            p = p * pl.reciprocal(jnp.sum(p, axis=-1, keepdims=True), approx=True)
            o_h = jnp.dot(p, v, preferred_element_type=jnp.float32)        # (L, dh)
            attn = attn + jnp.dot(o_h, r["wo"][i], preferred_element_type=jnp.float32)
        x = x + attn
        # ---- pre-LN MLP with QuickGELU ----
        h2 = _ln(x, r["ln2_g"][l], r["ln2_b"][l])
        h2 = jnp.dot(h2, r["wfc"][l], preferred_element_type=jnp.float32) + r["bfc"][l]
        h2 = h2 * jax.nn.sigmoid(1.702 * h2)                # QuickGELU
        h2 = jnp.dot(h2, r["wpj"][l], preferred_element_type=jnp.float32) + r["bpj"][l]
        x = x + h2
    return x


# ------------------------------ fused tower kernels ------------------------------
def _vision_kernel(*refs, layers, heads):
    """One batch element of the full VisionTransformer tower."""
    patch_ref, convw_ref, shift_ref, clspos_ref, lnpre_g, lnpre_b = refs[:6]
    tower = dict(zip(TOWER_KEYS, refs[6:6 + len(TOWER_KEYS)]))
    lnpost_g, lnpost_b, proj_ref, out_ref = refs[6 + len(TOWER_KEYS):]

    # patch-embedding "conv" (kernel == stride == patch) as a matmul on im2col patches
    pe = jnp.dot(patch_ref[0], convw_ref[...], preferred_element_type=jnp.float32)  # (gg, vw)
    # shift matrix places patch tokens at rows 1..gg; clspos has CLS+pos in row 0
    x = jnp.dot(shift_ref[...], pe, preferred_element_type=jnp.float32) + clspos_ref[...]
    x = _ln(x, lnpre_g[...], lnpre_b[...])
    x = _transformer_stack(x, tower, layers=layers, heads=heads, causal=False)
    x0 = _ln(x[0:1, :], lnpost_g[...], lnpost_b[...])        # CLS token only
    out_ref[0] = jnp.dot(x0, proj_ref[...], preferred_element_type=jnp.float32)


def _text_kernel(*refs, layers, heads):
    """One batch element of the full text transformer tower."""
    tok_ref, oh_ref, pos_ref = refs[:3]
    tower = dict(zip(TOWER_KEYS, refs[3:3 + len(TOWER_KEYS)]))
    lnf_g, lnf_b, proj_ref, out_ref = refs[3 + len(TOWER_KEYS):]

    x = tok_ref[0] + pos_ref[...]                            # (L, tw)
    x = _transformer_stack(x, tower, layers=layers, heads=heads, causal=True)
    xe = jnp.dot(oh_ref[0], x, preferred_element_type=jnp.float32)   # EOT row select (1, tw)
    xe = _ln(xe, lnf_g[...], lnf_b[...])
    out_ref[0] = jnp.dot(xe, proj_ref[...], preferred_element_type=jnp.float32)


def _scores_kernel(im_ref, tx_ref, o_ref):
    """L2-normalise features and compute (img @ txt.T + 1) / 2."""
    im = im_ref[...]
    tx = tx_ref[...]
    im = im * lax.rsqrt(jnp.sum(im * im, axis=-1, keepdims=True) + 1e-12)
    tx = tx * lax.rsqrt(jnp.sum(tx * tx, axis=-1, keepdims=True) + 1e-12)
    sim = lax.dot_general(im, tx, (((1,), (1,)), ((), ())),
                          preferred_element_type=jnp.float32)
    o_ref[...] = (sim + 1.0) * 0.5


# ------------------------------ pallas_call wrappers ------------------------------
def _const_spec(arr):
    """Full-array block whose index does not change across the batch grid."""
    zeros = (0,) * arr.ndim
    return pl.BlockSpec(arr.shape, lambda b, _z=zeros: _z)


def vision_tower(patches, vp):
    B, gg, d_in = patches.shape
    weights = [vp["conv_w"], vp["shift"], vp["cls_pos"], vp["ln_pre_g"], vp["ln_pre_b"]]
    weights += [vp["tower"][k] for k in TOWER_KEYS]
    weights += [vp["ln_post_g"], vp["ln_post_b"], vp["proj"]]
    kern = functools.partial(_vision_kernel, layers=VISION_LAYERS, heads=VISION_HEADS)
    out = pl.pallas_call(
        kern,
        grid=(B,),
        out_shape=jax.ShapeDtypeStruct((B, 1, EMBED_DIM), jnp.float32),
        in_specs=[pl.BlockSpec((1, gg, d_in), lambda b: (b, 0, 0))]
                 + [_const_spec(w) for w in weights],
        out_specs=pl.BlockSpec((1, 1, EMBED_DIM), lambda b: (b, 0, 0)),
        compiler_params=pltpu.CompilerParams(dimension_semantics=("parallel",)),
    )(patches, *weights)
    return out.reshape(B, EMBED_DIM)


def text_tower(tok, onehot, tp):
    B, Lt, tw = tok.shape
    weights = [tp["pos"]] + [tp["tower"][k] for k in TOWER_KEYS]
    weights += [tp["ln_f_g"], tp["ln_f_b"], tp["proj"]]
    kern = functools.partial(_text_kernel, layers=TXT_LAYERS, heads=TXT_HEADS)
    out = pl.pallas_call(
        kern,
        grid=(B,),
        out_shape=jax.ShapeDtypeStruct((B, 1, EMBED_DIM), jnp.float32),
        in_specs=[pl.BlockSpec((1, Lt, tw), lambda b: (b, 0, 0)),
                  pl.BlockSpec((1, 1, Lt), lambda b: (b, 0, 0))]
                 + [_const_spec(w) for w in weights],
        out_specs=pl.BlockSpec((1, 1, EMBED_DIM), lambda b: (b, 0, 0)),
        compiler_params=pltpu.CompilerParams(dimension_semantics=("parallel",)),
    )(tok, onehot, *weights)
    return out.reshape(B, EMBED_DIM)


def pallas_scores(img_feat, txt_feat):
    Bi, E = img_feat.shape
    Bt = txt_feat.shape[0]
    return pl.pallas_call(
        _scores_kernel,
        grid=(1,),
        out_shape=jax.ShapeDtypeStruct((Bi, Bt), jnp.float32),
        in_specs=[pl.BlockSpec((Bi, E), lambda i: (0, 0)),
                  pl.BlockSpec((Bt, E), lambda i: (0, 0))],
        out_specs=pl.BlockSpec((Bi, Bt), lambda i: (0, 0)),
    )(img_feat, txt_feat)


# ------------------------------------ forward ------------------------------------
def clip_forward(P, image, text):
    B = image.shape[0]
    p = VISION_PATCH
    g = IMAGE_RES // p
    # non-overlapping patch conv == im2col + in-kernel matmul (layout glue only)
    patches = image.reshape(B, 3, g, p, g, p).transpose(0, 2, 4, 1, 3, 5)
    patches = patches.reshape(B, g * g, 3 * p * p).astype(jnp.float32)
    img_feat = vision_tower(patches, P["visual"])

    # TODO(synk): token-embedding gather and EOT argmax are data-dependent gathers -> JAX glue.
    tok = jnp.take(P["token_embedding"], text, axis=0)[:, :CONTEXT_LEN, :].astype(jnp.float32)
    eot = jnp.argmax(text, axis=-1)
    onehot = jax.nn.one_hot(eot, CONTEXT_LEN, dtype=jnp.float32).reshape(B, 1, CONTEXT_LEN)
    txt_feat = text_tower(tok, onehot, P["text"])

    scores_per_image = pallas_scores(img_feat, txt_feat)   # (img @ txt.T - (-1)) / 2
    scores_per_text = scores_per_image.T
    return scores_per_image, scores_per_text


# ------------------------------- deterministic init --------------------------------
def init_params(key):
    """Parameters in PyTorch layout (same init statistics as origCLIP)."""
    keys = iter(jax.random.split(key, 256))

    def nrm(shape, std):
        return jax.random.normal(next(keys), shape, jnp.float32) * std

    def block_params(width, attn_std, proj_std, fc_std):
        return dict(
            ln1_g=jnp.ones((width,), jnp.float32),
            ln1_b=jnp.zeros((width,), jnp.float32),
            in_w=nrm((3 * width, width), attn_std),
            in_b=jnp.zeros((3 * width,), jnp.float32),
            out_w=nrm((width, width), proj_std),
            out_b=jnp.zeros((width,), jnp.float32),
            ln2_g=jnp.ones((width,), jnp.float32),
            ln2_b=jnp.zeros((width,), jnp.float32),
            fc_w=nrm((4 * width, width), fc_std),
            fc_b=jnp.zeros((4 * width,), jnp.float32),
            proj_w=nrm((width, 4 * width), proj_std),
            proj_b=jnp.zeros((width,), jnp.float32),
        )

    vw, tw = VISION_WIDTH, TXT_WIDTH
    v_attn_std = vw ** -0.5
    v_proj_std = (vw ** -0.5) * ((2 * VISION_LAYERS) ** -0.5)
    v_fc_std = (2 * vw) ** -0.5
    t_attn_std = tw ** -0.5
    t_proj_std = (tw ** -0.5) * ((2 * TXT_LAYERS) ** -0.5)
    t_fc_std = (2 * tw) ** -0.5
    g = IMAGE_RES // VISION_PATCH
    return dict(
        conv1_w=nrm((vw, 3, VISION_PATCH, VISION_PATCH),
                    (3 * VISION_PATCH ** 2) ** -0.5),
        class_embedding=nrm((vw,), vw ** -0.5),
        vis_pos=nrm((g * g + 1, vw), vw ** -0.5),
        ln_pre_g=jnp.ones((vw,), jnp.float32),
        ln_pre_b=jnp.zeros((vw,), jnp.float32),
        vis_blocks=[block_params(vw, v_attn_std, v_proj_std, v_fc_std)
                    for _ in range(VISION_LAYERS)],
        ln_post_g=jnp.ones((vw,), jnp.float32),
        ln_post_b=jnp.zeros((vw,), jnp.float32),
        vis_proj=nrm((vw, EMBED_DIM), vw ** -0.5),
        token_embedding=nrm((VOCAB_SIZE, tw), 0.02),
        txt_pos=nrm((CONTEXT_LEN, tw), 0.01),
        txt_blocks=[block_params(tw, t_attn_std, t_proj_std, t_fc_std)
                    for _ in range(TXT_LAYERS)],
        ln_final_g=jnp.ones((tw,), jnp.float32),
        ln_final_b=jnp.zeros((tw,), jnp.float32),
        text_projection=nrm((tw, EMBED_DIM), tw ** -0.5),
    )


def _pack_blocks(blocks, width, heads):
    """PyTorch-layout residual blocks -> kernel-ready (pre-transposed, per-head, stacked)."""
    E = width
    dh = E // heads

    def stack(fn):
        return jnp.stack([fn(b) for b in blocks], axis=0)

    def stack_heads(fn):                                     # (heads,...) per layer -> (L*H,...)
        return jnp.concatenate([fn(b) for b in blocks], axis=0)

    def qkv_w(b, which):                                     # x @ W form, split per head
        w = b["in_w"][which * E:(which + 1) * E, :].T        # (E, E)
        return w.reshape(E, heads, dh).transpose(1, 0, 2)    # (heads, E, dh)

    def qkv_b(b, which):
        return b["in_b"][which * E:(which + 1) * E].reshape(heads, 1, dh)

    return dict(
        ln1_g=stack(lambda b: b["ln1_g"].reshape(1, E)),
        ln1_b=stack(lambda b: b["ln1_b"].reshape(1, E)),
        wq=stack_heads(lambda b: qkv_w(b, 0)), bq=stack_heads(lambda b: qkv_b(b, 0)),
        wk=stack_heads(lambda b: qkv_w(b, 1)), bk=stack_heads(lambda b: qkv_b(b, 1)),
        wv=stack_heads(lambda b: qkv_w(b, 2)), bv=stack_heads(lambda b: qkv_b(b, 2)),
        wo=stack_heads(lambda b: b["out_w"].T.reshape(heads, dh, E)),
        bo=stack(lambda b: b["out_b"].reshape(1, E)),
        ln2_g=stack(lambda b: b["ln2_g"].reshape(1, E)),
        ln2_b=stack(lambda b: b["ln2_b"].reshape(1, E)),
        wfc=stack(lambda b: b["fc_w"].T),                    # (E, 4E)
        bfc=stack(lambda b: b["fc_b"].reshape(1, 4 * E)),
        wpj=stack(lambda b: b["proj_w"].T),                  # (4E, E)
        bpj=stack(lambda b: b["proj_b"].reshape(1, E)),
    )


def pack_params(raw):
    """One-time (outside jit) packing: no weight transposes remain in the forward pass."""
    vw, tw = VISION_WIDTH, TXT_WIDTH
    g = IMAGE_RES // VISION_PATCH
    gg = g * g
    Lv = gg + 1
    cls = raw["class_embedding"].reshape(1, vw)
    pos = raw["vis_pos"]                                     # (Lv, vw)
    visual = dict(
        conv_w=raw["conv1_w"].reshape(vw, -1).T,             # (3*p*p, vw)
        shift=jnp.eye(Lv, gg, k=-1, dtype=jnp.float32),      # puts patch tokens at rows 1..gg
        cls_pos=jnp.concatenate([cls + pos[0:1], pos[1:]], axis=0),   # row0 = CLS + pos0
        ln_pre_g=raw["ln_pre_g"].reshape(1, vw),
        ln_pre_b=raw["ln_pre_b"].reshape(1, vw),
        tower=_pack_blocks(raw["vis_blocks"], vw, VISION_HEADS),
        ln_post_g=raw["ln_post_g"].reshape(1, vw),
        ln_post_b=raw["ln_post_b"].reshape(1, vw),
        proj=raw["vis_proj"],
    )
    textp = dict(
        pos=raw["txt_pos"],
        tower=_pack_blocks(raw["txt_blocks"], tw, TXT_HEADS),
        ln_f_g=raw["ln_final_g"].reshape(1, tw),
        ln_f_b=raw["ln_final_b"].reshape(1, tw),
        proj=raw["text_projection"],
    )
    return dict(visual=visual, text=textp, token_embedding=raw["token_embedding"])


# -------------------------------------- main ---------------------------------------
if __name__ == "__main__":
    key = jax.random.PRNGKey(0)
    kp, ki, kt = jax.random.split(key, 3)
    raw_params = init_params(kp)
    params = pack_params(raw_params)                         # one-time, outside jit

    image = jax.random.normal(ki, (2, 3, IMAGE_RES, IMAGE_RES), jnp.float32)
    text = jax.random.randint(kt, (2, CONTEXT_LEN), 0, VOCAB_SIZE, jnp.int32)

    fwd = jax.jit(clip_forward)
    scores_per_image, scores_per_text = fwd(params, image, text)
    jax.block_until_ready((scores_per_image, scores_per_text))

    assert scores_per_image.shape == (2, 2)
    assert scores_per_text.shape == (2, 2)
    assert bool(jnp.all(jnp.isfinite(scores_per_image)))
    print("KERNEL_OK")
</pallas_src>

<mosaic_0001>
module attributes {stable_mosaic.version = 11 : i64} {
  func.func @_vision_kernel(%arg0: i32, %arg1: memref<1x4x192xf32, #tpu.memory_space<vmem>>, %arg2: memref<192x64xf32, #tpu.memory_space<vmem>>, %arg3: memref<5x4xf32, #tpu.memory_space<vmem>>, %arg4: memref<5x64xf32, #tpu.memory_space<vmem>>, %arg5: memref<1x64xf32, #tpu.memory_space<vmem>>, %arg6: memref<1x64xf32, #tpu.memory_space<vmem>>, %arg7: memref<2x1x64xf32, #tpu.memory_space<vmem>>, %arg8: memref<2x1x64xf32, #tpu.memory_space<vmem>>, %arg9: memref<2x64x64xf32, #tpu.memory_space<vmem>>, %arg10: memref<2x1x64xf32, #tpu.memory_space<vmem>>, %arg11: memref<2x64x64xf32, #tpu.memory_space<vmem>>, %arg12: memref<2x1x64xf32, #tpu.memory_space<vmem>>, %arg13: memref<2x64x64xf32, #tpu.memory_space<vmem>>, %arg14: memref<2x1x64xf32, #tpu.memory_space<vmem>>, %arg15: memref<2x64x64xf32, #tpu.memory_space<vmem>>, %arg16: memref<2x1x64xf32, #tpu.memory_space<vmem>>, %arg17: memref<2x1x64xf32, #tpu.memory_space<vmem>>, %arg18: memref<2x1x64xf32, #tpu.memory_space<vmem>>, %arg19: memref<2x64x256xf32, #tpu.memory_space<vmem>>, %arg20: memref<2x1x256xf32, #tpu.memory_space<vmem>>, %arg21: memref<2x256x64xf32, #tpu.memory_space<vmem>>, %arg22: memref<2x1x64xf32, #tpu.memory_space<vmem>>, %arg23: memref<1x64xf32, #tpu.memory_space<vmem>>, %arg24: memref<1x64xf32, #tpu.memory_space<vmem>>, %arg25: memref<64x32xf32, #tpu.memory_space<vmem>>, %arg26: memref<1x1x32xf32, #tpu.memory_space<vmem>>) attributes {dimension_semantics = [#tpu.dimension_semantics<parallel>], iteration_bounds = array<i64: 2>, scalar_prefetch = 0 : i64, scratch_operands = 0 : i64, tpu.core_type = #tpu.core_type<tc>, window_params = [{transform_indices = @transform_0, window_bounds = array<i64: 1, 4, 192>}, {pipeline_mode = #tpu.pipeline_mode<synchronous>, transform_indices = @transform_1, window_bounds = array<i64: 192, 64>}, {pipeline_mode = #tpu.pipeline_mode<synchronous>, transform_indices = @transform_2, window_bounds = array<i64: 5, 4>}, {pipeline_mode = #tpu.pipeline_mode<synchronous>, transform_indices = @transform_3, window_bounds = array<i64: 5, 64>}, {pipeline_mode = #tpu.pipeline_mode<synchronous>, transform_indices = @transform_4, window_bounds = array<i64: 1, 64>}, {pipeline_mode = #tpu.pipeline_mode<synchronous>, transform_indices = @transform_5, window_bounds = array<i64: 1, 64>}, {pipeline_mode = #tpu.pipeline_mode<synchronous>, transform_indices = @transform_6, window_bounds = array<i64: 2, 1, 64>}, {pipeline_mode = #tpu.pipeline_mode<synchronous>, transform_indices = @transform_7, window_bounds = array<i64: 2, 1, 64>}, {pipeline_mode = #tpu.pipeline_mode<synchronous>, transform_indices = @transform_8, window_bounds = array<i64: 2, 64, 64>}, {pipeline_mode = #tpu.pipeline_mode<synchronous>, transform_indices = @transform_9, window_bounds = array<i64: 2, 1, 64>}, {pipeline_mode = #tpu.pipeline_mode<synchronous>, transform_indices = @transform_10, window_bounds = array<i64: 2, 64, 64>}, {pipeline_mode = #tpu.pipeline_mode<synchronous>, transform_indices = @transform_11, window_bounds = array<i64: 2, 1, 64>}, {pipeline_mode = #tpu.pipeline_mode<synchronous>, transform_indices = @transform_12, window_bounds = array<i64: 2, 64, 64>}, {pipeline_mode = #tpu.pipeline_mode<synchronous>, transform_indices = @transform_13, window_bounds = array<i64: 2, 1, 64>}, {pipeline_mode = #tpu.pipeline_mode<synchronous>, transform_indices = @transform_14, window_bounds = array<i64: 2, 64, 64>}, {pipeline_mode = #tpu.pipeline_mode<synchronous>, transform_indices = @transform_15, window_bounds = array<i64: 2, 1, 64>}, {pipeline_mode = #tpu.pipeline_mode<synchronous>, transform_indices = @transform_16, window_bounds = array<i64: 2, 1, 64>}, {pipeline_mode = #tpu.pipeline_mode<synchronous>, transform_indices = @transform_17, window_bounds = array<i64: 2, 1, 64>}, {pipeline_mode = #tpu.pipeline_mode<synchronous>, transform_indices = @transform_18, window_bounds = array<i64: 2, 64, 256>}, {pipeline_mode = #tpu.pipeline_mode<synchronous>, transform_indices = @transform_19, window_bounds = array<i64: 2, 1, 256>}, {pipeline_mode = #tpu.pipeline_mode<synchronous>, transform_indices = @transform_20, window_bounds = array<i64: 2, 256, 64>}, {pipeline_mode = #tpu.pipeline_mode<synchronous>, transform_indices = @transform_21, window_bounds = array<i64: 2, 1, 64>}, {pipeline_mode = #tpu.pipeline_mode<synchronous>, transform_indices = @transform_22, window_bounds = array<i64: 1, 64>}, {pipeline_mode = #tpu.pipeline_mode<synchronous>, transform_indices = @transform_23, window_bounds = array<i64: 1, 64>}, {pipeline_mode = #tpu.pipeline_mode<synchronous>, transform_indices = @transform_24, window_bounds = array<i64: 64, 32>}, {transform_indices = @transform_25, window_bounds = array<i64: 1, 1, 32>}]} {
    %c0 = arith.constant 0 : index
    %c0_0 = arith.constant 0 : index
    %c0_1 = arith.constant 0 : index
    %0 = vector.load %arg1[%c0, %c0_0, %c0_1] : memref<1x4x192xf32, #tpu.memory_space<vmem>>, vector<1x4x192xf32>
    %1 = vector.shape_cast %0 : vector<1x4x192xf32> to vector<4x192xf32>
    %c0_2 = arith.constant 0 : index
    %c0_3 = arith.constant 0 : index
    %2 = vector.load %arg2[%c0_2, %c0_3] : memref<192x64xf32, #tpu.memory_space<vmem>>, vector<192x64xf32>
    %cst = arith.constant dense<0.000000e+00> : vector<4x64xf32>
    %3 = tpu.matmul %1, %2, %cst {dimension_numbers = #tpu.dot_dimension_numbers<[1], [0], [0], [1], [0, 0, 1, 1], [], []>} : vector<4x192xf32>, vector<192x64xf32>, vector<4x64xf32> -> vector<4x64xf32>
    %c0_4 = arith.constant 0 : index
    %c0_5 = arith.constant 0 : index
    %4 = vector.load %arg3[%c0_4, %c0_5] : memref<5x4xf32, #tpu.memory_space<vmem>>, vector<5x4xf32>
    %cst_6 = arith.constant dense<0.000000e+00> : vector<5x64xf32>
    %5 = tpu.matmul %4, %3, %cst_6 {dimension_numbers = #tpu.dot_dimension_numbers<[1], [0], [0], [1], [0, 0, 1, 1], [], []>} : vector<5x4xf32>, vector<4x64xf32>, vector<5x64xf32> -> vector<5x64xf32>
    %c0_7 = arith.constant 0 : index
    %c0_8 = arith.constant 0 : index
    %6 = vector.load %arg4[%c0_7, %c0_8] : memref<5x64xf32, #tpu.memory_space<vmem>>, vector<5x64xf32>
    %7 = arith.addf %5, %6 : vector<5x64xf32>
    %c0_9 = arith.constant 0 : index
    %c0_10 = arith.constant 0 : index
    %8 = vector.load %arg5[%c0_9, %c0_10] : memref<1x64xf32, #tpu.memory_space<vmem>>, vector<1x64xf32>
    %c0_11 = arith.constant 0 : index
    %c0_12 = arith.constant 0 : index
    %9 = vector.load %arg6[%c0_11, %c0_12] : memref<1x64xf32, #tpu.memory_space<vmem>>, vector<1x64xf32>
    %cst_13 = arith.constant dense<0.000000e+00> : vector<5xf32>
    %10 = vector.multi_reduction <add>, %7, %cst_13 [1] : vector<5x64xf32> to vector<5xf32>
    %11 = vector.shape_cast %10 : vector<5xf32> to vector<5x1xf32>
    %cst_14 = arith.constant 6.400000e+01 : f32
    %12 = vector.broadcast %cst_14 : f32 to vector<5x1xf32>
    %13 = arith.divf %11, %12 : vector<5x1xf32>
    %14 = vector.broadcast %13 : vector<5x1xf32> to vector<5x64xf32>
    %15 = arith.subf %7, %14 : vector<5x64xf32>
    %16 = arith.mulf %15, %15 : vector<5x64xf32>
    %cst_15 = arith.constant dense<0.000000e+00> : vector<5xf32>
    %17 = vector.multi_reduction <add>, %16, %cst_15 [1] : vector<5x64xf32> to vector<5xf32>
    %18 = vector.shape_cast %17 : vector<5xf32> to vector<5x1xf32>
    %cst_16 = arith.constant 6.400000e+01 : f32
    %19 = vector.broadcast %cst_16 : f32 to vector<5x1xf32>
    %20 = arith.divf %18, %19 : vector<5x1xf32>
    %cst_17 = arith.constant 9.99999974E-6 : f32
    %21 = vector.broadcast %cst_17 : f32 to vector<5x1xf32>
    %22 = arith.addf %20, %21 : vector<5x1xf32>
    %23 = math.rsqrt %22 : vector<5x1xf32>
    %24 = vector.broadcast %23 : vector<5x1xf32> to vector<5x64xf32>
    %25 = arith.mulf %15, %24 : vector<5x64xf32>
    %26 = vector.broadcast %8 : vector<1x64xf32> to vector<5x64xf32>
    %27 = arith.mulf %25, %26 : vector<5x64xf32>
    %28 = vector.broadcast %9 : vector<1x64xf32> to vector<5x64xf32>
    %29 = arith.addf %27, %28 : vector<5x64xf32>
    %c0_18 = arith.constant 0 : index
    %c0_19 = arith.constant 0 : index
    %c0_20 = arith.constant 0 : index
    %30 = vector.load %arg7[%c0_18, %c0_19, %c0_20] : memref<2x1x64xf32, #tpu.memory_space<vmem>>, vector<1x1x64xf32>
    %31 = vector.shape_cast %30 : vector<1x1x64xf32> to vector<1x64xf32>
    %c0_21 = arith.constant 0 : index
    %c0_22 = arith.constant 0 : index
    %c0_23 = arith.constant 0 : index
    %32 = vector.load %arg8[%c0_21, %c0_22, %c0_23] : memref<2x1x64xf32, #tpu.memory_space<vmem>>, vector<1x1x64xf32>
    %33 = vector.shape_cast %32 : vector<1x1x64xf32> to vector<1x64xf32>
    %cst_24 = arith.constant dense<0.000000e+00> : vector<5xf32>
    %34 = vector.multi_reduction <add>, %29, %cst_24 [1] : vector<5x64xf32> to vector<5xf32>
    %35 = vector.shape_cast %34 : vector<5xf32> to vector<5x1xf32>
    %cst_25 = arith.constant 6.400000e+01 : f32
    %36 = vector.broadcast %cst_25 : f32 to vector<5x1xf32>
    %37 = arith.divf %35, %36 : vector<5x1xf32>
    %38 = vector.broadcast %37 : vector<5x1xf32> to vector<5x64xf32>
    %39 = arith.subf %29, %38 : vector<5x64xf32>
    %40 = arith.mulf %39, %39 : vector<5x64xf32>
    %cst_26 = arith.constant dense<0.000000e+00> : vector<5xf32>
    %41 = vector.multi_reduction <add>, %40, %cst_26 [1] : vector<5x64xf32> to vector<5xf32>
    %42 = vector.shape_cast %41 : vector<5xf32> to vector<5x1xf32>
    %cst_27 = arith.constant 6.400000e+01 : f32
    %43 = vector.broadcast %cst_27 : f32 to vector<5x1xf32>
    %44 = arith.divf %42, %43 : vector<5x1xf32>
    %cst_28 = arith.constant 9.99999974E-6 : f32
    %45 = vector.broadcast %cst_28 : f32 to vector<5x1xf32>
    %46 = arith.addf %44, %45 : vector<5x1xf32>
    %47 = math.rsqrt %46 : vector<5x1xf32>
    %48 = vector.broadcast %47 : vector<5x1xf32> to vector<5x64xf32>
    %49 = arith.mulf %39, %48 : vector<5x64xf32>
    %50 = vector.broadcast %31 : vector<1x64xf32> to vector<5x64xf32>
    %51 = arith.mulf %49, %50 : vector<5x64xf32>
    %52 = vector.broadcast %33 : vector<1x64xf32> to vector<5x64xf32>
    %53 = arith.addf %51, %52 : vector<5x64xf32>
    %c0_29 = arith.constant 0 : index
    %c0_30 = arith.constant 0 : index
    %c0_31 = arith.constant 0 : index
    %54 = vector.load %arg16[%c0_29, %c0_30, %c0_31] : memref<2x1x64xf32, #tpu.memory_space<vmem>>, vector<1x1x64xf32>
    %55 = vector.shape_cast %54 : vector<1x1x64xf32> to vector<1x64xf32>
    %c0_32 = arith.constant 0 : index
    %c0_33 = arith.constant 0 : index
    %c0_34 = arith.constant 0 : index
    %56 = vector.load %arg9[%c0_32, %c0_33, %c0_34] : memref<2x64x64xf32, #tpu.memory_space<vmem>>, vector<1x64x64xf32>
    %57 = vector.shape_cast %56 : vector<1x64x64xf32> to vector<64x64xf32>
    %cst_35 = arith.constant dense<0.000000e+00> : vector<5x64xf32>
    %58 = tpu.matmul %53, %57, %cst_35 {dimension_numbers = #tpu.dot_dimension_numbers<[1], [0], [0], [1], [0, 0, 1, 1], [], []>} : vector<5x64xf32>, vector<64x64xf32>, vector<5x64xf32> -> vector<5x64xf32>
    %c0_36 = arith.constant 0 : index
    %c0_37 = arith.constant 0 : index
    %c0_38 = arith.constant 0 : index
    %59 = vector.load %arg10[%c0_36, %c0_37, %c0_38] : memref<2x1x64xf32, #tpu.memory_space<vmem>>, vector<1x1x64xf32>
    %60 = vector.shape_cast %59 : vector<1x1x64xf32> to vector<1x64xf32>
    %61 = vector.broadcast %60 : vector<1x64xf32> to vector<5x64xf32>
    %62 = arith.addf %58, %61 : vector<5x64xf32>
    %c0_39 = arith.constant 0 : index
    %c0_40 = arith.constant 0 : index
    %c0_41 = arith.constant 0 : index
    %63 = vector.load %arg11[%c0_39, %c0_40, %c0_41] : memref<2x64x64xf32, #tpu.memory_space<vmem>>, vector<1x64x64xf32>
    %64 = vector.shape_cast %63 : vector<1x64x64xf32> to vector<64x64xf32>
    %cst_42 = arith.constant dense<0.000000e+00> : vector<5x64xf32>
    %65 = tpu.matmul %53, %64, %cst_42 {dimension_numbers = #tpu.dot_dimension_numbers<[1], [0], [0], [1], [0, 0, 1, 1], [], []>} : vector<5x64xf32>, vector<64x64xf32>, vector<5x64xf32> -> vector<5x64xf32>
    %c0_43 = arith.constant 0 : index
    %c0_44 = arith.constant 0 : index
    %c0_45 = arith.constant 0 : index
    %66 = vector.load %arg12[%c0_43, %c0_44, %c0_45] : memref<2x1x64xf32, #tpu.memory_space<vmem>>, vector<1x1x64xf32>
    %67 = vector.shape_cast %66 : vector<1x1x64xf32> to vector<1x64xf32>
    %68 = vector.broadcast %67 : vector<1x64xf32> to vector<5x64xf32>
    %69 = arith.addf %65, %68 : vector<5x64xf32>
    %c0_46 = arith.constant 0 : index
    %c0_47 = arith.constant 0 : index
    %c0_48 = arith.constant 0 : index
    %70 = vector.load %arg13[%c0_46, %c0_47, %c0_48] : memref<2x64x64xf32, #tpu.memory_space<vmem>>, vector<1x64x64xf32>
    %71 = vector.shape_cast %70 : vector<1x64x64xf32> to vector<64x64xf32>
    %cst_49 = arith.constant dense<0.000000e+00> : vector<5x64xf32>
    %72 = tpu.matmul %53, %71, %cst_49 {dimension_numbers = #tpu.dot_dimension_numbers<[1], [0], [0], [1], [0, 0, 1, 1], [], []>} : vector<5x64xf32>, vector<64x64xf32>, vector<5x64xf32> -> vector<5x64xf32>
    %c0_50 = arith.constant 0 : index
    %c0_51 = arith.constant 0 : index
    %c0_52 = arith.constant 0 : index
    %73 = vector.load %arg14[%c0_50, %c0_51, %c0_52] : memref<2x1x64xf32, #tpu.memory_space<vmem>>, vector<1x1x64xf32>
    %74 = vector.shape_cast %73 : vector<1x1x64xf32> to vector<1x64xf32>
    %75 = vector.broadcast %74 : vector<1x64xf32> to vector<5x64xf32>
    %76 = arith.addf %72, %75 : vector<5x64xf32>
    %cst_53 = arith.constant dense<0.000000e+00> : vector<5x5xf32>
    %77 = tpu.matmul %62, %69, %cst_53 {dimension_numbers = #tpu.dot_dimension_numbers<[1], [1], [0], [0], [0, 0, 1, 0], [], []>} : vector<5x64xf32>, vector<5x64xf32>, vector<5x5xf32> -> vector<5x5xf32>
    %cst_54 = arith.constant 1.250000e-01 : f32
    %78 = vector.broadcast %cst_54 : f32 to vector<5x5xf32>
    %79 = arith.mulf %77, %78 : vector<5x5xf32>
    %cst_55 = arith.constant dense<0xFF800000> : vector<5xf32>
    %80 = vector.multi_reduction <maximumf>, %79, %cst_55 [1] : vector<5x5xf32> to vector<5xf32>
    %81 = vector.shape_cast %80 : vector<5xf32> to vector<5x1xf32>
    %82 = vector.broadcast %81 : vector<5x1xf32> to vector<5x5xf32>
    %83 = arith.subf %79, %82 : vector<5x5xf32>
    %84 = math.exp %83 : vector<5x5xf32>
    %cst_56 = arith.constant dense<0.000000e+00> : vector<5xf32>
    %85 = vector.multi_reduction <add>, %84, %cst_56 [1] : vector<5x5xf32> to vector<5xf32>
    %86 = vector.shape_cast %85 : vector<5xf32> to vector<5x1xf32>
    %87 = tpu.reciprocal %86 {approx = true} : vector<5x1xf32> -> vector<5x1xf32>
    %88 = vector.broadcast %87 : vector<5x1xf32> to vector<5x5xf32>
    %89 = arith.mulf %84, %88 : vector<5x5xf32>
    %cst_57 = arith.constant dense<0.000000e+00> : vector<5x64xf32>
    %90 = tpu.matmul %89, %76, %cst_57 {dimension_numbers = #tpu.dot_dimension_numbers<[1], [0], [0], [1], [0, 0, 1, 1], [], []>} : vector<5x5xf32>, vector<5x64xf32>, vector<5x64xf32> -> vector<5x64xf32>
    %c0_58 = arith.constant 0 : index
    %c0_59 = arith.constant 0 : index
    %c0_60 = arith.constant 0 : index
    %91 = vector.load %arg15[%c0_58, %c0_59, %c0_60] : memref<2x64x64xf32, #tpu.memory_space<vmem>>, vector<1x64x64xf32>
    %92 = vector.shape_cast %91 : vector<1x64x64xf32> to vector<64x64xf32>
    %cst_61 = arith.constant dense<0.000000e+00> : vector<5x64xf32>
    %93 = tpu.matmul %90, %92, %cst_61 {dimension_numbers = #tpu.dot_dimension_numbers<[1], [0], [0], [1], [0, 0, 1, 1], [], []>} : vector<5x64xf32>, vector<64x64xf32>, vector<5x64xf32> -> vector<5x64xf32>
    %94 = vector.broadcast %55 : vector<1x64xf32> to vector<5x64xf32>
    %95 = arith.addf %94, %93 : vector<5x64xf32>
    %96 = arith.addf %29, %95 : vector<5x64xf32>
    %c0_62 = arith.constant 0 : index
    %c0_63 = arith.constant 0 : index
    %c0_64 = arith.constant 0 : index
    %97 = vector.load %arg17[%c0_62, %c0_63, %c0_64] : memref<2x1x64xf32, #tpu.memory_space<vmem>>, vector<1x1x64xf32>
    %98 = vector.shape_cast %97 : vector<1x1x64xf32> to vector<1x64xf32>
    %c0_65 = arith.constant 0 : index
    %c0_66 = arith.constant 0 : index
    %c0_67 = arith.constant 0 : index
    %99 = vector.load %arg18[%c0_65, %c0_66, %c0_67] : memref<2x1x64xf32, #tpu.memory_space<vmem>>, vector<1x1x64xf32>
    %100 = vector.shape_cast %99 : vector<1x1x64xf32> to vector<1x64xf32>
    %cst_68 = arith.constant dense<0.000000e+00> : vector<5xf32>
    %101 = vector.multi_reduction <add>, %96, %cst_68 [1] : vector<5x64xf32> to vector<5xf32>
    %102 = vector.shape_cast %101 : vector<5xf32> to vector<5x1xf32>
    %cst_69 = arith.constant 6.400000e+01 : f32
    %103 = vector.broadcast %cst_69 : f32 to vector<5x1xf32>
    %104 = arith.divf %102, %103 : vector<5x1xf32>
    %105 = vector.broadcast %104 : vector<5x1xf32> to vector<5x64xf32>
    %106 = arith.subf %96, %105 : vector<5x64xf32>
    %107 = arith.mulf %106, %106 : vector<5x64xf32>
    %cst_70 = arith.constant dense<0.000000e+00> : vector<5xf32>
    %108 = vector.multi_reduction <add>, %107, %cst_70 [1] : vector<5x64xf32> to vector<5xf32>
    %109 = vector.shape_cast %108 : vector<5xf32> to vector<5x1xf32>
    %cst_71 = arith.constant 6.400000e+01 : f32
    %110 = vector.broadcast %cst_71 : f32 to vector<5x1xf32>
    %111 = arith.divf %109, %110 : vector<5x1xf32>
    %cst_72 = arith.constant 9.99999974E-6 : f32
    %112 = vector.broadcast %cst_72 : f32 to vector<5x1xf32>
    %113 = arith.addf %111, %112 : vector<5x1xf32>
    %114 = math.rsqrt %113 : vector<5x1xf32>
    %115 = vector.broadcast %114 : vector<5x1xf32> to vector<5x64xf32>
    %116 = arith.mulf %106, %115 : vector<5x64xf32>
    %117 = vector.broadcast %98 : vector<1x64xf32> to vector<5x64xf32>
    %118 = arith.mulf %116, %117 : vector<5x64xf32>
    %119 = vector.broadcast %100 : vector<1x64xf32> to vector<5x64xf32>
    %120 = arith.addf %118, %119 : vector<5x64xf32>
    %c0_73 = arith.constant 0 : index
    %c0_74 = arith.constant 0 : index
    %c0_75 = arith.constant 0 : index
    %121 = vector.load %arg19[%c0_73, %c0_74, %c0_75] : memref<2x64x256xf32, #tpu.memory_space<vmem>>, vector<1x64x256xf32>
    %122 = vector.shape_cast %121 : vector<1x64x256xf32> to vector<64x256xf32>
    %cst_76 = arith.constant dense<0.000000e+00> : vector<5x256xf32>
    %123 = tpu.matmul %120, %122, %cst_76 {dimension_numbers = #tpu.dot_dimension_numbers<[1], [0], [0], [1], [0, 0, 1, 1], [], []>} : vector<5x64xf32>, vector<64x256xf32>, vector<5x256xf32> -> vector<5x256xf32>
    %c0_77 = arith.constant 0 : index
    %c0_78 = arith.constant 0 : index
    %c0_79 = arith.constant 0 : index
    %124 = vector.load %arg20[%c0_77, %c0_78, %c0_79] : memref<2x1x256xf32, #tpu.memory_space<vmem>>, vector<1x1x256xf32>
    %125 = vector.shape_cast %124 : vector<1x1x256xf32> to vector<1x256xf32>
    %126 = vector.broadcast %125 : vector<1x256xf32> to vector<5x256xf32>
    %127 = arith.addf %123, %126 : vector<5x256xf32>
    %cst_80 = arith.constant 1.702000e+00 : f32
    %128 = vector.broadcast %cst_80 : f32 to vector<5x256xf32>
    %129 = arith.mulf %128, %127 : vector<5x256xf32>
    %130 = arith.negf %129 : vector<5x256xf32>
    %131 = math.exp %130 : vector<5x256xf32>
    %cst_81 = arith.constant 1.000000e+00 : f32
    %132 = vector.broadcast %cst_81 : f32 to vector<5x256xf32>
    %133 = arith.addf %132, %131 : vector<5x256xf32>
    %134 = arith.divf %132, %133 : vector<5x256xf32>
    %135 = arith.mulf %127, %134 : vector<5x256xf32>
    %c0_82 = arith.constant 0 : index
    %c0_83 = arith.constant 0 : index
    %c0_84 = arith.constant 0 : index
    %136 = vector.load %arg21[%c0_82, %c0_83, %c0_84] : memref<2x256x64xf32, #tpu.memory_space<vmem>>, vector<1x256x64xf32>
    %137 = vector.shape_cast %136 : vector<1x256x64xf32> to vector<256x64xf32>
    %cst_85 = arith.constant dense<0.000000e+00> : vector<5x64xf32>
    %138 = tpu.matmul %135, %137, %cst_85 {dimension_numbers = #tpu.dot_dimension_numbers<[1], [0], [0], [1], [0, 0, 1, 1], [], []>} : vector<5x256xf32>, vector<256x64xf32>, vector<5x64xf32> -> vector<5x64xf32>
    %c0_86 = arith.constant 0 : index
    %c0_87 = arith.constant 0 : index
    %c0_88 = arith.constant 0 : index
    %139 = vector.load %arg22[%c0_86, %c0_87, %c0_88] : memref<2x1x64xf32, #tpu.memory_space<vmem>>, vector<1x1x64xf32>
    %140 = vector.shape_cast %139 : vector<1x1x64xf32> to vector<1x64xf32>
    %141 = vector.broadcast %140 : vector<1x64xf32> to vector<5x64xf32>
    %142 = arith.addf %138, %141 : vector<5x64xf32>
    %143 = arith.addf %96, %142 : vector<5x64xf32>
    %c1 = arith.constant 1 : index
    %c0_89 = arith.constant 0 : index
    %c0_90 = arith.constant 0 : index
    %144 = vector.load %arg7[%c1, %c0_89, %c0_90] : memref<2x1x64xf32, #tpu.memory_space<vmem>>, vector<1x1x64xf32>
    %145 = vector.shape_cast %144 : vector<1x1x64xf32> to vector<1x64xf32>
    %c1_91 = arith.constant 1 : index
    %c0_92 = arith.constant 0 : index
    %c0_93 = arith.constant 0 : index
    %146 = vector.load %arg8[%c1_91, %c0_92, %c0_93] : memref<2x1x64xf32, #tpu.memory_space<vmem>>, vector<1x1x64xf32>
    %147 = vector.shape_cast %146 : vector<1x1x64xf32> to vector<1x64xf32>
    %cst_94 = arith.constant dense<0.000000e+00> : vector<5xf32>
    %148 = vector.multi_reduction <add>, %143, %cst_94 [1] : vector<5x64xf32> to vector<5xf32>
    %149 = vector.shape_cast %148 : vector<5xf32> to vector<5x1xf32>
    %cst_95 = arith.constant 6.400000e+01 : f32
    %150 = vector.broadcast %cst_95 : f32 to vector<5x1xf32>
    %151 = arith.divf %149, %150 : vector<5x1xf32>
    %152 = vector.broadcast %151 : vector<5x1xf32> to vector<5x64xf32>
    %153 = arith.subf %143, %152 : vector<5x64xf32>
    %154 = arith.mulf %153, %153 : vector<5x64xf32>
    %cst_96 = arith.constant dense<0.000000e+00> : vector<5xf32>
    %155 = vector.multi_reduction <add>, %154, %cst_96 [1] : vector<5x64xf32> to vector<5xf32>
    %156 = vector.shape_cast %155 : vector<5xf32> to vector<5x1xf32>
    %cst_97 = arith.constant 6.400000e+01 : f32
    %157 = vector.broadcast %cst_97 : f32 to vector<5x1xf32>
    %158 = arith.divf %156, %157 : vector<5x1xf32>
    %cst_98 = arith.constant 9.99999974E-6 : f32
    %159 = vector.broadcast %cst_98 : f32 to vector<5x1xf32>
    %160 = arith.addf %158, %159 : vector<5x1xf32>
    %161 = math.rsqrt %160 : vector<5x1xf32>
    %162 = vector.broadcast %161 : vector<5x1xf32> to vector<5x64xf32>
    %163 = arith.mulf %153, %162 : vector<5x64xf32>
    %164 = vector.broadcast %145 : vector<1x64xf32> to vector<5x64xf32>
    %165 = arith.mulf %163, %164 : vector<5x64xf32>
    %166 = vector.broadcast %147 : vector<1x64xf32> to vector<5x64xf32>
    %167 = arith.addf %165, %166 : vector<5x64xf32>
    %c1_99 = arith.constant 1 : index
    %c0_100 = arith.constant 0 : index
    %c0_101 = arith.constant 0 : index
    %168 = vector.load %arg16[%c1_99, %c0_100, %c0_101] : memref<2x1x64xf32, #tpu.memory_space<vmem>>, vector<1x1x64xf32>
    %169 = vector.shape_cast %168 : vector<1x1x64xf32> to vector<1x64xf32>
    %c1_102 = arith.constant 1 : index
    %c0_103 = arith.constant 0 : index
    %c0_104 = arith.constant 0 : index
    %170 = vector.load %arg9[%c1_102, %c0_103, %c0_104] : memref<2x64x64xf32, #tpu.memory_space<vmem>>, vector<1x64x64xf32>
    %171 = vector.shape_cast %170 : vector<1x64x64xf32> to vector<64x64xf32>
    %cst_105 = arith.constant dense<0.000000e+00> : vector<5x64xf32>
    %172 = tpu.matmul %167, %171, %cst_105 {dimension_numbers = #tpu.dot_dimension_numbers<[1], [0], [0], [1], [0, 0, 1, 1], [], []>} : vector<5x64xf32>, vector<64x64xf32>, vector<5x64xf32> -> vector<5x64xf32>
    %c1_106 = arith.constant 1 : index
    %c0_107 = arith.constant 0 : index
    %c0_108 = arith.constant 0 : index
    %173 = vector.load %arg10[%c1_106, %c0_107, %c0_108] : memref<2x1x64xf32, #tpu.memory_space<vmem>>, vector<1x1x64xf32>
    %174 = vector.shape_cast %173 : vector<1x1x64xf32> to vector<1x64xf32>
    %175 = vector.broadcast %174 : vector<1x64xf32> to vector<5x64xf32>
    %176 = arith.addf %172, %175 : vector<5x64xf32>
    %c1_109 = arith.constant 1 : index
    %c0_110 = arith.constant 0 : index
    %c0_111 = arith.constant 0 : index
    %177 = vector.load %arg11[%c1_109, %c0_110, %c0_111] : memref<2x64x64xf32, #tpu.memory_space<vmem>>, vector<1x64x64xf32>
    %178 = vector.shape_cast %177 : vector<1x64x64xf32> to vector<64x64xf32>
    %cst_112 = arith.constant dense<0.000000e+00> : vector<5x64xf32>
    %179 = tpu.matmul %167, %178, %cst_112 {dimension_numbers = #tpu.dot_dimension_numbers<[1], [0], [0], [1], [0, 0, 1, 1], [], []>} : vector<5x64xf32>, vector<64x64xf32>, vector<5x64xf32> -> vector<5x64xf32>
    %c1_113 = arith.constant 1 : index
    %c0_114 = arith.constant 0 : index
    %c0_115 = arith.constant 0 : index
    %180 = vector.load %arg12[%c1_113, %c0_114, %c0_115] : memref<2x1x64xf32, #tpu.memory_space<vmem>>, vector<1x1x64xf32>
    %181 = vector.shape_cast %180 : vector<1x1x64xf32> to vector<1x64xf32>
    %182 = vector.broadcast %181 : vector<1x64xf32> to vector<5x64xf32>
    %183 = arith.addf %179, %182 : vector<5x64xf32>
    %c1_116 = arith.constant 1 : index
    %c0_117 = arith.constant 0 : index
    %c0_118 = arith.constant 0 : index
    %184 = vector.load %arg13[%c1_116, %c0_117, %c0_118] : memref<2x64x64xf32, #tpu.memory_space<vmem>>, vector<1x64x64xf32>
    %185 = vector.shape_cast %184 : vector<1x64x64xf32> to vector<64x64xf32>
    %cst_119 = arith.constant dense<0.000000e+00> : vector<5x64xf32>
    %186 = tpu.matmul %167, %185, %cst_119 {dimension_numbers = #tpu.dot_dimension_numbers<[1], [0], [0], [1], [0, 0, 1, 1], [], []>} : vector<5x64xf32>, vector<64x64xf32>, vector<5x64xf32> -> vector<5x64xf32>
    %c1_120 = arith.constant 1 : index
    %c0_121 = arith.constant 0 : index
    %c0_122 = arith.constant 0 : index
    %187 = vector.load %arg14[%c1_120, %c0_121, %c0_122] : memref<2x1x64xf32, #tpu.memory_space<vmem>>, vector<1x1x64xf32>
    %188 = vector.shape_cast %187 : vector<1x1x64xf32> to vector<1x64xf32>
    %189 = vector.broadcast %188 : vector<1x64xf32> to vector<5x64xf32>
    %190 = arith.addf %186, %189 : vector<5x64xf32>
    %cst_123 = arith.constant dense<0.000000e+00> : vector<5x5xf32>
    %191 = tpu.matmul %176, %183, %cst_123 {dimension_numbers = #tpu.dot_dimension_numbers<[1], [1], [0], [0], [0, 0, 1, 0], [], []>} : vector<5x64xf32>, vector<5x64xf32>, vector<5x5xf32> -> vector<5x5xf32>
    %cst_124 = arith.constant 1.250000e-01 : f32
    %192 = vector.broadcast %cst_124 : f32 to vector<5x5xf32>
    %193 = arith.mulf %191, %192 : vector<5x5xf32>
    %cst_125 = arith.constant dense<0xFF800000> : vector<5xf32>
    %194 = vector.multi_reduction <maximumf>, %193, %cst_125 [1] : vector<5x5xf32> to vector<5xf32>
    %195 = vector.shape_cast %194 : vector<5xf32> to vector<5x1xf32>
    %196 = vector.broadcast %195 : vector<5x1xf32> to vector<5x5xf32>
    %197 = arith.subf %193, %196 : vector<5x5xf32>
    %198 = math.exp %197 : vector<5x5xf32>
    %cst_126 = arith.constant dense<0.000000e+00> : vector<5xf32>
    %199 = vector.multi_reduction <add>, %198, %cst_126 [1] : vector<5x5xf32> to vector<5xf32>
    %200 = vector.shape_cast %199 : vector<5xf32> to vector<5x1xf32>
    %201 = tpu.reciprocal %200 {approx = true} : vector<5x1xf32> -> vector<5x1xf32>
    %202 = vector.broadcast %201 : vector<5x1xf32> to vector<5x5xf32>
    %203 = arith.mulf %198, %202 : vector<5x5xf32>
    %cst_127 = arith.constant dense<0.000000e+00> : vector<5x64xf32>
    %204 = tpu.matmul %203, %190, %cst_127 {dimension_numbers = #tpu.dot_dimension_numbers<[1], [0], [0], [1], [0, 0, 1, 1], [], []>} : vector<5x5xf32>, vector<5x64xf32>, vector<5x64xf32> -> vector<5x64xf32>
    %c1_128 = arith.constant 1 : index
    %c0_129 = arith.constant 0 : index
    %c0_130 = arith.constant 0 : index
    %205 = vector.load %arg15[%c1_128, %c0_129, %c0_130] : memref<2x64x64xf32, #tpu.memory_space<vmem>>, vector<1x64x64xf32>
    %206 = vector.shape_cast %205 : vector<1x64x64xf32> to vector<64x64xf32>
    %cst_131 = arith.constant dense<0.000000e+00> : vector<5x64xf32>
    %207 = tpu.matmul %204, %206, %cst_131 {dimension_numbers = #tpu.dot_dimension_numbers<[1], [0], [0], [1], [0, 0, 1, 1], [], []>} : vector<5x64xf32>, vector<64x64xf32>, vector<5x64xf32> -> vector<5x64xf32>
    %208 = vector.broadcast %169 : vector<1x64xf32> to vector<5x64xf32>
    %209 = arith.addf %208, %207 : vector<5x64xf32>
    %210 = arith.addf %143, %209 : vector<5x64xf32>
    %c1_132 = arith.constant 1 : index
    %c0_133 = arith.constant 0 : index
    %c0_134 = arith.constant 0 : index
    %211 = vector.load %arg17[%c1_132, %c0_133, %c0_134] : memref<2x1x64xf32, #tpu.memory_space<vmem>>, vector<1x1x64xf32>
    %212 = vector.shape_cast %211 : vector<1x1x64xf32> to vector<1x64xf32>
    %c1_135 = arith.constant 1 : index
    %c0_136 = arith.constant 0 : index
    %c0_137 = arith.constant 0 : index
    %213 = vector.load %arg18[%c1_135, %c0_136, %c0_137] : memref<2x1x64xf32, #tpu.memory_space<vmem>>, vector<1x1x64xf32>
    %214 = vector.shape_cast %213 : vector<1x1x64xf32> to vector<1x64xf32>
    %cst_138 = arith.constant dense<0.000000e+00> : vector<5xf32>
    %215 = vector.multi_reduction <add>, %210, %cst_138 [1] : vector<5x64xf32> to vector<5xf32>
    %216 = vector.shape_cast %215 : vector<5xf32> to vector<5x1xf32>
    %cst_139 = arith.constant 6.400000e+01 : f32
    %217 = vector.broadcast %cst_139 : f32 to vector<5x1xf32>
    %218 = arith.divf %216, %217 : vector<5x1xf32>
    %219 = vector.broadcast %218 : vector<5x1xf32> to vector<5x64xf32>
    %220 = arith.subf %210, %219 : vector<5x64xf32>
    %221 = arith.mulf %220, %220 : vector<5x64xf32>
    %cst_140 = arith.constant dense<0.000000e+00> : vector<5xf32>
    %222 = vector.multi_reduction <add>, %221, %cst_140 [1] : vector<5x64xf32> to vector<5xf32>
    %223 = vector.shape_cast %222 : vector<5xf32> to vector<5x1xf32>
    %cst_141 = arith.constant 6.400000e+01 : f32
    %224 = vector.broadcast %cst_141 : f32 to vector<5x1xf32>
    %225 = arith.divf %223, %224 : vector<5x1xf32>
    %cst_142 = arith.constant 9.99999974E-6 : f32
    %226 = vector.broadcast %cst_142 : f32 to vector<5x1xf32>
    %227 = arith.addf %225, %226 : vector<5x1xf32>
    %228 = math.rsqrt %227 : vector<5x1xf32>
    %229 = vector.broadcast %228 : vector<5x1xf32> to vector<5x64xf32>
    %230 = arith.mulf %220, %229 : vector<5x64xf32>
    %231 = vector.broadcast %212 : vector<1x64xf32> to vector<5x64xf32>
    %232 = arith.mulf %230, %231 : vector<5x64xf32>
    %233 = vector.broadcast %214 : vector<1x64xf32> to vector<5x64xf32>
    %234 = arith.addf %232, %233 : vector<5x64xf32>
    %c1_143 = arith.constant 1 : index
    %c0_144 = arith.constant 0 : index
    %c0_145 = arith.constant 0 : index
    %235 = vector.load %arg19[%c1_143, %c0_144, %c0_145] : memref<2x64x256xf32, #tpu.memory_space<vmem>>, vector<1x64x256xf32>
    %236 = vector.shape_cast %235 : vector<1x64x256xf32> to vector<64x256xf32>
    %cst_146 = arith.constant dense<0.000000e+00> : vector<5x256xf32>
    %237 = tpu.matmul %234, %236, %cst_146 {dimension_numbers = #tpu.dot_dimension_numbers<[1], [0], [0], [1], [0, 0, 1, 1], [], []>} : vector<5x64xf32>, vector<64x256xf32>, vector<5x256xf32> -> vector<5x256xf32>
    %c1_147 = arith.constant 1 : index
    %c0_148 = arith.constant 0 : index
    %c0_149 = arith.constant 0 : index
    %238 = vector.load %arg20[%c1_147, %c0_148, %c0_149] : memref<2x1x256xf32, #tpu.memory_space<vmem>>, vector<1x1x256xf32>
    %239 = vector.shape_cast %238 : vector<1x1x256xf32> to vector<1x256xf32>
    %240 = vector.broadcast %239 : vector<1x256xf32> to vector<5x256xf32>
    %241 = arith.addf %237, %240 : vector<5x256xf32>
    %cst_150 = arith.constant 1.702000e+00 : f32
    %242 = vector.broadcast %cst_150 : f32 to vector<5x256xf32>
    %243 = arith.mulf %242, %241 : vector<5x256xf32>
    %244 = arith.negf %243 : vector<5x256xf32>
    %245 = math.exp %244 : vector<5x256xf32>
    %cst_151 = arith.constant 1.000000e+00 : f32
    %246 = vector.broadcast %cst_151 : f32 to vector<5x256xf32>
    %247 = arith.addf %246, %245 : vector<5x256xf32>
    %248 = arith.divf %246, %247 : vector<5x256xf32>
    %249 = arith.mulf %241, %248 : vector<5x256xf32>
    %c1_152 = arith.constant 1 : index
    %c0_153 = arith.constant 0 : index
    %c0_154 = arith.constant 0 : index
    %250 = vector.load %arg21[%c1_152, %c0_153, %c0_154] : memref<2x256x64xf32, #tpu.memory_space<vmem>>, vector<1x256x64xf32>
    %251 = vector.shape_cast %250 : vector<1x256x64xf32> to vector<256x64xf32>
    %cst_155 = arith.constant dense<0.000000e+00> : vector<5x64xf32>
    %252 = tpu.matmul %249, %251, %cst_155 {dimension_numbers = #tpu.dot_dimension_numbers<[1], [0], [0], [1], [0, 0, 1, 1], [], []>} : vector<5x256xf32>, vector<256x64xf32>, vector<5x64xf32> -> vector<5x64xf32>
    %c1_156 = arith.constant 1 : index
    %c0_157 = arith.constant 0 : index
    %c0_158 = arith.constant 0 : index
    %253 = vector.load %arg22[%c1_156, %c0_157, %c0_158] : memref<2x1x64xf32, #tpu.memory_space<vmem>>, vector<1x1x64xf32>
    %254 = vector.shape_cast %253 : vector<1x1x64xf32> to vector<1x64xf32>
    %255 = vector.broadcast %254 : vector<1x64xf32> to vector<5x64xf32>
    %256 = arith.addf %252, %255 : vector<5x64xf32>
    %257 = arith.addf %210, %256 : vector<5x64xf32>
    %258 = vector.extract_strided_slice %257 {offsets = [0, 0], sizes = [1, 64], strides = [1, 1]} : vector<5x64xf32> to vector<1x64xf32>
    %c0_159 = arith.constant 0 : index
    %c0_160 = arith.constant 0 : index
    %259 = vector.load %arg23[%c0_159, %c0_160] : memref<1x64xf32, #tpu.memory_space<vmem>>, vector<1x64xf32>
    %c0_161 = arith.constant 0 : index
    %c0_162 = arith.constant 0 : index
    %260 = vector.load %arg24[%c0_161, %c0_162] : memref<1x64xf32, #tpu.memory_space<vmem>>, vector<1x64xf32>
    %cst_163 = arith.constant dense<0.000000e+00> : vector<1xf32>
    %261 = vector.multi_reduction <add>, %258, %cst_163 [1] : vector<1x64xf32> to vector<1xf32>
    %262 = vector.shape_cast %261 : vector<1xf32> to vector<1x1xf32>
    %cst_164 = arith.constant 6.400000e+01 : f32
    %263 = vector.broadcast %cst_164 : f32 to vector<1x1xf32>
    %264 = arith.divf %262, %263 : vector<1x1xf32>
    %265 = vector.broadcast %264 : vector<1x1xf32> to vector<1x64xf32>
    %266 = arith.subf %258, %265 : vector<1x64xf32>
    %267 = arith.mulf %266, %266 : vector<1x64xf32>
    %cst_165 = arith.constant dense<0.000000e+00> : vector<1xf32>
    %268 = vector.multi_reduction <add>, %267, %cst_165 [1] : vector<1x64xf32> to vector<1xf32>
    %269 = vector.shape_cast %268 : vector<1xf32> to vector<1x1xf32>
    %cst_166 = arith.constant 6.400000e+01 : f32
    %270 = vector.broadcast %cst_166 : f32 to vector<1x1xf32>
    %271 = arith.divf %269, %270 : vector<1x1xf32>
    %cst_167 = arith.constant 9.99999974E-6 : f32
    %272 = vector.broadcast %cst_167 : f32 to vector<1x1xf32>
    %273 = arith.addf %271, %272 : vector<1x1xf32>
    %274 = math.rsqrt %273 : vector<1x1xf32>
    %275 = vector.broadcast %274 : vector<1x1xf32> to vector<1x64xf32>
    %276 = arith.mulf %266, %275 : vector<1x64xf32>
    %277 = arith.mulf %276, %259 : vector<1x64xf32>
    %278 = arith.addf %277, %260 : vector<1x64xf32>
    %c0_168 = arith.constant 0 : index
    %c0_169 = arith.constant 0 : index
    %279 = vector.load %arg25[%c0_168, %c0_169] : memref<64x32xf32, #tpu.memory_space<vmem>>, vector<64x32xf32>
    %cst_170 = arith.constant dense<0.000000e+00> : vector<1x32xf32>
    %280 = tpu.matmul %278, %279, %cst_170 {dimension_numbers = #tpu.dot_dimension_numbers<[1], [0], [0], [1], [0, 0, 1, 1], [], []>} : vector<1x64xf32>, vector<64x32xf32>, vector<1x32xf32> -> vector<1x32xf32>
    %c0_171 = arith.constant 0 : index
    %c0_172 = arith.constant 0 : index
    %c0_173 = arith.constant 0 : index
    %281 = vector.load %arg26[%c0_171, %c0_172, %c0_173] : memref<1x1x32xf32, #tpu.memory_space<vmem>>, vector<1x1x32xf32>
    %282 = vector.shape_cast %281 : vector<1x1x32xf32> to vector<1x32xf32>
    %283 = vector.shape_cast %280 : vector<1x32xf32> to vector<1x1x32xf32>
    tpu.vector_store %arg26[%c0_171, %c0_172, %c0_173], %283 {strides = array<i32>} : memref<1x1x32xf32, #tpu.memory_space<vmem>>, vector<1x1x32xf32>,
    return
  }
  func.func @transform_0(%arg0: i32) -> (i32, i32, i32) {
    %c0_i32 = arith.constant 0 : i32
    %c0_i32_0 = arith.constant 0 : i32
    %c0_i32_1 = arith.constant 0 : i32
    return %arg0, %c0_i32, %c0_i32_0 : i32, i32, i32
  }
  func.func @transform_1(%arg0: i32) -> (i32, i32) {
    %c0_i32 = arith.constant 0 : i32
    %c0_i32_0 = arith.constant 0 : i32
    %c0_i32_1 = arith.constant 0 : i32
    return %c0_i32, %c0_i32_0 : i32, i32
  }
  func.func @transform_2(%arg0: i32) -> (i32, i32) {
    %c0_i32 = arith.constant 0 : i32
    %c0_i32_0 = arith.constant 0 : i32
    %c0_i32_1 = arith.constant 0 : i32
    return %c0_i32, %c0_i32_0 : i32, i32
  }
  func.func @transform_3(%arg0: i32) -> (i32, i32) {
    %c0_i32 = arith.constant 0 : i32
    %c0_i32_0 = arith.constant 0 : i32
    %c0_i32_1 = arith.constant 0 : i32
    return %c0_i32, %c0_i32_0 : i32, i32
  }
  func.func @transform_4(%arg0: i32) -> (i32, i32) {
    %c0_i32 = arith.constant 0 : i32
    %c0_i32_0 = arith.constant 0 : i32
    %c0_i32_1 = arith.constant 0 : i32
    return %c0_i32, %c0_i32_0 : i32, i32
  }
  func.func @transform_5(%arg0: i32) -> (i32, i32) {
    %c0_i32 = arith.constant 0 : i32
    %c0_i32_0 = arith.constant 0 : i32
    %c0_i32_1 = arith.constant 0 : i32
    return %c0_i32, %c0_i32_0 : i32, i32
  }
  func.func @transform_6(%arg0: i32) -> (i32, i32, i32) {
    %c0_i32 = arith.constant 0 : i32
    %c0_i32_0 = arith.constant 0 : i32
    %c0_i32_1 = arith.constant 0 : i32
    %c0_i32_2 = arith.constant 0 : i32
    return %c0_i32, %c0_i32_0, %c0_i32_1 : i32, i32, i32
  }
  func.func @transform_7(%arg0: i32) -> (i32, i32, i32) {
    %c0_i32 = arith.constant 0 : i32
    %c0_i32_0 = arith.constant 0 : i32
    %c0_i32_1 = arith.constant 0 : i32
    %c0_i32_2 = arith.constant 0 : i32
    return %c0_i32, %c0_i32_0, %c0_i32_1 : i32, i32, i32
  }
  func.func @transform_8(%arg0: i32) -> (i32, i32, i32) {
    %c0_i32 = arith.constant 0 : i32
    %c0_i32_0 = arith.constant 0 : i32
    %c0_i32_1 = arith.constant 0 : i32
    %c0_i32_2 = arith.constant 0 : i32
    return %c0_i32, %c0_i32_0, %c0_i32_1 : i32, i32, i32
  }
  func.func @transform_9(%arg0: i32) -> (i32, i32, i32) {
    %c0_i32 = arith.constant 0 : i32
    %c0_i32_0 = arith.constant 0 : i32
    %c0_i32_1 = arith.constant 0 : i32
    %c0_i32_2 = arith.constant 0 : i32
    return %c0_i32, %c0_i32_0, %c0_i32_1 : i32, i32, i32
  }
  func.func @transform_10(%arg0: i32) -> (i32, i32, i32) {
    %c0_i32 = arith.constant 0 : i32
    %c0_i32_0 = arith.constant 0 : i32
    %c0_i32_1 = arith.constant 0 : i32
    %c0_i32_2 = arith.constant 0 : i32
    return %c0_i32, %c0_i32_0, %c0_i32_1 : i32, i32, i32
  }
  func.func @transform_11(%arg0: i32) -> (i32, i32, i32) {
    %c0_i32 = arith.constant 0 : i32
    %c0_i32_0 = arith.constant 0 : i32
    %c0_i32_1 = arith.constant 0 : i32
    %c0_i32_2 = arith.constant 0 : i32
    return %c0_i32, %c0_i32_0, %c0_i32_1 : i32, i32, i32
  }
  func.func @transform_12(%arg0: i32) -> (i32, i32, i32) {
    %c0_i32 = arith.constant 0 : i32
    %c0_i32_0 = arith.constant 0 : i32
    %c0_i32_1 = arith.constant 0 : i32
    %c0_i32_2 = arith.constant 0 : i32
    return %c0_i32, %c0_i32_0, %c0_i32_1 : i32, i32, i32
  }
  func.func @transform_13(%arg0: i32) -> (i32, i32, i32) {
    %c0_i32 = arith.constant 0 : i32
    %c0_i32_0 = arith.constant 0 : i32
    %c0_i32_1 = arith.constant 0 : i32
    %c0_i32_2 = arith.constant 0 : i32
    return %c0_i32, %c0_i32_0, %c0_i32_1 : i32, i32, i32
  }
  func.func @transform_14(%arg0: i32) -> (i32, i32, i32) {
    %c0_i32 = arith.constant 0 : i32
    %c0_i32_0 = arith.constant 0 : i32
    %c0_i32_1 = arith.constant 0 : i32
    %c0_i32_2 = arith.constant 0 : i32
    return %c0_i32, %c0_i32_0, %c0_i32_1 : i32, i32, i32
  }
  func.func @transform_15(%arg0: i32) -> (i32, i32, i32) {
    %c0_i32 = arith.constant 0 : i32
    %c0_i32_0 = arith.constant 0 : i32
    %c0_i32_1 = arith.constant 0 : i32
    %c0_i32_2 = arith.constant 0 : i32
    return %c0_i32, %c0_i32_0, %c0_i32_1 : i32, i32, i32
  }
  func.func @transform_16(%arg0: i32) -> (i32, i32, i32) {
    %c0_i32 = arith.constant 0 : i32
    %c0_i32_0 = arith.constant 0 : i32
    %c0_i32_1 = arith.constant 0 : i32
    %c0_i32_2 = arith.constant 0 : i32
    return %c0_i32, %c0_i32_0, %c0_i32_1 : i32, i32, i32
  }
  func.func @transform_17(%arg0: i32) -> (i32, i32, i32) {
    %c0_i32 = arith.constant 0 : i32
    %c0_i32_0 = arith.constant 0 : i32
    %c0_i32_1 = arith.constant 0 : i32
    %c0_i32_2 = arith.constant 0 : i32
    return %c0_i32, %c0_i32_0, %c0_i32_1 : i32, i32, i32
  }
  func.func @transform_18(%arg0: i32) -> (i32, i32, i32) {
    %c0_i32 = arith.constant 0 : i32
    %c0_i32_0 = arith.constant 0 : i32
    %c0_i32_1 = arith.constant 0 : i32
    %c0_i32_2 = arith.constant 0 : i32
    return %c0_i32, %c0_i32_0, %c0_i32_1 : i32, i32, i32
  }
  func.func @transform_19(%arg0: i32) -> (i32, i32, i32) {
    %c0_i32 = arith.constant 0 : i32
    %c0_i32_0 = arith.constant 0 : i32
    %c0_i32_1 = arith.constant 0 : i32
    %c0_i32_2 = arith.constant 0 : i32
    return %c0_i32, %c0_i32_0, %c0_i32_1 : i32, i32, i32
  }
  func.func @transform_20(%arg0: i32) -> (i32, i32, i32) {
    %c0_i32 = arith.constant 0 : i32
    %c0_i32_0 = arith.constant 0 : i32
    %c0_i32_1 = arith.constant 0 : i32
    %c0_i32_2 = arith.constant 0 : i32
    return %c0_i32, %c0_i32_0, %c0_i32_1 : i32, i32, i32
  }
  func.func @transform_21(%arg0: i32) -> (i32, i32, i32) {
    %c0_i32 = arith.constant 0 : i32
    %c0_i32_0 = arith.constant 0 : i32
    %c0_i32_1 = arith.constant 0 : i32
    %c0_i32_2 = arith.constant 0 : i32
    return %c0_i32, %c0_i32_0, %c0_i32_1 : i32, i32, i32
  }
  func.func @transform_22(%arg0: i32) -> (i32, i32) {
    %c0_i32 = arith.constant 0 : i32
    %c0_i32_0 = arith.constant 0 : i32
    %c0_i32_1 = arith.constant 0 : i32
    return %c0_i32, %c0_i32_0 : i32, i32
  }
  func.func @transform_23(%arg0: i32) -> (i32, i32) {
    %c0_i32 = arith.constant 0 : i32
    %c0_i32_0 = arith.constant 0 : i32
    %c0_i32_1 = arith.constant 0 : i32
    return %c0_i32, %c0_i32_0 : i32, i32
  }
  func.func @transform_24(%arg0: i32) -> (i32, i32) {
    %c0_i32 = arith.constant 0 : i32
    %c0_i32_0 = arith.constant 0 : i32
    %c0_i32_1 = arith.constant 0 : i32
    return %c0_i32, %c0_i32_0 : i32, i32
  }
  func.func @transform_25(%arg0: i32) -> (i32, i32, i32) {
    %c0_i32 = arith.constant 0 : i32
    %c0_i32_0 = arith.constant 0 : i32
    %c0_i32_1 = arith.constant 0 : i32
    return %arg0, %c0_i32, %c0_i32_0 : i32, i32, i32
  }
}

module attributes {stable_mosaic.version = 11 : i64} {
  func.func @_text_kernel(%arg0: i32, %arg1: memref<1x8x64xf32, #tpu.memory_space<vmem>>, %arg2: memref<1x1x8xf32, #tpu.memory_space<vmem>>, %arg3: memref<8x64xf32, #tpu.memory_space<vmem>>, %arg4: memref<2x1x64xf32, #tpu.memory_space<vmem>>, %arg5: memref<2x1x64xf32, #tpu.memory_space<vmem>>, %arg6: memref<4x64x32xf32, #tpu.memory_space<vmem>>, %arg7: memref<4x1x32xf32, #tpu.memory_space<vmem>>, %arg8: memref<4x64x32xf32, #tpu.memory_space<vmem>>, %arg9: memref<4x1x32xf32, #tpu.memory_space<vmem>>, %arg10: memref<4x64x32xf32, #tpu.memory_space<vmem>>, %arg11: memref<4x1x32xf32, #tpu.memory_space<vmem>>, %arg12: memref<4x32x64xf32, #tpu.memory_space<vmem>>, %arg13: memref<2x1x64xf32, #tpu.memory_space<vmem>>, %arg14: memref<2x1x64xf32, #tpu.memory_space<vmem>>, %arg15: memref<2x1x64xf32, #tpu.memory_space<vmem>>, %arg16: memref<2x64x256xf32, #tpu.memory_space<vmem>>, %arg17: memref<2x1x256xf32, #tpu.memory_space<vmem>>, %arg18: memref<2x256x64xf32, #tpu.memory_space<vmem>>, %arg19: memref<2x1x64xf32, #tpu.memory_space<vmem>>, %arg20: memref<1x64xf32, #tpu.memory_space<vmem>>, %arg21: memref<1x64xf32, #tpu.memory_space<vmem>>, %arg22: memref<64x32xf32, #tpu.memory_space<vmem>>, %arg23: memref<1x1x32xf32, #tpu.memory_space<vmem>>) attributes {dimension_semantics = [#tpu.dimension_semantics<parallel>], iteration_bounds = array<i64: 2>, scalar_prefetch = 0 : i64, scratch_operands = 0 : i64, tpu.core_type = #tpu.core_type<tc>, window_params = [{transform_indices = @transform_0, window_bounds = array<i64: 1, 8, 64>}, {transform_indices = @transform_1, window_bounds = array<i64: 1, 1, 8>}, {pipeline_mode = #tpu.pipeline_mode<synchronous>, transform_indices = @transform_2, window_bounds = array<i64: 8, 64>}, {pipeline_mode = #tpu.pipeline_mode<synchronous>, transform_indices = @transform_3, window_bounds = array<i64: 2, 1, 64>}, {pipeline_mode = #tpu.pipeline_mode<synchronous>, transform_indices = @transform_4, window_bounds = array<i64: 2, 1, 64>}, {pipeline_mode = #tpu.pipeline_mode<synchronous>, transform_indices = @transform_5, window_bounds = array<i64: 4, 64, 32>}, {pipeline_mode = #tpu.pipeline_mode<synchronous>, transform_indices = @transform_6, window_bounds = array<i64: 4, 1, 32>}, {pipeline_mode = #tpu.pipeline_mode<synchronous>, transform_indices = @transform_7, window_bounds = array<i64: 4, 64, 32>}, {pipeline_mode = #tpu.pipeline_mode<synchronous>, transform_indices = @transform_8, window_bounds = array<i64: 4, 1, 32>}, {pipeline_mode = #tpu.pipeline_mode<synchronous>, transform_indices = @transform_9, window_bounds = array<i64: 4, 64, 32>}, {pipeline_mode = #tpu.pipeline_mode<synchronous>, transform_indices = @transform_10, window_bounds = array<i64: 4, 1, 32>}, {pipeline_mode = #tpu.pipeline_mode<synchronous>, transform_indices = @transform_11, window_bounds = array<i64: 4, 32, 64>}, {pipeline_mode = #tpu.pipeline_mode<synchronous>, transform_indices = @transform_12, window_bounds = array<i64: 2, 1, 64>}, {pipeline_mode = #tpu.pipeline_mode<synchronous>, transform_indices = @transform_13, window_bounds = array<i64: 2, 1, 64>}, {pipeline_mode = #tpu.pipeline_mode<synchronous>, transform_indices = @transform_14, window_bounds = array<i64: 2, 1, 64>}, {pipeline_mode = #tpu.pipeline_mode<synchronous>, transform_indices = @transform_15, window_bounds = array<i64: 2, 64, 256>}, {pipeline_mode = #tpu.pipeline_mode<synchronous>, transform_indices = @transform_16, window_bounds = array<i64: 2, 1, 256>}, {pipeline_mode = #tpu.pipeline_mode<synchronous>, transform_indices = @transform_17, window_bounds = array<i64: 2, 256, 64>}, {pipeline_mode = #tpu.pipeline_mode<synchronous>, transform_indices = @transform_18, window_bounds = array<i64: 2, 1, 64>}, {pipeline_mode = #tpu.pipeline_mode<synchronous>, transform_indices = @transform_19, window_bounds = array<i64: 1, 64>}, {pipeline_mode = #tpu.pipeline_mode<synchronous>, transform_indices = @transform_20, window_bounds = array<i64: 1, 64>}, {pipeline_mode = #tpu.pipeline_mode<synchronous>, transform_indices = @transform_21, window_bounds = array<i64: 64, 32>}, {transform_indices = @transform_22, window_bounds = array<i64: 1, 1, 32>}]} {
    %c0 = arith.constant 0 : index
    %c0_0 = arith.constant 0 : index
    %c0_1 = arith.constant 0 : index
    %0 = vector.load %arg1[%c0, %c0_0, %c0_1] : memref<1x8x64xf32, #tpu.memory_space<vmem>>, vector<1x8x64xf32>
    %1 = vector.shape_cast %0 : vector<1x8x64xf32> to vector<8x64xf32>
    %c0_2 = arith.constant 0 : index
    %c0_3 = arith.constant 0 : index
    %2 = vector.load %arg3[%c0_2, %c0_3] : memref<8x64xf32, #tpu.memory_space<vmem>>, vector<8x64xf32>
    %3 = arith.addf %1, %2 : vector<8x64xf32>
    %c0_4 = arith.constant 0 : index
    %c0_5 = arith.constant 0 : index
    %c0_6 = arith.constant 0 : index
    %4 = vector.load %arg4[%c0_4, %c0_5, %c0_6] : memref<2x1x64xf32, #tpu.memory_space<vmem>>, vector<1x1x64xf32>
    %5 = vector.shape_cast %4 : vector<1x1x64xf32> to vector<1x64xf32>
    %c0_7 = arith.constant 0 : index
    %c0_8 = arith.constant 0 : index
    %c0_9 = arith.constant 0 : index
    %6 = vector.load %arg5[%c0_7, %c0_8, %c0_9] : memref<2x1x64xf32, #tpu.memory_space<vmem>>, vector<1x1x64xf32>
    %7 = vector.shape_cast %6 : vector<1x1x64xf32> to vector<1x64xf32>
    %cst = arith.constant dense<0.000000e+00> : vector<8xf32>
    %8 = vector.multi_reduction <add>, %3, %cst [1] : vector<8x64xf32> to vector<8xf32>
    %9 = vector.shape_cast %8 : vector<8xf32> to vector<8x1xf32>
    %cst_10 = arith.constant 6.400000e+01 : f32
    %10 = vector.broadcast %cst_10 : f32 to vector<8x1xf32>
    %11 = arith.divf %9, %10 : vector<8x1xf32>
    %12 = vector.broadcast %11 : vector<8x1xf32> to vector<8x64xf32>
    %13 = arith.subf %3, %12 : vector<8x64xf32>
    %14 = arith.mulf %13, %13 : vector<8x64xf32>
    %cst_11 = arith.constant dense<0.000000e+00> : vector<8xf32>
    %15 = vector.multi_reduction <add>, %14, %cst_11 [1] : vector<8x64xf32> to vector<8xf32>
    %16 = vector.shape_cast %15 : vector<8xf32> to vector<8x1xf32>
    %cst_12 = arith.constant 6.400000e+01 : f32
    %17 = vector.broadcast %cst_12 : f32 to vector<8x1xf32>
    %18 = arith.divf %16, %17 : vector<8x1xf32>
    %cst_13 = arith.constant 9.99999974E-6 : f32
    %19 = vector.broadcast %cst_13 : f32 to vector<8x1xf32>
    %20 = arith.addf %18, %19 : vector<8x1xf32>
    %21 = math.rsqrt %20 : vector<8x1xf32>
    %22 = vector.broadcast %21 : vector<8x1xf32> to vector<8x64xf32>
    %23 = arith.mulf %13, %22 : vector<8x64xf32>
    %24 = vector.broadcast %5 : vector<1x64xf32> to vector<8x64xf32>
    %25 = arith.mulf %23, %24 : vector<8x64xf32>
    %26 = vector.broadcast %7 : vector<1x64xf32> to vector<8x64xf32>
    %27 = arith.addf %25, %26 : vector<8x64xf32>
    %c0_14 = arith.constant 0 : index
    %c0_15 = arith.constant 0 : index
    %c0_16 = arith.constant 0 : index
    %28 = vector.load %arg13[%c0_14, %c0_15, %c0_16] : memref<2x1x64xf32, #tpu.memory_space<vmem>>, vector<1x1x64xf32>
    %29 = vector.shape_cast %28 : vector<1x1x64xf32> to vector<1x64xf32>
    %c0_17 = arith.constant 0 : index
    %c0_18 = arith.constant 0 : index
    %c0_19 = arith.constant 0 : index
    %30 = vector.load %arg6[%c0_17, %c0_18, %c0_19] : memref<4x64x32xf32, #tpu.memory_space<vmem>>, vector<1x64x32xf32>
    %31 = vector.shape_cast %30 : vector<1x64x32xf32> to vector<64x32xf32>
    %cst_20 = arith.constant dense<0.000000e+00> : vector<8x32xf32>
    %32 = tpu.matmul %27, %31, %cst_20 {dimension_numbers = #tpu.dot_dimension_numbers<[1], [0], [0], [1], [0, 0, 1, 1], [], []>} : vector<8x64xf32>, vector<64x32xf32>, vector<8x32xf32> -> vector<8x32xf32>
    %c0_21 = arith.constant 0 : index
    %c0_22 = arith.constant 0 : index
    %c0_23 = arith.constant 0 : index
    %33 = vector.load %arg7[%c0_21, %c0_22, %c0_23] : memref<4x1x32xf32, #tpu.memory_space<vmem>>, vector<1x1x32xf32>
    %34 = vector.shape_cast %33 : vector<1x1x32xf32> to vector<1x32xf32>
    %35 = vector.broadcast %34 : vector<1x32xf32> to vector<8x32xf32>
    %36 = arith.addf %32, %35 : vector<8x32xf32>
    %c0_24 = arith.constant 0 : index
    %c0_25 = arith.constant 0 : index
    %c0_26 = arith.constant 0 : index
    %37 = vector.load %arg8[%c0_24, %c0_25, %c0_26] : memref<4x64x32xf32, #tpu.memory_space<vmem>>, vector<1x64x32xf32>
    %38 = vector.shape_cast %37 : vector<1x64x32xf32> to vector<64x32xf32>
    %cst_27 = arith.constant dense<0.000000e+00> : vector<8x32xf32>
    %39 = tpu.matmul %27, %38, %cst_27 {dimension_numbers = #tpu.dot_dimension_numbers<[1], [0], [0], [1], [0, 0, 1, 1], [], []>} : vector<8x64xf32>, vector<64x32xf32>, vector<8x32xf32> -> vector<8x32xf32>
    %c0_28 = arith.constant 0 : index
    %c0_29 = arith.constant 0 : index
    %c0_30 = arith.constant 0 : index
    %40 = vector.load %arg9[%c0_28, %c0_29, %c0_30] : memref<4x1x32xf32, #tpu.memory_space<vmem>>, vector<1x1x32xf32>
    %41 = vector.shape_cast %40 : vector<1x1x32xf32> to vector<1x32xf32>
    %42 = vector.broadcast %41 : vector<1x32xf32> to vector<8x32xf32>
    %43 = arith.addf %39, %42 : vector<8x32xf32>
    %c0_31 = arith.constant 0 : index
    %c0_32 = arith.constant 0 : index
    %c0_33 = arith.constant 0 : index
    %44 = vector.load %arg10[%c0_31, %c0_32, %c0_33] : memref<4x64x32xf32, #tpu.memory_space<vmem>>, vector<1x64x32xf32>
    %45 = vector.shape_cast %44 : vector<1x64x32xf32> to vector<64x32xf32>
    %cst_34 = arith.constant dense<0.000000e+00> : vector<8x32xf32>
    %46 = tpu.matmul %27, %45, %cst_34 {dimension_numbers = #tpu.dot_dimension_numbers<[1], [0], [0], [1], [0, 0, 1, 1], [], []>} : vector<8x64xf32>, vector<64x32xf32>, vector<8x32xf32> -> vector<8x32xf32>
    %c0_35 = arith.constant 0 : index
    %c0_36 = arith.constant 0 : index
    %c0_37 = arith.constant 0 : index
    %47 = vector.load %arg11[%c0_35, %c0_36, %c0_37] : memref<4x1x32xf32, #tpu.memory_space<vmem>>, vector<1x1x32xf32>
    %48 = vector.shape_cast %47 : vector<1x1x32xf32> to vector<1x32xf32>
    %49 = vector.broadcast %48 : vector<1x32xf32> to vector<8x32xf32>
    %50 = arith.addf %46, %49 : vector<8x32xf32>
    %cst_38 = arith.constant dense<0.000000e+00> : vector<8x8xf32>
    %51 = tpu.matmul %36, %43, %cst_38 {dimension_numbers = #tpu.dot_dimension_numbers<[1], [1], [0], [0], [0, 0, 1, 0], [], []>} : vector<8x32xf32>, vector<8x32xf32>, vector<8x8xf32> -> vector<8x8xf32>
    %cst_39 = arith.constant 0.176776692 : f32
    %52 = vector.broadcast %cst_39 : f32 to vector<8x8xf32>
    %53 = arith.mulf %51, %52 : vector<8x8xf32>
    %54 = tpu.iota {dimensions = array<i32: 0>} : vector<8x8xi32>
    %55 = tpu.iota {dimensions = array<i32: 1>} : vector<8x8xi32>
    %56 = arith.cmpi sgt, %55, %54 : vector<8x8xi32>
    %cst_40 = arith.constant -1.000000e+30 : f32
    %57 = vector.broadcast %cst_40 : f32 to vector<8x8xf32>
    %58 = arith.select %56, %57, %53 : vector<8x8xi1>, vector<8x8xf32>
    %cst_41 = arith.constant dense<0xFF800000> : vector<8xf32>
    %59 = vector.multi_reduction <maximumf>, %58, %cst_41 [1] : vector<8x8xf32> to vector<8xf32>
    %60 = vector.shape_cast %59 : vector<8xf32> to vector<8x1xf32>
    %61 = vector.broadcast %60 : vector<8x1xf32> to vector<8x8xf32>
    %62 = arith.subf %58, %61 : vector<8x8xf32>
    %63 = math.exp %62 : vector<8x8xf32>
    %cst_42 = arith.constant dense<0.000000e+00> : vector<8xf32>
    %64 = vector.multi_reduction <add>, %63, %cst_42 [1] : vector<8x8xf32> to vector<8xf32>
    %65 = vector.shape_cast %64 : vector<8xf32> to vector<8x1xf32>
    %66 = tpu.reciprocal %65 {approx = true} : vector<8x1xf32> -> vector<8x1xf32>
    %67 = vector.broadcast %66 : vector<8x1xf32> to vector<8x8xf32>
    %68 = arith.mulf %63, %67 : vector<8x8xf32>
    %cst_43 = arith.constant dense<0.000000e+00> : vector<8x32xf32>
    %69 = tpu.matmul %68, %50, %cst_43 {dimension_numbers = #tpu.dot_dimension_numbers<[1], [0], [0], [1], [0, 0, 1, 1], [], []>} : vector<8x8xf32>, vector<8x32xf32>, vector<8x32xf32> -> vector<8x32xf32>
    %c0_44 = arith.constant 0 : index
    %c0_45 = arith.constant 0 : index
    %c0_46 = arith.constant 0 : index
    %70 = vector.load %arg12[%c0_44, %c0_45, %c0_46] : memref<4x32x64xf32, #tpu.memory_space<vmem>>, vector<1x32x64xf32>
    %71 = vector.shape_cast %70 : vector<1x32x64xf32> to vector<32x64xf32>
    %cst_47 = arith.constant dense<0.000000e+00> : vector<8x64xf32>
    %72 = tpu.matmul %69, %71, %cst_47 {dimension_numbers = #tpu.dot_dimension_numbers<[1], [0], [0], [1], [0, 0, 1, 1], [], []>} : vector<8x32xf32>, vector<32x64xf32>, vector<8x64xf32> -> vector<8x64xf32>
    %73 = vector.broadcast %29 : vector<1x64xf32> to vector<8x64xf32>
    %74 = arith.addf %73, %72 : vector<8x64xf32>
    %c1 = arith.constant 1 : index
    %c0_48 = arith.constant 0 : index
    %c0_49 = arith.constant 0 : index
    %75 = vector.load %arg6[%c1, %c0_48, %c0_49] : memref<4x64x32xf32, #tpu.memory_space<vmem>>, vector<1x64x32xf32>
    %76 = vector.shape_cast %75 : vector<1x64x32xf32> to vector<64x32xf32>
    %cst_50 = arith.constant dense<0.000000e+00> : vector<8x32xf32>
    %77 = tpu.matmul %27, %76, %cst_50 {dimension_numbers = #tpu.dot_dimension_numbers<[1], [0], [0], [1], [0, 0, 1, 1], [], []>} : vector<8x64xf32>, vector<64x32xf32>, vector<8x32xf32> -> vector<8x32xf32>
    %c1_51 = arith.constant 1 : index
    %c0_52 = arith.constant 0 : index
    %c0_53 = arith.constant 0 : index
    %78 = vector.load %arg7[%c1_51, %c0_52, %c0_53] : memref<4x1x32xf32, #tpu.memory_space<vmem>>, vector<1x1x32xf32>
    %79 = vector.shape_cast %78 : vector<1x1x32xf32> to vector<1x32xf32>
    %80 = vector.broadcast %79 : vector<1x32xf32> to vector<8x32xf32>
    %81 = arith.addf %77, %80 : vector<8x32xf32>
    %c1_54 = arith.constant 1 : index
    %c0_55 = arith.constant 0 : index
    %c0_56 = arith.constant 0 : index
    %82 = vector.load %arg8[%c1_54, %c0_55, %c0_56] : memref<4x64x32xf32, #tpu.memory_space<vmem>>, vector<1x64x32xf32>
    %83 = vector.shape_cast %82 : vector<1x64x32xf32> to vector<64x32xf32>
    %cst_57 = arith.constant dense<0.000000e+00> : vector<8x32xf32>
    %84 = tpu.matmul %27, %83, %cst_57 {dimension_numbers = #tpu.dot_dimension_numbers<[1], [0], [0], [1], [0, 0, 1, 1], [], []>} : vector<8x64xf32>, vector<64x32xf32>, vector<8x32xf32> -> vector<8x32xf32>
    %c1_58 = arith.constant 1 : index
    %c0_59 = arith.constant 0 : index
    %c0_60 = arith.constant 0 : index
    %85 = vector.load %arg9[%c1_58, %c0_59, %c0_60] : memref<4x1x32xf32, #tpu.memory_space<vmem>>, vector<1x1x32xf32>
    %86 = vector.shape_cast %85 : vector<1x1x32xf32> to vector<1x32xf32>
    %87 = vector.broadcast %86 : vector<1x32xf32> to vector<8x32xf32>
    %88 = arith.addf %84, %87 : vector<8x32xf32>
    %c1_61 = arith.constant 1 : index
    %c0_62 = arith.constant 0 : index
    %c0_63 = arith.constant 0 : index
    %89 = vector.load %arg10[%c1_61, %c0_62, %c0_63] : memref<4x64x32xf32, #tpu.memory_space<vmem>>, vector<1x64x32xf32>
    %90 = vector.shape_cast %89 : vector<1x64x32xf32> to vector<64x32xf32>
    %cst_64 = arith.constant dense<0.000000e+00> : vector<8x32xf32>
    %91 = tpu.matmul %27, %90, %cst_64 {dimension_numbers = #tpu.dot_dimension_numbers<[1], [0], [0], [1], [0, 0, 1, 1], [], []>} : vector<8x64xf32>, vector<64x32xf32>, vector<8x32xf32> -> vector<8x32xf32>
    %c1_65 = arith.constant 1 : index
    %c0_66 = arith.constant 0 : index
    %c0_67 = arith.constant 0 : index
    %92 = vector.load %arg11[%c1_65, %c0_66, %c0_67] : memref<4x1x32xf32, #tpu.memory_space<vmem>>, vector<1x1x32xf32>
    %93 = vector.shape_cast %92 : vector<1x1x32xf32> to vector<1x32xf32>
    %94 = vector.broadcast %93 : vector<1x32xf32> to vector<8x32xf32>
    %95 = arith.addf %91, %94 : vector<8x32xf32>
    %cst_68 = arith.constant dense<0.000000e+00> : vector<8x8xf32>
    %96 = tpu.matmul %81, %88, %cst_68 {dimension_numbers = #tpu.dot_dimension_numbers<[1], [1], [0], [0], [0, 0, 1, 0], [], []>} : vector<8x32xf32>, vector<8x32xf32>, vector<8x8xf32> -> vector<8x8xf32>
    %cst_69 = arith.constant 0.176776692 : f32
    %97 = vector.broadcast %cst_69 : f32 to vector<8x8xf32>
    %98 = arith.mulf %96, %97 : vector<8x8xf32>
    %99 = tpu.iota {dimensions = array<i32: 0>} : vector<8x8xi32>
    %100 = tpu.iota {dimensions = array<i32: 1>} : vector<8x8xi32>
    %101 = arith.cmpi sgt, %100, %99 : vector<8x8xi32>
    %cst_70 = arith.constant -1.000000e+30 : f32
    %102 = vector.broadcast %cst_70 : f32 to vector<8x8xf32>
    %103 = arith.select %101, %102, %98 : vector<8x8xi1>, vector<8x8xf32>
    %cst_71 = arith.constant dense<0xFF800000> : vector<8xf32>
    %104 = vector.multi_reduction <maximumf>, %103, %cst_71 [1] : vector<8x8xf32> to vector<8xf32>
    %105 = vector.shape_cast %104 : vector<8xf32> to vector<8x1xf32>
    %106 = vector.broadcast %105 : vector<8x1xf32> to vector<8x8xf32>
    %107 = arith.subf %103, %106 : vector<8x8xf32>
    %108 = math.exp %107 : vector<8x8xf32>
    %cst_72 = arith.constant dense<0.000000e+00> : vector<8xf32>
    %109 = vector.multi_reduction <add>, %108, %cst_72 [1] : vector<8x8xf32> to vector<8xf32>
    %110 = vector.shape_cast %109 : vector<8xf32> to vector<8x1xf32>
    %111 = tpu.reciprocal %110 {approx = true} : vector<8x1xf32> -> vector<8x1xf32>
    %112 = vector.broadcast %111 : vector<8x1xf32> to vector<8x8xf32>
    %113 = arith.mulf %108, %112 : vector<8x8xf32>
    %cst_73 = arith.constant dense<0.000000e+00> : vector<8x32xf32>
    %114 = tpu.matmul %113, %95, %cst_73 {dimension_numbers = #tpu.dot_dimension_numbers<[1], [0], [0], [1], [0, 0, 1, 1], [], []>} : vector<8x8xf32>, vector<8x32xf32>, vector<8x32xf32> -> vector<8x32xf32>
    %c1_74 = arith.constant 1 : index
    %c0_75 = arith.constant 0 : index
    %c0_76 = arith.constant 0 : index
    %115 = vector.load %arg12[%c1_74, %c0_75, %c0_76] : memref<4x32x64xf32, #tpu.memory_space<vmem>>, vector<1x32x64xf32>
    %116 = vector.shape_cast %115 : vector<1x32x64xf32> to vector<32x64xf32>
    %cst_77 = arith.constant dense<0.000000e+00> : vector<8x64xf32>
    %117 = tpu.matmul %114, %116, %cst_77 {dimension_numbers = #tpu.dot_dimension_numbers<[1], [0], [0], [1], [0, 0, 1, 1], [], []>} : vector<8x32xf32>, vector<32x64xf32>, vector<8x64xf32> -> vector<8x64xf32>
    %118 = arith.addf %74, %117 : vector<8x64xf32>
    %119 = arith.addf %3, %118 : vector<8x64xf32>
    %c0_78 = arith.constant 0 : index
    %c0_79 = arith.constant 0 : index
    %c0_80 = arith.constant 0 : index
    %120 = vector.load %arg14[%c0_78, %c0_79, %c0_80] : memref<2x1x64xf32, #tpu.memory_space<vmem>>, vector<1x1x64xf32>
    %121 = vector.shape_cast %120 : vector<1x1x64xf32> to vector<1x64xf32>
    %c0_81 = arith.constant 0 : index
    %c0_82 = arith.constant 0 : index
    %c0_83 = arith.constant 0 : index
    %122 = vector.load %arg15[%c0_81, %c0_82, %c0_83] : memref<2x1x64xf32, #tpu.memory_space<vmem>>, vector<1x1x64xf32>
    %123 = vector.shape_cast %122 : vector<1x1x64xf32> to vector<1x64xf32>
    %cst_84 = arith.constant dense<0.000000e+00> : vector<8xf32>
    %124 = vector.multi_reduction <add>, %119, %cst_84 [1] : vector<8x64xf32> to vector<8xf32>
    %125 = vector.shape_cast %124 : vector<8xf32> to vector<8x1xf32>
    %cst_85 = arith.constant 6.400000e+01 : f32
    %126 = vector.broadcast %cst_85 : f32 to vector<8x1xf32>
    %127 = arith.divf %125, %126 : vector<8x1xf32>
    %128 = vector.broadcast %127 : vector<8x1xf32> to vector<8x64xf32>
    %129 = arith.subf %119, %128 : vector<8x64xf32>
    %130 = arith.mulf %129, %129 : vector<8x64xf32>
    %cst_86 = arith.constant dense<0.000000e+00> : vector<8xf32>
    %131 = vector.multi_reduction <add>, %130, %cst_86 [1] : vector<8x64xf32> to vector<8xf32>
    %132 = vector.shape_cast %131 : vector<8xf32> to vector<8x1xf32>
    %cst_87 = arith.constant 6.400000e+01 : f32
    %133 = vector.broadcast %cst_87 : f32 to vector<8x1xf32>
    %134 = arith.divf %132, %133 : vector<8x1xf32>
    %cst_88 = arith.constant 9.99999974E-6 : f32
    %135 = vector.broadcast %cst_88 : f32 to vector<8x1xf32>
    %136 = arith.addf %134, %135 : vector<8x1xf32>
    %137 = math.rsqrt %136 : vector<8x1xf32>
    %138 = vector.broadcast %137 : vector<8x1xf32> to vector<8x64xf32>
    %139 = arith.mulf %129, %138 : vector<8x64xf32>
    %140 = vector.broadcast %121 : vector<1x64xf32> to vector<8x64xf32>
    %141 = arith.mulf %139, %140 : vector<8x64xf32>
    %142 = vector.broadcast %123 : vector<1x64xf32> to vector<8x64xf32>
    %143 = arith.addf %141, %142 : vector<8x64xf32>
    %c0_89 = arith.constant 0 : index
    %c0_90 = arith.constant 0 : index
    %c0_91 = arith.constant 0 : index
    %144 = vector.load %arg16[%c0_89, %c0_90, %c0_91] : memref<2x64x256xf32, #tpu.memory_space<vmem>>, vector<1x64x256xf32>
    %145 = vector.shape_cast %144 : vector<1x64x256xf32> to vector<64x256xf32>
    %cst_92 = arith.constant dense<0.000000e+00> : vector<8x256xf32>
    %146 = tpu.matmul %143, %145, %cst_92 {dimension_numbers = #tpu.dot_dimension_numbers<[1], [0], [0], [1], [0, 0, 1, 1], [], []>} : vector<8x64xf32>, vector<64x256xf32>, vector<8x256xf32> -> vector<8x256xf32>
    %c0_93 = arith.constant 0 : index
    %c0_94 = arith.constant 0 : index
    %c0_95 = arith.constant 0 : index
    %147 = vector.load %arg17[%c0_93, %c0_94, %c0_95] : memref<2x1x256xf32, #tpu.memory_space<vmem>>, vector<1x1x256xf32>
    %148 = vector.shape_cast %147 : vector<1x1x256xf32> to vector<1x256xf32>
    %149 = vector.broadcast %148 : vector<1x256xf32> to vector<8x256xf32>
    %150 = arith.addf %146, %149 : vector<8x256xf32>
    %cst_96 = arith.constant 1.702000e+00 : f32
    %151 = vector.broadcast %cst_96 : f32 to vector<8x256xf32>
    %152 = arith.mulf %151, %150 : vector<8x256xf32>
    %153 = arith.negf %152 : vector<8x256xf32>
    %154 = math.exp %153 : vector<8x256xf32>
    %cst_97 = arith.constant 1.000000e+00 : f32
    %155 = vector.broadcast %cst_97 : f32 to vector<8x256xf32>
    %156 = arith.addf %155, %154 : vector<8x256xf32>
    %157 = arith.divf %155, %156 : vector<8x256xf32>
    %158 = arith.mulf %150, %157 : vector<8x256xf32>
    %c0_98 = arith.constant 0 : index
    %c0_99 = arith.constant 0 : index
    %c0_100 = arith.constant 0 : index
    %159 = vector.load %arg18[%c0_98, %c0_99, %c0_100] : memref<2x256x64xf32, #tpu.memory_space<vmem>>, vector<1x256x64xf32>
    %160 = vector.shape_cast %159 : vector<1x256x64xf32> to vector<256x64xf32>
    %cst_101 = arith.constant dense<0.000000e+00> : vector<8x64xf32>
    %161 = tpu.matmul %158, %160, %cst_101 {dimension_numbers = #tpu.dot_dimension_numbers<[1], [0], [0], [1], [0, 0, 1, 1], [], []>} : vector<8x256xf32>, vector<256x64xf32>, vector<8x64xf32> -> vector<8x64xf32>
    %c0_102 = arith.constant 0 : index
    %c0_103 = arith.constant 0 : index
    %c0_104 = arith.constant 0 : index
    %162 = vector.load %arg19[%c0_102, %c0_103, %c0_104] : memref<2x1x64xf32, #tpu.memory_space<vmem>>, vector<1x1x64xf32>
    %163 = vector.shape_cast %162 : vector<1x1x64xf32> to vector<1x64xf32>
    %164 = vector.broadcast %163 : vector<1x64xf32> to vector<8x64xf32>
    %165 = arith.addf %161, %164 : vector<8x64xf32>
    %166 = arith.addf %119, %165 : vector<8x64xf32>
    %c1_105 = arith.constant 1 : index
    %c0_106 = arith.constant 0 : index
    %c0_107 = arith.constant 0 : index
    %167 = vector.load %arg4[%c1_105, %c0_106, %c0_107] : memref<2x1x64xf32, #tpu.memory_space<vmem>>, vector<1x1x64xf32>
    %168 = vector.shape_cast %167 : vector<1x1x64xf32> to vector<1x64xf32>
    %c1_108 = arith.constant 1 : index
    %c0_109 = arith.constant 0 : index
    %c0_110 = arith.constant 0 : index
    %169 = vector.load %arg5[%c1_108, %c0_109, %c0_110] : memref<2x1x64xf32, #tpu.memory_space<vmem>>, vector<1x1x64xf32>
    %170 = vector.shape_cast %169 : vector<1x1x64xf32> to vector<1x64xf32>
    %cst_111 = arith.constant dense<0.000000e+00> : vector<8xf32>
    %171 = vector.multi_reduction <add>, %166, %cst_111 [1] : vector<8x64xf32> to vector<8xf32>
    %172 = vector.shape_cast %171 : vector<8xf32> to vector<8x1xf32>
    %cst_112 = arith.constant 6.400000e+01 : f32
    %173 = vector.broadcast %cst_112 : f32 to vector<8x1xf32>
    %174 = arith.divf %172, %173 : vector<8x1xf32>
    %175 = vector.broadcast %174 : vector<8x1xf32> to vector<8x64xf32>
    %176 = arith.subf %166, %175 : vector<8x64xf32>
    %177 = arith.mulf %176, %176 : vector<8x64xf32>
    %cst_113 = arith.constant dense<0.000000e+00> : vector<8xf32>
    %178 = vector.multi_reduction <add>, %177, %cst_113 [1] : vector<8x64xf32> to vector<8xf32>
    %179 = vector.shape_cast %178 : vector<8xf32> to vector<8x1xf32>
    %cst_114 = arith.constant 6.400000e+01 : f32
    %180 = vector.broadcast %cst_114 : f32 to vector<8x1xf32>
    %181 = arith.divf %179, %180 : vector<8x1xf32>
    %cst_115 = arith.constant 9.99999974E-6 : f32
    %182 = vector.broadcast %cst_115 : f32 to vector<8x1xf32>
    %183 = arith.addf %181, %182 : vector<8x1xf32>
    %184 = math.rsqrt %183 : vector<8x1xf32>
    %185 = vector.broadcast %184 : vector<8x1xf32> to vector<8x64xf32>
    %186 = arith.mulf %176, %185 : vector<8x64xf32>
    %187 = vector.broadcast %168 : vector<1x64xf32> to vector<8x64xf32>
    %188 = arith.mulf %186, %187 : vector<8x64xf32>
    %189 = vector.broadcast %170 : vector<1x64xf32> to vector<8x64xf32>
    %190 = arith.addf %188, %189 : vector<8x64xf32>
    %c1_116 = arith.constant 1 : index
    %c0_117 = arith.constant 0 : index
    %c0_118 = arith.constant 0 : index
    %191 = vector.load %arg13[%c1_116, %c0_117, %c0_118] : memref<2x1x64xf32, #tpu.memory_space<vmem>>, vector<1x1x64xf32>
    %192 = vector.shape_cast %191 : vector<1x1x64xf32> to vector<1x64xf32>
    %c2 = arith.constant 2 : index
    %c0_119 = arith.constant 0 : index
    %c0_120 = arith.constant 0 : index
    %193 = vector.load %arg6[%c2, %c0_119, %c0_120] : memref<4x64x32xf32, #tpu.memory_space<vmem>>, vector<1x64x32xf32>
    %194 = vector.shape_cast %193 : vector<1x64x32xf32> to vector<64x32xf32>
    %cst_121 = arith.constant dense<0.000000e+00> : vector<8x32xf32>
    %195 = tpu.matmul %190, %194, %cst_121 {dimension_numbers = #tpu.dot_dimension_numbers<[1], [0], [0], [1], [0, 0, 1, 1], [], []>} : vector<8x64xf32>, vector<64x32xf32>, vector<8x32xf32> -> vector<8x32xf32>
    %c2_122 = arith.constant 2 : index
    %c0_123 = arith.constant 0 : index
    %c0_124 = arith.constant 0 : index
    %196 = vector.load %arg7[%c2_122, %c0_123, %c0_124] : memref<4x1x32xf32, #tpu.memory_space<vmem>>, vector<1x1x32xf32>
    %197 = vector.shape_cast %196 : vector<1x1x32xf32> to vector<1x32xf32>
    %198 = vector.broadcast %197 : vector<1x32xf32> to vector<8x32xf32>
    %199 = arith.addf %195, %198 : vector<8x32xf32>
    %c2_125 = arith.constant 2 : index
    %c0_126 = arith.constant 0 : index
    %c0_127 = arith.constant 0 : index
    %200 = vector.load %arg8[%c2_125, %c0_126, %c0_127] : memref<4x64x32xf32, #tpu.memory_space<vmem>>, vector<1x64x32xf32>
    %201 = vector.shape_cast %200 : vector<1x64x32xf32> to vector<64x32xf32>
    %cst_128 = arith.constant dense<0.000000e+00> : vector<8x32xf32>
    %202 = tpu.matmul %190, %201, %cst_128 {dimension_numbers = #tpu.dot_dimension_numbers<[1], [0], [0], [1], [0, 0, 1, 1], [], []>} : vector<8x64xf32>, vector<64x32xf32>, vector<8x32xf32> -> vector<8x32xf32>
    %c2_129 = arith.constant 2 : index
    %c0_130 = arith.constant 0 : index
    %c0_131 = arith.constant 0 : index
    %203 = vector.load %arg9[%c2_129, %c0_130, %c0_131] : memref<4x1x32xf32, #tpu.memory_space<vmem>>, vector<1x1x32xf32>
    %204 = vector.shape_cast %203 : vector<1x1x32xf32> to vector<1x32xf32>
    %205 = vector.broadcast %204 : vector<1x32xf32> to vector<8x32xf32>
    %206 = arith.addf %202, %205 : vector<8x32xf32>
    %c2_132 = arith.constant 2 : index
    %c0_133 = arith.constant 0 : index
    %c0_134 = arith.constant 0 : index
    %207 = vector.load %arg10[%c2_132, %c0_133, %c0_134] : memref<4x64x32xf32, #tpu.memory_space<vmem>>, vector<1x64x32xf32>
    %208 = vector.shape_cast %207 : vector<1x64x32xf32> to vector<64x32xf32>
    %cst_135 = arith.constant dense<0.000000e+00> : vector<8x32xf32>
    %209 = tpu.matmul %190, %208, %cst_135 {dimension_numbers = #tpu.dot_dimension_numbers<[1], [0], [0], [1], [0, 0, 1, 1], [], []>} : vector<8x64xf32>, vector<64x32xf32>, vector<8x32xf32> -> vector<8x32xf32>
    %c2_136 = arith.constant 2 : index
    %c0_137 = arith.constant 0 : index
    %c0_138 = arith.constant 0 : index
    %210 = vector.load %arg11[%c2_136, %c0_137, %c0_138] : memref<4x1x32xf32, #tpu.memory_space<vmem>>, vector<1x1x32xf32>
    %211 = vector.shape_cast %210 : vector<1x1x32xf32> to vector<1x32xf32>
    %212 = vector.broadcast %211 : vector<1x32xf32> to vector<8x32xf32>
    %213 = arith.addf %209, %212 : vector<8x32xf32>
    %cst_139 = arith.constant dense<0.000000e+00> : vector<8x8xf32>
    %214 = tpu.matmul %199, %206, %cst_139 {dimension_numbers = #tpu.dot_dimension_numbers<[1], [1], [0], [0], [0, 0, 1, 0], [], []>} : vector<8x32xf32>, vector<8x32xf32>, vector<8x8xf32> -> vector<8x8xf32>
    %cst_140 = arith.constant 0.176776692 : f32
    %215 = vector.broadcast %cst_140 : f32 to vector<8x8xf32>
    %216 = arith.mulf %214, %215 : vector<8x8xf32>
    %217 = tpu.iota {dimensions = array<i32: 0>} : vector<8x8xi32>
    %218 = tpu.iota {dimensions = array<i32: 1>} : vector<8x8xi32>
    %219 = arith.cmpi sgt, %218, %217 : vector<8x8xi32>
    %cst_141 = arith.constant -1.000000e+30 : f32
    %220 = vector.broadcast %cst_141 : f32 to vector<8x8xf32>
    %221 = arith.select %219, %220, %216 : vector<8x8xi1>, vector<8x8xf32>
    %cst_142 = arith.constant dense<0xFF800000> : vector<8xf32>
    %222 = vector.multi_reduction <maximumf>, %221, %cst_142 [1] : vector<8x8xf32> to vector<8xf32>
    %223 = vector.shape_cast %222 : vector<8xf32> to vector<8x1xf32>
    %224 = vector.broadcast %223 : vector<8x1xf32> to vector<8x8xf32>
    %225 = arith.subf %221, %224 : vector<8x8xf32>
    %226 = math.exp %225 : vector<8x8xf32>
    %cst_143 = arith.constant dense<0.000000e+00> : vector<8xf32>
    %227 = vector.multi_reduction <add>, %226, %cst_143 [1] : vector<8x8xf32> to vector<8xf32>
    %228 = vector.shape_cast %227 : vector<8xf32> to vector<8x1xf32>
    %229 = tpu.reciprocal %228 {approx = true} : vector<8x1xf32> -> vector<8x1xf32>
    %230 = vector.broadcast %229 : vector<8x1xf32> to vector<8x8xf32>
    %231 = arith.mulf %226, %230 : vector<8x8xf32>
    %cst_144 = arith.constant dense<0.000000e+00> : vector<8x32xf32>
    %232 = tpu.matmul %231, %213, %cst_144 {dimension_numbers = #tpu.dot_dimension_numbers<[1], [0], [0], [1], [0, 0, 1, 1], [], []>} : vector<8x8xf32>, vector<8x32xf32>, vector<8x32xf32> -> vector<8x32xf32>
    %c2_145 = arith.constant 2 : index
    %c0_146 = arith.constant 0 : index
    %c0_147 = arith.constant 0 : index
    %233 = vector.load %arg12[%c2_145, %c0_146, %c0_147] : memref<4x32x64xf32, #tpu.memory_space<vmem>>, vector<1x32x64xf32>
    %234 = vector.shape_cast %233 : vector<1x32x64xf32> to vector<32x64xf32>
    %cst_148 = arith.constant dense<0.000000e+00> : vector<8x64xf32>
    %235 = tpu.matmul %232, %234, %cst_148 {dimension_numbers = #tpu.dot_dimension_numbers<[1], [0], [0], [1], [0, 0, 1, 1], [], []>} : vector<8x32xf32>, vector<32x64xf32>, vector<8x64xf32> -> vector<8x64xf32>
    %236 = vector.broadcast %192 : vector<1x64xf32> to vector<8x64xf32>
    %237 = arith.addf %236, %235 : vector<8x64xf32>
    %c3 = arith.constant 3 : index
    %c0_149 = arith.constant 0 : index
    %c0_150 = arith.constant 0 : index
    %238 = vector.load %arg6[%c3, %c0_149, %c0_150] : memref<4x64x32xf32, #tpu.memory_space<vmem>>, vector<1x64x32xf32>
    %239 = vector.shape_cast %238 : vector<1x64x32xf32> to vector<64x32xf32>
    %cst_151 = arith.constant dense<0.000000e+00> : vector<8x32xf32>
    %240 = tpu.matmul %190, %239, %cst_151 {dimension_numbers = #tpu.dot_dimension_numbers<[1], [0], [0], [1], [0, 0, 1, 1], [], []>} : vector<8x64xf32>, vector<64x32xf32>, vector<8x32xf32> -> vector<8x32xf32>
    %c3_152 = arith.constant 3 : index
    %c0_153 = arith.constant 0 : index
    %c0_154 = arith.constant 0 : index
    %241 = vector.load %arg7[%c3_152, %c0_153, %c0_154] : memref<4x1x32xf32, #tpu.memory_space<vmem>>, vector<1x1x32xf32>
    %242 = vector.shape_cast %241 : vector<1x1x32xf32> to vector<1x32xf32>
    %243 = vector.broadcast %242 : vector<1x32xf32> to vector<8x32xf32>
    %244 = arith.addf %240, %243 : vector<8x32xf32>
    %c3_155 = arith.constant 3 : index
    %c0_156 = arith.constant 0 : index
    %c0_157 = arith.constant 0 : index
    %245 = vector.load %arg8[%c3_155, %c0_156, %c0_157] : memref<4x64x32xf32, #tpu.memory_space<vmem>>, vector<1x64x32xf32>
    %246 = vector.shape_cast %245 : vector<1x64x32xf32> to vector<64x32xf32>
    %cst_158 = arith.constant dense<0.000000e+00> : vector<8x32xf32>
    %247 = tpu.matmul %190, %246, %cst_158 {dimension_numbers = #tpu.dot_dimension_numbers<[1], [0], [0], [1], [0, 0, 1, 1], [], []>} : vector<8x64xf32>, vector<64x32xf32>, vector<8x32xf32> -> vector<8x32xf32>
    %c3_159 = arith.constant 3 : index
    %c0_160 = arith.constant 0 : index
    %c0_161 = arith.constant 0 : index
    %248 = vector.load %arg9[%c3_159, %c0_160, %c0_161] : memref<4x1x32xf32, #tpu.memory_space<vmem>>, vector<1x1x32xf32>
    %249 = vector.shape_cast %248 : vector<1x1x32xf32> to vector<1x32xf32>
    %250 = vector.broadcast %249 : vector<1x32xf32> to vector<8x32xf32>
    %251 = arith.addf %247, %250 : vector<8x32xf32>
    %c3_162 = arith.constant 3 : index
    %c0_163 = arith.constant 0 : index
    %c0_164 = arith.constant 0 : index
    %252 = vector.load %arg10[%c3_162, %c0_163, %c0_164] : memref<4x64x32xf32, #tpu.memory_space<vmem>>, vector<1x64x32xf32>
    %253 = vector.shape_cast %252 : vector<1x64x32xf32> to vector<64x32xf32>
    %cst_165 = arith.constant dense<0.000000e+00> : vector<8x32xf32>
    %254 = tpu.matmul %190, %253, %cst_165 {dimension_numbers = #tpu.dot_dimension_numbers<[1], [0], [0], [1], [0, 0, 1, 1], [], []>} : vector<8x64xf32>, vector<64x32xf32>, vector<8x32xf32> -> vector<8x32xf32>
    %c3_166 = arith.constant 3 : index
    %c0_167 = arith.constant 0 : index
    %c0_168 = arith.constant 0 : index
    %255 = vector.load %arg11[%c3_166, %c0_167, %c0_168] : memref<4x1x32xf32, #tpu.memory_space<vmem>>, vector<1x1x32xf32>
    %256 = vector.shape_cast %255 : vector<1x1x32xf32> to vector<1x32xf32>
    %257 = vector.broadcast %256 : vector<1x32xf32> to vector<8x32xf32>
    %258 = arith.addf %254, %257 : vector<8x32xf32>
    %cst_169 = arith.constant dense<0.000000e+00> : vector<8x8xf32>
    %259 = tpu.matmul %244, %251, %cst_169 {dimension_numbers = #tpu.dot_dimension_numbers<[1], [1], [0], [0], [0, 0, 1, 0], [], []>} : vector<8x32xf32>, vector<8x32xf32>, vector<8x8xf32> -> vector<8x8xf32>
    %cst_170 = arith.constant 0.176776692 : f32
    %260 = vector.broadcast %cst_170 : f32 to vector<8x8xf32>
    %261 = arith.mulf %259, %260 : vector<8x8xf32>
    %262 = tpu.iota {dimensions = array<i32: 0>} : vector<8x8xi32>
    %263 = tpu.iota {dimensions = array<i32: 1>} : vector<8x8xi32>
    %264 = arith.cmpi sgt, %263, %262 : vector<8x8xi32>
    %cst_171 = arith.constant -1.000000e+30 : f32
    %265 = vector.broadcast %cst_171 : f32 to vector<8x8xf32>
    %266 = arith.select %264, %265, %261 : vector<8x8xi1>, vector<8x8xf32>
    %cst_172 = arith.constant dense<0xFF800000> : vector<8xf32>
    %267 = vector.multi_reduction <maximumf>, %266, %cst_172 [1] : vector<8x8xf32> to vector<8xf32>
    %268 = vector.shape_cast %267 : vector<8xf32> to vector<8x1xf32>
    %269 = vector.broadcast %268 : vector<8x1xf32> to vector<8x8xf32>
    %270 = arith.subf %266, %269 : vector<8x8xf32>
    %271 = math.exp %270 : vector<8x8xf32>
    %cst_173 = arith.constant dense<0.000000e+00> : vector<8xf32>
    %272 = vector.multi_reduction <add>, %271, %cst_173 [1] : vector<8x8xf32> to vector<8xf32>
    %273 = vector.shape_cast %272 : vector<8xf32> to vector<8x1xf32>
    %274 = tpu.reciprocal %273 {approx = true} : vector<8x1xf32> -> vector<8x1xf32>
    %275 = vector.broadcast %274 : vector<8x1xf32> to vector<8x8xf32>
    %276 = arith.mulf %271, %275 : vector<8x8xf32>
    %cst_174 = arith.constant dense<0.000000e+00> : vector<8x32xf32>
    %277 = tpu.matmul %276, %258, %cst_174 {dimension_numbers = #tpu.dot_dimension_numbers<[1], [0], [0], [1], [0, 0, 1, 1], [], []>} : vector<8x8xf32>, vector<8x32xf32>, vector<8x32xf32> -> vector<8x32xf32>
    %c3_175 = arith.constant 3 : index
    %c0_176 = arith.constant 0 : index
    %c0_177 = arith.constant 0 : index
    %278 = vector.load %arg12[%c3_175, %c0_176, %c0_177] : memref<4x32x64xf32, #tpu.memory_space<vmem>>, vector<1x32x64xf32>
    %279 = vector.shape_cast %278 : vector<1x32x64xf32> to vector<32x64xf32>
    %cst_178 = arith.constant dense<0.000000e+00> : vector<8x64xf32>
    %280 = tpu.matmul %277, %279, %cst_178 {dimension_numbers = #tpu.dot_dimension_numbers<[1], [0], [0], [1], [0, 0, 1, 1], [], []>} : vector<8x32xf32>, vector<32x64xf32>, vector<8x64xf32> -> vector<8x64xf32>
    %281 = arith.addf %237, %280 : vector<8x64xf32>
    %282 = arith.addf %166, %281 : vector<8x64xf32>
    %c1_179 = arith.constant 1 : index
    %c0_180 = arith.constant 0 : index
    %c0_181 = arith.constant 0 : index
    %283 = vector.load %arg14[%c1_179, %c0_180, %c0_181] : memref<2x1x64xf32, #tpu.memory_space<vmem>>, vector<1x1x64xf32>
    %284 = vector.shape_cast %283 : vector<1x1x64xf32> to vector<1x64xf32>
    %c1_182 = arith.constant 1 : index
    %c0_183 = arith.constant 0 : index
    %c0_184 = arith.constant 0 : index
    %285 = vector.load %arg15[%c1_182, %c0_183, %c0_184] : memref<2x1x64xf32, #tpu.memory_space<vmem>>, vector<1x1x64xf32>
    %286 = vector.shape_cast %285 : vector<1x1x64xf32> to vector<1x64xf32>
    %cst_185 = arith.constant dense<0.000000e+00> : vector<8xf32>
    %287 = vector.multi_reduction <add>, %282, %cst_185 [1] : vector<8x64xf32> to vector<8xf32>
    %288 = vector.shape_cast %287 : vector<8xf32> to vector<8x1xf32>
    %cst_186 = arith.constant 6.400000e+01 : f32
    %289 = vector.broadcast %cst_186 : f32 to vector<8x1xf32>
    %290 = arith.divf %288, %289 : vector<8x1xf32>
    %291 = vector.broadcast %290 : vector<8x1xf32> to vector<8x64xf32>
    %292 = arith.subf %282, %291 : vector<8x64xf32>
    %293 = arith.mulf %292, %292 : vector<8x64xf32>
    %cst_187 = arith.constant dense<0.000000e+00> : vector<8xf32>
    %294 = vector.multi_reduction <add>, %293, %cst_187 [1] : vector<8x64xf32> to vector<8xf32>
    %295 = vector.shape_cast %294 : vector<8xf32> to vector<8x1xf32>
    %cst_188 = arith.constant 6.400000e+01 : f32
    %296 = vector.broadcast %cst_188 : f32 to vector<8x1xf32>
    %297 = arith.divf %295, %296 : vector<8x1xf32>
    %cst_189 = arith.constant 9.99999974E-6 : f32
    %298 = vector.broadcast %cst_189 : f32 to vector<8x1xf32>
    %299 = arith.addf %297, %298 : vector<8x1xf32>
    %300 = math.rsqrt %299 : vector<8x1xf32>
    %301 = vector.broadcast %300 : vector<8x1xf32> to vector<8x64xf32>
    %302 = arith.mulf %292, %301 : vector<8x64xf32>
    %303 = vector.broadcast %284 : vector<1x64xf32> to vector<8x64xf32>
    %304 = arith.mulf %302, %303 : vector<8x64xf32>
    %305 = vector.broadcast %286 : vector<1x64xf32> to vector<8x64xf32>
    %306 = arith.addf %304, %305 : vector<8x64xf32>
    %c1_190 = arith.constant 1 : index
    %c0_191 = arith.constant 0 : index
    %c0_192 = arith.constant 0 : index
    %307 = vector.load %arg16[%c1_190, %c0_191, %c0_192] : memref<2x64x256xf32, #tpu.memory_space<vmem>>, vector<1x64x256xf32>
    %308 = vector.shape_cast %307 : vector<1x64x256xf32> to vector<64x256xf32>
    %cst_193 = arith.constant dense<0.000000e+00> : vector<8x256xf32>
    %309 = tpu.matmul %306, %308, %cst_193 {dimension_numbers = #tpu.dot_dimension_numbers<[1], [0], [0], [1], [0, 0, 1, 1], [], []>} : vector<8x64xf32>, vector<64x256xf32>, vector<8x256xf32> -> vector<8x256xf32>
    %c1_194 = arith.constant 1 : index
    %c0_195 = arith.constant 0 : index
    %c0_196 = arith.constant 0 : index
    %310 = vector.load %arg17[%c1_194, %c0_195, %c0_196] : memref<2x1x256xf32, #tpu.memory_space<vmem>>, vector<1x1x256xf32>
    %311 = vector.shape_cast %310 : vector<1x1x256xf32> to vector<1x256xf32>
    %312 = vector.broadcast %311 : vector<1x256xf32> to vector<8x256xf32>
    %313 = arith.addf %309, %312 : vector<8x256xf32>
    %cst_197 = arith.constant 1.702000e+00 : f32
    %314 = vector.broadcast %cst_197 : f32 to vector<8x256xf32>
    %315 = arith.mulf %314, %313 : vector<8x256xf32>
    %316 = arith.negf %315 : vector<8x256xf32>
    %317 = math.exp %316 : vector<8x256xf32>
    %cst_198 = arith.constant 1.000000e+00 : f32
    %318 = vector.broadcast %cst_198 : f32 to vector<8x256xf32>
    %319 = arith.addf %318, %317 : vector<8x256xf32>
    %320 = arith.divf %318, %319 : vector<8x256xf32>
    %321 = arith.mulf %313, %320 : vector<8x256xf32>
    %c1_199 = arith.constant 1 : index
    %c0_200 = arith.constant 0 : index
    %c0_201 = arith.constant 0 : index
    %322 = vector.load %arg18[%c1_199, %c0_200, %c0_201] : memref<2x256x64xf32, #tpu.memory_space<vmem>>, vector<1x256x64xf32>
    %323 = vector.shape_cast %322 : vector<1x256x64xf32> to vector<256x64xf32>
    %cst_202 = arith.constant dense<0.000000e+00> : vector<8x64xf32>
    %324 = tpu.matmul %321, %323, %cst_202 {dimension_numbers = #tpu.dot_dimension_numbers<[1], [0], [0], [1], [0, 0, 1, 1], [], []>} : vector<8x256xf32>, vector<256x64xf32>, vector<8x64xf32> -> vector<8x64xf32>
    %c1_203 = arith.constant 1 : index
    %c0_204 = arith.constant 0 : index
    %c0_205 = arith.constant 0 : index
    %325 = vector.load %arg19[%c1_203, %c0_204, %c0_205] : memref<2x1x64xf32, #tpu.memory_space<vmem>>, vector<1x1x64xf32>
    %326 = vector.shape_cast %325 : vector<1x1x64xf32> to vector<1x64xf32>
    %327 = vector.broadcast %326 : vector<1x64xf32> to vector<8x64xf32>
    %328 = arith.addf %324, %327 : vector<8x64xf32>
    %329 = arith.addf %282, %328 : vector<8x64xf32>
    %c0_206 = arith.constant 0 : index
    %c0_207 = arith.constant 0 : index
    %c0_208 = arith.constant 0 : index
    %330 = vector.load %arg2[%c0_206, %c0_207, %c0_208] : memref<1x1x8xf32, #tpu.memory_space<vmem>>, vector<1x1x8xf32>
    %331 = vector.shape_cast %330 : vector<1x1x8xf32> to vector<1x8xf32>
    %cst_209 = arith.constant dense<0.000000e+00> : vector<1x64xf32>
    %332 = tpu.matmul %331, %329, %cst_209 {dimension_numbers = #tpu.dot_dimension_numbers<[1], [0], [0], [1], [0, 0, 1, 1], [], []>} : vector<1x8xf32>, vector<8x64xf32>, vector<1x64xf32> -> vector<1x64xf32>
    %c0_210 = arith.constant 0 : index
    %c0_211 = arith.constant 0 : index
    %333 = vector.load %arg20[%c0_210, %c0_211] : memref<1x64xf32, #tpu.memory_space<vmem>>, vector<1x64xf32>
    %c0_212 = arith.constant 0 : index
    %c0_213 = arith.constant 0 : index
    %334 = vector.load %arg21[%c0_212, %c0_213] : memref<1x64xf32, #tpu.memory_space<vmem>>, vector<1x64xf32>
    %cst_214 = arith.constant dense<0.000000e+00> : vector<1xf32>
    %335 = vector.multi_reduction <add>, %332, %cst_214 [1] : vector<1x64xf32> to vector<1xf32>
    %336 = vector.shape_cast %335 : vector<1xf32> to vector<1x1xf32>
    %cst_215 = arith.constant 6.400000e+01 : f32
    %337 = vector.broadcast %cst_215 : f32 to vector<1x1xf32>
    %338 = arith.divf %336, %337 : vector<1x1xf32>
    %339 = vector.broadcast %338 : vector<1x1xf32> to vector<1x64xf32>
    %340 = arith.subf %332, %339 : vector<1x64xf32>
    %341 = arith.mulf %340, %340 : vector<1x64xf32>
    %cst_216 = arith.constant dense<0.000000e+00> : vector<1xf32>
    %342 = vector.multi_reduction <add>, %341, %cst_216 [1] : vector<1x64xf32> to vector<1xf32>
    %343 = vector.shape_cast %342 : vector<1xf32> to vector<1x1xf32>
    %cst_217 = arith.constant 6.400000e+01 : f32
    %344 = vector.broadcast %cst_217 : f32 to vector<1x1xf32>
    %345 = arith.divf %343, %344 : vector<1x1xf32>
    %cst_218 = arith.constant 9.99999974E-6 : f32
    %346 = vector.broadcast %cst_218 : f32 to vector<1x1xf32>
    %347 = arith.addf %345, %346 : vector<1x1xf32>
    %348 = math.rsqrt %347 : vector<1x1xf32>
    %349 = vector.broadcast %348 : vector<1x1xf32> to vector<1x64xf32>
    %350 = arith.mulf %340, %349 : vector<1x64xf32>
    %351 = arith.mulf %350, %333 : vector<1x64xf32>
    %352 = arith.addf %351, %334 : vector<1x64xf32>
    %c0_219 = arith.constant 0 : index
    %c0_220 = arith.constant 0 : index
    %353 = vector.load %arg22[%c0_219, %c0_220] : memref<64x32xf32, #tpu.memory_space<vmem>>, vector<64x32xf32>
    %cst_221 = arith.constant dense<0.000000e+00> : vector<1x32xf32>
    %354 = tpu.matmul %352, %353, %cst_221 {dimension_numbers = #tpu.dot_dimension_numbers<[1], [0], [0], [1], [0, 0, 1, 1], [], []>} : vector<1x64xf32>, vector<64x32xf32>, vector<1x32xf32> -> vector<1x32xf32>
    %c0_222 = arith.constant 0 : index
    %c0_223 = arith.constant 0 : index
    %c0_224 = arith.constant 0 : index
    %355 = vector.load %arg23[%c0_222, %c0_223, %c0_224] : memref<1x1x32xf32, #tpu.memory_space<vmem>>, vector<1x1x32xf32>
    %356 = vector.shape_cast %355 : vector<1x1x32xf32> to vector<1x32xf32>
    %357 = vector.shape_cast %354 : vector<1x32xf32> to vector<1x1x32xf32>
    tpu.vector_store %arg23[%c0_222, %c0_223, %c0_224], %357 {strides = array<i32>} : memref<1x1x32xf32, #tpu.memory_space<vmem>>, vector<1x1x32xf32>,
    return
  }
  func.func @transform_0(%arg0: i32) -> (i32, i32, i32) {
    %c0_i32 = arith.constant 0 : i32
    %c0_i32_0 = arith.constant 0 : i32
    %c0_i32_1 = arith.constant 0 : i32
    return %arg0, %c0_i32, %c0_i32_0 : i32, i32, i32
  }
  func.func @transform_1(%arg0: i32) -> (i32, i32, i32) {
    %c0_i32 = arith.constant 0 : i32
    %c0_i32_0 = arith.constant 0 : i32
    %c0_i32_1 = arith.constant 0 : i32
    return %arg0, %c0_i32, %c0_i32_0 : i32, i32, i32
  }
  func.func @transform_2(%arg0: i32) -> (i32, i32) {
    %c0_i32 = arith.constant 0 : i32
    %c0_i32_0 = arith.constant 0 : i32
    %c0_i32_1 = arith.constant 0 : i32
    return %c0_i32, %c0_i32_0 : i32, i32
  }
  func.func @transform_3(%arg0: i32) -> (i32, i32, i32) {
    %c0_i32 = arith.constant 0 : i32
    %c0_i32_0 = arith.constant 0 : i32
    %c0_i32_1 = arith.constant 0 : i32
    %c0_i32_2 = arith.constant 0 : i32
    return %c0_i32, %c0_i32_0, %c0_i32_1 : i32, i32, i32
  }
  func.func @transform_4(%arg0: i32) -> (i32, i32, i32) {
    %c0_i32 = arith.constant 0 : i32
    %c0_i32_0 = arith.constant 0 : i32
    %c0_i32_1 = arith.constant 0 : i32
    %c0_i32_2 = arith.constant 0 : i32
    return %c0_i32, %c0_i32_0, %c0_i32_1 : i32, i32, i32
  }
  func.func @transform_5(%arg0: i32) -> (i32, i32, i32) {
    %c0_i32 = arith.constant 0 : i32
    %c0_i32_0 = arith.constant 0 : i32
    %c0_i32_1 = arith.constant 0 : i32
    %c0_i32_2 = arith.constant 0 : i32
    return %c0_i32, %c0_i32_0, %c0_i32_1 : i32, i32, i32
  }
  func.func @transform_6(%arg0: i32) -> (i32, i32, i32) {
    %c0_i32 = arith.constant 0 : i32
    %c0_i32_0 = arith.constant 0 : i32
    %c0_i32_1 = arith.constant 0 : i32
    %c0_i32_2 = arith.constant 0 : i32
    return %c0_i32, %c0_i32_0, %c0_i32_1 : i32, i32, i32
  }
  func.func @transform_7(%arg0: i32) -> (i32, i32, i32) {
    %c0_i32 = arith.constant 0 : i32
    %c0_i32_0 = arith.constant 0 : i32
    %c0_i32_1 = arith.constant 0 : i32
    %c0_i32_2 = arith.constant 0 : i32
    return %c0_i32, %c0_i32_0, %c0_i32_1 : i32, i32, i32
  }
  func.func @transform_8(%arg0: i32) -> (i32, i32, i32) {
    %c0_i32 = arith.constant 0 : i32
    %c0_i32_0 = arith.constant 0 : i32
    %c0_i32_1 = arith.constant 0 : i32
    %c0_i32_2 = arith.constant 0 : i32
    return %c0_i32, %c0_i32_0, %c0_i32_1 : i32, i32, i32
  }
  func.func @transform_9(%arg0: i32) -> (i32, i32, i32) {
    %c0_i32 = arith.constant 0 : i32
    %c0_i32_0 = arith.constant 0 : i32
    %c0_i32_1 = arith.constant 0 : i32
    %c0_i32_2 = arith.constant 0 : i32
    return %c0_i32, %c0_i32_0, %c0_i32_1 : i32, i32, i32
  }
  func.func @transform_10(%arg0: i32) -> (i32, i32, i32) {
    %c0_i32 = arith.constant 0 : i32
    %c0_i32_0 = arith.constant 0 : i32
    %c0_i32_1 = arith.constant 0 : i32
    %c0_i32_2 = arith.constant 0 : i32
    return %c0_i32, %c0_i32_0, %c0_i32_1 : i32, i32, i32
  }
  func.func @transform_11(%arg0: i32) -> (i32, i32, i32) {
    %c0_i32 = arith.constant 0 : i32
    %c0_i32_0 = arith.constant 0 : i32
    %c0_i32_1 = arith.constant 0 : i32
    %c0_i32_2 = arith.constant 0 : i32
    return %c0_i32, %c0_i32_0, %c0_i32_1 : i32, i32, i32
  }
  func.func @transform_12(%arg0: i32) -> (i32, i32, i32) {
    %c0_i32 = arith.constant 0 : i32
    %c0_i32_0 = arith.constant 0 : i32
    %c0_i32_1 = arith.constant 0 : i32
    %c0_i32_2 = arith.constant 0 : i32
    return %c0_i32, %c0_i32_0, %c0_i32_1 : i32, i32, i32
  }
  func.func @transform_13(%arg0: i32) -> (i32, i32, i32) {
    %c0_i32 = arith.constant 0 : i32
    %c0_i32_0 = arith.constant 0 : i32
    %c0_i32_1 = arith.constant 0 : i32
    %c0_i32_2 = arith.constant 0 : i32
    return %c0_i32, %c0_i32_0, %c0_i32_1 : i32, i32, i32
  }
  func.func @transform_14(%arg0: i32) -> (i32, i32, i32) {
    %c0_i32 = arith.constant 0 : i32
    %c0_i32_0 = arith.constant 0 : i32
    %c0_i32_1 = arith.constant 0 : i32
    %c0_i32_2 = arith.constant 0 : i32
    return %c0_i32, %c0_i32_0, %c0_i32_1 : i32, i32, i32
  }
  func.func @transform_15(%arg0: i32) -> (i32, i32, i32) {
    %c0_i32 = arith.constant 0 : i32
    %c0_i32_0 = arith.constant 0 : i32
    %c0_i32_1 = arith.constant 0 : i32
    %c0_i32_2 = arith.constant 0 : i32
    return %c0_i32, %c0_i32_0, %c0_i32_1 : i32, i32, i32
  }
  func.func @transform_16(%arg0: i32) -> (i32, i32, i32) {
    %c0_i32 = arith.constant 0 : i32
    %c0_i32_0 = arith.constant 0 : i32
    %c0_i32_1 = arith.constant 0 : i32
    %c0_i32_2 = arith.constant 0 : i32
    return %c0_i32, %c0_i32_0, %c0_i32_1 : i32, i32, i32
  }
  func.func @transform_17(%arg0: i32) -> (i32, i32, i32) {
    %c0_i32 = arith.constant 0 : i32
    %c0_i32_0 = arith.constant 0 : i32
    %c0_i32_1 = arith.constant 0 : i32
    %c0_i32_2 = arith.constant 0 : i32
    return %c0_i32, %c0_i32_0, %c0_i32_1 : i32, i32, i32
  }
  func.func @transform_18(%arg0: i32) -> (i32, i32, i32) {
    %c0_i32 = arith.constant 0 : i32
    %c0_i32_0 = arith.constant 0 : i32
    %c0_i32_1 = arith.constant 0 : i32
    %c0_i32_2 = arith.constant 0 : i32
    return %c0_i32, %c0_i32_0, %c0_i32_1 : i32, i32, i32
  }
  func.func @transform_19(%arg0: i32) -> (i32, i32) {
    %c0_i32 = arith.constant 0 : i32
    %c0_i32_0 = arith.constant 0 : i32
    %c0_i32_1 = arith.constant 0 : i32
    return %c0_i32, %c0_i32_0 : i32, i32
  }
  func.func @transform_20(%arg0: i32) -> (i32, i32) {
    %c0_i32 = arith.constant 0 : i32
    %c0_i32_0 = arith.constant 0 : i32
    %c0_i32_1 = arith.constant 0 : i32
    return %c0_i32, %c0_i32_0 : i32, i32
  }
  func.func @transform_21(%arg0: i32) -> (i32, i32) {
    %c0_i32 = arith.constant 0 : i32
    %c0_i32_0 = arith.constant 0 : i32
    %c0_i32_1 = arith.constant 0 : i32
    return %c0_i32, %c0_i32_0 : i32, i32
  }
  func.func @transform_22(%arg0: i32) -> (i32, i32, i32) {
    %c0_i32 = arith.constant 0 : i32
    %c0_i32_0 = arith.constant 0 : i32
    %c0_i32_1 = arith.constant 0 : i32
    return %arg0, %c0_i32, %c0_i32_0 : i32, i32, i32
  }
}

module attributes {stable_mosaic.version = 11 : i64} {
  func.func @_scores_kernel(%arg0: i32, %arg1: memref<2x32xf32, #tpu.memory_space<vmem>>, %arg2: memref<2x32xf32, #tpu.memory_space<vmem>>, %arg3: memref<2x2xf32, #tpu.memory_space<vmem>>) attributes {dimension_semantics = [#tpu.dimension_semantics<arbitrary>], iteration_bounds = array<i64: 1>, scalar_prefetch = 0 : i64, scratch_operands = 0 : i64, tpu.core_type = #tpu.core_type<tc>, window_params = [{pipeline_mode = #tpu.pipeline_mode<synchronous>, transform_indices = @transform_0, window_bounds = array<i64: 2, 32>}, {pipeline_mode = #tpu.pipeline_mode<synchronous>, transform_indices = @transform_1, window_bounds = array<i64: 2, 32>}, {pipeline_mode = #tpu.pipeline_mode<synchronous>, transform_indices = @transform_2, window_bounds = array<i64: 2, 2>}]} {
    %c0 = arith.constant 0 : index
    %c0_0 = arith.constant 0 : index
    %0 = vector.load %arg1[%c0, %c0_0] : memref<2x32xf32, #tpu.memory_space<vmem>>, vector<2x32xf32>
    %c0_1 = arith.constant 0 : index
    %c0_2 = arith.constant 0 : index
    %1 = vector.load %arg2[%c0_1, %c0_2] : memref<2x32xf32, #tpu.memory_space<vmem>>, vector<2x32xf32>
    %2 = arith.mulf %0, %0 : vector<2x32xf32>
    %cst = arith.constant dense<0.000000e+00> : vector<2xf32>
    %3 = vector.multi_reduction <add>, %2, %cst [1] : vector<2x32xf32> to vector<2xf32>
    %4 = vector.shape_cast %3 : vector<2xf32> to vector<2x1xf32>
    %cst_3 = arith.constant 9.99999996E-13 : f32
    %5 = vector.broadcast %cst_3 : f32 to vector<2x1xf32>
    %6 = arith.addf %4, %5 : vector<2x1xf32>
    %7 = math.rsqrt %6 : vector<2x1xf32>
    %8 = vector.broadcast %7 : vector<2x1xf32> to vector<2x32xf32>
    %9 = arith.mulf %0, %8 : vector<2x32xf32>
    %10 = arith.mulf %1, %1 : vector<2x32xf32>
    %cst_4 = arith.constant dense<0.000000e+00> : vector<2xf32>
    %11 = vector.multi_reduction <add>, %10, %cst_4 [1] : vector<2x32xf32> to vector<2xf32>
    %12 = vector.shape_cast %11 : vector<2xf32> to vector<2x1xf32>
    %cst_5 = arith.constant 9.99999996E-13 : f32
    %13 = vector.broadcast %cst_5 : f32 to vector<2x1xf32>
    %14 = arith.addf %12, %13 : vector<2x1xf32>
    %15 = math.rsqrt %14 : vector<2x1xf32>
    %16 = vector.broadcast %15 : vector<2x1xf32> to vector<2x32xf32>
    %17 = arith.mulf %1, %16 : vector<2x32xf32>
    %cst_6 = arith.constant dense<0.000000e+00> : vector<2x2xf32>
    %18 = tpu.matmul %9, %17, %cst_6 {dimension_numbers = #tpu.dot_dimension_numbers<[1], [1], [0], [0], [0, 0, 1, 0], [], []>} : vector<2x32xf32>, vector<2x32xf32>, vector<2x2xf32> -> vector<2x2xf32>
    %cst_7 = arith.constant 1.000000e+00 : f32
    %19 = vector.broadcast %cst_7 : f32 to vector<2x2xf32>
    %20 = arith.addf %18, %19 : vector<2x2xf32>
    %cst_8 = arith.constant 5.000000e-01 : f32
    %21 = vector.broadcast %cst_8 : f32 to vector<2x2xf32>
    %22 = arith.mulf %20, %21 : vector<2x2xf32>
    %c0_9 = arith.constant 0 : index
    %c0_10 = arith.constant 0 : index
    %23 = vector.load %arg3[%c0_9, %c0_10] : memref<2x2xf32, #tpu.memory_space<vmem>>, vector<2x2xf32>
    tpu.vector_store %arg3[%c0_9, %c0_10], %22 {strides = array<i32>} : memref<2x2xf32, #tpu.memory_space<vmem>>, vector<2x2xf32>,
    return
  }
  func.func @transform_0(%arg0: i32) -> (i32, i32) {
    %c0_i32 = arith.constant 0 : i32
    %c0_i32_0 = arith.constant 0 : i32
    %c0_i32_1 = arith.constant 0 : i32
    return %c0_i32, %c0_i32_0 : i32, i32
  }
  func.func @transform_1(%arg0: i32) -> (i32, i32) {
    %c0_i32 = arith.constant 0 : i32
    %c0_i32_0 = arith.constant 0 : i32
    %c0_i32_1 = arith.constant 0 : i32
    return %c0_i32, %c0_i32_0 : i32, i32
  }
  func.func @transform_2(%arg0: i32) -> (i32, i32) {
    %c0_i32 = arith.constant 0 : i32
    %c0_i32_0 = arith.constant 0 : i32
    %c0_i32_1 = arith.constant 0 : i32
    return %c0_i32, %c0_i32_0 : i32, i32
  }
}

</mosaic_0001>

<llo_original>
// kernel: clip_forward.5
$region0: #{clip_forward.5}
  #allocation0 [shape = 'u32[]', space=smem, size = 0x4, offset = 0x4, fixed_abs, tag = 'smem constant byte address 0x4 - core index']
  #allocation1 [shape = 'u32[144,128]{1,0:T(1,128)}', space=vmem, size = 0x12000, scoped, tag = 'internal scratch']
  %s0 = inlined_call_operand.vmem [shape: f32[2,32], index: 0, kind: input, shape index: {}]
  %s1 = inlined_call_operand.vmem [shape: f32[2,32], index: 1, kind: input, shape index: {}]
  %s2 = inlined_call_operand.vmem [shape: f32[2,2], index: 2, kind: output, shape index: {}]
  %s3 = sld [smem:[#allocation0]]
  $region18: #{clip_forward.5} parent=0
    _
  %s5 = ssub.s32 1, %s3
  %s6 = scalar_select 0, %s5, %s3
  // Predicated region
  $region2: #{clip_forward.5} parent=0 // pred_check
    _
  $region3: #{clip_forward.5} parent=0 // pred_check_branch
    %8 = sbr.rel (0) target = $region5
  $region4: #{clip_forward.5} parent=0 // pred_region
    _
  $region5: #{clip_forward.5} parent=0 // pred_fallthru
    _
  // Predicated region
  $region6: #{clip_forward.5} parent=0 // pred_check
    _
  $region7: #{clip_forward.5} parent=0 // pred_check_branch
    %10 = sbr.rel (0) target = $region9
  $region8: #{clip_forward.5} parent=0 // pred_region
    _
  $region9: #{clip_forward.5} parent=0 // pred_fallthru
    _
  %v11 = vld [vmem:[%s0] sm:$0x3]
  %v12 = vld [vmem:[%s1] sm:$0x3]
  %v13 = vmul.f32 %v11, %v11
  %vm14 = vcmask 254976
  %v15 = vsel %vm14, %v13, 0.0
  %16 = vadd.xlane.f32.xlu0 %v15
  %v17 = vpop.xlane.xlu0 %16
  %v18 = vadd.f32 %v17, 1e-12
  %v19 = vrsqrt.pop %v18
  %v20 = vmul.f32 %v11, %v19
  %v21 = vmul.f32 %v12, %v12
  %v22 = vsel %vm14, %v21, 0.0
  %23 = vadd.xlane.f32.xlu0 %v22
  %v24 = vpop.xlane.xlu0 %23
  %v25 = vadd.f32 %v24, 1e-12
  %v26 = vrsqrt.pop %v25
  %v27 = vmul.f32 %v12, %v26
  %vm28 = vcmask 261120
  %v30 = vsel %vm28, %v20, 0
  %v33 = vsel %vm28, %v27, 0
  %35 = vmatprep.subr.mxu0 0.0
  %36 = vmatpush1.xpose.msra.mxu0 %v33
  %37 = vmatprep.subr.mxu0 0.0
  %38 = vmatpush1.xpose.msra.mxu0 0.0
  %39 = vmatprep.subr.mxu0 0.0
  %40 = vmatpush1.xpose.msra.mxu0 0.0
  %41 = vmatprep.subr.mxu0 0.0
  %42 = vmatpush1.xpose.msra.mxu0 0.0
  %43 = vmatprep.subr.mxu0 0.0
  %44 = vmatpush1.xpose.msra.mxu0 0.0
  %45 = vmatprep.subr.mxu0 0.0
  %46 = vmatpush1.xpose.msra.mxu0 0.0
  %47 = vmatprep.subr.mxu0 0.0
  %48 = vmatpush1.xpose.msra.mxu0 0.0
  %49 = vmatprep.subr.mxu0 0.0
  %50 = vmatpush1.xpose.msra.mxu0 0.0
  %51 = vmatprep.subr.mxu0 0.0
  %52 = vmatpush1.xpose.msra.mxu0 0.0
  %53 = vmatprep.subr.mxu0 0.0
  %54 = vmatpush1.xpose.msra.mxu0 0.0
  %55 = vmatprep.subr.mxu0 0.0
  %56 = vmatpush1.xpose.msra.mxu0 0.0
  %57 = vmatprep.subr.mxu0 0.0
  %58 = vmatpush1.xpose.msra.mxu0 0.0
  %59 = vmatprep.subr.mxu0 0.0
  %60 = vmatpush1.xpose.msra.mxu0 0.0
  %61 = vmatprep.subr.mxu0 0.0
  %62 = vmatpush1.xpose.msra.mxu0 0.0
  %63 = vmatprep.subr.mxu0 0.0
  %64 = vmatpush1.xpose.msra.mxu0 0.0
  %65 = vmatprep.subr.mxu0 0.0
  %66 = vmatpush1.xpose.msra.mxu0 0.0
  %67 = vmatprep.subr.mxu0 0.0
  %68 = vmatpush1.xpose.msra.mxu0 0.0
  %69 = vmatprep.subr.mxu0 0.0
  %70 = vmatpush1.xpose.msra.mxu0 0.0
  %71 = vmatprep.subr.mxu0 0.0
  %72 = vmatpush1.xpose.msra.mxu0 0.0
  %73 = vmatprep.subr.mxu0 0.0
  %74 = vmatpush1.xpose.msra.mxu0 0.0
  %75 = vmatprep.subr.mxu0 0.0
  %76 = vmatpush1.xpose.msra.mxu0 0.0
  %77 = vmatprep.subr.mxu0 0.0
  %78 = vmatpush1.xpose.msra.mxu0 0.0
  %79 = vmatprep.subr.mxu0 0.0
  %80 = vmatpush1.xpose.msra.mxu0 0.0
  %81 = vmatprep.subr.mxu0 0.0
  %82 = vmatpush1.xpose.msra.mxu0 0.0
  %83 = vmatprep.subr.mxu0 0.0
  %84 = vmatpush1.xpose.msra.mxu0 0.0
  %85 = vmatprep.subr.mxu0 0.0
  %86 = vmatpush1.xpose.msra.mxu0 0.0
  %87 = vmatprep.subr.mxu0 0.0
  %88 = vmatpush1.xpose.msra.mxu0 0.0
  %89 = vmatprep.subr.mxu0 0.0
  %90 = vmatpush1.xpose.msra.mxu0 0.0
  %91 = vmatprep.subr.mxu0 0.0
  %92 = vmatpush1.xpose.msra.mxu0 0.0
  %93 = vmatprep.subr.mxu0 0.0
  %94 = vmatpush1.xpose.msra.mxu0 0.0
  %95 = vmatprep.subr.mxu0 0.0
  %96 = vmatpush1.xpose.msra.mxu0 0.0
  %97 = vmatprep.subr.mxu0 0.0
  %98 = vmatpush1.xpose.msra.mxu0 0.0
  %99 = vmatprep.mubr.f32.mxu0 0.0
  %100 = vmatmul.mubr.f32.gmra.mrb[0].mxu0 %v30
  %v101 = vpop.f32.mrb[0].mxu0
  %v102 = vadd.f32 1.0, %v101
  %v103 = vpop.f32.mrb[0].mxu0
  %104 = vdwg.mxu0
  %v105 = vmul.f32 %v102, 0.5
  %vm106 = vcmask 9216
  %107 = vst.msk [vmem:[%s2] sm:$0x3] %vm106, %v105
  // Predicated region
  $region10: #{clip_forward.5} parent=0 // pred_check
    _
  $region11: #{clip_forward.5} parent=0 // pred_check_branch
    %109 = sbr.rel (0) target = $region13
  $region12: #{clip_forward.5} parent=0 // pred_region
    _
  $region13: #{clip_forward.5} parent=0 // pred_fallthru
    _
  // Predicated region
  $region14: #{clip_forward.5} parent=0 // pred_check
    _
  $region15: #{clip_forward.5} parent=0 // pred_check_branch
    %111 = sbr.rel (0) target = $region17
  $region16: #{clip_forward.5} parent=0 // pred_region
    _
  $region17: #{clip_forward.5} parent=0 // pred_fallthru
    _

// kernel: clip_forward.3
$region0: #{clip_forward.3}
  #allocation0 [shape = 'u32[]', space=smem, size = 0x4, offset = 0x4, fixed_abs, tag = 'smem constant byte address 0x4 - core index']
  #allocation1 [shape = 'u32[144,128]{1,0:T(1,128)}', space=vmem, size = 0x12000, scoped, tag = 'internal scratch']
  %s0 = inlined_call_operand.vmem [shape: f32[2,4,192], index: 0, kind: input, shape index: {}]
  %s1 = inlined_call_operand.vmem [shape: f32[192,64], index: 1, kind: input, shape index: {}]
  %s2 = inlined_call_operand.vmem [shape: f32[5,4], index: 2, kind: input, shape index: {}]
  %s3 = inlined_call_operand.vmem [shape: f32[5,64], index: 3, kind: input, shape index: {}]
  %s4 = inlined_call_operand.vmem [shape: f32[1,64], index: 4, kind: input, shape index: {}]
  %s5 = inlined_call_operand.vmem [shape: f32[1,64], index: 5, kind: input, shape index: {}]
  %s6 = inlined_call_operand.vmem [shape: f32[2,1,64], index: 6, kind: input, shape index: {}]
  %s7 = inlined_call_operand.vmem [shape: f32[2,1,64], index: 7, kind: input, shape index: {}]
  %s8 = inlined_call_operand.vmem [shape: f32[2,64,64], index: 8, kind: input, shape index: {}]
  %s9 = inlined_call_operand.vmem [shape: f32[2,1,64], index: 9, kind: input, shape index: {}]
  %s10 = inlined_call_operand.vmem [shape: f32[2,64,64], index: 10, kind: input, shape index: {}]
  %s11 = inlined_call_operand.vmem [shape: f32[2,1,64], index: 11, kind: input, shape index: {}]
  %s12 = inlined_call_operand.vmem [shape: f32[2,64,64], index: 12, kind: input, shape index: {}]
  %s13 = inlined_call_operand.vmem [shape: f32[2,1,64], index: 13, kind: input, shape index: {}]
  %s14 = inlined_call_operand.vmem [shape: f32[2,64,64], index: 14, kind: input, shape index: {}]
  %s15 = inlined_call_operand.vmem [shape: f32[2,1,64], index: 15, kind: input, shape index: {}]
  %s16 = inlined_call_operand.vmem [shape: f32[2,1,64], index: 16, kind: input, shape index: {}]
  %s17 = inlined_call_operand.vmem [shape: f32[2,1,64], index: 17, kind: input, shape index: {}]
  %s18 = inlined_call_operand.vmem [shape: f32[2,64,256], index: 18, kind: input, shape index: {}]
  %s19 = inlined_call_operand.vmem [shape: f32[2,1,256], index: 19, kind: input, shape index: {}]
  %s20 = inlined_call_operand.vmem [shape: f32[2,256,64], index: 20, kind: input, shape index: {}]
  %s21 = inlined_call_operand.vmem [shape: f32[2,1,64], index: 21, kind: input, shape index: {}]
  %s22 = inlined_call_operand.vmem [shape: f32[1,64], index: 22, kind: input, shape index: {}]
  %s23 = inlined_call_operand.vmem [shape: f32[1,64], index: 23, kind: input, shape index: {}]
  %s24 = inlined_call_operand.vmem [shape: f32[64,32], index: 24, kind: input, shape index: {}]
  %s25 = inlined_call_operand.vmem [shape: f32[2,1,32], index: 25, kind: output, shape index: {}]
  %s26 = sld [smem:[#allocation0]]
  $region133: #{clip_forward.3} parent=0
    _
  %s28 = ssub.s32 1, %s26
  %s29 = scalar_select 0, %s28, %s26
  loop: start=0, step=1, limit=4
  $region2: #{clip_forward.3} parent=0 // loop_pre_header
    _
  $region3: #{clip_forward.3} parent=0 // loop_header
    %s31 = sphi 0, %s35
    %p32 = scmp.ge.s32.totalorder %s31, 4
    %s41 = sphi 0, %s43
    %s44 = sphi 0, %s41
    %s45 = sphi 0, %s44
    %s61 = sphi 0, %s45
    %s65 = sphi 0, %s65
    %s67 = sphi 0, %s65
    %s68 = sphi 0, %s67
    %s82 = sphi 0, %s68
    %s86 = sphi 0, %s86
    %s88 = sphi 0, %s86
    %s89 = sphi 0, %s88
    %s103 = sphi 0, %s89
    %s107 = sphi 0, %s107
    %s109 = sphi 0, %s107
    %s110 = sphi 0, %s109
    %s124 = sphi 0, %s110
    %s128 = sphi 0, %s128
    %s130 = sphi 0, %s128
    %s131 = sphi 0, %s130
    %s145 = sphi 0, %s131
    %s149 = sphi 0, %s149
    %s151 = sphi 0, %s149
    %s152 = sphi 0, %s151
    %s166 = sphi 0, %s152
    %s170 = sphi 0, %s170
    %s172 = sphi 0, %s170
    %s173 = sphi 0, %s172
    %s187 = sphi 0, %s173
    %s191 = sphi 0, %s191
    %s193 = sphi 0, %s191
    %s194 = sphi 0, %s193
    %s208 = sphi 0, %s194
    %s212 = sphi 0, %s212
    %s214 = sphi 0, %s212
    %s215 = sphi 0, %s214
    %s229 = sphi 0, %s215
    %s233 = sphi 0, %s233
    %s235 = sphi 0, %s233
    %s236 = sphi 0, %s235
    %s250 = sphi 0, %s236
    %s254 = sphi 0, %s254
    %s256 = sphi 0, %s254
    %s257 = sphi 0, %s256
    %s271 = sphi 0, %s257
    %s275 = sphi 0, %s275
    %s277 = sphi 0, %s275
    %s278 = sphi 0, %s277
    %s292 = sphi 0, %s278
    %s296 = sphi 0, %s296
    %s298 = sphi 0, %s296
    %s299 = sphi 0, %s298
    %s313 = sphi 0, %s299
    %s317 = sphi 0, %s317
    %s319 = sphi 0, %s317
    %s320 = sphi 0, %s319
    %s334 = sphi 0, %s320
    %s338 = sphi 0, %s338
    %s340 = sphi 0, %s338
    %s341 = sphi 0, %s340
    %s355 = sphi 0, %s341
    %s359 = sphi 0, %s359
    %s361 = sphi 0, %s359
    %s362 = sphi 0, %s361
    %s376 = sphi 0, %s362
    %s380 = sphi 0, %s380
    %s382 = sphi 0, %s380
    %s383 = sphi 0, %s382
    %s397 = sphi 0, %s383
    %s401 = sphi 0, %s401
    %s403 = sphi 0, %s401
    %s404 = sphi 0, %s403
    %s418 = sphi 0, %s404
    %s422 = sphi 0, %s422
    %s424 = sphi 0, %s422
    %s425 = sphi 0, %s424
    %s439 = sphi 0, %s425
    %s443 = sphi 0, %s443
    %s445 = sphi 0, %s443
    %s446 = sphi 0, %s445
    %s460 = sphi 0, %s446
    %s464 = sphi 0, %s464
    %s466 = sphi 0, %s464
    %s467 = sphi 0, %s466
    %s481 = sphi 0, %s467
    %s485 = sphi 0, %s485
    %s487 = sphi 0, %s485
    %s488 = sphi 0, %s487
    %s502 = sphi 0, %s488
    %s506 = sphi 0, %s506
    %s508 = sphi 0, %s506
    %s509 = sphi 0, %s508
    %s523 = sphi 0, %s509
    %s527 = sphi 0, %s527
    %s529 = sphi 0, %s527
    %s530 = sphi 0, %s529
    %s544 = sphi 0, %s530
    %s548 = sphi 0, %s548
    %s550 = sphi 0, %s548
    %s551 = sphi 0, %s550
    %s565 = sphi 0, %s551
    %s571 = sphi 0, %s573
    %s574 = sphi 0, %s571
    %s575 = sphi 0, %s574
    %s591 = sphi 0, %s575
  $region4: #{clip_forward.3} parent=0 // loop_header_branch
    %34 = sbr.rel (%p32) target = $region8
  $region5: #{clip_forward.3} parent=0 // loop_body
    %s36 = ssub.s32 %s31, 1
    %s37 = ssub.s32 %s31, 2
    %s38 = sadd.s32 %s31, 1
    %s39 = ssub.s32 %s31, %s38
    %p40 = scmp.eq.s32.totalorder %s39, 0
    %s42 = sadd.s32 %s41, 1
    %s43 = scalar_select %p40, %s41, %s42
    %p46 = pneg %p40
    %p47 = scmp.eq.s32.totalorder %s31, 1
    %p48 = por %p46, %p47
    %p49 = scmp.ne.s32.totalorder %s41, %s44
    %p50 = scmp.eq.s32.totalorder %s31, 0
    %p51 = por %p49, %p50
    %p52 = scmp.ne.s32.totalorder %s41, %s44
    %p53 = scmp.eq.s32.totalorder %s36, 1
    %p54 = por %p52, %p53
    %p55 = scmp.ne.s32.totalorder %s44, %s45
    %p56 = scmp.eq.s32.totalorder %s36, 0
    %p57 = por %p55, %p56
    %p58 = scmp.ne.s32.totalorder %s44, %s45
    %p59 = scmp.eq.s32.totalorder %s37, 1
    %p60 = por %p58, %p59
    %p62 = scmp.ne.s32.totalorder %s45, %s61
    %p63 = scmp.eq.s32.totalorder %s37, 0
    %p64 = por %p62, %p63
    %s66 = sadd.s32 %s65, 1
    %p69 = scmp.eq.s32.totalorder %s31, 1
    %p70 = scmp.ne.s32.totalorder %s65, %s67
    %p71 = scmp.eq.s32.totalorder %s31, 0
    %p72 = por %p70, %p71
    %p73 = scmp.ne.s32.totalorder %s65, %s67
    %p74 = scmp.eq.s32.totalorder %s36, 1
    %p75 = por %p73, %p74
    %p76 = scmp.ne.s32.totalorder %s67, %s68
    %p77 = scmp.eq.s32.totalorder %s36, 0
    %p78 = por %p76, %p77
    %p79 = scmp.ne.s32.totalorder %s67, %s68
    %p80 = scmp.eq.s32.totalorder %s37, 1
    %p81 = por %p79, %p80
    %p83 = scmp.ne.s32.totalorder %s68, %s82
    %p84 = scmp.eq.s32.totalorder %s37, 0
    %p85 = por %p83, %p84
    %s87 = sadd.s32 %s86, 1
    %p90 = scmp.eq.s32.totalorder %s31, 1
    %p91 = scmp.ne.s32.totalorder %s86, %s88
    %p92 = scmp.eq.s32.totalorder %s31, 0
    %p93 = por %p91, %p92
    %p94 = scmp.ne.s32.totalorder %s86, %s88
    %p95 = scmp.eq.s32.totalorder %s36, 1
    %p96 = por %p94, %p95
    %p97 = scmp.ne.s32.totalorder %s88, %s89
    %p98 = scmp.eq.s32.totalorder %s36, 0
    %p99 = por %p97, %p98
    %p100 = scmp.ne.s32.totalorder %s88, %s89
    %p101 = scmp.eq.s32.totalorder %s37, 1
    %p102 = por %p100, %p101
    %p104 = scmp.ne.s32.totalorder %s89, %s103
    %p105 = scmp.eq.s32.totalorder %s37, 0
    %p106 = por %p104, %p105
    %s108 = sadd.s32 %s107, 1
    %p111 = scmp.eq.s32.totalorder %s31, 1
    %p112 = scmp.ne.s32.totalorder %s107, %s109
    %p113 = scmp.eq.s32.totalorder %s31, 0
    %p114 = por %p112, %p113
    %p115 = scmp.ne.s32.totalorder %s107, %s109
    %p116 = scmp.eq.s32.totalorder %s36, 1
    %p117 = por %p115, %p116
    %p118 = scmp.ne.s32.totalorder %s109, %s110
    %p119 = scmp.eq.s32.totalorder %s36, 0
    %p120 = por %p118, %p119
    %p121 = scmp.ne.s32.totalorder %s109, %s110
    %p122 = scmp.eq.s32.totalorder %s37, 1
    %p123 = por %p121, %p122
    %p125 = scmp.ne.s32.totalorder %s110, %s124
    %p126 = scmp.eq.s32.totalorder %s37, 0
    %p127 = por %p125, %p126
    %s129 = sadd.s32 %s128, 1
    %p132 = scmp.eq.s32.totalorder %s31, 1
    %p133 = scmp.ne.s32.totalorder %s128, %s130
    %p134 = scmp.eq.s32.totalorder %s31, 0
    %p135 = por %p133, %p134
    %p136 = scmp.ne.s32.totalorder %s128, %s130
    %p137 = scmp.eq.s32.totalorder %s36, 1
    %p138 = por %p136, %p137
    %p139 = scmp.ne.s32.totalorder %s130, %s131
    %p140 = scmp.eq.s32.totalorder %s36, 0
    %p141 = por %p139, %p140
    %p142 = scmp.ne.s32.totalorder %s130, %s131
    %p143 = scmp.eq.s32.totalorder %s37, 1
    %p144 = por %p142, %p143
    %p146 = scmp.ne.s32.totalorder %s131, %s145
    %p147 = scmp.eq.s32.totalorder %s37, 0
    %p148 = por %p146, %p147
    %s150 = sadd.s32 %s149, 1
    %p153 = scmp.eq.s32.totalorder %s31, 1
    %p154 = scmp.ne.s32.totalorder %s149, %s151
    %p155 = scmp.eq.s32.totalorder %s31, 0
    %p156 = por %p154, %p155
    %p157 = scmp.ne.s32.totalorder %s149, %s151
    %p158 = scmp.eq.s32.totalorder %s36, 1
    %p159 = por %p157, %p158
    %p160 = scmp.ne.s32.totalorder %s151, %s152
    %p161 = scmp.eq.s32.totalorder %s36, 0
    %p162 = por %p160, %p161
    %p163 = scmp.ne.s32.totalorder %s151, %s152
    %p164 = scmp.eq.s32.totalorder %s37, 1
    %p165 = por %p163, %p164
    %p167 = scmp.ne.s32.totalorder %s152, %s166
    %p168 = scmp.eq.s32.totalorder %s37, 0
    %p169 = por %p167, %p168
    %s171 = sadd.s32 %s170, 1
    %p174 = scmp.eq.s32.totalorder %s31, 1
    %p175 = scmp.ne.s32.totalorder %s170, %s172
    %p176 = scmp.eq.s32.totalorder %s31, 0
    %p177 = por %p175, %p176
    %p178 = scmp.ne.s32.totalorder %s170, %s172
    %p179 = scmp.eq.s32.totalorder %s36, 1
    %p180 = por %p178, %p179
    %p181 = scmp.ne.s32.totalorder %s172, %s173
    %p182 = scmp.eq.s32.totalorder %s36, 0
    %p183 = por %p181, %p182
    %p184 = scmp.ne.s32.totalorder %s172, %s173
    %p185 = scmp.eq.s32.totalorder %s37, 1
    %p186 = por %p184, %p185
    %p188 = scmp.ne.s32.totalorder %s173, %s187
    %p189 = scmp.eq.s32.totalorder %s37, 0
    %p190 = por %p188, %p189
    %s192 = sadd.s32 %s191, 1
    %p195 = scmp.eq.s32.totalorder %s31, 1
    %p196 = scmp.ne.s32.totalorder %s191, %s193
    %p197 = scmp.eq.s32.totalorder %s31, 0
    %p198 = por %p196, %p197
    %p199 = scmp.ne.s32.totalorder %s191, %s193
    %p200 = scmp.eq.s32.totalorder %s36, 1
    %p201 = por %p199, %p200
    %p202 = scmp.ne.s32.totalorder %s193, %s194
    %p203 = scmp.eq.s32.totalorder %s36, 0
    %p204 = por %p202, %p203
    %p205 = scmp.ne.s32.totalorder %s193, %s194
    %p206 = scmp.eq.s32.totalorder %s37, 1
    %p207 = por %p205, %p206
    %p209 = scmp.ne.s32.totalorder %s194, %s208
    %p210 = scmp.eq.s32.totalorder %s37, 0
    %p211 = por %p209, %p210
    %s213 = sadd.s32 %s212, 1
    %p216 = scmp.eq.s32.totalorder %s31, 1
    %p217 = scmp.ne.s32.totalorder %s212, %s214
    %p218 = scmp.eq.s32.totalorder %s31, 0
    %p219 = por %p217, %p218
    %p220 = scmp.ne.s32.totalorder %s212, %s214
    %p221 = scmp.eq.s32.totalorder %s36, 1
    %p222 = por %p220, %p221
    %p223 = scmp.ne.s32.totalorder %s214, %s215
    %p224 = scmp.eq.s32.totalorder %s36, 0
    %p225 = por %p223, %p224
    %p226 = scmp.ne.s32.totalorder %s214, %s215
    %p227 = scmp.eq.s32.totalorder %s37, 1
    %p228 = por %p226, %p227
    %p230 = scmp.ne.s32.totalorder %s215, %s229
    %p231 = scmp.eq.s32.totalorder %s37, 0
    %p232 = por %p230, %p231
    %s234 = sadd.s32 %s233, 1
    %p237 = scmp.eq.s32.totalorder %s31, 1
    %p238 = scmp.ne.s32.totalorder %s233, %s235
    %p239 = scmp.eq.s32.totalorder %s31, 0
    %p240 = por %p238, %p239
    %p241 = scmp.ne.s32.totalorder %s233, %s235
    %p242 = scmp.eq.s32.totalorder %s36, 1
    %p243 = por %p241, %p242
    %p244 = scmp.ne.s32.totalorder %s235, %s236
    %p245 = scmp.eq.s32.totalorder %s36, 0
    %p246 = por %p244, %p245
    %p247 = scmp.ne.s32.totalorder %s235, %s236
    %p248 = scmp.eq.s32.totalorder %s37, 1
    %p249 = por %p247, %p248
    %p251 = scmp.ne.s32.totalorder %s236, %s250
    %p252 = scmp.eq.s32.totalorder %s37, 0
    %p253 = por %p251, %p252
    %s255 = sadd.s32 %s254, 1
    %p258 = scmp.eq.s32.totalorder %s31, 1
    %p259 = scmp.ne.s32.totalorder %s254, %s256
    %p260 = scmp.eq.s32.totalorder %s31, 0
    %p261 = por %p259, %p260
    %p262 = scmp.ne.s32.totalorder %s254, %s256
    %p263 = scmp.eq.s32.totalorder %s36, 1
    %p264 = por %p262, %p263
    %p265 = scmp.ne.s32.totalorder %s256, %s257
    %p266 = scmp.eq.s32.totalorder %s36, 0
    %p267 = por %p265, %p266
    %p268 = scmp.ne.s32.totalorder %s256, %s257
    %p269 = scmp.eq.s32.totalorder %s37, 1
    %p270 = por %p268, %p269
    %p272 = scmp.ne.s32.totalorder %s257, %s271
    %p273 = scmp.eq.s32.totalorder %s37, 0
    %p274 = por %p272, %p273
    %s276 = sadd.s32 %s275, 1
    %p279 = scmp.eq.s32.totalorder %s31, 1
    %p280 = scmp.ne.s32.totalorder %s275, %s277
    %p281 = scmp.eq.s32.totalorder %s31, 0
    %p282 = por %p280, %p281
    %p283 = scmp.ne.s32.totalorder %s275, %s277
    %p284 = scmp.eq.s32.totalorder %s36, 1
    %p285 = por %p283, %p284
    %p286 = scmp.ne.s32.totalorder %s277, %s278
    %p287 = scmp.eq.s32.totalorder %s36, 0
    %p288 = por %p286, %p287
    %p289 = scmp.ne.s32.totalorder %s277, %s278
    %p290 = scmp.eq.s32.totalorder %s37, 1
    %p291 = por %p289, %p290
    %p293 = scmp.ne.s32.totalorder %s278, %s292
    %p294 = scmp.eq.s32.totalorder %s37, 0
    %p295 = por %p293, %p294
    %s297 = sadd.s32 %s296, 1
    %p300 = scmp.eq.s32.totalorder %s31, 1
    %p301 = scmp.ne.s32.totalorder %s296, %s298
    %p302 = scmp.eq.s32.totalorder %s31, 0
    %p303 = por %p301, %p302
    %p304 = scmp.ne.s32.totalorder %s296, %s298
    %p305 = scmp.eq.s32.totalorder %s36, 1
    %p306 = por %p304, %p305
    %p307 = scmp.ne.s32.totalorder %s298, %s299
    %p308 = scmp.eq.s32.totalorder %s36, 0
    %p309 = por %p307, %p308
    %p310 = scmp.ne.s32.totalorder %s298, %s299
    %p311 = scmp.eq.s32.totalorder %s37, 1
    %p312 = por %p310, %p311
    %p314 = scmp.ne.s32.totalorder %s299, %s313
    %p315 = scmp.eq.s32.totalorder %s37, 0
    %p316 = por %p314, %p315
    %s318 = sadd.s32 %s317, 1
    %p321 = scmp.eq.s32.totalorder %s31, 1
    %p322 = scmp.ne.s32.totalorder %s317, %s319
    %p323 = scmp.eq.s32.totalorder %s31, 0
    %p324 = por %p322, %p323
    %p325 = scmp.ne.s32.totalorder %s317, %s319
    %p326 = scmp.eq.s32.totalorder %s36, 1
    %p327 = por %p325, %p326
    %p328 = scmp.ne.s32.totalorder %s319, %s320
    %p329 = scmp.eq.s32.totalorder %s36, 0
    %p330 = por %p328, %p329
    %p331 = scmp.ne.s32.totalorder %s319, %s320
    %p332 = scmp.eq.s32.totalorder %s37, 1
    %p333 = por %p331, %p332
    %p335 = scmp.ne.s32.totalorder %s320, %s334
    %p336 = scmp.eq.s32.totalorder %s37, 0
    %p337 = por %p335, %p336
    %s339 = sadd.s32 %s338, 1
    %p342 = scmp.eq.s32.totalorder %s31, 1
    %p343 = scmp.ne.s32.totalorder %s338, %s340
    %p344 = scmp.eq.s32.totalorder %s31, 0
    %p345 = por %p343, %p344
    %p346 = scmp.ne.s32.totalorder %s338, %s340
    %p347 = scmp.eq.s32.totalorder %s36, 1
    %p348 = por %p346, %p347
    %p349 = scmp.ne.s32.totalorder %s340, %s341
    %p350 = scmp.eq.s32.totalorder %s36, 0
    %p351 = por %p349, %p350
    %p352 = scmp.ne.s32.totalorder %s340, %s341
    %p353 = scmp.eq.s32.totalorder %s37, 1
    %p354 = por %p352, %p353
    %p356 = scmp.ne.s32.totalorder %s341, %s355
    %p357 = scmp.eq.s32.totalorder %s37, 0
    %p358 = por %p356, %p357
    %s360 = sadd.s32 %s359, 1
    %p363 = scmp.eq.s32.totalorder %s31, 1
    %p364 = scmp.ne.s32.totalorder %s359, %s361
    %p365 = scmp.eq.s32.totalorder %s31, 0
    %p366 = por %p364, %p365
    %p367 = scmp.ne.s32.totalorder %s359, %s361
    %p368 = scmp.eq.s32.totalorder %s36, 1
    %p369 = por %p367, %p368
    %p370 = scmp.ne.s32.totalorder %s361, %s362
    %p371 = scmp.eq.s32.totalorder %s36, 0
    %p372 = por %p370, %p371
    %p373 = scmp.ne.s32.totalorder %s361, %s362
    %p374 = scmp.eq.s32.totalorder %s37, 1
    %p375 = por %p373, %p374
    %p377 = scmp.ne.s32.totalorder %s362, %s376
    %p378 = scmp.eq.s32.totalorder %s37, 0
    %p379 = por %p377, %p378
    %s381 = sadd.s32 %s380, 1
    %p384 = scmp.eq.s32.totalorder %s31, 1
    %p385 = scmp.ne.s32.totalorder %s380, %s382
    %p386 = scmp.eq.s32.totalorder %s31, 0
    %p387 = por %p385, %p386
    %p388 = scmp.ne.s32.totalorder %s380, %s382
    %p389 = scmp.eq.s32.totalorder %s36, 1
    %p390 = por %p388, %p389
    %p391 = scmp.ne.s32.totalorder %s382, %s383
    %p392 = scmp.eq.s32.totalorder %s36, 0
    %p393 = por %p391, %p392
    %p394 = scmp.ne.s32.totalorder %s382, %s383
    %p395 = scmp.eq.s32.totalorder %s37, 1
    %p396 = por %p394, %p395
    %p398 = scmp.ne.s32.totalorder %s383, %s397
    %p399 = scmp.eq.s32.totalorder %s37, 0
    %p400 = por %p398, %p399
    %s402 = sadd.s32 %s401, 1
    %p405 = scmp.eq.s32.totalorder %s31, 1
    %p406 = scmp.ne.s32.totalorder %s401, %s403
    %p407 = scmp.eq.s32.totalorder %s31, 0
    %p408 = por %p406, %p407
    %p409 = scmp.ne.s32.totalorder %s401, %s403
    %p410 = scmp.eq.s32.totalorder %s36, 1
    %p411 = por %p409, %p410
    %p412 = scmp.ne.s32.totalorder %s403, %s404
    %p413 = scmp.eq.s32.totalorder %s36, 0
    %p414 = por %p412, %p413
    %p415 = scmp.ne.s32.totalorder %s403, %s404
    %p416 = scmp.eq.s32.totalorder %s37, 1
    %p417 = por %p415, %p416
    %p419 = scmp.ne.s32.totalorder %s404, %s418
    %p420 = scmp.eq.s32.totalorder %s37, 0
    %p421 = por %p419, %p420
    %s423 = sadd.s32 %s422, 1
    %p426 = scmp.eq.s32.totalorder %s31, 1
    %p427 = scmp.ne.s32.totalorder %s422, %s424
    %p428 = scmp.eq.s32.totalorder %s31, 0
    %p429 = por %p427, %p428
    %p430 = scmp.ne.s32.totalorder %s422, %s424
    %p431 = scmp.eq.s32.totalorder %s36, 1
    %p432 = por %p430, %p431
    %p433 = scmp.ne.s32.totalorder %s424, %s425
    %p434 = scmp.eq.s32.totalorder %s36, 0
    %p435 = por %p433, %p434
    %p436 = scmp.ne.s32.totalorder %s424, %s425
    %p437 = scmp.eq.s32.totalorder %s37, 1
    %p438 = por %p436, %p437
    %p440 = scmp.ne.s32.totalorder %s425, %s439
    %p441 = scmp.eq.s32.totalorder %s37, 0
    %p442 = por %p440, %p441
    %s444 = sadd.s32 %s443, 1
    %p447 = scmp.eq.s32.totalorder %s31, 1
    %p448 = scmp.ne.s32.totalorder %s443, %s445
    %p449 = scmp.eq.s32.totalorder %s31, 0
    %p450 = por %p448, %p449
    %p451 = scmp.ne.s32.totalorder %s443, %s445
    %p452 = scmp.eq.s32.totalorder %s36, 1
    %p453 = por %p451, %p452
    %p454 = scmp.ne.s32.totalorder %s445, %s446
    %p455 = scmp.eq.s32.totalorder %s36, 0
    %p456 = por %p454, %p455
    %p457 = scmp.ne.s32.totalorder %s445, %s446
    %p458 = scmp.eq.s32.totalorder %s37, 1
    %p459 = por %p457, %p458
    %p461 = scmp.ne.s32.totalorder %s446, %s460
    %p462 = scmp.eq.s32.totalorder %s37, 0
    %p463 = por %p461, %p462
    %s465 = sadd.s32 %s464, 1
    %p468 = scmp.eq.s32.totalorder %s31, 1
    %p469 = scmp.ne.s32.totalorder %s464, %s466
    %p470 = scmp.eq.s32.totalorder %s31, 0
    %p471 = por %p469, %p470
    %p472 = scmp.ne.s32.totalorder %s464, %s466
    %p473 = scmp.eq.s32.totalorder %s36, 1
    %p474 = por %p472, %p473
    %p475 = scmp.ne.s32.totalorder %s466, %s467
    %p476 = scmp.eq.s32.totalorder %s36, 0
    %p477 = por %p475, %p476
    %p478 = scmp.ne.s32.totalorder %s466, %s467
    %p479 = scmp.eq.s32.totalorder %s37, 1
    %p480 = por %p478, %p479
    %p482 = scmp.ne.s32.totalorder %s467, %s481
    %p483 = scmp.eq.s32.totalorder %s37, 0
    %p484 = por %p482, %p483
    %s486 = sadd.s32 %s485, 1
    %p489 = scmp.eq.s32.totalorder %s31, 1
    %p490 = scmp.ne.s32.totalorder %s485, %s487
    %p491 = scmp.eq.s32.totalorder %s31, 0
    %p492 = por %p490, %p491
    %p493 = scmp.ne.s32.totalorder %s485, %s487
    %p494 = scmp.eq.s32.totalorder %s36, 1
    %p495 = por %p493, %p494
    %p496 = scmp.ne.s32.totalorder %s487, %s488
    %p497 = scmp.eq.s32.totalorder %s36, 0
    %p498 = por %p496, %p497
    %p499 = scmp.ne.s32.totalorder %s487, %s488
    %p500 = scmp.eq.s32.totalorder %s37, 1
    %p501 = por %p499, %p500
    %p503 = scmp.ne.s32.totalorder %s488, %s502
    %p504 = scmp.eq.s32.totalorder %s37, 0
    %p505 = por %p503, %p504
    %s507 = sadd.s32 %s506, 1
    %p510 = scmp.eq.s32.totalorder %s31, 1
    %p511 = scmp.ne.s32.totalorder %s506, %s508
    %p512 = scmp.eq.s32.totalorder %s31, 0
    %p513 = por %p511, %p512
    %p514 = scmp.ne.s32.totalorder %s506, %s508
    %p515 = scmp.eq.s32.totalorder %s36, 1
    %p516 = por %p514, %p515
    %p517 = scmp.ne.s32.totalorder %s508, %s509
    %p518 = scmp.eq.s32.totalorder %s36, 0
    %p519 = por %p517, %p518
    %p520 = scmp.ne.s32.totalorder %s508, %s509
    %p521 = scmp.eq.s32.totalorder %s37, 1
    %p522 = por %p520, %p521
    %p524 = scmp.ne.s32.totalorder %s509, %s523
    %p525 = scmp.eq.s32.totalorder %s37, 0
    %p526 = por %p524, %p525
    %s528 = sadd.s32 %s527, 1
    %p531 = scmp.eq.s32.totalorder %s31, 1
    %p532 = scmp.ne.s32.totalorder %s527, %s529
    %p533 = scmp.eq.s32.totalorder %s31, 0
    %p534 = por %p532, %p533
    %p535 = scmp.ne.s32.totalorder %s527, %s529
    %p536 = scmp.eq.s32.totalorder %s36, 1
    %p537 = por %p535, %p536
    %p538 = scmp.ne.s32.totalorder %s529, %s530
    %p539 = scmp.eq.s32.totalorder %s36, 0
    %p540 = por %p538, %p539
    %p541 = scmp.ne.s32.totalorder %s529, %s530
    %p542 = scmp.eq.s32.totalorder %s37, 1
    %p543 = por %p541, %p542
    %p545 = scmp.ne.s32.totalorder %s530, %s544
    %p546 = scmp.eq.s32.totalorder %s37, 0
    %p547 = por %p545, %p546
    %s549 = sadd.s32 %s548, 1
    %p552 = scmp.eq.s32.totalorder %s31, 1
    %p553 = scmp.ne.s32.totalorder %s548, %s550
    %p554 = scmp.eq.s32.totalorder %s31, 0
    %p555 = por %p553, %p554
    %p556 = scmp.ne.s32.totalorder %s548, %s550
    %p557 = scmp.eq.s32.totalorder %s36, 1
    %p558 = por %p556, %p557
    %p559 = scmp.ne.s32.totalorder %s550, %s551
    %p560 = scmp.eq.s32.totalorder %s36, 0
    %p561 = por %p559, %p560
    %p562 = scmp.ne.s32.totalorder %s550, %s551
    %p563 = scmp.eq.s32.totalorder %s37, 1
    %p564 = por %p562, %p563
    %p566 = scmp.ne.s32.totalorder %s551, %s565
    %p567 = scmp.eq.s32.totalorder %s37, 0
    %p568 = por %p566, %p567
    %s569 = ssub.s32 %s31, %s38
    %p570 = scmp.eq.s32.totalorder %s569, 0
    %s572 = sadd.s32 %s571, 1
    %s573 = scalar_select %p570, %s571, %s572
    %p576 = pneg %p570
    %p577 = scmp.eq.s32.totalorder %s31, 1
    %p578 = por %p576, %p577
    %p579 = scmp.ne.s32.totalorder %s571, %s574
    %p580 = scmp.eq.s32.totalorder %s31, 0
    %p581 = por %p579, %p580
    %p582 = scmp.ne.s32.totalorder %s571, %s574
    %p583 = scmp.eq.s32.totalorder %s36, 1
    %p584 = por %p582, %p583
    %p585 = scmp.ne.s32.totalorder %s574, %s575
    %p586 = scmp.eq.s32.totalorder %s36, 0
    %p587 = por %p585, %p586
    %p588 = scmp.ne.s32.totalorder %s574, %s575
    %p589 = scmp.eq.s32.totalorder %s37, 1
    %p590 = por %p588, %p589
    %p592 = scmp.ne.s32.totalorder %s575, %s591
    %p593 = scmp.eq.s32.totalorder %s37, 0
    %p594 = por %p592, %p593
    %p595 = scmp.le.s32.totalorder 1, %s31
    %p596 = scmp.lt.s32.totalorder %s31, 3
    %p597 = pnand %p595, %p596
    %p598 = pneg %p597
    // Predicated region
    $region9: #{clip_forward.3} parent=5 // pred_check
      _
    $region10: #{clip_forward.3} parent=5 // pred_check_branch
      %600 = sbr.rel (%p597) target = $region12
    $region11: #{clip_forward.3} parent=5 // pred_region
      %s601 = ssub.s32 %s31, 1
      // Predicated region
      $region13: #{clip_forward.3} parent=11 // pred_check
        %p602 = pneg %p78
      $region14: #{clip_forward.3} parent=11 // pred_check_branch
        %604 = sbr.rel (%p602) target = $region16
      $region15: #{clip_forward.3} parent=11 // pred_region
        _
      $region16: #{clip_forward.3} parent=11 // pred_fallthru
        _
      // Predicated region
      $region17: #{clip_forward.3} parent=11 // pred_check
        %p605 = pneg %p99
      $region18: #{clip_forward.3} parent=11 // pred_check_branch
        %607 = sbr.rel (%p605) target = $region20
      $region19: #{clip_forward.3} parent=11 // pred_region
        _
      $region20: #{clip_forward.3} parent=11 // pred_fallthru
        _
      // Predicated region
      $region21: #{clip_forward.3} parent=11 // pred_check
        %p608 = pneg %p120
      $region22: #{clip_forward.3} parent=11 // pred_check_branch
        %610 = sbr.rel (%p608) target = $region24
      $region23: #{clip_forward.3} parent=11 // pred_region
        _
      $region24: #{clip_forward.3} parent=11 // pred_fallthru
        _
      // Predicated region
      $region25: #{clip_forward.3} parent=11 // pred_check
        %p611 = pneg %p141
      $region26: #{clip_forward.3} parent=11 // pred_check_branch
        %613 = sbr.rel (%p611) target = $region28
      $region27: #{clip_forward.3} parent=11 // pred_region
        _
      $region28: #{clip_forward.3} parent=11 // pred_fallthru
        _
      // Predicated region
      $region29: #{clip_forward.3} parent=11 // pred_check
        %p614 = pneg %p162
      $region30: #{clip_forward.3} parent=11 // pred_check_branch
        %616 = sbr.rel (%p614) target = $region32
      $region31: #{clip_forward.3} parent=11 // pred_region
        _
      $region32: #{clip_forward.3} parent=11 // pred_fallthru
        _
      // Predicated region
      $region33: #{clip_forward.3} parent=11 // pred_check
        %p617 = pneg %p183
      $region34: #{clip_forward.3} parent=11 // pred_check_branch
        %619 = sbr.rel (%p617) target = $region36
      $region35: #{clip_forward.3} parent=11 // pred_region
        _
      $region36: #{clip_forward.3} parent=11 // pred_fallthru
        _
      // Predicated region
      $region37: #{clip_forward.3} parent=11 // pred_check
        %p620 = pneg %p204
      $region38: #{clip_forward.3} parent=11 // pred_check_branch
        %622 = sbr.rel (%p620) target = $region40
      $region39: #{clip_forward.3} parent=11 // pred_region
        _
      $region40: #{clip_forward.3} parent=11 // pred_fallthru
        _
      // Predicated region
      $region41: #{clip_forward.3} parent=11 // pred_check
        %p623 = pneg %p225
      $region42: #{clip_forward.3} parent=11 // pred_check_branch
        %625 = sbr.rel (%p623) target = $region44
      $region43: #{clip_forward.3} parent=11 // pred_region
        _
      $region44: #{clip_forward.3} parent=11 // pred_fallthru
        _
      // Predicated region
      $region45: #{clip_forward.3} parent=11 // pred_check
        %p626 = pneg %p246
      $region46: #{clip_forward.3} parent=11 // pred_check_branch
        %628 = sbr.rel (%p626) target = $region48
      $region47: #{clip_forward.3} parent=11 // pred_region
        _
      $region48: #{clip_forward.3} parent=11 // pred_fallthru
        _
      // Predicated region
      $region49: #{clip_forward.3} parent=11 // pred_check
        %p629 = pneg %p267
      $region50: #{clip_forward.3} parent=11 // pred_check_branch
        %631 = sbr.rel (%p629) target = $region52
      $region51: #{clip_forward.3} parent=11 // pred_region
        _
      $region52: #{clip_forward.3} parent=11 // pred_fallthru
        _
      // Predicated region
      $region53: #{clip_forward.3} parent=11 // pred_check
        %p632 = pneg %p288
      $region54: #{clip_forward.3} parent=11 // pred_check_branch
        %634 = sbr.rel (%p632) target = $region56
      $region55: #{clip_forward.3} parent=11 // pred_region
        _
      $region56: #{clip_forward.3} parent=11 // pred_fallthru
        _
      // Predicated region
      $region57: #{clip_forward.3} parent=11 // pred_check
        %p635 = pneg %p309
      $region58: #{clip_forward.3} parent=11 // pred_check_branch
        %637 = sbr.rel (%p635) target = $region60
      $region59: #{clip_forward.3} parent=11 // pred_region
        _
      $region60: #{clip_forward.3} parent=11 // pred_fallthru
        _
      // Predicated region
      $region61: #{clip_forward.3} parent=11 // pred_check
        %p638 = pneg %p330
      $region62: #{clip_forward.3} parent=11 // pred_check_branch
        %640 = sbr.rel (%p638) target = $region64
      $region63: #{clip_forward.3} parent=11 // pred_region
        _
      $region64: #{clip_forward.3} parent=11 // pred_fallthru
        _
      // Predicated region
      $region65: #{clip_forward.3} parent=11 // pred_check
        %p641 = pneg %p351
      $region66: #{clip_forward.3} parent=11 // pred_check_branch
        %643 = sbr.rel (%p641) target = $region68
      $region67: #{clip_forward.3} parent=11 // pred_region
        _
      $region68: #{clip_forward.3} parent=11 // pred_fallthru
        _
      // Predicated region
      $region69: #{clip_forward.3} parent=11 // pred_check
        %p644 = pneg %p372
      $region70: #{clip_forward.3} parent=11 // pred_check_branch
        %646 = sbr.rel (%p644) target = $region72
      $region71: #{clip_forward.3} parent=11 // pred_region
        _
      $region72: #{clip_forward.3} parent=11 // pred_fallthru
        _
      // Predicated region
      $region73: #{clip_forward.3} parent=11 // pred_check
        %p647 = pneg %p393
      $region74: #{clip_forward.3} parent=11 // pred_check_branch
        %649 = sbr.rel (%p647) target = $region76
      $region75: #{clip_forward.3} parent=11 // pred_region
        _
      $region76: #{clip_forward.3} parent=11 // pred_fallthru
        _
      // Predicated region
      $region77: #{clip_forward.3} parent=11 // pred_check
        %p650 = pneg %p414
      $region78: #{clip_forward.3} parent=11 // pred_check_branch
        %652 = sbr.rel (%p650) target = $region80
      $region79: #{clip_forward.3} parent=11 // pred_region
        _
      $region80: #{clip_forward.3} parent=11 // pred_fallthru
        _
      // Predicated region
      $region81: #{clip_forward.3} parent=11 // pred_check
        %p653 = pneg %p435
      $region82: #{clip_forward.3} parent=11 // pred_check_branch
        %655 = sbr.rel (%p653) target = $region84
      $region83: #{clip_forward.3} parent=11 // pred_region
        _
      $region84: #{clip_forward.3} parent=11 // pred_fallthru
        _
      // Predicated region
      $region85: #{clip_forward.3} parent=11 // pred_check
        %p656 = pneg %p456
      $region86: #{clip_forward.3} parent=11 // pred_check_branch
        %658 = sbr.rel (%p656) target = $region88
      $region87: #{clip_forward.3} parent=11 // pred_region
        _
      $region88: #{clip_forward.3} parent=11 // pred_fallthru
        _
      // Predicated region
      $region89: #{clip_forward.3} parent=11 // pred_check
        %p659 = pneg %p477
      $region90: #{clip_forward.3} parent=11 // pred_check_branch
        %661 = sbr.rel (%p659) target = $region92
      $region91: #{clip_forward.3} parent=11 // pred_region
        _
      $region92: #{clip_forward.3} parent=11 // pred_fallthru
        _
      // Predicated region
      $region93: #{clip_forward.3} parent=11 // pred_check
        %p662 = pneg %p498
      $region94: #{clip_forward.3} parent=11 // pred_check_branch
        %664 = sbr.rel (%p662) target = $region96
      $region95: #{clip_forward.3} parent=11 // pred_region
        _
      $region96: #{clip_forward.3} parent=11 // pred_fallthru
        _
      // Predicated region
      $region97: #{clip_forward.3} parent=11 // pred_check
        %p665 = pneg %p519
      $region98: #{clip_forward.3} parent=11 // pred_check_branch
        %667 = sbr.rel (%p665) target = $region100
      $region99: #{clip_forward.3} parent=11 // pred_region
        _
      $region100: #{clip_forward.3} parent=11 // pred_fallthru
        _
      // Predicated region
      $region101: #{clip_forward.3} parent=11 // pred_check
        %p668 = pneg %p540
      $region102: #{clip_forward.3} parent=11 // pred_check_branch
        %670 = sbr.rel (%p668) target = $region104
      $region103: #{clip_forward.3} parent=11 // pred_region
        _
      $region104: #{clip_forward.3} parent=11 // pred_fallthru
        _
      // Predicated region
      $region105: #{clip_forward.3} parent=11 // pred_check
        %p671 = pneg %p561
      $region106: #{clip_forward.3} parent=11 // pred_check_branch
        %673 = sbr.rel (%p671) target = $region108
      $region107: #{clip_forward.3} parent=11 // pred_region
        _
      $region108: #{clip_forward.3} parent=11 // pred_fallthru
        _
    $region12: #{clip_forward.3} parent=5 // pred_fallthru
      _
    %p674 = scmp.lt.s32.totalorder %s31, 2
    // Predicated region
    $region109: #{clip_forward.3} parent=5 // pred_check
      %p675 = pneg %p674
    $region110: #{clip_forward.3} parent=5 // pred_check_branch
      %677 = sbr.rel (%p675) target = $region112
    $region111: #{clip_forward.3} parent=5 // pred_region
      // Predicated region
      $region113: #{clip_forward.3} parent=111 // pred_check
        %p678 = pneg %p51
      $region114: #{clip_forward.3} parent=111 // pred_check_branch
        %680 = sbr.rel (%p678) target = $region116
      $region115: #{clip_forward.3} parent=111 // pred_region
        %p681 = scmp.lt.s32.totalorder %s31, 1
        %s682 = scalar_select %p681, %s31, 1
        %s683 = smul.addr %s682, 2
        %s684 = smul.addr %s683, 4
        %s685 = scalar_lea.vmem %s0, %s684
      $region116: #{clip_forward.3} parent=111 // pred_fallthru
        _
    $region112: #{clip_forward.3} parent=5 // pred_fallthru
      _
    %p686 = scmp.le.s32.totalorder 1, %s31
    %p687 = scmp.lt.s32.totalorder %s31, 3
    %p688 = pnand %p686, %p687
    %p689 = pneg %p688
    // Predicated region
    $region117: #{clip_forward.3} parent=5 // pred_check
      _
    $region118: #{clip_forward.3} parent=5 // pred_check_branch
      %691 = sbr.rel (%p688) target = $region120
    $region119: #{clip_forward.3} parent=5 // pred_region
      %s692 = ssub.s32 %s31, 1
      %p693 = scmp.lt.s32.totalorder %s36, 1
      %s694 = scalar_select %p693, %s36, 1
      %s695 = smul.addr %s694, 2
      %s696 = smul.addr %s695, 4
      %s697 = scalar_lea.vmem %s0, %s696
      %p698 = pneg %p57
      %p699 = pneg %p54
      %p700 = pneg %p78
      %p701 = pneg %p75
      %p702 = pneg %p99
      %p703 = pneg %p96
      %p704 = pneg %p120
      %p705 = pneg %p117
      %p706 = pneg %p141
      %p707 = pneg %p138
      %p708 = pneg %p162
      %p709 = pneg %p159
      %p710 = pneg %p183
      %p711 = pneg %p180
      %p712 = pneg %p204
      %p713 = pneg %p201
      %p714 = pneg %p225
      %p715 = pneg %p222
      %p716 = pneg %p246
      %p717 = pneg %p243
      %p718 = pneg %p267
      %p719 = pneg %p264
      %p720 = pneg %p288
      %p721 = pneg %p285
      %p722 = pneg %p309
      %p723 = pneg %p306
      %p724 = pneg %p330
      %p725 = pneg %p327
      %p726 = pneg %p351
      %p727 = pneg %p348
      %p728 = pneg %p372
      %p729 = pneg %p369
      %p730 = pneg %p393
      %p731 = pneg %p390
      %p732 = pneg %p414
      %p733 = pneg %p411
      %p734 = pneg %p435
      %p735 = pneg %p432
      %p736 = pneg %p456
      %p737 = pneg %p453
      %p738 = pneg %p477
      %p739 = pneg %p474
      %p740 = pneg %p498
      %p741 = pneg %p495
      %p742 = pneg %p519
      %p743 = pneg %p516
      %p744 = pneg %p540
      %p745 = pneg %p537
      %p746 = pneg %p561
      %p747 = pneg %p558
      %p748 = pneg %p587
      %p749 = pneg %p584
      %p750 = scmp.lt.s32.totalorder %s36, 1
      %s751 = scalar_select %p750, %s36, 1
      %s752 = scalar_lea.vmem %s25, %s751
      %p753 = scmp.lt.s32.totalorder %s36, 1
      %s754 = scalar_select %p753, %s36, 1
      %s755 = smul.addr %s754, 2
      %s756 = smul.addr %s755, 4
      %s757 = scalar_lea.vmem %s0, %s756
      %p758 = scmp.lt.s32.totalorder %s36, 1
      %s759 = scalar_select %p758, %s36, 1
      %s760 = scalar_lea.vmem %s25, %s759
      %v761 = vld [vmem:[%s757] sm:$0xff]
      %v762 = vld [vmem:[%s1] sm:$0xff]
      %v763 = vld [vmem:[%s1 + $0x8] sm:$0xff]
      %v764 = vld [vmem:[%s1 + $0x10] sm:$0xff]
      %v765 = vld [vmem:[%s1 + $0x18] sm:$0xff]
      %v766 = vld [vmem:[%s1 + $0x20] sm:$0xff]
      %v767 = vld [vmem:[%s1 + $0x28] sm:$0xff]
      %v768 = vld [vmem:[%s1 + $0x30] sm:$0xff]
      %v769 = vld [vmem:[%s1 + $0x38] sm:$0xff]
      %v770 = vld [vmem:[%s1 + $0x40] sm:$0xff]
      %v771 = vld [vmem:[%s1 + $0x48] sm:$0xff]
      %v772 = vld [vmem:[%s1 + $0x50] sm:$0xff]
      %v773 = vld [vmem:[%s1 + $0x58] sm:$0xff]
      %v774 = vld [vmem:[%s1 + $0x60] sm:$0xff]
      %v775 = vld [vmem:[%s1 + $0x68] sm:$0xff]
      %v776 = vld [vmem:[%s1 + $0x70] sm:$0xff]
      %v777 = vld [vmem:[%s1 + $0x78] sm:$0xff]
      %v778 = vld [vmem:[%s1 + $0x80] sm:$0xff]
      %v779 = vld [vmem:[%s1 + $0x88] sm:$0xff]
      %v780 = vld [vmem:[%s1 + $0x90] sm:$0xff]
      %v781 = vld [vmem:[%s1 + $0x98] sm:$0xff]
      %v782 = vld [vmem:[%s1 + $0xa0] sm:$0xff]
      %v783 = vld [vmem:[%s1 + $0xa8] sm:$0xff]
      %v784 = vld [vmem:[%s1 + $0xb0] sm:$0xff]
      %v785 = vld [vmem:[%s1 + $0xb8] sm:$0xff]
      %v787 = vcombine.high %v761, %v761
      %vm788 = vcmask 523264
      %v789 = vsel %vm788, %v787, 0
      %791 = vmatprep.subr.mxu0 0.0
      %792 = vmatpush1.msra.mxu0 %v762
      %793 = vmatprep.subr.mxu0 0.0
      %794 = vmatpush1.msra.mxu0 %v763
      %795 = vmatprep.subr.mxu0 0.0
      %796 = vmatpush1.msra.mxu0 %v764
      %797 = vmatprep.subr.mxu0 0.0
      %798 = vmatpush1.msra.mxu0 %v765
      %799 = vmatprep.subr.mxu0 0.0
      %800 = vmatpush1.msra.mxu0 %v766
      %801 = vmatprep.subr.mxu0 0.0
      %802 = vmatpush1.msra.mxu0 %v767
      %803 = vmatprep.subr.mxu0 0.0
      %804 = vmatpush1.msra.mxu0 %v768
      %805 = vmatprep.subr.mxu0 0.0
      %806 = vmatpush1.msra.mxu0 %v769
      %807 = vmatprep.subr.mxu0 0.0
      %808 = vmatpush1.msra.mxu0 %v770
      %809 = vmatprep.subr.mxu0 0.0
      %810 = vmatpush1.msra.mxu0 %v771
      %811 = vmatprep.subr.mxu0 0.0
      %812 = vmatpush1.msra.mxu0 %v772
      %813 = vmatprep.subr.mxu0 0.0
      %814 = vmatpush1.msra.mxu0 %v773
      %815 = vmatprep.subr.mxu0 0.0
      %816 = vmatpush1.msra.mxu0 %v774
      %817 = vmatprep.subr.mxu0 0.0
      %818 = vmatpush1.msra.mxu0 %v775
      %819 = vmatprep.subr.mxu0 0.0
      %820 = vmatpush1.msra.mxu0 %v776
      %821 = vmatprep.subr.mxu0 0.0
      %822 = vmatpush1.msra.mxu0 %v777
      %823 = vmatprep.subr.mxu0 0.0
      %824 = vmatpush1.msra.mxu0 %v778
      %825 = vmatprep.subr.mxu0 0.0
      %826 = vmatpush1.msra.mxu0 %v779
      %827 = vmatprep.subr.mxu0 0.0
      %828 = vmatpush1.msra.mxu0 %v780
      %829 = vmatprep.subr.mxu0 0.0
      %830 = vmatpush1.msra.mxu0 %v781
      %831 = vmatprep.subr.mxu0 0.0
      %832 = vmatpush1.msra.mxu0 %v782
      %833 = vmatprep.subr.mxu0 0.0
      %834 = vmatpush1.msra.mxu0 %v783
      %835 = vmatprep.subr.mxu0 0.0
      %836 = vmatpush1.msra.mxu0 %v784
      %837 = vmatprep.subr.mxu0 0.0
      %838 = vmatpush1.msra.mxu0 %v785
      %839 = vmatprep.subr.mxu0 0.0
      %840 = vmatpush1.msra.mxu0 0.0
      %841 = vmatprep.subr.mxu0 0.0
      %842 = vmatpush1.msra.mxu0 0.0
      %843 = vmatprep.subr.mxu0 0.0
      %844 = vmatpush1.msra.mxu0 0.0
      %845 = vmatprep.subr.mxu0 0.0
      %846 = vmatpush1.msra.mxu0 0.0
      %847 = vmatprep.subr.mxu0 0.0
      %848 = vmatpush1.msra.mxu0 0.0
      %849 = vmatprep.subr.mxu0 0.0
      %850 = vmatpush1.msra.mxu0 0.0
      %851 = vmatprep.subr.mxu0 0.0
      %852 = vmatpush1.msra.mxu0 0.0
      %853 = vmatprep.subr.mxu0 0.0
      %854 = vmatpush1.msra.mxu0 0.0
      %855 = vmatprep.mubr.f32.mxu0 %v789
      %856 = vmatmul.mubr.f32.gmra.mrb[0].mxu0 %v761
      %v857 = vpop.f32.mrb[0].mxu0
      %v858 = vadd.f32 0.0, %v857
      %v859 = vpop.f32.mrb[0].mxu0
      %860 = vdwg.mxu0
      %v861 = vld [vmem:[%s2] sm:$0x1f]
      %v862 = vld [vmem:[%s3] sm:$0x1f]
      %vm863 = vcmask 31744
      %v865 = vsel %vm863, %v861, 0
      %vm867 = vcmask 1043456
      %v869 = vsel %vm867, %v858, 0
      %871 = vmatprep.subr.mxu0 0.0
      %872 = vmatpush1.msra.mxu0 %v869
      %873 = vmatprep.subr.mxu0 0.0
      %874 = vmatpush1.msra.mxu0 0.0
      %875 = vmatprep.subr.mxu0 0.0
      %876 = vmatpush1.msra.mxu0 0.0
      %877 = vmatprep.subr.mxu0 0.0
      %878 = vmatpush1.msra.mxu0 0.0
      %879 = vmatprep.subr.mxu0 0.0
      %880 = vmatpush1.msra.mxu0 0.0
      %881 = vmatprep.subr.mxu0 0.0
      %882 = vmatpush1.msra.mxu0 0.0
      %883 = vmatprep.subr.mxu0 0.0
      %884 = vmatpush1.msra.mxu0 0.0
      %885 = vmatprep.subr.mxu0 0.0
      %886 = vmatpush1.msra.mxu0 0.0
      %887 = vmatprep.subr.mxu0 0.0
      %888 = vmatpush1.msra.mxu0 0.0
      %889 = vmatprep.subr.mxu0 0.0
      %890 = vmatpush1.msra.mxu0 0.0
      %891 = vmatprep.subr.mxu0 0.0
      %892 = vmatpush1.msra.mxu0 0.0
      %893 = vmatprep.subr.mxu0 0.0
      %894 = vmatpush1.msra.mxu0 0.0
      %895 = vmatprep.subr.mxu0 0.0
      %896 = vmatpush1.msra.mxu0 0.0
      %897 = vmatprep.subr.mxu0 0.0
      %898 = vmatpush1.msra.mxu0 0.0
      %899 = vmatprep.subr.mxu0 0.0
      %900 = vmatpush1.msra.mxu0 0.0
      %901 = vmatprep.subr.mxu0 0.0
      %902 = vmatpush1.msra.mxu0 0.0
      %903 = vmatprep.subr.mxu0 0.0
      %904 = vmatpush1.msra.mxu0 0.0
      %905 = vmatprep.subr.mxu0 0.0
      %906 = vmatpush1.msra.mxu0 0.0
      %907 = vmatprep.subr.mxu0 0.0
      %908 = vmatpush1.msra.mxu0 0.0
      %909 = vmatprep.subr.mxu0 0.0
      %910 = vmatpush1.msra.mxu0 0.0
      %911 = vmatprep.subr.mxu0 0.0
      %912 = vmatpush1.msra.mxu0 0.0
      %913 = vmatprep.subr.mxu0 0.0
      %914 = vmatpush1.msra.mxu0 0.0
      %915 = vmatprep.subr.mxu0 0.0
      %916 = vmatpush1.msra.mxu0 0.0
      %917 = vmatprep.subr.mxu0 0.0
      %918 = vmatpush1.msra.mxu0 0.0
      %919 = vmatprep.subr.mxu0 0.0
      %920 = vmatpush1.msra.mxu0 0.0
      %921 = vmatprep.subr.mxu0 0.0
      %922 = vmatpush1.msra.mxu0 0.0
      %923 = vmatprep.subr.mxu0 0.0
      %924 = vmatpush1.msra.mxu0 0.0
      %925 = vmatprep.subr.mxu0 0.0
      %926 = vmatpush1.msra.mxu0 0.0
      %927 = vmatprep.subr.mxu0 0.0
      %928 = vmatpush1.msra.mxu0 0.0
      %929 = vmatprep.subr.mxu0 0.0
      %930 = vmatpush1.msra.mxu0 0.0
      %931 = vmatprep.subr.mxu0 0.0
      %932 = vmatpush1.msra.mxu0 0.0
      %933 = vmatprep.subr.mxu0 0.0
      %934 = vmatpush1.msra.mxu0 0.0
      %935 = vmatprep.mubr.f32.mxu0 0.0
      %936 = vmatmul.mubr.f32.gmra.mrb[0].mxu0 %v865
      %v937 = vpop.f32.mrb[0].mxu0
      %v938 = vadd.f32 %v862, %v937
      %v939 = vpop.f32.mrb[0].mxu0
      %940 = vdwg.mxu0
      %v941 = vld [vmem:[%s4] sm:$0x1]
      %v942 = vld [vmem:[%s5] sm:$0x1]
      %vm943 = vcmask 520192
      %v944 = vsel %vm943, %v938, 0.0
      %945 = vadd.xlane.f32.xlu0 %v944
      %v946 = vpop.xlane.xlu0 %945
      %v947 = vrcp.pop 64.0
      %v948 = vmul.f32 %v946, %v947
      %v949 = vsub.f32 %v938, %v948
      %v950 = vmul.f32 %v949, %v949
      %v951 = vsel %vm943, %v950, 0.0
      %952 = vadd.xlane.f32.xlu0 %v951
      %v953 = vpop.xlane.xlu0 %952
      %v954 = vmul.f32 %v953, %v947
      %v955 = vadd.f32 %v954, 1e-05
      %v956 = vrsqrt.pop %v955
      %v957 = vmul.f32 %v949, %v956
      %v959 = vlaneseq
      %v960 = vshrl.u32 %v959, 7
      %v961 = vsub.s32 0, %v960
      %v962 = vrot.slane %v941, %v961
      %v964 = vmul.f32 %v957, %v962
      %v966 = vlaneseq
      %v967 = vshrl.u32 %v966, 7
      %v968 = vsub.s32 0, %v967
      %v969 = vrot.slane %v942, %v968
      %v971 = vadd.f32 %v964, %v969
      %v972 = vld [vmem:[%s6] sm:$0x1]
      %v973 = vld [vmem:[%s7] sm:$0x1]
      %v974 = vsel %vm943, %v971, 0.0
      %975 = vadd.xlane.f32.xlu0 %v974
      %v976 = vpop.xlane.xlu0 %975
      %v977 = vmul.f32 %v976, %v947
      %v978 = vsub.f32 %v971, %v977
      %v979 = vmul.f32 %v978, %v978
      %v980 = vsel %vm943, %v979, 0.0
      %981 = vadd.xlane.f32.xlu0 %v980
      %v982 = vpop.xlane.xlu0 %981
      %v983 = vmul.f32 %v982, %v947
      %v984 = vadd.f32 %v983, 1e-05
      %v985 = vrsqrt.pop %v984
      %v986 = vmul.f32 %v978, %v985
      %v988 = vlaneseq
      %v989 = vshrl.u32 %v988, 7
      %v990 = vsub.s32 0, %v989
      %v991 = vrot.slane %v972, %v990
      %v993 = vmul.f32 %v986, %v991
      %v995 = vlaneseq
      %v996 = vshrl.u32 %v995, 7
      %v997 = vsub.s32 0, %v996
      %v998 = vrot.slane %v973, %v997
      %v1000 = vadd.f32 %v993, %v998
      %v1001 = vld [vmem:[%s15] sm:$0x1]
      %v1002 = vld [vmem:[%s8] sm:$0xff]
      %v1003 = vld [vmem:[%s8 + $0x8] sm:$0xff]
      %v1004 = vld [vmem:[%s8 + $0x10] sm:$0xff]
      %v1005 = vld [vmem:[%s8 + $0x18] sm:$0xff]
      %v1006 = vld [vmem:[%s8 + $0x20] sm:$0xff]
      %v1007 = vld [vmem:[%s8 + $0x28] sm:$0xff]
      %v1008 = vld [vmem:[%s8 + $0x30] sm:$0xff]
      %v1009 = vld [vmem:[%s8 + $0x38] sm:$0xff]
      %v1010 = vld [vmem:[%s9] sm:$0x1]
      %v1012 = vlaneseq
      %v1013 = vshrl.u32 %v1012, 7
      %v1014 = vsub.s32 0, %v1013
      %v1015 = vrot.slane %v1010, %v1014
      %v1018 = vsel %vm788, %v1000, 0
      %1020 = vmatprep.subr.mxu0 0.0
      %1021 = vmatpush1.msra.mxu0 %v1002
      %1022 = vmatprep.subr.mxu0 0.0
      %1023 = vmatpush1.msra.mxu0 %v1003
      %1024 = vmatprep.subr.mxu0 0.0
      %1025 = vmatpush1.msra.mxu0 %v1004
      %1026 = vmatprep.subr.mxu0 0.0
      %1027 = vmatpush1.msra.mxu0 %v1005
      %1028 = vmatprep.subr.mxu0 0.0
      %1029 = vmatpush1.msra.mxu0 %v1006
      %1030 = vmatprep.subr.mxu0 0.0
      %1031 = vmatpush1.msra.mxu0 %v1007
      %1032 = vmatprep.subr.mxu0 0.0
      %1033 = vmatpush1.msra.mxu0 %v1008
      %1034 = vmatprep.subr.mxu0 0.0
      %1035 = vmatpush1.msra.mxu0 %v1009
      %1036 = vmatprep.subr.mxu0 0.0
      %1037 = vmatpush1.msra.mxu0 0.0
      %1038 = vmatprep.subr.mxu0 0.0
      %1039 = vmatpush1.msra.mxu0 0.0
      %1040 = vmatprep.subr.mxu0 0.0
      %1041 = vmatpush1.msra.mxu0 0.0
      %1042 = vmatprep.subr.mxu0 0.0
      %1043 = vmatpush1.msra.mxu0 0.0
      %1044 = vmatprep.subr.mxu0 0.0
      %1045 = vmatpush1.msra.mxu0 0.0
      %1046 = vmatprep.subr.mxu0 0.0
      %1047 = vmatpush1.msra.mxu0 0.0
      %1048 = vmatprep.subr.mxu0 0.0
      %1049 = vmatpush1.msra.mxu0 0.0
      %1050 = vmatprep.subr.mxu0 0.0
      %1051 = vmatpush1.msra.mxu0 0.0
      %1052 = vmatprep.subr.mxu0 0.0
      %1053 = vmatpush1.msra.mxu0 0.0
      %1054 = vmatprep.subr.mxu0 0.0
      %1055 = vmatpush1.msra.mxu0 0.0
      %1056 = vmatprep.subr.mxu0 0.0
      %1057 = vmatpush1.msra.mxu0 0.0
      %1058 = vmatprep.subr.mxu0 0.0
      %1059 = vmatpush1.msra.mxu0 0.0
      %1060 = vmatprep.subr.mxu0 0.0
      %1061 = vmatpush1.msra.mxu0 0.0
      %1062 = vmatprep.subr.mxu0 0.0
      %1063 = vmatpush1.msra.mxu0 0.0
      %1064 = vmatprep.subr.mxu0 0.0
      %1065 = vmatpush1.msra.mxu0 0.0
      %1066 = vmatprep.subr.mxu0 0.0
      %1067 = vmatpush1.msra.mxu0 0.0
      %1068 = vmatprep.subr.mxu0 0.0
      %1069 = vmatpush1.msra.mxu0 0.0
      %1070 = vmatprep.subr.mxu0 0.0
      %1071 = vmatpush1.msra.mxu0 0.0
      %1072 = vmatprep.subr.mxu0 0.0
      %1073 = vmatpush1.msra.mxu0 0.0
      %1074 = vmatprep.subr.mxu0 0.0
      %1075 = vmatpush1.msra.mxu0 0.0
      %1076 = vmatprep.subr.mxu0 0.0
      %1077 = vmatpush1.msra.mxu0 0.0
      %1078 = vmatprep.subr.mxu0 0.0
      %1079 = vmatpush1.msra.mxu0 0.0
      %1080 = vmatprep.subr.mxu0 0.0
      %1081 = vmatpush1.msra.mxu0 0.0
      %1082 = vmatprep.subr.mxu0 0.0
      %1083 = vmatpush1.msra.mxu0 0.0
      %1084 = vmatprep.mubr.f32.mxu0 0.0
      %1085 = vmatmul.mubr.f32.gmra.mrb[0].mxu0 %v1018
      %v1086 = vpop.f32.mrb[0].mxu0
      %v1087 = vadd.f32 %v1015, %v1086
      %v1088 = vpop.f32.mrb[0].mxu0
      %1089 = vdwg.mxu0
      %v1090 = vld [vmem:[%s10] sm:$0xff]
      %v1091 = vld [vmem:[%s10 + $0x8] sm:$0xff]
      %v1092 = vld [vmem:[%s10 + $0x10] sm:$0xff]
      %v1093 = vld [vmem:[%s10 + $0x18] sm:$0xff]
      %v1094 = vld [vmem:[%s10 + $0x20] sm:$0xff]
      %v1095 = vld [vmem:[%s10 + $0x28] sm:$0xff]
      %v1096 = vld [vmem:[%s10 + $0x30] sm:$0xff]
      %v1097 = vld [vmem:[%s10 + $0x38] sm:$0xff]
      %v1098 = vld [vmem:[%s11] sm:$0x1]
      %v1100 = vlaneseq
      %v1101 = vshrl.u32 %v1100, 7
      %v1102 = vsub.s32 0, %v1101
      %v1103 = vrot.slane %v1098, %v1102
      %1105 = vmatprep.subr.mxu0 0.0
      %1106 = vmatpush1.msra.mxu0 %v1090
      %1107 = vmatprep.subr.mxu0 0.0
      %1108 = vmatpush1.msra.mxu0 %v1091
      %1109 = vmatprep.subr.mxu0 0.0
      %1110 = vmatpush1.msra.mxu0 %v1092
      %1111 = vmatprep.subr.mxu0 0.0
      %1112 = vmatpush1.msra.mxu0 %v1093
      %1113 = vmatprep.subr.mxu0 0.0
      %1114 = vmatpush1.msra.mxu0 %v1094
      %1115 = vmatprep.subr.mxu0 0.0
      %1116 = vmatpush1.msra.mxu0 %v1095
      %1117 = vmatprep.subr.mxu0 0.0
      %1118 = vmatpush1.msra.mxu0 %v1096
      %1119 = vmatprep.subr.mxu0 0.0
      %1120 = vmatpush1.msra.mxu0 %v1097
      %1121 = vmatprep.subr.mxu0 0.0
      %1122 = vmatpush1.msra.mxu0 0.0
      %1123 = vmatprep.subr.mxu0 0.0
      %1124 = vmatpush1.msra.mxu0 0.0
      %1125 = vmatprep.subr.mxu0 0.0
      %1126 = vmatpush1.msra.mxu0 0.0
      %1127 = vmatprep.subr.mxu0 0.0
      %1128 = vmatpush1.msra.mxu0 0.0
      %1129 = vmatprep.subr.mxu0 0.0
      %1130 = vmatpush1.msra.mxu0 0.0
      %1131 = vmatprep.subr.mxu0 0.0
      %1132 = vmatpush1.msra.mxu0 0.0
      %1133 = vmatprep.subr.mxu0 0.0
      %1134 = vmatpush1.msra.mxu0 0.0
      %1135 = vmatprep.subr.mxu0 0.0
      %1136 = vmatpush1.msra.mxu0 0.0
      %1137 = vmatprep.subr.mxu0 0.0
      %1138 = vmatpush1.msra.mxu0 0.0
      %1139 = vmatprep.subr.mxu0 0.0
      %1140 = vmatpush1.msra.mxu0 0.0
      %1141 = vmatprep.subr.mxu0 0.0
      %1142 = vmatpush1.msra.mxu0 0.0
      %1143 = vmatprep.subr.mxu0 0.0
      %1144 = vmatpush1.msra.mxu0 0.0
      %1145 = vmatprep.subr.mxu0 0.0
      %1146 = vmatpush1.msra.mxu0 0.0
      %1147 = vmatprep.subr.mxu0 0.0
      %1148 = vmatpush1.msra.mxu0 0.0
      %1149 = vmatprep.subr.mxu0 0.0
      %1150 = vmatpush1.msra.mxu0 0.0
      %1151 = vmatprep.subr.mxu0 0.0
      %1152 = vmatpush1.msra.mxu0 0.0
      %1153 = vmatprep.subr.mxu0 0.0
      %1154 = vmatpush1.msra.mxu0 0.0
      %1155 = vmatprep.subr.mxu0 0.0
      %1156 = vmatpush1.msra.mxu0 0.0
      %1157 = vmatprep.subr.mxu0 0.0
      %1158 = vmatpush1.msra.mxu0 0.0
      %1159 = vmatprep.subr.mxu0 0.0
      %1160 = vmatpush1.msra.mxu0 0.0
      %1161 = vmatprep.subr.mxu0 0.0
      %1162 = vmatpush1.msra.mxu0 0.0
      %1163 = vmatprep.subr.mxu0 0.0
      %1164 = vmatpush1.msra.mxu0 0.0
      %1165 = vmatprep.subr.mxu0 0.0
      %1166 = vmatpush1.msra.mxu0 0.0
      %1167 = vmatprep.subr.mxu0 0.0
      %1168 = vmatpush1.msra.mxu0 0.0
      %1169 = vmatprep.mubr.f32.mxu0 0.0
      %1170 = vmatmul.mubr.f32.gmra.mrb[0].mxu0 %v1018
      %v1171 = vpop.f32.mrb[0].mxu0
      %v1172 = vadd.f32 %v1103, %v1171
      %v1173 = vpop.f32.mrb[0].mxu0
      %1174 = vdwg.mxu0
      %v1175 = vld [vmem:[%s12] sm:$0xff]
      %v1176 = vld [vmem:[%s12 + $0x8] sm:$0xff]
      %v1177 = vld [vmem:[%s12 + $0x10] sm:$0xff]
      %v1178 = vld [vmem:[%s12 + $0x18] sm:$0xff]
      %v1179 = vld [vmem:[%s12 + $0x20] sm:$0xff]
      %v1180 = vld [vmem:[%s12 + $0x28] sm:$0xff]
      %v1181 = vld [vmem:[%s12 + $0x30] sm:$0xff]
      %v1182 = vld [vmem:[%s12 + $0x38] sm:$0xff]
      %v1183 = vld [vmem:[%s13] sm:$0x1]
      %v1185 = vlaneseq
      %v1186 = vshrl.u32 %v1185, 7
      %v1187 = vsub.s32 0, %v1186
      %v1188 = vrot.slane %v1183, %v1187
      %1190 = vmatprep.subr.mxu0 0.0
      %1191 = vmatpush1.msra.mxu0 %v1175
      %1192 = vmatprep.subr.mxu0 0.0
      %1193 = vmatpush1.msra.mxu0 %v1176
      %1194 = vmatprep.subr.mxu0 0.0
      %1195 = vmatpush1.msra.mxu0 %v1177
      %1196 = vmatprep.subr.mxu0 0.0
      %1197 = vmatpush1.msra.mxu0 %v1178
      %1198 = vmatprep.subr.mxu0 0.0
      %1199 = vmatpush1.msra.mxu0 %v1179
      %1200 = vmatprep.subr.mxu0 0.0
      %1201 = vmatpush1.msra.mxu0 %v1180
      %1202 = vmatprep.subr.mxu0 0.0
      %1203 = vmatpush1.msra.mxu0 %v1181
      %1204 = vmatprep.subr.mxu0 0.0
      %1205 = vmatpush1.msra.mxu0 %v1182
      %1206 = vmatprep.subr.mxu0 0.0
      %1207 = vmatpush1.msra.mxu0 0.0
      %1208 = vmatprep.subr.mxu0 0.0
      %1209 = vmatpush1.msra.mxu0 0.0
      %1210 = vmatprep.subr.mxu0 0.0
      %1211 = vmatpush1.msra.mxu0 0.0
      %1212 = vmatprep.subr.mxu0 0.0
      %1213 = vmatpush1.msra.mxu0 0.0
      %1214 = vmatprep.subr.mxu0 0.0
      %1215 = vmatpush1.msra.mxu0 0.0
      %1216 = vmatprep.subr.mxu0 0.0
      %1217 = vmatpush1.msra.mxu0 0.0
      %1218 = vmatprep.subr.mxu0 0.0
      %1219 = vmatpush1.msra.mxu0 0.0
      %1220 = vmatprep.subr.mxu0 0.0
      %1221 = vmatpush1.msra.mxu0 0.0
      %1222 = vmatprep.subr.mxu0 0.0
      %1223 = vmatpush1.msra.mxu0 0.0
      %1224 = vmatprep.subr.mxu0 0.0
      %1225 = vmatpush1.msra.mxu0 0.0
      %1226 = vmatprep.subr.mxu0 0.0
      %1227 = vmatpush1.msra.mxu0 0.0
      %1228 = vmatprep.subr.mxu0 0.0
      %1229 = vmatpush1.msra.mxu0 0.0
      %1230 = vmatprep.subr.mxu0 0.0
      %1231 = vmatpush1.msra.mxu0 0.0
      %1232 = vmatprep.subr.mxu0 0.0
      %1233 = vmatpush1.msra.mxu0 0.0
      %1234 = vmatprep.subr.mxu0 0.0
      %1235 = vmatpush1.msra.mxu0 0.0
      %1236 = vmatprep.subr.mxu0 0.0
      %1237 = vmatpush1.msra.mxu0 0.0
      %1238 = vmatprep.subr.mxu0 0.0
      %1239 = vmatpush1.msra.mxu0 0.0
      %1240 = vmatprep.subr.mxu0 0.0
      %1241 = vmatpush1.msra.mxu0 0.0
      %1242 = vmatprep.subr.mxu0 0.0
      %1243 = vmatpush1.msra.mxu0 0.0
      %1244 = vmatprep.subr.mxu0 0.0
      %1245 = vmatpush1.msra.mxu0 0.0
      %1246 = vmatprep.subr.mxu0 0.0
      %1247 = vmatpush1.msra.mxu0 0.0
      %1248 = vmatprep.subr.mxu0 0.0
      %1249 = vmatpush1.msra.mxu0 0.0
      %1250 = vmatprep.subr.mxu0 0.0
      %1251 = vmatpush1.msra.mxu0 0.0
      %1252 = vmatprep.subr.mxu0 0.0
      %1253 = vmatpush1.msra.mxu0 0.0
      %1254 = vmatprep.mubr.f32.mxu0 0.0
      %1255 = vmatmul.mubr.f32.gmra.mrb[0].mxu0 %v1018
      %v1256 = vpop.f32.mrb[0].mxu0
      %v1257 = vadd.f32 %v1188, %v1256
      %v1258 = vpop.f32.mrb[0].mxu0
      %1259 = vdwg.mxu0
      %v1261 = vsel %vm788, %v1087, 0
      %v1264 = vsel %vm788, %v1172, 0
      %1266 = vmatprep.subr.mxu0 0.0
      %1267 = vmatpush1.xpose.msra.mxu0 %v1264
      %1268 = vmatprep.subr.mxu0 0.0
      %1269 = vmatpush1.xpose.msra.mxu0 0.0
      %1270 = vmatprep.subr.mxu0 0.0
      %1271 = vmatpush1.xpose.msra.mxu0 0.0
      %1272 = vmatprep.subr.mxu0 0.0
      %1273 = vmatpush1.xpose.msra.mxu0 0.0
      %1274 = vmatprep.subr.mxu0 0.0
      %1275 = vmatpush1.xpose.msra.mxu0 0.0
      %1276 = vmatprep.subr.mxu0 0.0
      %1277 = vmatpush1.xpose.msra.mxu0 0.0
      %1278 = vmatprep.subr.mxu0 0.0
      %1279 = vmatpush1.xpose.msra.mxu0 0.0
      %1280 = vmatprep.subr.mxu0 0.0
      %1281 = vmatpush1.xpose.msra.mxu0 0.0
      %1282 = vmatprep.subr.mxu0 0.0
      %1283 = vmatpush1.xpose.msra.mxu0 0.0
      %1284 = vmatprep.subr.mxu0 0.0
      %1285 = vmatpush1.xpose.msra.mxu0 0.0
      %1286 = vmatprep.subr.mxu0 0.0
      %1287 = vmatpush1.xpose.msra.mxu0 0.0
      %1288 = vmatprep.subr.mxu0 0.0
      %1289 = vmatpush1.xpose.msra.mxu0 0.0
      %1290 = vmatprep.subr.mxu0 0.0
      %1291 = vmatpush1.xpose.msra.mxu0 0.0
      %1292 = vmatprep.subr.mxu0 0.0
      %1293 = vmatpush1.xpose.msra.mxu0 0.0
      %1294 = vmatprep.subr.mxu0 0.0
      %1295 = vmatpush1.xpose.msra.mxu0 0.0
      %1296 = vmatprep.subr.mxu0 0.0
      %1297 = vmatpush1.xpose.msra.mxu0 0.0
      %1298 = vmatprep.subr.mxu0 0.0
      %1299 = vmatpush1.xpose.msra.mxu0 0.0
      %1300 = vmatprep.subr.mxu0 0.0
      %1301 = vmatpush1.xpose.msra.mxu0 0.0
      %1302 = vmatprep.subr.mxu0 0.0
      %1303 = vmatpush1.xpose.msra.mxu0 0.0
      %1304 = vmatprep.subr.mxu0 0.0
      %1305 = vmatpush1.xpose.msra.mxu0 0.0
      %1306 = vmatprep.subr.mxu0 0.0
      %1307 = vmatpush1.xpose.msra.mxu0 0.0
      %1308 = vmatprep.subr.mxu0 0.0
      %1309 = vmatpush1.xpose.msra.mxu0 0.0
      %1310 = vmatprep.subr.mxu0 0.0
      %1311 = vmatpush1.xpose.msra.mxu0 0.0
      %1312 = vmatprep.subr.mxu0 0.0
      %1313 = vmatpush1.xpose.msra.mxu0 0.0
      %1314 = vmatprep.subr.mxu0 0.0
      %1315 = vmatpush1.xpose.msra.mxu0 0.0
      %1316 = vmatprep.subr.mxu0 0.0
      %1317 = vmatpush1.xpose.msra.mxu0 0.0
      %1318 = vmatprep.subr.mxu0 0.0
      %1319 = vmatpush1.xpose.msra.mxu0 0.0
      %1320 = vmatprep.subr.mxu0 0.0
      %1321 = vmatpush1.xpose.msra.mxu0 0.0
      %1322 = vmatprep.subr.mxu0 0.0
      %1323 = vmatpush1.xpose.msra.mxu0 0.0
      %1324 = vmatprep.subr.mxu0 0.0
      %1325 = vmatpush1.xpose.msra.mxu0 0.0
      %1326 = vmatprep.subr.mxu0 0.0
      %1327 = vmatpush1.xpose.msra.mxu0 0.0
      %1328 = vmatprep.subr.mxu0 0.0
      %1329 = vmatpush1.xpose.msra.mxu0 0.0
      %1330 = vmatprep.mubr.f32.mxu0 0.0
      %1331 = vmatmul.mubr.f32.gmra.mrb[0].mxu0 %v1261
      %v1332 = vpop.f32.mrb[0].mxu0
      %v1333 = vadd.f32 0.0, %v1332
      %v1334 = vpop.f32.mrb[0].mxu0
      %1335 = vdwg.mxu0
      %v1336 = vmul.f32 %v1333, 0.125
      %vm1337 = vcmask 36864
      %v1338 = vsel %vm1337, %v1336, -inf
      %1339 = vmax.xlane.f32.xlu0 %v1338
      %v1340 = vpop.xlane.xlu0 %1339
      %v1341 = vsub.f32 %v1336, %v1340
      %v1342 = vmul.f32 %v1341, 1.442695
      %v1343 = vpow.pop %v1342
      %v1344 = vsel %vm1337, %v1343, 0.0
      %1345 = vadd.xlane.f32.xlu0 %v1344
      %v1346 = vpop.xlane.xlu0 %1345
      %v1347 = vrcp.pop %v1346
      %v1348 = vmul.f32 %v1343, %v1347
      %vm1349 = vcmask 39936
      %v1351 = vsel %vm1349, %v1348, 0
      %vm1353 = vcmask 1044480
      %v1355 = vsel %vm1353, %v1257, 0
      %1357 = vmatprep.subr.mxu0 0.0
      %1358 = vmatpush1.msra.mxu0 %v1355
      %1359 = vmatprep.subr.mxu0 0.0
      %1360 = vmatpush1.msra.mxu0 0.0
      %1361 = vmatprep.subr.mxu0 0.0
      %1362 = vmatpush1.msra.mxu0 0.0
      %1363 = vmatprep.subr.mxu0 0.0
      %1364 = vmatpush1.msra.mxu0 0.0
      %1365 = vmatprep.subr.mxu0 0.0
      %1366 = vmatpush1.msra.mxu0 0.0
      %1367 = vmatprep.subr.mxu0 0.0
      %1368 = vmatpush1.msra.mxu0 0.0
      %1369 = vmatprep.subr.mxu0 0.0
      %1370 = vmatpush1.msra.mxu0 0.0
      %1371 = vmatprep.subr.mxu0 0.0
      %1372 = vmatpush1.msra.mxu0 0.0
      %1373 = vmatprep.subr.mxu0 0.0
      %1374 = vmatpush1.msra.mxu0 0.0
      %1375 = vmatprep.subr.mxu0 0.0
      %1376 = vmatpush1.msra.mxu0 0.0
      %1377 = vmatprep.subr.mxu0 0.0
      %1378 = vmatpush1.msra.mxu0 0.0
      %1379 = vmatprep.subr.mxu0 0.0
      %1380 = vmatpush1.msra.mxu0 0.0
      %1381 = vmatprep.subr.mxu0 0.0
      %1382 = vmatpush1.msra.mxu0 0.0
      %1383 = vmatprep.subr.mxu0 0.0
      %1384 = vmatpush1.msra.mxu0 0.0
      %1385 = vmatprep.subr.mxu0 0.0
      %1386 = vmatpush1.msra.mxu0 0.0
      %1387 = vmatprep.subr.mxu0 0.0
      %1388 = vmatpush1.msra.mxu0 0.0
      %1389 = vmatprep.subr.mxu0 0.0
      %1390 = vmatpush1.msra.mxu0 0.0
      %1391 = vmatprep.subr.mxu0 0.0
      %1392 = vmatpush1.msra.mxu0 0.0
      %1393 = vmatprep.subr.mxu0 0.0
      %1394 = vmatpush1.msra.mxu0 0.0
      %1395 = vmatprep.subr.mxu0 0.0
      %1396 = vmatpush1.msra.mxu0 0.0
      %1397 = vmatprep.subr.mxu0 0.0
      %1398 = vmatpush1.msra.mxu0 0.0
      %1399 = vmatprep.subr.mxu0 0.0
      %1400 = vmatpush1.msra.mxu0 0.0
      %1401 = vmatprep.subr.mxu0 0.0
      %1402 = vmatpush1.msra.mxu0 0.0
      %1403 = vmatprep.subr.mxu0 0.0
      %1404 = vmatpush1.msra.mxu0 0.0
      %1405 = vmatprep.subr.mxu0 0.0
      %1406 = vmatpush1.msra.mxu0 0.0
      %1407 = vmatprep.subr.mxu0 0.0
      %1408 = vmatpush1.msra.mxu0 0.0
      %1409 = vmatprep.subr.mxu0 0.0
      %1410 = vmatpush1.msra.mxu0 0.0
      %1411 = vmatprep.subr.mxu0 0.0
      %1412 = vmatpush1.msra.mxu0 0.0
      %1413 = vmatprep.subr.mxu0 0.0
      %1414 = vmatpush1.msra.mxu0 0.0
      %1415 = vmatprep.subr.mxu0 0.0
      %1416 = vmatpush1.msra.mxu0 0.0
      %1417 = vmatprep.subr.mxu0 0.0
      %1418 = vmatpush1.msra.mxu0 0.0
      %1419 = vmatprep.subr.mxu0 0.0
      %1420 = vmatpush1.msra.mxu0 0.0
      %1421 = vmatprep.mubr.f32.mxu0 0.0
      %1422 = vmatmul.mubr.f32.gmra.mrb[0].mxu0 %v1351
      %v1423 = vpop.f32.mrb[0].mxu0
      %v1424 = vadd.f32 0.0, %v1423
      %v1425 = vpop.f32.mrb[0].mxu0
      %1426 = vdwg.mxu0
      %v1427 = vld [vmem:[%s14] sm:$0xff]
      %v1428 = vld [vmem:[%s14 + $0x8] sm:$0xff]
      %v1429 = vld [vmem:[%s14 + $0x10] sm:$0xff]
      %v1430 = vld [vmem:[%s14 + $0x18] sm:$0xff]
      %v1431 = vld [vmem:[%s14 + $0x20] sm:$0xff]
      %v1432 = vld [vmem:[%s14 + $0x28] sm:$0xff]
      %v1433 = vld [vmem:[%s14 + $0x30] sm:$0xff]
      %v1434 = vld [vmem:[%s14 + $0x38] sm:$0xff]
      %v1436 = vsel %vm788, %v1424, 0
      %1438 = vmatprep.subr.mxu0 0.0
      %1439 = vmatpush1.msra.mxu0 %v1427
      %1440 = vmatprep.subr.mxu0 0.0
      %1441 = vmatpush1.msra.mxu0 %v1428
      %1442 = vmatprep.subr.mxu0 0.0
      %1443 = vmatpush1.msra.mxu0 %v1429
      %1444 = vmatprep.subr.mxu0 0.0
      %1445 = vmatpush1.msra.mxu0 %v1430
      %1446 = vmatprep.subr.mxu0 0.0
      %1447 = vmatpush1.msra.mxu0 %v1431
      %1448 = vmatprep.subr.mxu0 0.0
      %1449 = vmatpush1.msra.mxu0 %v1432
      %1450 = vmatprep.subr.mxu0 0.0
      %1451 = vmatpush1.msra.mxu0 %v1433
      %1452 = vmatprep.subr.mxu0 0.0
      %1453 = vmatpush1.msra.mxu0 %v1434
      %1454 = vmatprep.subr.mxu0 0.0
      %1455 = vmatpush1.msra.mxu0 0.0
      %1456 = vmatprep.subr.mxu0 0.0
      %1457 = vmatpush1.msra.mxu0 0.0
      %1458 = vmatprep.subr.mxu0 0.0
      %1459 = vmatpush1.msra.mxu0 0.0
      %1460 = vmatprep.subr.mxu0 0.0
      %1461 = vmatpush1.msra.mxu0 0.0
      %1462 = vmatprep.subr.mxu0 0.0
      %1463 = vmatpush1.msra.mxu0 0.0
      %1464 = vmatprep.subr.mxu0 0.0
      %1465 = vmatpush1.msra.mxu0 0.0
      %1466 = vmatprep.subr.mxu0 0.0
      %1467 = vmatpush1.msra.mxu0 0.0
      %1468 = vmatprep.subr.mxu0 0.0
      %1469 = vmatpush1.msra.mxu0 0.0
      %1470 = vmatprep.subr.mxu0 0.0
      %1471 = vmatpush1.msra.mxu0 0.0
      %1472 = vmatprep.subr.mxu0 0.0
      %1473 = vmatpush1.msra.mxu0 0.0
      %1474 = vmatprep.subr.mxu0 0.0
      %1475 = vmatpush1.msra.mxu0 0.0
      %1476 = vmatprep.subr.mxu0 0.0
      %1477 = vmatpush1.msra.mxu0 0.0
      %1478 = vmatprep.subr.mxu0 0.0
      %1479 = vmatpush1.msra.mxu0 0.0
      %1480 = vmatprep.subr.mxu0 0.0
      %1481 = vmatpush1.msra.mxu0 0.0
      %1482 = vmatprep.subr.mxu0 0.0
      %1483 = vmatpush1.msra.mxu0 0.0
      %1484 = vmatprep.subr.mxu0 0.0
      %1485 = vmatpush1.msra.mxu0 0.0
      %1486 = vmatprep.subr.mxu0 0.0
      %1487 = vmatpush1.msra.mxu0 0.0
      %1488 = vmatprep.subr.mxu0 0.0
      %1489 = vmatpush1.msra.mxu0 0.0
      %1490 = vmatprep.subr.mxu0 0.0
      %1491 = vmatpush1.msra.mxu0 0.0
      %1492 = vmatprep.subr.mxu0 0.0
      %1493 = vmatpush1.msra.mxu0 0.0
      %1494 = vmatprep.subr.mxu0 0.0
      %1495 = vmatpush1.msra.mxu0 0.0
      %1496 = vmatprep.subr.mxu0 0.0
      %1497 = vmatpush1.msra.mxu0 0.0
      %1498 = vmatprep.subr.mxu0 0.0
      %1499 = vmatpush1.msra.mxu0 0.0
      %1500 = vmatprep.subr.mxu0 0.0
      %1501 = vmatpush1.msra.mxu0 0.0
      %1502 = vmatprep.mubr.f32.mxu0 0.0
      %1503 = vmatmul.mubr.f32.gmra.mrb[0].mxu0 %v1436
      %v1504 = vpop.f32.mrb[0].mxu0
      %v1505 = vadd.f32 0.0, %v1504
      %v1506 = vpop.f32.mrb[0].mxu0
      %1507 = vdwg.mxu0
      %v1509 = vlaneseq
      %v1510 = vshrl.u32 %v1509, 7
      %v1511 = vsub.s32 0, %v1510
      %v1512 = vrot.slane %v1001, %v1511
      %v1514 = vadd.f32 %v1512, %v1505
      %v1515 = vadd.f32 %v971, %v1514
      %v1516 = vld [vmem:[%s16] sm:$0x1]
      %v1517 = vld [vmem:[%s17] sm:$0x1]
      %v1518 = vsel %vm943, %v1515, 0.0
      %1519 = vadd.xlane.f32.xlu0 %v1518
      %v1520 = vpop.xlane.xlu0 %1519
      %v1521 = vmul.f32 %v1520, %v947
      %v1522 = vsub.f32 %v1515, %v1521
      %v1523 = vmul.f32 %v1522, %v1522
      %v1524 = vsel %vm943, %v1523, 0.0
      %1525 = vadd.xlane.f32.xlu0 %v1524
      %v1526 = vpop.xlane.xlu0 %1525
      %v1527 = vmul.f32 %v1526, %v947
      %v1528 = vadd.f32 %v1527, 1e-05
      %v1529 = vrsqrt.pop %v1528
      %v1530 = vmul.f32 %v1522, %v1529
      %v1532 = vlaneseq
      %v1533 = vshrl.u32 %v1532, 7
      %v1534 = vsub.s32 0, %v1533
      %v1535 = vrot.slane %v1516, %v1534
      %v1537 = vmul.f32 %v1530, %v1535
      %v1539 = vlaneseq
      %v1540 = vshrl.u32 %v1539, 7
      %v1541 = vsub.s32 0, %v1540
      %v1542 = vrot.slane %v1517, %v1541
      %v1544 = vadd.f32 %v1537, %v1542
      %v1545 = vld [vmem:[%s18] sm:$0xff]
      %v1546 = vld [vmem:[%s18 + $0x8] sm:$0xff]
      %v1547 = vld [vmem:[%s18 + $0x10] sm:$0xff]
      %v1548 = vld [vmem:[%s18 + $0x18] sm:$0xff]
      %v1549 = vld [vmem:[%s18 + $0x20] sm:$0xff]
      %v1550 = vld [vmem:[%s18 + $0x28] sm:$0xff]
      %v1551 = vld [vmem:[%s18 + $0x30] sm:$0xff]
      %v1552 = vld [vmem:[%s18 + $0x38] sm:$0xff]
      %v1553 = vld [vmem:[%s18 + $0x40] sm:$0xff]
      %v1554 = vld [vmem:[%s18 + $0x48] sm:$0xff]
      %v1555 = vld [vmem:[%s18 + $0x50] sm:$0xff]
      %v1556 = vld [vmem:[%s18 + $0x58] sm:$0xff]
      %v1557 = vld [vmem:[%s18 + $0x60] sm:$0xff]
      %v1558 = vld [vmem:[%s18 + $0x68] sm:$0xff]
      %v1559 = vld [vmem:[%s18 + $0x70] sm:$0xff]
      %v1560 = vld [vmem:[%s18 + $0x78] sm:$0xff]
      %v1561 = vld [vmem:[%s19] sm:$0x3]
      %v1563 = vlaneseq
      %v1564 = vshrl.u32 %v1563, 7
      %v1565 = vsub.s32 0, %v1564
      %v1566 = vrot.slane %v1561, %v1565
      %v1567 = vlaneseq
      %v1568 = vshrl.u32 %v1567, 7
      %v1569 = vsub.s32 1, %v1568
      %v1570 = vrot.slane %v1561, %v1569
      %v1574 = vsel %vm788, %v1544, 0
      %1576 = vmatprep.subr.mxu0 %v1546
      %1577 = vmatpush1.msra.mxu0 %v1545
      %1578 = vmatprep.subr.mxu0 %v1548
      %1579 = vmatpush1.msra.mxu0 %v1547
      %1580 = vmatprep.subr.mxu0 %v1550
      %1581 = vmatpush1.msra.mxu0 %v1549
      %1582 = vmatprep.subr.mxu0 %v1552
      %1583 = vmatpush1.msra.mxu0 %v1551
      %1584 = vmatprep.subr.mxu0 %v1554
      %1585 = vmatpush1.msra.mxu0 %v1553
      %1586 = vmatprep.subr.mxu0 %v1556
      %1587 = vmatpush1.msra.mxu0 %v1555
      %1588 = vmatprep.subr.mxu0 %v1558
      %1589 = vmatpush1.msra.mxu0 %v1557
      %1590 = vmatprep.subr.mxu0 %v1560
      %1591 = vmatpush1.msra.mxu0 %v1559
      %1592 = vmatprep.subr.mxu0 0.0
      %1593 = vmatpush1.msra.mxu0 0.0
      %1594 = vmatprep.subr.mxu0 0.0
      %1595 = vmatpush1.msra.mxu0 0.0
      %1596 = vmatprep.subr.mxu0 0.0
      %1597 = vmatpush1.msra.mxu0 0.0
      %1598 = vmatprep.subr.mxu0 0.0
      %1599 = vmatpush1.msra.mxu0 0.0
      %1600 = vmatprep.subr.mxu0 0.0
      %1601 = vmatpush1.msra.mxu0 0.0
      %1602 = vmatprep.subr.mxu0 0.0
      %1603 = vmatpush1.msra.mxu0 0.0
      %1604 = vmatprep.subr.mxu0 0.0
      %1605 = vmatpush1.msra.mxu0 0.0
      %1606 = vmatprep.subr.mxu0 0.0
      %1607 = vmatpush1.msra.mxu0 0.0
      %1608 = vmatprep.subr.mxu0 0.0
      %1609 = vmatpush1.msra.mxu0 0.0
      %1610 = vmatprep.subr.mxu0 0.0
      %1611 = vmatpush1.msra.mxu0 0.0
      %1612 = vmatprep.subr.mxu0 0.0
      %1613 = vmatpush1.msra.mxu0 0.0
      %1614 = vmatprep.subr.mxu0 0.0
      %1615 = vmatpush1.msra.mxu0 0.0
      %1616 = vmatprep.subr.mxu0 0.0
      %1617 = vmatpush1.msra.mxu0 0.0
      %1618 = vmatprep.subr.mxu0 0.0
      %1619 = vmatpush1.msra.mxu0 0.0
      %1620 = vmatprep.subr.mxu0 0.0
      %1621 = vmatpush1.msra.mxu0 0.0
      %1622 = vmatprep.subr.mxu0 0.0
      %1623 = vmatpush1.msra.mxu0 0.0
      %1624 = vmatprep.subr.mxu0 0.0
      %1625 = vmatpush1.msra.mxu0 0.0
      %1626 = vmatprep.subr.mxu0 0.0
      %1627 = vmatpush1.msra.mxu0 0.0
      %1628 = vmatprep.subr.mxu0 0.0
      %1629 = vmatpush1.msra.mxu0 0.0
      %1630 = vmatprep.subr.mxu0 0.0
      %1631 = vmatpush1.msra.mxu0 0.0
      %1632 = vmatprep.subr.mxu0 0.0
      %1633 = vmatpush1.msra.mxu0 0.0
      %1634 = vmatprep.subr.mxu0 0.0
      %1635 = vmatpush1.msra.mxu0 0.0
      %1636 = vmatprep.subr.mxu0 0.0
      %1637 = vmatpush1.msra.mxu0 0.0
      %1638 = vmatprep.subr.mxu0 0.0
      %1639 = vmatpush1.msra.mxu0 0.0
      %1640 = vmatprep.mubr.f32.mxu0 0.0
      %1641 = vmatmul.mubr.f32.gmra.mrb[0].mxu0 %v1574
      %v1642 = vpop.f32.mrb[0].mxu0
      %v1643 = vadd.f32 %v1566, %v1642
      %v1644 = vpop.f32.mrb[0].mxu0
      %v1645 = vadd.f32 %v1570, %v1644
      %1646 = vdwg.mxu0
      %v1647 = vmul.f32 %v1643, 1.702
      %v1648 = vmul.f32 %v1645, 1.702
      %v1649 = vxor.u32 %v1647, 2147483648
      %v1650 = vxor.u32 %v1648, 2147483648
      %v1651 = vmul.f32 %v1649, 1.442695
      %v1652 = vpow.pop %v1651
      %v1653 = vmul.f32 %v1650, 1.442695
      %v1654 = vpow.pop %v1653
      %v1655 = vadd.f32 %v1652, 1.0
      %v1656 = vadd.f32 %v1654, 1.0
      %v1657 = vrcp.pop %v1655
      %v1658 = vmul.f32 1.0, %v1657
      %v1659 = vrcp.pop %v1656
      %v1660 = vmul.f32 1.0, %v1659
      %v1661 = vmul.f32 %v1643, %v1658
      %v1662 = vmul.f32 %v1645, %v1660
      %v1663 = vld [vmem:[%s20] sm:$0xff]
      %v1664 = vld [vmem:[%s20 + $0x8] sm:$0xff]
      %v1665 = vld [vmem:[%s20 + $0x10] sm:$0xff]
      %v1666 = vld [vmem:[%s20 + $0x18] sm:$0xff]
      %v1667 = vld [vmem:[%s20 + $0x20] sm:$0xff]
      %v1668 = vld [vmem:[%s20 + $0x28] sm:$0xff]
      %v1669 = vld [vmem:[%s20 + $0x30] sm:$0xff]
      %v1670 = vld [vmem:[%s20 + $0x38] sm:$0xff]
      %v1671 = vld [vmem:[%s20 + $0x40] sm:$0xff]
      %v1672 = vld [vmem:[%s20 + $0x48] sm:$0xff]
      %v1673 = vld [vmem:[%s20 + $0x50] sm:$0xff]
      %v1674 = vld [vmem:[%s20 + $0x58] sm:$0xff]
      %v1675 = vld [vmem:[%s20 + $0x60] sm:$0xff]
      %v1676 = vld [vmem:[%s20 + $0x68] sm:$0xff]
      %v1677 = vld [vmem:[%s20 + $0x70] sm:$0xff]
      %v1678 = vld [vmem:[%s20 + $0x78] sm:$0xff]
      %v1679 = vld [vmem:[%s20 + $0x80] sm:$0xff]
      %v1680 = vld [vmem:[%s20 + $0x88] sm:$0xff]
      %v1681 = vld [vmem:[%s20 + $0x90] sm:$0xff]
      %v1682 = vld [vmem:[%s20 + $0x98] sm:$0xff]
      %v1683 = vld [vmem:[%s20 + $0xa0] sm:$0xff]
      %v1684 = vld [vmem:[%s20 + $0xa8] sm:$0xff]
      %v1685 = vld [vmem:[%s20 + $0xb0] sm:$0xff]
      %v1686 = vld [vmem:[%s20 + $0xb8] sm:$0xff]
      %v1687 = vld [vmem:[%s20 + $0xc0] sm:$0xff]
      %v1688 = vld [vmem:[%s20 + $0xc8] sm:$0xff]
      %v1689 = vld [vmem:[%s20 + $0xd0] sm:$0xff]
      %v1690 = vld [vmem:[%s20 + $0xd8] sm:$0xff]
      %v1691 = vld [vmem:[%s20 + $0xe0] sm:$0xff]
      %v1692 = vld [vmem:[%s20 + $0xe8] sm:$0xff]
      %v1693 = vld [vmem:[%s20 + $0xf0] sm:$0xff]
      %v1694 = vld [vmem:[%s20 + $0xf8] sm:$0xff]
      %v1695 = vld [vmem:[%s21] sm:$0x1]
      %v1697 = vlaneseq
      %v1698 = vshrl.u32 %v1697, 7
      %v1699 = vsub.s32 0, %v1698
      %v1700 = vrot.slane %v1695, %v1699
      %1702 = vmatprep.subr.mxu0 0.0
      %1703 = vmatpush1.msra.mxu0 %v1663
      %1704 = vmatprep.subr.mxu0 0.0
      %1705 = vmatpush1.msra.mxu0 %v1664
      %1706 = vmatprep.subr.mxu0 0.0
      %1707 = vmatpush1.msra.mxu0 %v1665
      %1708 = vmatprep.subr.mxu0 0.0
      %1709 = vmatpush1.msra.mxu0 %v1666
      %1710 = vmatprep.subr.mxu0 0.0
      %1711 = vmatpush1.msra.mxu0 %v1667
      %1712 = vmatprep.subr.mxu0 0.0
      %1713 = vmatpush1.msra.mxu0 %v1668
      %1714 = vmatprep.subr.mxu0 0.0
      %1715 = vmatpush1.msra.mxu0 %v1669
      %1716 = vmatprep.subr.mxu0 0.0
      %1717 = vmatpush1.msra.mxu0 %v1670
      %1718 = vmatprep.subr.mxu0 0.0
      %1719 = vmatpush1.msra.mxu0 %v1671
      %1720 = vmatprep.subr.mxu0 0.0
      %1721 = vmatpush1.msra.mxu0 %v1672
      %1722 = vmatprep.subr.mxu0 0.0
      %1723 = vmatpush1.msra.mxu0 %v1673
      %1724 = vmatprep.subr.mxu0 0.0
      %1725 = vmatpush1.msra.mxu0 %v1674
      %1726 = vmatprep.subr.mxu0 0.0
      %1727 = vmatpush1.msra.mxu0 %v1675
      %1728 = vmatprep.subr.mxu0 0.0
      %1729 = vmatpush1.msra.mxu0 %v1676
      %1730 = vmatprep.subr.mxu0 0.0
      %1731 = vmatpush1.msra.mxu0 %v1677
      %1732 = vmatprep.subr.mxu0 0.0
      %1733 = vmatpush1.msra.mxu0 %v1678
      %1734 = vmatprep.subr.mxu0 0.0
      %1735 = vmatpush1.msra.mxu0 %v1679
      %1736 = vmatprep.subr.mxu0 0.0
      %1737 = vmatpush1.msra.mxu0 %v1680
      %1738 = vmatprep.subr.mxu0 0.0
      %1739 = vmatpush1.msra.mxu0 %v1681
      %1740 = vmatprep.subr.mxu0 0.0
      %1741 = vmatpush1.msra.mxu0 %v1682
      %1742 = vmatprep.subr.mxu0 0.0
      %1743 = vmatpush1.msra.mxu0 %v1683
      %1744 = vmatprep.subr.mxu0 0.0
      %1745 = vmatpush1.msra.mxu0 %v1684
      %1746 = vmatprep.subr.mxu0 0.0
      %1747 = vmatpush1.msra.mxu0 %v1685
      %1748 = vmatprep.subr.mxu0 0.0
      %1749 = vmatpush1.msra.mxu0 %v1686
      %1750 = vmatprep.subr.mxu0 0.0
      %1751 = vmatpush1.msra.mxu0 %v1687
      %1752 = vmatprep.subr.mxu0 0.0
      %1753 = vmatpush1.msra.mxu0 %v1688
      %1754 = vmatprep.subr.mxu0 0.0
      %1755 = vmatpush1.msra.mxu0 %v1689
      %1756 = vmatprep.subr.mxu0 0.0
      %1757 = vmatpush1.msra.mxu0 %v1690
      %1758 = vmatprep.subr.mxu0 0.0
      %1759 = vmatpush1.msra.mxu0 %v1691
      %1760 = vmatprep.subr.mxu0 0.0
      %1761 = vmatpush1.msra.mxu0 %v1692
      %1762 = vmatprep.subr.mxu0 0.0
      %1763 = vmatpush1.msra.mxu0 %v1693
      %1764 = vmatprep.subr.mxu0 0.0
      %1765 = vmatpush1.msra.mxu0 %v1694
      %1766 = vmatprep.mubr.f32.mxu0 %v1662
      %1767 = vmatmul.mubr.f32.gmra.mrb[0].mxu0 %v1661
      %v1768 = vpop.f32.mrb[0].mxu0
      %v1769 = vadd.f32 %v1700, %v1768
      %v1770 = vpop.f32.mrb[0].mxu0
      %1771 = vdwg.mxu0
      %v1772 = vadd.f32 %v1515, %v1769
      %s1773 = scalar_lea.vmem %s6, 1
      %v1774 = vld [vmem:[%s1773] sm:$0x1]
      %s1775 = scalar_lea.vmem %s7, 1
      %v1776 = vld [vmem:[%s1775] sm:$0x1]
      %v1777 = vsel %vm943, %v1772, 0.0
      %1778 = vadd.xlane.f32.xlu0 %v1777
      %v1779 = vpop.xlane.xlu0 %1778
      %v1780 = vmul.f32 %v1779, %v947
      %v1781 = vsub.f32 %v1772, %v1780
      %v1782 = vmul.f32 %v1781, %v1781
      %v1783 = vsel %vm943, %v1782, 0.0
      %1784 = vadd.xlane.f32.xlu0 %v1783
      %v1785 = vpop.xlane.xlu0 %1784
      %v1786 = vmul.f32 %v1785, %v947
      %v1787 = vadd.f32 %v1786, 1e-05
      %v1788 = vrsqrt.pop %v1787
      %v1789 = vmul.f32 %v1781, %v1788
      %v1791 = vlaneseq
      %v1792 = vshrl.u32 %v1791, 7
      %v1793 = vsub.s32 0, %v1792
      %v1794 = vrot.slane %v1774, %v1793
      %v1796 = vmul.f32 %v1789, %v1794
      %v1798 = vlaneseq
      %v1799 = vshrl.u32 %v1798, 7
      %v1800 = vsub.s32 0, %v1799
      %v1801 = vrot.slane %v1776, %v1800
      %v1803 = vadd.f32 %v1796, %v1801
      %s1804 = scalar_lea.vmem %s15, 1
      %v1805 = vld [vmem:[%s1804] sm:$0x1]
      %s1806 = scalar_lea.vmem %s8, 64
      %v1807 = vld [vmem:[%s1806] sm:$0xff]
      %v1808 = vld [vmem:[%s1806 + $0x8] sm:$0xff]
      %v1809 = vld [vmem:[%s1806 + $0x10] sm:$0xff]
      %v1810 = vld [vmem:[%s1806 + $0x18] sm:$0xff]
      %v1811 = vld [vmem:[%s1806 + $0x20] sm:$0xff]
      %v1812 = vld [vmem:[%s1806 + $0x28] sm:$0xff]
      %v1813 = vld [vmem:[%s1806 + $0x30] sm:$0xff]
      %v1814 = vld [vmem:[%s1806 + $0x38] sm:$0xff]
      %s1815 = scalar_lea.vmem %s9, 1
      %v1816 = vld [vmem:[%s1815] sm:$0x1]
      %v1818 = vlaneseq
      %v1819 = vshrl.u32 %v1818, 7
      %v1820 = vsub.s32 0, %v1819
      %v1821 = vrot.slane %v1816, %v1820
      %v1824 = vsel %vm788, %v1803, 0
      %1826 = vmatprep.subr.mxu0 0.0
      %1827 = vmatpush1.msra.mxu0 %v1807
      %1828 = vmatprep.subr.mxu0 0.0
      %1829 = vmatpush1.msra.mxu0 %v1808
      %1830 = vmatprep.subr.mxu0 0.0
      %1831 = vmatpush1.msra.mxu0 %v1809
      %1832 = vmatprep.subr.mxu0 0.0
      %1833 = vmatpush1.msra.mxu0 %v1810
      %1834 = vmatprep.subr.mxu0 0.0
      %1835 = vmatpush1.msra.mxu0 %v1811
      %1836 = vmatprep.subr.mxu0 0.0
      %1837 = vmatpush1.msra.mxu0 %v1812
      %1838 = vmatprep.subr.mxu0 0.0
      %1839 = vmatpush1.msra.mxu0 %v1813
      %1840 = vmatprep.subr.mxu0 0.0
      %1841 = vmatpush1.msra.mxu0 %v1814
      %1842 = vmatprep.subr.mxu0 0.0
      %1843 = vmatpush1.msra.mxu0 0.0
      %1844 = vmatprep.subr.mxu0 0.0
      %1845 = vmatpush1.msra.mxu0 0.0
      %1846 = vmatprep.subr.mxu0 0.0
      %1847 = vmatpush1.msra.mxu0 0.0
      %1848 = vmatprep.subr.mxu0 0.0
      %1849 = vmatpush1.msra.mxu0 0.0
      %1850 = vmatprep.subr.mxu0 0.0
      %1851 = vmatpush1.msra.mxu0 0.0
      %1852 = vmatprep.subr.mxu0 0.0
      %1853 = vmatpush1.msra.mxu0 0.0
      %1854 = vmatprep.subr.mxu0 0.0
      %1855 = vmatpush1.msra.mxu0 0.0
      %1856 = vmatprep.subr.mxu0 0.0
      %1857 = vmatpush1.msra.mxu0 0.0
      %1858 = vmatprep.subr.mxu0 0.0
      %1859 = vmatpush1.msra.mxu0 0.0
      %1860 = vmatprep.subr.mxu0 0.0
      %1861 = vmatpush1.msra.mxu0 0.0
      %1862 = vmatprep.subr.mxu0 0.0
      %1863 = vmatpush1.msra.mxu0 0.0
      %1864 = vmatprep.subr.mxu0 0.0
      %1865 = vmatpush1.msra.mxu0 0.0
      %1866 = vmatprep.subr.mxu0 0.0
      %1867 = vmatpush1.msra.mxu0 0.0
      %1868 = vmatprep.subr.mxu0 0.0
      %1869 = vmatpush1.msra.mxu0 0.0
      %1870 = vmatprep.subr.mxu0 0.0
      %1871 = vmatpush1.msra.mxu0 0.0
      %1872 = vmatprep.subr.mxu0 0.0
      %1873 = vmatpush1.msra.mxu0 0.0
      %1874 = vmatprep.subr.mxu0 0.0
      %1875 = vmatpush1.msra.mxu0 0.0
      %1876 = vmatprep.subr.mxu0 0.0
      %1877 = vmatpush1.msra.mxu0 0.0
      %1878 = vmatprep.subr.mxu0 0.0
      %1879 = vmatpush1.msra.mxu0 0.0
      %1880 = vmatprep.subr.mxu0 0.0
      %1881 = vmatpush1.msra.mxu0 0.0
      %1882 = vmatprep.subr.mxu0 0.0
      %1883 = vmatpush1.msra.mxu0 0.0
      %1884 = vmatprep.subr.mxu0 0.0
      %1885 = vmatpush1.msra.mxu0 0.0
      %1886 = vmatprep.subr.mxu0 0.0
      %1887 = vmatpush1.msra.mxu0 0.0
      %1888 = vmatprep.subr.mxu0 0.0
      %1889 = vmatpush1.msra.mxu0 0.0
      %1890 = vmatprep.mubr.f32.mxu0 0.0
      %1891 = vmatmul.mubr.f32.gmra.mrb[0].mxu0 %v1824
      %v1892 = vpop.f32.mrb[0].mxu0
      %v1893 = vadd.f32 %v1821, %v1892
      %v1894 = vpop.f32.mrb[0].mxu0
      %1895 = vdwg.mxu0
      %s1896 = scalar_lea.vmem %s10, 64
      %v1897 = vld [vmem:[%s1896] sm:$0xff]
      %v1898 = vld [vmem:[%s1896 + $0x8] sm:$0xff]
      %v1899 = vld [vmem:[%s1896 + $0x10] sm:$0xff]
      %v1900 = vld [vmem:[%s1896 + $0x18] sm:$0xff]
      %v1901 = vld [vmem:[%s1896 + $0x20] sm:$0xff]
      %v1902 = vld [vmem:[%s1896 + $0x28] sm:$0xff]
      %v1903 = vld [vmem:[%s1896 + $0x30] sm:$0xff]
      %v1904 = vld [vmem:[%s1896 + $0x38] sm:$0xff]
      %s1905 = scalar_lea.vmem %s11, 1
      %v1906 = vld [vmem:[%s1905] sm:$0x1]
      %v1908 = vlaneseq
      %v1909 = vshrl.u32 %v1908, 7
      %v1910 = vsub.s32 0, %v1909
      %v1911 = vrot.slane %v1906, %v1910
      %1913 = vmatprep.subr.mxu0 0.0
      %1914 = vmatpush1.msra.mxu0 %v1897
      %1915 = vmatprep.subr.mxu0 0.0
      %1916 = vmatpush1.msra.mxu0 %v1898
      %1917 = vmatprep.subr.mxu0 0.0
      %1918 = vmatpush1.msra.mxu0 %v1899
      %1919 = vmatprep.subr.mxu0 0.0
      %1920 = vmatpush1.msra.mxu0 %v1900
      %1921 = vmatprep.subr.mxu0 0.0
      %1922 = vmatpush1.msra.mxu0 %v1901
      %1923 = vmatprep.subr.mxu0 0.0
      %1924 = vmatpush1.msra.mxu0 %v1902
      %1925 = vmatprep.subr.mxu0 0.0
      %1926 = vmatpush1.msra.mxu0 %v1903
      %1927 = vmatprep.subr.mxu0 0.0
      %1928 = vmatpush1.msra.mxu0 %v1904
      %1929 = vmatprep.subr.mxu0 0.0
      %1930 = vmatpush1.msra.mxu0 0.0
      %1931 = vmatprep.subr.mxu0 0.0
      %1932 = vmatpush1.msra.mxu0 0.0
      %1933 = vmatprep.subr.mxu0 0.0
      %1934 = vmatpush1.msra.mxu0 0.0
      %1935 = vmatprep.subr.mxu0 0.0
      %1936 = vmatpush1.msra.mxu0 0.0
      %1937 = vmatprep.subr.mxu0 0.0
      %1938 = vmatpush1.msra.mxu0 0.0
      %1939 = vmatprep.subr.mxu0 0.0
      %1940 = vmatpush1.msra.mxu0 0.0
      %1941 = vmatprep.subr.mxu0 0.0
      %1942 = vmatpush1.msra.mxu0 0.0
      %1943 = vmatprep.subr.mxu0 0.0
      %1944 = vmatpush1.msra.mxu0 0.0
      %1945 = vmatprep.subr.mxu0 0.0
      %1946 = vmatpush1.msra.mxu0 0.0
      %1947 = vmatprep.subr.mxu0 0.0
      %1948 = vmatpush1.msra.mxu0 0.0
      %1949 = vmatprep.subr.mxu0 0.0
      %1950 = vmatpush1.msra.mxu0 0.0
      %1951 = vmatprep.subr.mxu0 0.0
      %1952 = vmatpush1.msra.mxu0 0.0
      %1953 = vmatprep.subr.mxu0 0.0
      %1954 = vmatpush1.msra.mxu0 0.0
      %1955 = vmatprep.subr.mxu0 0.0
      %1956 = vmatpush1.msra.mxu0 0.0
      %1957 = vmatprep.subr.mxu0 0.0
      %1958 = vmatpush1.msra.mxu0 0.0
      %1959 = vmatprep.subr.mxu0 0.0
      %1960 = vmatpush1.msra.mxu0 0.0
      %1961 = vmatprep.subr.mxu0 0.0
      %1962 = vmatpush1.msra.mxu0 0.0
      %1963 = vmatprep.subr.mxu0 0.0
      %1964 = vmatpush1.msra.mxu0 0.0
      %1965 = vmatprep.subr.mxu0 0.0
      %1966 = vmatpush1.msra.mxu0 0.0
      %1967 = vmatprep.subr.mxu0 0.0
      %1968 = vmatpush1.msra.mxu0 0.0
      %1969 = vmatprep.subr.mxu0 0.0
      %1970 = vmatpush1.msra.mxu0 0.0
      %1971 = vmatprep.subr.mxu0 0.0
      %1972 = vmatpush1.msra.mxu0 0.0
      %1973 = vmatprep.subr.mxu0 0.0
      %1974 = vmatpush1.msra.mxu0 0.0
      %1975 = vmatprep.subr.mxu0 0.0
      %1976 = vmatpush1.msra.mxu0 0.0
      %1977 = vmatprep.mubr.f32.mxu0 0.0
      %1978 = vmatmul.mubr.f32.gmra.mrb[0].mxu0 %v1824
      %v1979 = vpop.f32.mrb[0].mxu0
      %v1980 = vadd.f32 %v1911, %v1979
      %v1981 = vpop.f32.mrb[0].mxu0
      %1982 = vdwg.mxu0
      %s1983 = scalar_lea.vmem %s12, 64
      %v1984 = vld [vmem:[%s1983] sm:$0xff]
      %v1985 = vld [vmem:[%s1983 + $0x8] sm:$0xff]
      %v1986 = vld [vmem:[%s1983 + $0x10] sm:$0xff]
      %v1987 = vld [vmem:[%s1983 + $0x18] sm:$0xff]
      %v1988 = vld [vmem:[%s1983 + $0x20] sm:$0xff]
      %v1989 = vld [vmem:[%s1983 + $0x28] sm:$0xff]
      %v1990 = vld [vmem:[%s1983 + $0x30] sm:$0xff]
      %v1991 = vld [vmem:[%s1983 + $0x38] sm:$0xff]
      %s1992 = scalar_lea.vmem %s13, 1
      %v1993 = vld [vmem:[%s1992] sm:$0x1]
      %v1995 = vlaneseq
      %v1996 = vshrl.u32 %v1995, 7
      %v1997 = vsub.s32 0, %v1996
      %v1998 = vrot.slane %v1993, %v1997
      %2000 = vmatprep.subr.mxu0 0.0
      %2001 = vmatpush1.msra.mxu0 %v1984
      %2002 = vmatprep.subr.mxu0 0.0
      %2003 = vmatpush1.msra.mxu0 %v1985
      %2004 = vmatprep.subr.mxu0 0.0
      %2005 = vmatpush1.msra.mxu0 %v1986
      %2006 = vmatprep.subr.mxu0 0.0
      %2007 = vmatpush1.msra.mxu0 %v1987
      %2008 = vmatprep.subr.mxu0 0.0
      %2009 = vmatpush1.msra.mxu0 %v1988
      %2010 = vmatprep.subr.mxu0 0.0
      %2011 = vmatpush1.msra.mxu0 %v1989
      %2012 = vmatprep.subr.mxu0 0.0
      %2013 = vmatpush1.msra.mxu0 %v1990
      %2014 = vmatprep.subr.mxu0 0.0
      %2015 = vmatpush1.msra.mxu0 %v1991
      %2016 = vmatprep.subr.mxu0 0.0
      %2017 = vmatpush1.msra.mxu0 0.0
      %2018 = vmatprep.subr.mxu0 0.0
      %2019 = vmatpush1.msra.mxu0 0.0
      %2020 = vmatprep.subr.mxu0 0.0
      %2021 = vmatpush1.msra.mxu0 0.0
      %2022 = vmatprep.subr.mxu0 0.0
      %2023 = vmatpush1.msra.mxu0 0.0
      %2024 = vmatprep.subr.mxu0 0.0
      %2025 = vmatpush1.msra.mxu0 0.0
      %2026 = vmatprep.subr.mxu0 0.0
      %2027 = vmatpush1.msra.mxu0 0.0
      %2028 = vmatprep.subr.mxu0 0.0
      %2029 = vmatpush1.msra.mxu0 0.0
      %2030 = vmatprep.subr.mxu0 0.0
      %2031 = vmatpush1.msra.mxu0 0.0
      %2032 = vmatprep.subr.mxu0 0.0
      %2033 = vmatpush1.msra.mxu0 0.0
      %2034 = vmatprep.subr.mxu0 0.0
      %2035 = vmatpush1.msra.mxu0 0.0
      %2036 = vmatprep.subr.mxu0 0.0
      %2037 = vmatpush1.msra.mxu0 0.0
      %2038 = vmatprep.subr.mxu0 0.0
      %2039 = vmatpush1.msra.mxu0 0.0
      %2040 = vmatprep.subr.mxu0 0.0
      %2041 = vmatpush1.msra.mxu0 0.0
      %2042 = vmatprep.subr.mxu0 0.0
      %2043 = vmatpush1.msra.mxu0 0.0
      %2044 = vmatprep.subr.mxu0 0.0
      %2045 = vmatpush1.msra.mxu0 0.0
      %2046 = vmatprep.subr.mxu0 0.0
      %2047 = vmatpush1.msra.mxu0 0.0
      %2048 = vmatprep.subr.mxu0 0.0
      %2049 = vmatpush1.msra.mxu0 0.0
      %2050 = vmatprep.subr.mxu0 0.0
      %2051 = vmatpush1.msra.mxu0 0.0
      %2052 = vmatprep.subr.mxu0 0.0
      %2053 = vmatpush1.msra.mxu0 0.0
      %2054 = vmatprep.subr.mxu0 0.0
      %2055 = vmatpush1.msra.mxu0 0.0
      %2056 = vmatprep.subr.mxu0 0.0
      %2057 = vmatpush1.msra.mxu0 0.0
      %2058 = vmatprep.subr.mxu0 0.0
      %2059 = vmatpush1.msra.mxu0 0.0
      %2060 = vmatprep.subr.mxu0 0.0
      %2061 = vmatpush1.msra.mxu0 0.0
      %2062 = vmatprep.subr.mxu0 0.0
      %2063 = vmatpush1.msra.mxu0 0.0
      %2064 = vmatprep.mubr.f32.mxu0 0.0
      %2065 = vmatmul.mubr.f32.gmra.mrb[0].mxu0 %v1824
      %v2066 = vpop.f32.mrb[0].mxu0
      %v2067 = vadd.f32 %v1998, %v2066
      %v2068 = vpop.f32.mrb[0].mxu0
      %2069 = vdwg.mxu0
      %v2071 = vsel %vm788, %v1893, 0
      %v2074 = vsel %vm788, %v1980, 0
      %2076 = vmatprep.subr.mxu0 0.0
      %2077 = vmatpush1.xpose.msra.mxu0 %v2074
      %2078 = vmatprep.subr.mxu0 0.0
      %2079 = vmatpush1.xpose.msra.mxu0 0.0
      %2080 = vmatprep.subr.mxu0 0.0
      %2081 = vmatpush1.xpose.msra.mxu0 0.0
      %2082 = vmatprep.subr.mxu0 0.0
      %2083 = vmatpush1.xpose.msra.mxu0 0.0
      %2084 = vmatprep.subr.mxu0 0.0
      %2085 = vmatpush1.xpose.msra.mxu0 0.0
      %2086 = vmatprep.subr.mxu0 0.0
      %2087 = vmatpush1.xpose.msra.mxu0 0.0
      %2088 = vmatprep.subr.mxu0 0.0
      %2089 = vmatpush1.xpose.msra.mxu0 0.0
      %2090 = vmatprep.subr.mxu0 0.0
      %2091 = vmatpush1.xpose.msra.mxu0 0.0
      %2092 = vmatprep.subr.mxu0 0.0
      %2093 = vmatpush1.xpose.msra.mxu0 0.0
      %2094 = vmatprep.subr.mxu0 0.0
      %2095 = vmatpush1.xpose.msra.mxu0 0.0
      %2096 = vmatprep.subr.mxu0 0.0
      %2097 = vmatpush1.xpose.msra.mxu0 0.0
      %2098 = vmatprep.subr.mxu0 0.0
      %2099 = vmatpush1.xpose.msra.mxu0 0.0
      %2100 = vmatprep.subr.mxu0 0.0
      %2101 = vmatpush1.xpose.msra.mxu0 0.0
      %2102 = vmatprep.subr.mxu0 0.0
      %2103 = vmatpush1.xpose.msra.mxu0 0.0
      %2104 = vmatprep.subr.mxu0 0.0
      %2105 = vmatpush1.xpose.msra.mxu0 0.0
      %2106 = vmatprep.subr.mxu0 0.0
      %2107 = vmatpush1.xpose.msra.mxu0 0.0
      %2108 = vmatprep.subr.mxu0 0.0
      %2109 = vmatpush1.xpose.msra.mxu0 0.0
      %2110 = vmatprep.subr.mxu0 0.0
      %2111 = vmatpush1.xpose.msra.mxu0 0.0
      %2112 = vmatprep.subr.mxu0 0.0
      %2113 = vmatpush1.xpose.msra.mxu0 0.0
      %2114 = vmatprep.subr.mxu0 0.0
      %2115 = vmatpush1.xpose.msra.mxu0 0.0
      %2116 = vmatprep.subr.mxu0 0.0
      %2117 = vmatpush1.xpose.msra.mxu0 0.0
      %2118 = vmatprep.subr.mxu0 0.0
      %2119 = vmatpush1.xpose.msra.mxu0 0.0
      %2120 = vmatprep.subr.mxu0 0.0
      %2121 = vmatpush1.xpose.msra.mxu0 0.0
      %2122 = vmatprep.subr.mxu0 0.0
      %2123 = vmatpush1.xpose.msra.mxu0 0.0
      %2124 = vmatprep.subr.mxu0 0.0
      %2125 = vmatpush1.xpose.msra.mxu0 0.0
      %2126 = vmatprep.subr.mxu0 0.0
      %2127 = vmatpush1.xpose.msra.mxu0 0.0
      %2128 = vmatprep.subr.mxu0 0.0
      %2129 = vmatpush1.xpose.msra.mxu0 0.0
      %2130 = vmatprep.subr.mxu0 0.0
      %2131 = vmatpush1.xpose.msra.mxu0 0.0
      %2132 = vmatprep.subr.mxu0 0.0
      %2133 = vmatpush1.xpose.msra.mxu0 0.0
      %2134 = vmatprep.subr.mxu0 0.0
      %2135 = vmatpush1.xpose.msra.mxu0 0.0
      %2136 = vmatprep.subr.mxu0 0.0
      %2137 = vmatpush1.xpose.msra.mxu0 0.0
      %2138 = vmatprep.subr.mxu0 0.0
      %2139 = vmatpush1.xpose.msra.mxu0 0.0
      %2140 = vmatprep.mubr.f32.mxu0 0.0
      %2141 = vmatmul.mubr.f32.gmra.mrb[0].mxu0 %v2071
      %v2142 = vpop.f32.mrb[0].mxu0
      %v2143 = vadd.f32 0.0, %v2142
      %v2144 = vpop.f32.mrb[0].mxu0
      %2145 = vdwg.mxu0
      %v2146 = vmul.f32 %v2143, 0.125
      %v2147 = vsel %vm1337, %v2146, -inf
      %2148 = vmax.xlane.f32.xlu0 %v2147
      %v2149 = vpop.xlane.xlu0 %2148
      %v2150 = vsub.f32 %v2146, %v2149
      %v2151 = vmul.f32 %v2150, 1.442695
      %v2152 = vpow.pop %v2151
      %v2153 = vsel %vm1337, %v2152, 0.0
      %2154 = vadd.xlane.f32.xlu0 %v2153
      %v2155 = vpop.xlane.xlu0 %2154
      %v2156 = vrcp.pop %v2155
      %v2157 = vmul.f32 %v2152, %v2156
      %v2159 = vsel %vm1349, %v2157, 0
      %v2162 = vsel %vm1353, %v2067, 0
      %2164 = vmatprep.subr.mxu0 0.0
      %2165 = vmatpush1.msra.mxu0 %v2162
      %2166 = vmatprep.subr.mxu0 0.0
      %2167 = vmatpush1.msra.mxu0 0.0
      %2168 = vmatprep.subr.mxu0 0.0
      %2169 = vmatpush1.msra.mxu0 0.0
      %2170 = vmatprep.subr.mxu0 0.0
      %2171 = vmatpush1.msra.mxu0 0.0
      %2172 = vmatprep.subr.mxu0 0.0
      %2173 = vmatpush1.msra.mxu0 0.0
      %2174 = vmatprep.subr.mxu0 0.0
      %2175 = vmatpush1.msra.mxu0 0.0
      %2176 = vmatprep.subr.mxu0 0.0
      %2177 = vmatpush1.msra.mxu0 0.0
      %2178 = vmatprep.subr.mxu0 0.0
      %2179 = vmatpush1.msra.mxu0 0.0
      %2180 = vmatprep.subr.mxu0 0.0
      %2181 = vmatpush1.msra.mxu0 0.0
      %2182 = vmatprep.subr.mxu0 0.0
      %2183 = vmatpush1.msra.mxu0 0.0
      %2184 = vmatprep.subr.mxu0 0.0
      %2185 = vmatpush1.msra.mxu0 0.0
      %2186 = vmatprep.subr.mxu0 0.0
      %2187 = vmatpush1.msra.mxu0 0.0
      %2188 = vmatprep.subr.mxu0 0.0
      %2189 = vmatpush1.msra.mxu0 0.0
      %2190 = vmatprep.subr.mxu0 0.0
      %2191 = vmatpush1.msra.mxu0 0.0
      %2192 = vmatprep.subr.mxu0 0.0
      %2193 = vmatpush1.msra.mxu0 0.0
      %2194 = vmatprep.subr.mxu0 0.0
      %2195 = vmatpush1.msra.mxu0 0.0
      %2196 = vmatprep.subr.mxu0 0.0
      %2197 = vmatpush1.msra.mxu0 0.0
      %2198 = vmatprep.subr.mxu0 0.0
      %2199 = vmatpush1.msra.mxu0 0.0
      %2200 = vmatprep.subr.mxu0 0.0
      %2201 = vmatpush1.msra.mxu0 0.0
      %2202 = vmatprep.subr.mxu0 0.0
      %2203 = vmatpush1.msra.mxu0 0.0
      %2204 = vmatprep.subr.mxu0 0.0
      %2205 = vmatpush1.msra.mxu0 0.0
      %2206 = vmatprep.subr.mxu0 0.0
      %2207 = vmatpush1.msra.mxu0 0.0
      %2208 = vmatprep.subr.mxu0 0.0
      %2209 = vmatpush1.msra.mxu0 0.0
      %2210 = vmatprep.subr.mxu0 0.0
      %2211 = vmatpush1.msra.mxu0 0.0
      %2212 = vmatprep.subr.mxu0 0.0
      %2213 = vmatpush1.msra.mxu0 0.0
      %2214 = vmatprep.subr.mxu0 0.0
      %2215 = vmatpush1.msra.mxu0 0.0
      %2216 = vmatprep.subr.mxu0 0.0
      %2217 = vmatpush1.msra.mxu0 0.0
      %2218 = vmatprep.subr.mxu0 0.0
      %2219 = vmatpush1.msra.mxu0 0.0
      %2220 = vmatprep.subr.mxu0 0.0
      %2221 = vmatpush1.msra.mxu0 0.0
      %2222 = vmatprep.subr.mxu0 0.0
      %2223 = vmatpush1.msra.mxu0 0.0
      %2224 = vmatprep.subr.mxu0 0.0
      %2225 = vmatpush1.msra.mxu0 0.0
      %2226 = vmatprep.subr.mxu0 0.0
      %2227 = vmatpush1.msra.mxu0 0.0
      %2228 = vmatprep.mubr.f32.mxu0 0.0
      %2229 = vmatmul.mubr.f32.gmra.mrb[0].mxu0 %v2159
      %v2230 = vpop.f32.mrb[0].mxu0
      %v2231 = vadd.f32 0.0, %v2230
      %v2232 = vpop.f32.mrb[0].mxu0
      %2233 = vdwg.mxu0
      %s2234 = scalar_lea.vmem %s14, 64
      %v2235 = vld [vmem:[%s2234] sm:$0xff]
      %v2236 = vld [vmem:[%s2234 + $0x8] sm:$0xff]
      %v2237 = vld [vmem:[%s2234 + $0x10] sm:$0xff]
      %v2238 = vld [vmem:[%s2234 + $0x18] sm:$0xff]
      %v2239 = vld [vmem:[%s2234 + $0x20] sm:$0xff]
      %v2240 = vld [vmem:[%s2234 + $0x28] sm:$0xff]
      %v2241 = vld [vmem:[%s2234 + $0x30] sm:$0xff]
      %v2242 = vld [vmem:[%s2234 + $0x38] sm:$0xff]
      %v2244 = vsel %vm788, %v2231, 0
      %2246 = vmatprep.subr.mxu0 0.0
      %2247 = vmatpush1.msra.mxu0 %v2235
      %2248 = vmatprep.subr.mxu0 0.0
      %2249 = vmatpush1.msra.mxu0 %v2236
      %2250 = vmatprep.subr.mxu0 0.0
      %2251 = vmatpush1.msra.mxu0 %v2237
      %2252 = vmatprep.subr.mxu0 0.0
      %2253 = vmatpush1.msra.mxu0 %v2238
      %2254 = vmatprep.subr.mxu0 0.0
      %2255 = vmatpush1.msra.mxu0 %v2239
      %2256 = vmatprep.subr.mxu0 0.0
      %2257 = vmatpush1.msra.mxu0 %v2240
      %2258 = vmatprep.subr.mxu0 0.0
      %2259 = vmatpush1.msra.mxu0 %v2241
      %2260 = vmatprep.subr.mxu0 0.0
      %2261 = vmatpush1.msra.mxu0 %v2242
      %2262 = vmatprep.subr.mxu0 0.0
      %2263 = vmatpush1.msra.mxu0 0.0
      %2264 = vmatprep.subr.mxu0 0.0
      %2265 = vmatpush1.msra.mxu0 0.0
      %2266 = vmatprep.subr.mxu0 0.0
      %2267 = vmatpush1.msra.mxu0 0.0
      %2268 = vmatprep.subr.mxu0 0.0
      %2269 = vmatpush1.msra.mxu0 0.0
      %2270 = vmatprep.subr.mxu0 0.0
      %2271 = vmatpush1.msra.mxu0 0.0
      %2272 = vmatprep.subr.mxu0 0.0
      %2273 = vmatpush1.msra.mxu0 0.0
      %2274 = vmatprep.subr.mxu0 0.0
      %2275 = vmatpush1.msra.mxu0 0.0
      %2276 = vmatprep.subr.mxu0 0.0
      %2277 = vmatpush1.msra.mxu0 0.0
      %2278 = vmatprep.subr.mxu0 0.0
      %2279 = vmatpush1.msra.mxu0 0.0
      %2280 = vmatprep.subr.mxu0 0.0
      %2281 = vmatpush1.msra.mxu0 0.0
      %2282 = vmatprep.subr.mxu0 0.0
      %2283 = vmatpush1.msra.mxu0 0.0
      %2284 = vmatprep.subr.mxu0 0.0
      %2285 = vmatpush1.msra.mxu0 0.0
      %2286 = vmatprep.subr.mxu0 0.0
      %2287 = vmatpush1.msra.mxu0 0.0
      %2288 = vmatprep.subr.mxu0 0.0
      %2289 = vmatpush1.msra.mxu0 0.0
      %2290 = vmatprep.subr.mxu0 0.0
      %2291 = vmatpush1.msra.mxu0 0.0
      %2292 = vmatprep.subr.mxu0 0.0
      %2293 = vmatpush1.msra.mxu0 0.0
      %2294 = vmatprep.subr.mxu0 0.0
      %2295 = vmatpush1.msra.mxu0 0.0
      %2296 = vmatprep.subr.mxu0 0.0
      %2297 = vmatpush1.msra.mxu0 0.0
      %2298 = vmatprep.subr.mxu0 0.0
      %2299 = vmatpush1.msra.mxu0 0.0
      %2300 = vmatprep.subr.mxu0 0.0
      %2301 = vmatpush1.msra.mxu0 0.0
      %2302 = vmatprep.subr.mxu0 0.0
      %2303 = vmatpush1.msra.mxu0 0.0
      %2304 = vmatprep.subr.mxu0 0.0
      %2305 = vmatpush1.msra.mxu0 0.0
      %2306 = vmatprep.subr.mxu0 0.0
      %2307 = vmatpush1.msra.mxu0 0.0
      %2308 = vmatprep.subr.mxu0 0.0
      %2309 = vmatpush1.msra.mxu0 0.0
      %2310 = vmatprep.mubr.f32.mxu0 0.0
      %2311 = vmatmul.mubr.f32.gmra.mrb[0].mxu0 %v2244
      %v2312 = vpop.f32.mrb[0].mxu0
      %v2313 = vadd.f32 0.0, %v2312
      %v2314 = vpop.f32.mrb[0].mxu0
      %2315 = vdwg.mxu0
      %v2317 = vlaneseq
      %v2318 = vshrl.u32 %v2317, 7
      %v2319 = vsub.s32 0, %v2318
      %v2320 = vrot.slane %v1805, %v2319
      %v2322 = vadd.f32 %v2320, %v2313
      %v2323 = vadd.f32 %v1772, %v2322
      %s2324 = scalar_lea.vmem %s16, 1
      %v2325 = vld [vmem:[%s2324] sm:$0x1]
      %s2326 = scalar_lea.vmem %s17, 1
      %v2327 = vld [vmem:[%s2326] sm:$0x1]
      %v2328 = vsel %vm943, %v2323, 0.0
      %2329 = vadd.xlane.f32.xlu0 %v2328
      %v2330 = vpop.xlane.xlu0 %2329
      %v2331 = vmul.f32 %v2330, %v947
      %v2332 = vsub.f32 %v2323, %v2331
      %v2333 = vmul.f32 %v2332, %v2332
      %v2334 = vsel %vm943, %v2333, 0.0
      %2335 = vadd.xlane.f32.xlu0 %v2334
      %v2336 = vpop.xlane.xlu0 %2335
      %v2337 = vmul.f32 %v2336, %v947
      %v2338 = vadd.f32 %v2337, 1e-05
      %v2339 = vrsqrt.pop %v2338
      %v2340 = vmul.f32 %v2332, %v2339
      %v2342 = vlaneseq
      %v2343 = vshrl.u32 %v2342, 7
      %v2344 = vsub.s32 0, %v2343
      %v2345 = vrot.slane %v2325, %v2344
      %v2347 = vmul.f32 %v2340, %v2345
      %v2349 = vlaneseq
      %v2350 = vshrl.u32 %v2349, 7
      %v2351 = vsub.s32 0, %v2350
      %v2352 = vrot.slane %v2327, %v2351
      %v2354 = vadd.f32 %v2347, %v2352
      %s2355 = scalar_lea.vmem %s18, 128
      %v2356 = vld [vmem:[%s2355] sm:$0xff]
      %v2357 = vld [vmem:[%s2355 + $0x8] sm:$0xff]
      %v2358 = vld [vmem:[%s2355 + $0x10] sm:$0xff]
      %v2359 = vld [vmem:[%s2355 + $0x18] sm:$0xff]
      %v2360 = vld [vmem:[%s2355 + $0x20] sm:$0xff]
      %v2361 = vld [vmem:[%s2355 + $0x28] sm:$0xff]
      %v2362 = vld [vmem:[%s2355 + $0x30] sm:$0xff]
      %v2363 = vld [vmem:[%s2355 + $0x38] sm:$0xff]
      %v2364 = vld [vmem:[%s2355 + $0x40] sm:$0xff]
      %v2365 = vld [vmem:[%s2355 + $0x48] sm:$0xff]
      %v2366 = vld [vmem:[%s2355 + $0x50] sm:$0xff]
      %v2367 = vld [vmem:[%s2355 + $0x58] sm:$0xff]
      %v2368 = vld [vmem:[%s2355 + $0x60] sm:$0xff]
      %v2369 = vld [vmem:[%s2355 + $0x68] sm:$0xff]
      %v2370 = vld [vmem:[%s2355 + $0x70] sm:$0xff]
      %v2371 = vld [vmem:[%s2355 + $0x78] sm:$0xff]
      %s2372 = scalar_lea.vmem %s19, 2
      %v2373 = vld [vmem:[%s2372] sm:$0x3]
      %v2375 = vlaneseq
      %v2376 = vshrl.u32 %v2375, 7
      %v2377 = vsub.s32 0, %v2376
      %v2378 = vrot.slane %v2373, %v2377
      %v2379 = vlaneseq
      %v2380 = vshrl.u32 %v2379, 7
      %v2381 = vsub.s32 1, %v2380
      %v2382 = vrot.slane %v2373, %v2381
      %v2386 = vsel %vm788, %v2354, 0
      %2388 = vmatprep.subr.mxu0 %v2357
      %2389 = vmatpush1.msra.mxu0 %v2356
      %2390 = vmatprep.subr.mxu0 %v2359
      %2391 = vmatpush1.msra.mxu0 %v2358
      %2392 = vmatprep.subr.mxu0 %v2361
      %2393 = vmatpush1.msra.mxu0 %v2360
      %2394 = vmatprep.subr.mxu0 %v2363
      %2395 = vmatpush1.msra.mxu0 %v2362
      %2396 = vmatprep.subr.mxu0 %v2365
      %2397 = vmatpush1.msra.mxu0 %v2364
      %2398 = vmatprep.subr.mxu0 %v2367
      %2399 = vmatpush1.msra.mxu0 %v2366
      %2400 = vmatprep.subr.mxu0 %v2369
      %2401 = vmatpush1.msra.mxu0 %v2368
      %2402 = vmatprep.subr.mxu0 %v2371
      %2403 = vmatpush1.msra.mxu0 %v2370
      %2404 = vmatprep.subr.mxu0 0.0
      %2405 = vmatpush1.msra.mxu0 0.0
      %2406 = vmatprep.subr.mxu0 0.0
      %2407 = vmatpush1.msra.mxu0 0.0
      %2408 = vmatprep.subr.mxu0 0.0
      %2409 = vmatpush1.msra.mxu0 0.0
      %2410 = vmatprep.subr.mxu0 0.0
      %2411 = vmatpush1.msra.mxu0 0.0
      %2412 = vmatprep.subr.mxu0 0.0
      %2413 = vmatpush1.msra.mxu0 0.0
      %2414 = vmatprep.subr.mxu0 0.0
      %2415 = vmatpush1.msra.mxu0 0.0
      %2416 = vmatprep.subr.mxu0 0.0
      %2417 = vmatpush1.msra.mxu0 0.0
      %2418 = vmatprep.subr.mxu0 0.0
      %2419 = vmatpush1.msra.mxu0 0.0
      %2420 = vmatprep.subr.mxu0 0.0
      %2421 = vmatpush1.msra.mxu0 0.0
      %2422 = vmatprep.subr.mxu0 0.0
      %2423 = vmatpush1.msra.mxu0 0.0
      %2424 = vmatprep.subr.mxu0 0.0
      %2425 = vmatpush1.msra.mxu0 0.0
      %2426 = vmatprep.subr.mxu0 0.0
      %2427 = vmatpush1.msra.mxu0 0.0
      %2428 = vmatprep.subr.mxu0 0.0
      %2429 = vmatpush1.msra.mxu0 0.0
      %2430 = vmatprep.subr.mxu0 0.0
      %2431 = vmatpush1.msra.mxu0 0.0
      %2432 = vmatprep.subr.mxu0 0.0
      %2433 = vmatpush1.msra.mxu0 0.0
      %2434 = vmatprep.subr.mxu0 0.0
      %2435 = vmatpush1.msra.mxu0 0.0
      %2436 = vmatprep.subr.mxu0 0.0
      %2437 = vmatpush1.msra.mxu0 0.0
      %2438 = vmatprep.subr.mxu0 0.0
      %2439 = vmatpush1.msra.mxu0 0.0
      %2440 = vmatprep.subr.mxu0 0.0
      %2441 = vmatpush1.msra.mxu0 0.0
      %2442 = vmatprep.subr.mxu0 0.0
      %2443 = vmatpush1.msra.mxu0 0.0
      %2444 = vmatprep.subr.mxu0 0.0
      %2445 = vmatpush1.msra.mxu0 0.0
      %2446 = vmatprep.subr.mxu0 0.0
      %2447 = vmatpush1.msra.mxu0 0.0
      %2448 = vmatprep.subr.mxu0 0.0
      %2449 = vmatpush1.msra.mxu0 0.0
      %2450 = vmatprep.subr.mxu0 0.0
      %2451 = vmatpush1.msra.mxu0 0.0
      %2452 = vmatprep.mubr.f32.mxu0 0.0
      %2453 = vmatmul.mubr.f32.gmra.mrb[0].mxu0 %v2386
      %v2454 = vpop.f32.mrb[0].mxu0
      %v2455 = vadd.f32 %v2378, %v2454
      %v2456 = vpop.f32.mrb[0].mxu0
      %v2457 = vadd.f32 %v2382, %v2456
      %2458 = vdwg.mxu0
      %v2459 = vmul.f32 %v2455, 1.702
      %v2460 = vmul.f32 %v2457, 1.702
      %v2461 = vxor.u32 %v2459, 2147483648
      %v2462 = vxor.u32 %v2460, 2147483648
      %v2463 = vmul.f32 %v2461, 1.442695
      %v2464 = vpow.pop %v2463
      %v2465 = vmul.f32 %v2462, 1.442695
      %v2466 = vpow.pop %v2465
      %v2467 = vadd.f32 %v2464, 1.0
      %v2468 = vadd.f32 %v2466, 1.0
      %v2469 = vrcp.pop %v2467
      %v2470 = vmul.f32 1.0, %v2469
      %v2471 = vrcp.pop %v2468
      %v2472 = vmul.f32 1.0, %v2471
      %v2473 = vmul.f32 %v2455, %v2470
      %v2474 = vmul.f32 %v2457, %v2472
      %s2475 = scalar_lea.vmem %s20, 256
      %v2476 = vld [vmem:[%s2475] sm:$0xff]
      %v2477 = vld [vmem:[%s2475 + $0x8] sm:$0xff]
      %v2478 = vld [vmem:[%s2475 + $0x10] sm:$0xff]
      %v2479 = vld [vmem:[%s2475 + $0x18] sm:$0xff]
      %v2480 = vld [vmem:[%s2475 + $0x20] sm:$0xff]
      %v2481 = vld [vmem:[%s2475 + $0x28] sm:$0xff]
      %v2482 = vld [vmem:[%s2475 + $0x30] sm:$0xff]
      %v2483 = vld [vmem:[%s2475 + $0x38] sm:$0xff]
      %v2484 = vld [vmem:[%s2475 + $0x40] sm:$0xff]
      %v2485 = vld [vmem:[%s2475 + $0x48] sm:$0xff]
      %v2486 = vld [vmem:[%s2475 + $0x50] sm:$0xff]
      %v2487 = vld [vmem:[%s2475 + $0x58] sm:$0xff]
      %v2488 = vld [vmem:[%s2475 + $0x60] sm:$0xff]
      %v2489 = vld [vmem:[%s2475 + $0x68] sm:$0xff]
      %v2490 = vld [vmem:[%s2475 + $0x70] sm:$0xff]
      %v2491 = vld [vmem:[%s2475 + $0x78] sm:$0xff]
      %v2492 = vld [vmem:[%s2475 + $0x80] sm:$0xff]
      %v2493 = vld [vmem:[%s2475 + $0x88] sm:$0xff]
      %v2494 = vld [vmem:[%s2475 + $0x90] sm:$0xff]
      %v2495 = vld [vmem:[%s2475 + $0x98] sm:$0xff]
      %v2496 = vld [vmem:[%s2475 + $0xa0] sm:$0xff]
      %v2497 = vld [vmem:[%s2475 + $0xa8] sm:$0xff]
      %v2498 = vld [vmem:[%s2475 + $0xb0] sm:$0xff]
      %v2499 = vld [vmem:[%s2475 + $0xb8] sm:$0xff]
      %v2500 = vld [vmem:[%s2475 + $0xc0] sm:$0xff]
      %v2501 = vld [vmem:[%s2475 + $0xc8] sm:$0xff]
      %v2502 = vld [vmem:[%s2475 + $0xd0] sm:$0xff]
      %v2503 = vld [vmem:[%s2475 + $0xd8] sm:$0xff]
      %v2504 = vld [vmem:[%s2475 + $0xe0] sm:$0xff]
      %v2505 = vld [vmem:[%s2475 + $0xe8] sm:$0xff]
      %v2506 = vld [vmem:[%s2475 + $0xf0] sm:$0xff]
      %v2507 = vld [vmem:[%s2475 + $0xf8] sm:$0xff]
      %s2508 = scalar_lea.vmem %s21, 1
      %v2509 = vld [vmem:[%s2508] sm:$0x1]
      %v2511 = vlaneseq
      %v2512 = vshrl.u32 %v2511, 7
      %v2513 = vsub.s32 0, %v2512
      %v2514 = vrot.slane %v2509, %v2513
      %2516 = vmatprep.subr.mxu0 0.0
      %2517 = vmatpush1.msra.mxu0 %v2476
      %2518 = vmatprep.subr.mxu0 0.0
      %2519 = vmatpush1.msra.mxu0 %v2477
      %2520 = vmatprep.subr.mxu0 0.0
      %2521 = vmatpush1.msra.mxu0 %v2478
      %2522 = vmatprep.subr.mxu0 0.0
      %2523 = vmatpush1.msra.mxu0 %v2479
      %2524 = vmatprep.subr.mxu0 0.0
      %2525 = vmatpush1.msra.mxu0 %v2480
      %2526 = vmatprep.subr.mxu0 0.0
      %2527 = vmatpush1.msra.mxu0 %v2481
      %2528 = vmatprep.subr.mxu0 0.0
      %2529 = vmatpush1.msra.mxu0 %v2482
      %2530 = vmatprep.subr.mxu0 0.0
      %2531 = vmatpush1.msra.mxu0 %v2483
      %2532 = vmatprep.subr.mxu0 0.0
      %2533 = vmatpush1.msra.mxu0 %v2484
      %2534 = vmatprep.subr.mxu0 0.0
      %2535 = vmatpush1.msra.mxu0 %v2485
      %2536 = vmatprep.subr.mxu0 0.0
      %2537 = vmatpush1.msra.mxu0 %v2486
      %2538 = vmatprep.subr.mxu0 0.0
      %2539 = vmatpush1.msra.mxu0 %v2487
      %2540 = vmatprep.subr.mxu0 0.0
      %2541 = vmatpush1.msra.mxu0 %v2488
      %2542 = vmatprep.subr.mxu0 0.0
      %2543 = vmatpush1.msra.mxu0 %v2489
      %2544 = vmatprep.subr.mxu0 0.0
      %2545 = vmatpush1.msra.mxu0 %v2490
      %2546 = vmatprep.subr.mxu0 0.0
      %2547 = vmatpush1.msra.mxu0 %v2491
      %2548 = vmatprep.subr.mxu0 0.0
      %2549 = vmatpush1.msra.mxu0 %v2492
      %2550 = vmatprep.subr.mxu0 0.0
      %2551 = vmatpush1.msra.mxu0 %v2493
      %2552 = vmatprep.subr.mxu0 0.0
      %2553 = vmatpush1.msra.mxu0 %v2494
      %2554 = vmatprep.subr.mxu0 0.0
      %2555 = vmatpush1.msra.mxu0 %v2495
      %2556 = vmatprep.subr.mxu0 0.0
      %2557 = vmatpush1.msra.mxu0 %v2496
      %2558 = vmatprep.subr.mxu0 0.0
      %2559 = vmatpush1.msra.mxu0 %v2497
      %2560 = vmatprep.subr.mxu0 0.0
      %2561 = vmatpush1.msra.mxu0 %v2498
      %2562 = vmatprep.subr.mxu0 0.0
      %2563 = vmatpush1.msra.mxu0 %v2499
      %2564 = vmatprep.subr.mxu0 0.0
      %2565 = vmatpush1.msra.mxu0 %v2500
      %2566 = vmatprep.subr.mxu0 0.0
      %2567 = vmatpush1.msra.mxu0 %v2501
      %2568 = vmatprep.subr.mxu0 0.0
      %2569 = vmatpush1.msra.mxu0 %v2502
      %2570 = vmatprep.subr.mxu0 0.0
      %2571 = vmatpush1.msra.mxu0 %v2503
      %2572 = vmatprep.subr.mxu0 0.0
      %2573 = vmatpush1.msra.mxu0 %v2504
      %2574 = vmatprep.subr.mxu0 0.0
      %2575 = vmatpush1.msra.mxu0 %v2505
      %2576 = vmatprep.subr.mxu0 0.0
      %2577 = vmatpush1.msra.mxu0 %v2506
      %2578 = vmatprep.subr.mxu0 0.0
      %2579 = vmatpush1.msra.mxu0 %v2507
      %2580 = vmatprep.mubr.f32.mxu0 %v2474
      %2581 = vmatmul.mubr.f32.gmra.mrb[0].mxu0 %v2473
      %v2582 = vpop.f32.mrb[0].mxu0
      %v2583 = vadd.f32 %v2514, %v2582
      %v2584 = vpop.f32.mrb[0].mxu0
      %2585 = vdwg.mxu0
      %v2586 = vadd.f32 %v2323, %v2583
      %v2587 = vld [vmem:[%s22] sm:$0x1]
      %v2588 = vld [vmem:[%s23] sm:$0x1]
      %vm2589 = vcmask 516096
      %v2590 = vsel %vm2589, %v2586, 0.0
      %2591 = vadd.xlane.f32.xlu0 %v2590
      %v2592 = vpop.xlane.xlu0 %2591
      %v2593 = vmul.f32 %v2592, %v947
      %v2594 = vsub.f32 %v2586, %v2593
      %v2595 = vmul.f32 %v2594, %v2594
      %v2596 = vsel %vm2589, %v2595, 0.0
      %2597 = vadd.xlane.f32.xlu0 %v2596
      %v2598 = vpop.xlane.xlu0 %2597
      %v2599 = vmul.f32 %v2598, %v947
      %v2600 = vadd.f32 %v2599, 1e-05
      %v2601 = vrsqrt.pop %v2600
      %v2602 = vmul.f32 %v2594, %v2601
      %v2603 = vmul.f32 %v2602, %v2587
      %v2604 = vadd.f32 %v2603, %v2588
      %v2605 = vld [vmem:[%s24] sm:$0xff]
      %v2606 = vld [vmem:[%s24 + $0x8] sm:$0xff]
      %v2607 = vld [vmem:[%s24 + $0x10] sm:$0xff]
      %v2608 = vld [vmem:[%s24 + $0x18] sm:$0xff]
      %v2609 = vld [vmem:[%s24 + $0x20] sm:$0xff]
      %v2610 = vld [vmem:[%s24 + $0x28] sm:$0xff]
      %v2611 = vld [vmem:[%s24 + $0x30] sm:$0xff]
      %v2612 = vld [vmem:[%s24 + $0x38] sm:$0xff]
      %v2614 = vsel %vm788, %v2604, 0
      %2616 = vmatprep.subr.mxu0 0.0
      %2617 = vmatpush1.msra.mxu0 %v2605
      %2618 = vmatprep.subr.mxu0 0.0
      %2619 = vmatpush1.msra.mxu0 %v2606
      %2620 = vmatprep.subr.mxu0 0.0
      %2621 = vmatpush1.msra.mxu0 %v2607
      %2622 = vmatprep.subr.mxu0 0.0
      %2623 = vmatpush1.msra.mxu0 %v2608
      %2624 = vmatprep.subr.mxu0 0.0
      %2625 = vmatpush1.msra.mxu0 %v2609
      %2626 = vmatprep.subr.mxu0 0.0
      %2627 = vmatpush1.msra.mxu0 %v2610
      %2628 = vmatprep.subr.mxu0 0.0
      %2629 = vmatpush1.msra.mxu0 %v2611
      %2630 = vmatprep.subr.mxu0 0.0
      %2631 = vmatpush1.msra.mxu0 %v2612
      %2632 = vmatprep.subr.mxu0 0.0
      %2633 = vmatpush1.msra.mxu0 0.0
      %2634 = vmatprep.subr.mxu0 0.0
      %2635 = vmatpush1.msra.mxu0 0.0
      %2636 = vmatprep.subr.mxu0 0.0
      %2637 = vmatpush1.msra.mxu0 0.0
      %2638 = vmatprep.subr.mxu0 0.0
      %2639 = vmatpush1.msra.mxu0 0.0
      %2640 = vmatprep.subr.mxu0 0.0
      %2641 = vmatpush1.msra.mxu0 0.0
      %2642 = vmatprep.subr.mxu0 0.0
      %2643 = vmatpush1.msra.mxu0 0.0
      %2644 = vmatprep.subr.mxu0 0.0
      %2645 = vmatpush1.msra.mxu0 0.0
      %2646 = vmatprep.subr.mxu0 0.0
      %2647 = vmatpush1.msra.mxu0 0.0
      %2648 = vmatprep.subr.mxu0 0.0
      %2649 = vmatpush1.msra.mxu0 0.0
      %2650 = vmatprep.subr.mxu0 0.0
      %2651 = vmatpush1.msra.mxu0 0.0
      %2652 = vmatprep.subr.mxu0 0.0
      %2653 = vmatpush1.msra.mxu0 0.0
      %2654 = vmatprep.subr.mxu0 0.0
      %2655 = vmatpush1.msra.mxu0 0.0
      %2656 = vmatprep.subr.mxu0 0.0
      %2657 = vmatpush1.msra.mxu0 0.0
      %2658 = vmatprep.subr.mxu0 0.0
      %2659 = vmatpush1.msra.mxu0 0.0
      %2660 = vmatprep.subr.mxu0 0.0
      %2661 = vmatpush1.msra.mxu0 0.0
      %2662 = vmatprep.subr.mxu0 0.0
      %2663 = vmatpush1.msra.mxu0 0.0
      %2664 = vmatprep.subr.mxu0 0.0
      %2665 = vmatpush1.msra.mxu0 0.0
      %2666 = vmatprep.subr.mxu0 0.0
      %2667 = vmatpush1.msra.mxu0 0.0
      %2668 = vmatprep.subr.mxu0 0.0
      %2669 = vmatpush1.msra.mxu0 0.0
      %2670 = vmatprep.subr.mxu0 0.0
      %2671 = vmatpush1.msra.mxu0 0.0
      %2672 = vmatprep.subr.mxu0 0.0
      %2673 = vmatpush1.msra.mxu0 0.0
      %2674 = vmatprep.subr.mxu0 0.0
      %2675 = vmatpush1.msra.mxu0 0.0
      %2676 = vmatprep.subr.mxu0 0.0
      %2677 = vmatpush1.msra.mxu0 0.0
      %2678 = vmatprep.subr.mxu0 0.0
      %2679 = vmatpush1.msra.mxu0 0.0
      %2680 = vmatprep.mubr.f32.mxu0 0.0
      %2681 = vmatmul.mubr.f32.gmra.mrb[0].mxu0 %v2614
      %v2682 = vpop.f32.mrb[0].mxu0
      %v2683 = vadd.f32 0.0, %v2682
      %v2684 = vpop.f32.mrb[0].mxu0
      %2685 = vdwg.mxu0
      %vm2686 = vcmask 253952
      %2687 = vst.msk [vmem:[%s760] sm:$0x1] %vm2686, %v2683
      %p2688 = scmp.lt.s32.totalorder %s36, 1
      %s2689 = scalar_select %p2688, %s36, 1
      %s2690 = scalar_lea.vmem %s25, %s2689
      // Predicated region
      $region121: #{clip_forward.3} parent=119 // pred_check
        %p2691 = pneg %p584
      $region122: #{clip_forward.3} parent=119 // pred_check_branch
        %2693 = sbr.rel (%p2691) target = $region124
      $region123: #{clip_forward.3} parent=119 // pred_region
        _
      $region124: #{clip_forward.3} parent=119 // pred_fallthru
        _
    $region120: #{clip_forward.3} parent=5 // pred_fallthru
      _
    %p2694 = scmp.le.s32.totalorder 2, %s31
    // Predicated region
    $region125: #{clip_forward.3} parent=5 // pred_check
      %p2695 = pneg %p2694
    $region126: #{clip_forward.3} parent=5 // pred_check_branch
      %2697 = sbr.rel (%p2695) target = $region128
    $region127: #{clip_forward.3} parent=5 // pred_region
      %s2698 = ssub.s32 %s31, 2
      // Predicated region
      $region129: #{clip_forward.3} parent=127 // pred_check
        %p2699 = pneg %p590
      $region130: #{clip_forward.3} parent=127 // pred_check_branch
        %2701 = sbr.rel (%p2699) target = $region132
      $region131: #{clip_forward.3} parent=127 // pred_region
        %p2702 = scmp.lt.s32.totalorder %s37, 1
        %s2703 = scalar_select %p2702, %s37, 1
        %s2704 = scalar_lea.vmem %s25, %s2703
      $region132: #{clip_forward.3} parent=127 // pred_fallthru
        _
    $region128: #{clip_forward.3} parent=5 // pred_fallthru
      _
  $region6: #{clip_forward.3} parent=0 // loop_footer
    %s35 = sadd.s32 1, %s31
  $region7: #{clip_forward.3} parent=0 // loop_footer_branch
    %30 = sbr.rel target = $region3
  $region8: #{clip_forward.3} parent=0 // loop_exit
    _

// kernel: clip_forward.4
$region0: #{clip_forward.4}
  #allocation0 [shape = 'u32[]', space=smem, size = 0x4, offset = 0x4, fixed_abs, tag = 'smem constant byte address 0x4 - core index']
  #allocation1 [shape = 'u32[144,128]{1,0:T(1,128)}', space=vmem, size = 0x12000, scoped, tag = 'internal scratch']
  %s0 = inlined_call_operand.vmem [shape: f32[2,8,64], index: 0, kind: input, shape index: {}]
  %s1 = inlined_call_operand.vmem [shape: f32[2,1,8], index: 1, kind: input, shape index: {}]
  %s2 = inlined_call_operand.vmem [shape: f32[8,64], index: 2, kind: input, shape index: {}]
  %s3 = inlined_call_operand.vmem [shape: f32[2,1,64], index: 3, kind: input, shape index: {}]
  %s4 = inlined_call_operand.vmem [shape: f32[2,1,64], index: 4, kind: input, shape index: {}]
  %s5 = inlined_call_operand.vmem [shape: f32[4,64,32], index: 5, kind: input, shape index: {}]
  %s6 = inlined_call_operand.vmem [shape: f32[4,1,32], index: 6, kind: input, shape index: {}]
  %s7 = inlined_call_operand.vmem [shape: f32[4,64,32], index: 7, kind: input, shape index: {}]
  %s8 = inlined_call_operand.vmem [shape: f32[4,1,32], index: 8, kind: input, shape index: {}]
  %s9 = inlined_call_operand.vmem [shape: f32[4,64,32], index: 9, kind: input, shape index: {}]
  %s10 = inlined_call_operand.vmem [shape: f32[4,1,32], index: 10, kind: input, shape index: {}]
  %s11 = inlined_call_operand.vmem [shape: f32[4,32,64], index: 11, kind: input, shape index: {}]
  %s12 = inlined_call_operand.vmem [shape: f32[2,1,64], index: 12, kind: input, shape index: {}]
  %s13 = inlined_call_operand.vmem [shape: f32[2,1,64], index: 13, kind: input, shape index: {}]
  %s14 = inlined_call_operand.vmem [shape: f32[2,1,64], index: 14, kind: input, shape index: {}]
  %s15 = inlined_call_operand.vmem [shape: f32[2,64,256], index: 15, kind: input, shape index: {}]
  %s16 = inlined_call_operand.vmem [shape: f32[2,1,256], index: 16, kind: input, shape index: {}]
  %s17 = inlined_call_operand.vmem [shape: f32[2,256,64], index: 17, kind: input, shape index: {}]
  %s18 = inlined_call_operand.vmem [shape: f32[2,1,64], index: 18, kind: input, shape index: {}]
  %s19 = inlined_call_operand.vmem [shape: f32[1,64], index: 19, kind: input, shape index: {}]
  %s20 = inlined_call_operand.vmem [shape: f32[1,64], index: 20, kind: input, shape index: {}]
  %s21 = inlined_call_operand.vmem [shape: f32[64,32], index: 21, kind: input, shape index: {}]
  %s22 = inlined_call_operand.vmem [shape: f32[2,1,32], index: 22, kind: output, shape index: {}]
  %s23 = sld [smem:[#allocation0]]
  $region121: #{clip_forward.4} parent=0
    _
  %s25 = ssub.s32 1, %s23
  %s26 = scalar_select 0, %s25, %s23
  loop: start=0, step=1, limit=4
  $region2: #{clip_forward.4} parent=0 // loop_pre_header
    _
  $region3: #{clip_forward.4} parent=0 // loop_header
    %s28 = sphi 0, %s32
    %p29 = scmp.ge.s32.totalorder %s28, 4
    %s38 = sphi 0, %s40
    %s41 = sphi 0, %s38
    %s42 = sphi 0, %s41
    %s58 = sphi 0, %s42
    %s64 = sphi 0, %s66
    %s67 = sphi 0, %s64
    %s68 = sphi 0, %s67
    %s84 = sphi 0, %s68
    %s88 = sphi 0, %s88
    %s90 = sphi 0, %s88
    %s91 = sphi 0, %s90
    %s105 = sphi 0, %s91
    %s109 = sphi 0, %s109
    %s111 = sphi 0, %s109
    %s112 = sphi 0, %s111
    %s126 = sphi 0, %s112
    %s130 = sphi 0, %s130
    %s132 = sphi 0, %s130
    %s133 = sphi 0, %s132
    %s147 = sphi 0, %s133
    %s151 = sphi 0, %s151
    %s153 = sphi 0, %s151
    %s154 = sphi 0, %s153
    %s168 = sphi 0, %s154
    %s172 = sphi 0, %s172
    %s174 = sphi 0, %s172
    %s175 = sphi 0, %s174
    %s189 = sphi 0, %s175
    %s193 = sphi 0, %s193
    %s195 = sphi 0, %s193
    %s196 = sphi 0, %s195
    %s210 = sphi 0, %s196
    %s214 = sphi 0, %s214
    %s216 = sphi 0, %s214
    %s217 = sphi 0, %s216
    %s231 = sphi 0, %s217
    %s235 = sphi 0, %s235
    %s237 = sphi 0, %s235
    %s238 = sphi 0, %s237
    %s252 = sphi 0, %s238
    %s256 = sphi 0, %s256
    %s258 = sphi 0, %s256
    %s259 = sphi 0, %s258
    %s273 = sphi 0, %s259
    %s277 = sphi 0, %s277
    %s279 = sphi 0, %s277
    %s280 = sphi 0, %s279
    %s294 = sphi 0, %s280
    %s298 = sphi 0, %s298
    %s300 = sphi 0, %s298
    %s301 = sphi 0, %s300
    %s315 = sphi 0, %s301
    %s319 = sphi 0, %s319
    %s321 = sphi 0, %s319
    %s322 = sphi 0, %s321
    %s336 = sphi 0, %s322
    %s340 = sphi 0, %s340
    %s342 = sphi 0, %s340
    %s343 = sphi 0, %s342
    %s357 = sphi 0, %s343
    %s361 = sphi 0, %s361
    %s363 = sphi 0, %s361
    %s364 = sphi 0, %s363
    %s378 = sphi 0, %s364
    %s382 = sphi 0, %s382
    %s384 = sphi 0, %s382
    %s385 = sphi 0, %s384
    %s399 = sphi 0, %s385
    %s403 = sphi 0, %s403
    %s405 = sphi 0, %s403
    %s406 = sphi 0, %s405
    %s420 = sphi 0, %s406
    %s424 = sphi 0, %s424
    %s426 = sphi 0, %s424
    %s427 = sphi 0, %s426
    %s441 = sphi 0, %s427
    %s445 = sphi 0, %s445
    %s447 = sphi 0, %s445
    %s448 = sphi 0, %s447
    %s462 = sphi 0, %s448
    %s466 = sphi 0, %s466
    %s468 = sphi 0, %s466
    %s469 = sphi 0, %s468
    %s483 = sphi 0, %s469
    %s487 = sphi 0, %s487
    %s489 = sphi 0, %s487
    %s490 = sphi 0, %s489
    %s504 = sphi 0, %s490
    %s510 = sphi 0, %s512
    %s513 = sphi 0, %s510
    %s514 = sphi 0, %s513
    %s530 = sphi 0, %s514
  $region4: #{clip_forward.4} parent=0 // loop_header_branch
    %31 = sbr.rel (%p29) target = $region8
  $region5: #{clip_forward.4} parent=0 // loop_body
    %s33 = ssub.s32 %s28, 1
    %s34 = ssub.s32 %s28, 2
    %s35 = sadd.s32 %s28, 1
    %s36 = ssub.s32 %s28, %s35
    %p37 = scmp.eq.s32.totalorder %s36, 0
    %s39 = sadd.s32 %s38, 1
    %s40 = scalar_select %p37, %s38, %s39
    %p43 = pneg %p37
    %p44 = scmp.eq.s32.totalorder %s28, 1
    %p45 = por %p43, %p44
    %p46 = scmp.ne.s32.totalorder %s38, %s41
    %p47 = scmp.eq.s32.totalorder %s28, 0
    %p48 = por %p46, %p47
    %p49 = scmp.ne.s32.totalorder %s38, %s41
    %p50 = scmp.eq.s32.totalorder %s33, 1
    %p51 = por %p49, %p50
    %p52 = scmp.ne.s32.totalorder %s41, %s42
    %p53 = scmp.eq.s32.totalorder %s33, 0
    %p54 = por %p52, %p53
    %p55 = scmp.ne.s32.totalorder %s41, %s42
    %p56 = scmp.eq.s32.totalorder %s34, 1
    %p57 = por %p55, %p56
    %p59 = scmp.ne.s32.totalorder %s42, %s58
    %p60 = scmp.eq.s32.totalorder %s34, 0
    %p61 = por %p59, %p60
    %s62 = ssub.s32 %s28, %s35
    %p63 = scmp.eq.s32.totalorder %s62, 0
    %s65 = sadd.s32 %s64, 1
    %s66 = scalar_select %p63, %s64, %s65
    %p69 = pneg %p63
    %p70 = scmp.eq.s32.totalorder %s28, 1
    %p71 = por %p69, %p70
    %p72 = scmp.ne.s32.totalorder %s64, %s67
    %p73 = scmp.eq.s32.totalorder %s28, 0
    %p74 = por %p72, %p73
    %p75 = scmp.ne.s32.totalorder %s64, %s67
    %p76 = scmp.eq.s32.totalorder %s33, 1
    %p77 = por %p75, %p76
    %p78 = scmp.ne.s32.totalorder %s67, %s68
    %p79 = scmp.eq.s32.totalorder %s33, 0
    %p80 = por %p78, %p79
    %p81 = scmp.ne.s32.totalorder %s67, %s68
    %p82 = scmp.eq.s32.totalorder %s34, 1
    %p83 = por %p81, %p82
    %p85 = scmp.ne.s32.totalorder %s68, %s84
    %p86 = scmp.eq.s32.totalorder %s34, 0
    %p87 = por %p85, %p86
    %s89 = sadd.s32 %s88, 1
    %p92 = scmp.eq.s32.totalorder %s28, 1
    %p93 = scmp.ne.s32.totalorder %s88, %s90
    %p94 = scmp.eq.s32.totalorder %s28, 0
    %p95 = por %p93, %p94
    %p96 = scmp.ne.s32.totalorder %s88, %s90
    %p97 = scmp.eq.s32.totalorder %s33, 1
    %p98 = por %p96, %p97
    %p99 = scmp.ne.s32.totalorder %s90, %s91
    %p100 = scmp.eq.s32.totalorder %s33, 0
    %p101 = por %p99, %p100
    %p102 = scmp.ne.s32.totalorder %s90, %s91
    %p103 = scmp.eq.s32.totalorder %s34, 1
    %p104 = por %p102, %p103
    %p106 = scmp.ne.s32.totalorder %s91, %s105
    %p107 = scmp.eq.s32.totalorder %s34, 0
    %p108 = por %p106, %p107
    %s110 = sadd.s32 %s109, 1
    %p113 = scmp.eq.s32.totalorder %s28, 1
    %p114 = scmp.ne.s32.totalorder %s109, %s111
    %p115 = scmp.eq.s32.totalorder %s28, 0
    %p116 = por %p114, %p115
    %p117 = scmp.ne.s32.totalorder %s109, %s111
    %p118 = scmp.eq.s32.totalorder %s33, 1
    %p119 = por %p117, %p118
    %p120 = scmp.ne.s32.totalorder %s111, %s112
    %p121 = scmp.eq.s32.totalorder %s33, 0
    %p122 = por %p120, %p121
    %p123 = scmp.ne.s32.totalorder %s111, %s112
    %p124 = scmp.eq.s32.totalorder %s34, 1
    %p125 = por %p123, %p124
    %p127 = scmp.ne.s32.totalorder %s112, %s126
    %p128 = scmp.eq.s32.totalorder %s34, 0
    %p129 = por %p127, %p128
    %s131 = sadd.s32 %s130, 1
    %p134 = scmp.eq.s32.totalorder %s28, 1
    %p135 = scmp.ne.s32.totalorder %s130, %s132
    %p136 = scmp.eq.s32.totalorder %s28, 0
    %p137 = por %p135, %p136
    %p138 = scmp.ne.s32.totalorder %s130, %s132
    %p139 = scmp.eq.s32.totalorder %s33, 1
    %p140 = por %p138, %p139
    %p141 = scmp.ne.s32.totalorder %s132, %s133
    %p142 = scmp.eq.s32.totalorder %s33, 0
    %p143 = por %p141, %p142
    %p144 = scmp.ne.s32.totalorder %s132, %s133
    %p145 = scmp.eq.s32.totalorder %s34, 1
    %p146 = por %p144, %p145
    %p148 = scmp.ne.s32.totalorder %s133, %s147
    %p149 = scmp.eq.s32.totalorder %s34, 0
    %p150 = por %p148, %p149
    %s152 = sadd.s32 %s151, 1
    %p155 = scmp.eq.s32.totalorder %s28, 1
    %p156 = scmp.ne.s32.totalorder %s151, %s153
    %p157 = scmp.eq.s32.totalorder %s28, 0
    %p158 = por %p156, %p157
    %p159 = scmp.ne.s32.totalorder %s151, %s153
    %p160 = scmp.eq.s32.totalorder %s33, 1
    %p161 = por %p159, %p160
    %p162 = scmp.ne.s32.totalorder %s153, %s154
    %p163 = scmp.eq.s32.totalorder %s33, 0
    %p164 = por %p162, %p163
    %p165 = scmp.ne.s32.totalorder %s153, %s154
    %p166 = scmp.eq.s32.totalorder %s34, 1
    %p167 = por %p165, %p166
    %p169 = scmp.ne.s32.totalorder %s154, %s168
    %p170 = scmp.eq.s32.totalorder %s34, 0
    %p171 = por %p169, %p170
    %s173 = sadd.s32 %s172, 1
    %p176 = scmp.eq.s32.totalorder %s28, 1
    %p177 = scmp.ne.s32.totalorder %s172, %s174
    %p178 = scmp.eq.s32.totalorder %s28, 0
    %p179 = por %p177, %p178
    %p180 = scmp.ne.s32.totalorder %s172, %s174
    %p181 = scmp.eq.s32.totalorder %s33, 1
    %p182 = por %p180, %p181
    %p183 = scmp.ne.s32.totalorder %s174, %s175
    %p184 = scmp.eq.s32.totalorder %s33, 0
    %p185 = por %p183, %p184
    %p186 = scmp.ne.s32.totalorder %s174, %s175
    %p187 = scmp.eq.s32.totalorder %s34, 1
    %p188 = por %p186, %p187
    %p190 = scmp.ne.s32.totalorder %s175, %s189
    %p191 = scmp.eq.s32.totalorder %s34, 0
    %p192 = por %p190, %p191
    %s194 = sadd.s32 %s193, 1
    %p197 = scmp.eq.s32.totalorder %s28, 1
    %p198 = scmp.ne.s32.totalorder %s193, %s195
    %p199 = scmp.eq.s32.totalorder %s28, 0
    %p200 = por %p198, %p199
    %p201 = scmp.ne.s32.totalorder %s193, %s195
    %p202 = scmp.eq.s32.totalorder %s33, 1
    %p203 = por %p201, %p202
    %p204 = scmp.ne.s32.totalorder %s195, %s196
    %p205 = scmp.eq.s32.totalorder %s33, 0
    %p206 = por %p204, %p205
    %p207 = scmp.ne.s32.totalorder %s195, %s196
    %p208 = scmp.eq.s32.totalorder %s34, 1
    %p209 = por %p207, %p208
    %p211 = scmp.ne.s32.totalorder %s196, %s210
    %p212 = scmp.eq.s32.totalorder %s34, 0
    %p213 = por %p211, %p212
    %s215 = sadd.s32 %s214, 1
    %p218 = scmp.eq.s32.totalorder %s28, 1
    %p219 = scmp.ne.s32.totalorder %s214, %s216
    %p220 = scmp.eq.s32.totalorder %s28, 0
    %p221 = por %p219, %p220
    %p222 = scmp.ne.s32.totalorder %s214, %s216
    %p223 = scmp.eq.s32.totalorder %s33, 1
    %p224 = por %p222, %p223
    %p225 = scmp.ne.s32.totalorder %s216, %s217
    %p226 = scmp.eq.s32.totalorder %s33, 0
    %p227 = por %p225, %p226
    %p228 = scmp.ne.s32.totalorder %s216, %s217
    %p229 = scmp.eq.s32.totalorder %s34, 1
    %p230 = por %p228, %p229
    %p232 = scmp.ne.s32.totalorder %s217, %s231
    %p233 = scmp.eq.s32.totalorder %s34, 0
    %p234 = por %p232, %p233
    %s236 = sadd.s32 %s235, 1
    %p239 = scmp.eq.s32.totalorder %s28, 1
    %p240 = scmp.ne.s32.totalorder %s235, %s237
    %p241 = scmp.eq.s32.totalorder %s28, 0
    %p242 = por %p240, %p241
    %p243 = scmp.ne.s32.totalorder %s235, %s237
    %p244 = scmp.eq.s32.totalorder %s33, 1
    %p245 = por %p243, %p244
    %p246 = scmp.ne.s32.totalorder %s237, %s238
    %p247 = scmp.eq.s32.totalorder %s33, 0
    %p248 = por %p246, %p247
    %p249 = scmp.ne.s32.totalorder %s237, %s238
    %p250 = scmp.eq.s32.totalorder %s34, 1
    %p251 = por %p249, %p250
    %p253 = scmp.ne.s32.totalorder %s238, %s252
    %p254 = scmp.eq.s32.totalorder %s34, 0
    %p255 = por %p253, %p254
    %s257 = sadd.s32 %s256, 1
    %p260 = scmp.eq.s32.totalorder %s28, 1
    %p261 = scmp.ne.s32.totalorder %s256, %s258
    %p262 = scmp.eq.s32.totalorder %s28, 0
    %p263 = por %p261, %p262
    %p264 = scmp.ne.s32.totalorder %s256, %s258
    %p265 = scmp.eq.s32.totalorder %s33, 1
    %p266 = por %p264, %p265
    %p267 = scmp.ne.s32.totalorder %s258, %s259
    %p268 = scmp.eq.s32.totalorder %s33, 0
    %p269 = por %p267, %p268
    %p270 = scmp.ne.s32.totalorder %s258, %s259
    %p271 = scmp.eq.s32.totalorder %s34, 1
    %p272 = por %p270, %p271
    %p274 = scmp.ne.s32.totalorder %s259, %s273
    %p275 = scmp.eq.s32.totalorder %s34, 0
    %p276 = por %p274, %p275
    %s278 = sadd.s32 %s277, 1
    %p281 = scmp.eq.s32.totalorder %s28, 1
    %p282 = scmp.ne.s32.totalorder %s277, %s279
    %p283 = scmp.eq.s32.totalorder %s28, 0
    %p284 = por %p282, %p283
    %p285 = scmp.ne.s32.totalorder %s277, %s279
    %p286 = scmp.eq.s32.totalorder %s33, 1
    %p287 = por %p285, %p286
    %p288 = scmp.ne.s32.totalorder %s279, %s280
    %p289 = scmp.eq.s32.totalorder %s33, 0
    %p290 = por %p288, %p289
    %p291 = scmp.ne.s32.totalorder %s279, %s280
    %p292 = scmp.eq.s32.totalorder %s34, 1
    %p293 = por %p291, %p292
    %p295 = scmp.ne.s32.totalorder %s280, %s294
    %p296 = scmp.eq.s32.totalorder %s34, 0
    %p297 = por %p295, %p296
    %s299 = sadd.s32 %s298, 1
    %p302 = scmp.eq.s32.totalorder %s28, 1
    %p303 = scmp.ne.s32.totalorder %s298, %s300
    %p304 = scmp.eq.s32.totalorder %s28, 0
    %p305 = por %p303, %p304
    %p306 = scmp.ne.s32.totalorder %s298, %s300
    %p307 = scmp.eq.s32.totalorder %s33, 1
    %p308 = por %p306, %p307
    %p309 = scmp.ne.s32.totalorder %s300, %s301
    %p310 = scmp.eq.s32.totalorder %s33, 0
    %p311 = por %p309, %p310
    %p312 = scmp.ne.s32.totalorder %s300, %s301
    %p313 = scmp.eq.s32.totalorder %s34, 1
    %p314 = por %p312, %p313
    %p316 = scmp.ne.s32.totalorder %s301, %s315
    %p317 = scmp.eq.s32.totalorder %s34, 0
    %p318 = por %p316, %p317
    %s320 = sadd.s32 %s319, 1
    %p323 = scmp.eq.s32.totalorder %s28, 1
    %p324 = scmp.ne.s32.totalorder %s319, %s321
    %p325 = scmp.eq.s32.totalorder %s28, 0
    %p326 = por %p324, %p325
    %p327 = scmp.ne.s32.totalorder %s319, %s321
    %p328 = scmp.eq.s32.totalorder %s33, 1
    %p329 = por %p327, %p328
    %p330 = scmp.ne.s32.totalorder %s321, %s322
    %p331 = scmp.eq.s32.totalorder %s33, 0
    %p332 = por %p330, %p331
    %p333 = scmp.ne.s32.totalorder %s321, %s322
    %p334 = scmp.eq.s32.totalorder %s34, 1
    %p335 = por %p333, %p334
    %p337 = scmp.ne.s32.totalorder %s322, %s336
    %p338 = scmp.eq.s32.totalorder %s34, 0
    %p339 = por %p337, %p338
    %s341 = sadd.s32 %s340, 1
    %p344 = scmp.eq.s32.totalorder %s28, 1
    %p345 = scmp.ne.s32.totalorder %s340, %s342
    %p346 = scmp.eq.s32.totalorder %s28, 0
    %p347 = por %p345, %p346
    %p348 = scmp.ne.s32.totalorder %s340, %s342
    %p349 = scmp.eq.s32.totalorder %s33, 1
    %p350 = por %p348, %p349
    %p351 = scmp.ne.s32.totalorder %s342, %s343
    %p352 = scmp.eq.s32.totalorder %s33, 0
    %p353 = por %p351, %p352
    %p354 = scmp.ne.s32.totalorder %s342, %s343
    %p355 = scmp.eq.s32.totalorder %s34, 1
    %p356 = por %p354, %p355
    %p358 = scmp.ne.s32.totalorder %s343, %s357
    %p359 = scmp.eq.s32.totalorder %s34, 0
    %p360 = por %p358, %p359
    %s362 = sadd.s32 %s361, 1
    %p365 = scmp.eq.s32.totalorder %s28, 1
    %p366 = scmp.ne.s32.totalorder %s361, %s363
    %p367 = scmp.eq.s32.totalorder %s28, 0
    %p368 = por %p366, %p367
    %p369 = scmp.ne.s32.totalorder %s361, %s363
    %p370 = scmp.eq.s32.totalorder %s33, 1
    %p371 = por %p369, %p370
    %p372 = scmp.ne.s32.totalorder %s363, %s364
    %p373 = scmp.eq.s32.totalorder %s33, 0
    %p374 = por %p372, %p373
    %p375 = scmp.ne.s32.totalorder %s363, %s364
    %p376 = scmp.eq.s32.totalorder %s34, 1
    %p377 = por %p375, %p376
    %p379 = scmp.ne.s32.totalorder %s364, %s378
    %p380 = scmp.eq.s32.totalorder %s34, 0
    %p381 = por %p379, %p380
    %s383 = sadd.s32 %s382, 1
    %p386 = scmp.eq.s32.totalorder %s28, 1
    %p387 = scmp.ne.s32.totalorder %s382, %s384
    %p388 = scmp.eq.s32.totalorder %s28, 0
    %p389 = por %p387, %p388
    %p390 = scmp.ne.s32.totalorder %s382, %s384
    %p391 = scmp.eq.s32.totalorder %s33, 1
    %p392 = por %p390, %p391
    %p393 = scmp.ne.s32.totalorder %s384, %s385
    %p394 = scmp.eq.s32.totalorder %s33, 0
    %p395 = por %p393, %p394
    %p396 = scmp.ne.s32.totalorder %s384, %s385
    %p397 = scmp.eq.s32.totalorder %s34, 1
    %p398 = por %p396, %p397
    %p400 = scmp.ne.s32.totalorder %s385, %s399
    %p401 = scmp.eq.s32.totalorder %s34, 0
    %p402 = por %p400, %p401
    %s404 = sadd.s32 %s403, 1
    %p407 = scmp.eq.s32.totalorder %s28, 1
    %p408 = scmp.ne.s32.totalorder %s403, %s405
    %p409 = scmp.eq.s32.totalorder %s28, 0
    %p410 = por %p408, %p409
    %p411 = scmp.ne.s32.totalorder %s403, %s405
    %p412 = scmp.eq.s32.totalorder %s33, 1
    %p413 = por %p411, %p412
    %p414 = scmp.ne.s32.totalorder %s405, %s406
    %p415 = scmp.eq.s32.totalorder %s33, 0
    %p416 = por %p414, %p415
    %p417 = scmp.ne.s32.totalorder %s405, %s406
    %p418 = scmp.eq.s32.totalorder %s34, 1
    %p419 = por %p417, %p418
    %p421 = scmp.ne.s32.totalorder %s406, %s420
    %p422 = scmp.eq.s32.totalorder %s34, 0
    %p423 = por %p421, %p422
    %s425 = sadd.s32 %s424, 1
    %p428 = scmp.eq.s32.totalorder %s28, 1
    %p429 = scmp.ne.s32.totalorder %s424, %s426
    %p430 = scmp.eq.s32.totalorder %s28, 0
    %p431 = por %p429, %p430
    %p432 = scmp.ne.s32.totalorder %s424, %s426
    %p433 = scmp.eq.s32.totalorder %s33, 1
    %p434 = por %p432, %p433
    %p435 = scmp.ne.s32.totalorder %s426, %s427
    %p436 = scmp.eq.s32.totalorder %s33, 0
    %p437 = por %p435, %p436
    %p438 = scmp.ne.s32.totalorder %s426, %s427
    %p439 = scmp.eq.s32.totalorder %s34, 1
    %p440 = por %p438, %p439
    %p442 = scmp.ne.s32.totalorder %s427, %s441
    %p443 = scmp.eq.s32.totalorder %s34, 0
    %p444 = por %p442, %p443
    %s446 = sadd.s32 %s445, 1
    %p449 = scmp.eq.s32.totalorder %s28, 1
    %p450 = scmp.ne.s32.totalorder %s445, %s447
    %p451 = scmp.eq.s32.totalorder %s28, 0
    %p452 = por %p450, %p451
    %p453 = scmp.ne.s32.totalorder %s445, %s447
    %p454 = scmp.eq.s32.totalorder %s33, 1
    %p455 = por %p453, %p454
    %p456 = scmp.ne.s32.totalorder %s447, %s448
    %p457 = scmp.eq.s32.totalorder %s33, 0
    %p458 = por %p456, %p457
    %p459 = scmp.ne.s32.totalorder %s447, %s448
    %p460 = scmp.eq.s32.totalorder %s34, 1
    %p461 = por %p459, %p460
    %p463 = scmp.ne.s32.totalorder %s448, %s462
    %p464 = scmp.eq.s32.totalorder %s34, 0
    %p465 = por %p463, %p464
    %s467 = sadd.s32 %s466, 1
    %p470 = scmp.eq.s32.totalorder %s28, 1
    %p471 = scmp.ne.s32.totalorder %s466, %s468
    %p472 = scmp.eq.s32.totalorder %s28, 0
    %p473 = por %p471, %p472
    %p474 = scmp.ne.s32.totalorder %s466, %s468
    %p475 = scmp.eq.s32.totalorder %s33, 1
    %p476 = por %p474, %p475
    %p477 = scmp.ne.s32.totalorder %s468, %s469
    %p478 = scmp.eq.s32.totalorder %s33, 0
    %p479 = por %p477, %p478
    %p480 = scmp.ne.s32.totalorder %s468, %s469
    %p481 = scmp.eq.s32.totalorder %s34, 1
    %p482 = por %p480, %p481
    %p484 = scmp.ne.s32.totalorder %s469, %s483
    %p485 = scmp.eq.s32.totalorder %s34, 0
    %p486 = por %p484, %p485
    %s488 = sadd.s32 %s487, 1
    %p491 = scmp.eq.s32.totalorder %s28, 1
    %p492 = scmp.ne.s32.totalorder %s487, %s489
    %p493 = scmp.eq.s32.totalorder %s28, 0
    %p494 = por %p492, %p493
    %p495 = scmp.ne.s32.totalorder %s487, %s489
    %p496 = scmp.eq.s32.totalorder %s33, 1
    %p497 = por %p495, %p496
    %p498 = scmp.ne.s32.totalorder %s489, %s490
    %p499 = scmp.eq.s32.totalorder %s33, 0
    %p500 = por %p498, %p499
    %p501 = scmp.ne.s32.totalorder %s489, %s490
    %p502 = scmp.eq.s32.totalorder %s34, 1
    %p503 = por %p501, %p502
    %p505 = scmp.ne.s32.totalorder %s490, %s504
    %p506 = scmp.eq.s32.totalorder %s34, 0
    %p507 = por %p505, %p506
    %s508 = ssub.s32 %s28, %s35
    %p509 = scmp.eq.s32.totalorder %s508, 0
    %s511 = sadd.s32 %s510, 1
    %s512 = scalar_select %p509, %s510, %s511
    %p515 = pneg %p509
    %p516 = scmp.eq.s32.totalorder %s28, 1
    %p517 = por %p515, %p516
    %p518 = scmp.ne.s32.totalorder %s510, %s513
    %p519 = scmp.eq.s32.totalorder %s28, 0
    %p520 = por %p518, %p519
    %p521 = scmp.ne.s32.totalorder %s510, %s513
    %p522 = scmp.eq.s32.totalorder %s33, 1
    %p523 = por %p521, %p522
    %p524 = scmp.ne.s32.totalorder %s513, %s514
    %p525 = scmp.eq.s32.totalorder %s33, 0
    %p526 = por %p524, %p525
    %p527 = scmp.ne.s32.totalorder %s513, %s514
    %p528 = scmp.eq.s32.totalorder %s34, 1
    %p529 = por %p527, %p528
    %p531 = scmp.ne.s32.totalorder %s514, %s530
    %p532 = scmp.eq.s32.totalorder %s34, 0
    %p533 = por %p531, %p532
    %p534 = scmp.le.s32.totalorder 1, %s28
    %p535 = scmp.lt.s32.totalorder %s28, 3
    %p536 = pnand %p534, %p535
    %p537 = pneg %p536
    // Predicated region
    $region9: #{clip_forward.4} parent=5 // pred_check
      _
    $region10: #{clip_forward.4} parent=5 // pred_check_branch
      %539 = sbr.rel (%p536) target = $region12
    $region11: #{clip_forward.4} parent=5 // pred_region
      %s540 = ssub.s32 %s28, 1
      // Predicated region
      $region13: #{clip_forward.4} parent=11 // pred_check
        %p541 = pneg %p101
      $region14: #{clip_forward.4} parent=11 // pred_check_branch
        %543 = sbr.rel (%p541) target = $region16
      $region15: #{clip_forward.4} parent=11 // pred_region
        _
      $region16: #{clip_forward.4} parent=11 // pred_fallthru
        _
      // Predicated region
      $region17: #{clip_forward.4} parent=11 // pred_check
        %p544 = pneg %p122
      $region18: #{clip_forward.4} parent=11 // pred_check_branch
        %546 = sbr.rel (%p544) target = $region20
      $region19: #{clip_forward.4} parent=11 // pred_region
        _
      $region20: #{clip_forward.4} parent=11 // pred_fallthru
        _
      // Predicated region
      $region21: #{clip_forward.4} parent=11 // pred_check
        %p547 = pneg %p143
      $region22: #{clip_forward.4} parent=11 // pred_check_branch
        %549 = sbr.rel (%p547) target = $region24
      $region23: #{clip_forward.4} parent=11 // pred_region
        _
      $region24: #{clip_forward.4} parent=11 // pred_fallthru
        _
      // Predicated region
      $region25: #{clip_forward.4} parent=11 // pred_check
        %p550 = pneg %p164
      $region26: #{clip_forward.4} parent=11 // pred_check_branch
        %552 = sbr.rel (%p550) target = $region28
      $region27: #{clip_forward.4} parent=11 // pred_region
        _
      $region28: #{clip_forward.4} parent=11 // pred_fallthru
        _
      // Predicated region
      $region29: #{clip_forward.4} parent=11 // pred_check
        %p553 = pneg %p185
      $region30: #{clip_forward.4} parent=11 // pred_check_branch
        %555 = sbr.rel (%p553) target = $region32
      $region31: #{clip_forward.4} parent=11 // pred_region
        _
      $region32: #{clip_forward.4} parent=11 // pred_fallthru
        _
      // Predicated region
      $region33: #{clip_forward.4} parent=11 // pred_check
        %p556 = pneg %p206
      $region34: #{clip_forward.4} parent=11 // pred_check_branch
        %558 = sbr.rel (%p556) target = $region36
      $region35: #{clip_forward.4} parent=11 // pred_region
        _
      $region36: #{clip_forward.4} parent=11 // pred_fallthru
        _
      // Predicated region
      $region37: #{clip_forward.4} parent=11 // pred_check
        %p559 = pneg %p227
      $region38: #{clip_forward.4} parent=11 // pred_check_branch
        %561 = sbr.rel (%p559) target = $region40
      $region39: #{clip_forward.4} parent=11 // pred_region
        _
      $region40: #{clip_forward.4} parent=11 // pred_fallthru
        _
      // Predicated region
      $region41: #{clip_forward.4} parent=11 // pred_check
        %p562 = pneg %p248
      $region42: #{clip_forward.4} parent=11 // pred_check_branch
        %564 = sbr.rel (%p562) target = $region44
      $region43: #{clip_forward.4} parent=11 // pred_region
        _
      $region44: #{clip_forward.4} parent=11 // pred_fallthru
        _
      // Predicated region
      $region45: #{clip_forward.4} parent=11 // pred_check
        %p565 = pneg %p269
      $region46: #{clip_forward.4} parent=11 // pred_check_branch
        %567 = sbr.rel (%p565) target = $region48
      $region47: #{clip_forward.4} parent=11 // pred_region
        _
      $region48: #{clip_forward.4} parent=11 // pred_fallthru
        _
      // Predicated region
      $region49: #{clip_forward.4} parent=11 // pred_check
        %p568 = pneg %p290
      $region50: #{clip_forward.4} parent=11 // pred_check_branch
        %570 = sbr.rel (%p568) target = $region52
      $region51: #{clip_forward.4} parent=11 // pred_region
        _
      $region52: #{clip_forward.4} parent=11 // pred_fallthru
        _
      // Predicated region
      $region53: #{clip_forward.4} parent=11 // pred_check
        %p571 = pneg %p311
      $region54: #{clip_forward.4} parent=11 // pred_check_branch
        %573 = sbr.rel (%p571) target = $region56
      $region55: #{clip_forward.4} parent=11 // pred_region
        _
      $region56: #{clip_forward.4} parent=11 // pred_fallthru
        _
      // Predicated region
      $region57: #{clip_forward.4} parent=11 // pred_check
        %p574 = pneg %p332
      $region58: #{clip_forward.4} parent=11 // pred_check_branch
        %576 = sbr.rel (%p574) target = $region60
      $region59: #{clip_forward.4} parent=11 // pred_region
        _
      $region60: #{clip_forward.4} parent=11 // pred_fallthru
        _
      // Predicated region
      $region61: #{clip_forward.4} parent=11 // pred_check
        %p577 = pneg %p353
      $region62: #{clip_forward.4} parent=11 // pred_check_branch
        %579 = sbr.rel (%p577) target = $region64
      $region63: #{clip_forward.4} parent=11 // pred_region
        _
      $region64: #{clip_forward.4} parent=11 // pred_fallthru
        _
      // Predicated region
      $region65: #{clip_forward.4} parent=11 // pred_check
        %p580 = pneg %p374
      $region66: #{clip_forward.4} parent=11 // pred_check_branch
        %582 = sbr.rel (%p580) target = $region68
      $region67: #{clip_forward.4} parent=11 // pred_region
        _
      $region68: #{clip_forward.4} parent=11 // pred_fallthru
        _
      // Predicated region
      $region69: #{clip_forward.4} parent=11 // pred_check
        %p583 = pneg %p395
      $region70: #{clip_forward.4} parent=11 // pred_check_branch
        %585 = sbr.rel (%p583) target = $region72
      $region71: #{clip_forward.4} parent=11 // pred_region
        _
      $region72: #{clip_forward.4} parent=11 // pred_fallthru
        _
      // Predicated region
      $region73: #{clip_forward.4} parent=11 // pred_check
        %p586 = pneg %p416
      $region74: #{clip_forward.4} parent=11 // pred_check_branch
        %588 = sbr.rel (%p586) target = $region76
      $region75: #{clip_forward.4} parent=11 // pred_region
        _
      $region76: #{clip_forward.4} parent=11 // pred_fallthru
        _
      // Predicated region
      $region77: #{clip_forward.4} parent=11 // pred_check
        %p589 = pneg %p437
      $region78: #{clip_forward.4} parent=11 // pred_check_branch
        %591 = sbr.rel (%p589) target = $region80
      $region79: #{clip_forward.4} parent=11 // pred_region
        _
      $region80: #{clip_forward.4} parent=11 // pred_fallthru
        _
      // Predicated region
      $region81: #{clip_forward.4} parent=11 // pred_check
        %p592 = pneg %p458
      $region82: #{clip_forward.4} parent=11 // pred_check_branch
        %594 = sbr.rel (%p592) target = $region84
      $region83: #{clip_forward.4} parent=11 // pred_region
        _
      $region84: #{clip_forward.4} parent=11 // pred_fallthru
        _
      // Predicated region
      $region85: #{clip_forward.4} parent=11 // pred_check
        %p595 = pneg %p479
      $region86: #{clip_forward.4} parent=11 // pred_check_branch
        %597 = sbr.rel (%p595) target = $region88
      $region87: #{clip_forward.4} parent=11 // pred_region
        _
      $region88: #{clip_forward.4} parent=11 // pred_fallthru
        _
      // Predicated region
      $region89: #{clip_forward.4} parent=11 // pred_check
        %p598 = pneg %p500
      $region90: #{clip_forward.4} parent=11 // pred_check_branch
        %600 = sbr.rel (%p598) target = $region92
      $region91: #{clip_forward.4} parent=11 // pred_region
        _
      $region92: #{clip_forward.4} parent=11 // pred_fallthru
        _
    $region12: #{clip_forward.4} parent=5 // pred_fallthru
      _
    %p601 = scmp.lt.s32.totalorder %s28, 2
    // Predicated region
    $region93: #{clip_forward.4} parent=5 // pred_check
      %p602 = pneg %p601
    $region94: #{clip_forward.4} parent=5 // pred_check_branch
      %604 = sbr.rel (%p602) target = $region96
    $region95: #{clip_forward.4} parent=5 // pred_region
      // Predicated region
      $region97: #{clip_forward.4} parent=95 // pred_check
        %p605 = pneg %p48
      $region98: #{clip_forward.4} parent=95 // pred_check_branch
        %607 = sbr.rel (%p605) target = $region100
      $region99: #{clip_forward.4} parent=95 // pred_region
        %p608 = scmp.lt.s32.totalorder %s28, 1
        %s609 = scalar_select %p608, %s28, 1
        %s610 = smul.addr %s609, 8
        %s611 = scalar_lea.vmem %s0, %s610
      $region100: #{clip_forward.4} parent=95 // pred_fallthru
        _
      // Predicated region
      $region101: #{clip_forward.4} parent=95 // pred_check
        %p612 = pneg %p74
      $region102: #{clip_forward.4} parent=95 // pred_check_branch
        %614 = sbr.rel (%p612) target = $region104
      $region103: #{clip_forward.4} parent=95 // pred_region
        %p615 = scmp.lt.s32.totalorder %s28, 1
        %s616 = scalar_select %p615, %s28, 1
        %s617 = scalar_lea.vmem %s1, %s616
      $region104: #{clip_forward.4} parent=95 // pred_fallthru
        _
    $region96: #{clip_forward.4} parent=5 // pred_fallthru
      _
    %p618 = scmp.le.s32.totalorder 1, %s28
    %p619 = scmp.lt.s32.totalorder %s28, 3
    %p620 = pnand %p618, %p619
    %p621 = pneg %p620
    // Predicated region
    $region105: #{clip_forward.4} parent=5 // pred_check
      _
    $region106: #{clip_forward.4} parent=5 // pred_check_branch
      %623 = sbr.rel (%p620) target = $region108
    $region107: #{clip_forward.4} parent=5 // pred_region
      %s624 = ssub.s32 %s28, 1
      %p625 = scmp.lt.s32.totalorder %s33, 1
      %s626 = scalar_select %p625, %s33, 1
      %s627 = smul.addr %s626, 8
      %s628 = scalar_lea.vmem %s0, %s627
      %p629 = pneg %p54
      %p630 = pneg %p51
      %p631 = scmp.lt.s32.totalorder %s33, 1
      %s632 = scalar_select %p631, %s33, 1
      %s633 = scalar_lea.vmem %s1, %s632
      %p634 = pneg %p80
      %p635 = pneg %p77
      %p636 = pneg %p101
      %p637 = pneg %p98
      %p638 = pneg %p122
      %p639 = pneg %p119
      %p640 = pneg %p143
      %p641 = pneg %p140
      %p642 = pneg %p164
      %p643 = pneg %p161
      %p644 = pneg %p185
      %p645 = pneg %p182
      %p646 = pneg %p206
      %p647 = pneg %p203
      %p648 = pneg %p227
      %p649 = pneg %p224
      %p650 = pneg %p248
      %p651 = pneg %p245
      %p652 = pneg %p269
      %p653 = pneg %p266
      %p654 = pneg %p290
      %p655 = pneg %p287
      %p656 = pneg %p311
      %p657 = pneg %p308
      %p658 = pneg %p332
      %p659 = pneg %p329
      %p660 = pneg %p353
      %p661 = pneg %p350
      %p662 = pneg %p374
      %p663 = pneg %p371
      %p664 = pneg %p395
      %p665 = pneg %p392
      %p666 = pneg %p416
      %p667 = pneg %p413
      %p668 = pneg %p437
      %p669 = pneg %p434
      %p670 = pneg %p458
      %p671 = pneg %p455
      %p672 = pneg %p479
      %p673 = pneg %p476
      %p674 = pneg %p500
      %p675 = pneg %p497
      %p676 = pneg %p526
      %p677 = pneg %p523
      %p678 = scmp.lt.s32.totalorder %s33, 1
      %s679 = scalar_select %p678, %s33, 1
      %s680 = scalar_lea.vmem %s22, %s679
      %p681 = scmp.lt.s32.totalorder %s33, 1
      %s682 = scalar_select %p681, %s33, 1
      %s683 = smul.addr %s682, 8
      %s684 = scalar_lea.vmem %s0, %s683
      %p685 = scmp.lt.s32.totalorder %s33, 1
      %s686 = scalar_select %p685, %s33, 1
      %s687 = scalar_lea.vmem %s1, %s686
      %p688 = scmp.lt.s32.totalorder %s33, 1
      %s689 = scalar_select %p688, %s33, 1
      %s690 = scalar_lea.vmem %s22, %s689
      %v691 = vld [vmem:[%s684] sm:$0xff]
      %v692 = vld [vmem:[%s2] sm:$0xff]
      %v693 = vadd.f32 %v691, %v692
      %v694 = vld [vmem:[%s3] sm:$0x1]
      %v695 = vld [vmem:[%s4] sm:$0x1]
      %vm696 = vcmask 523264
      %v697 = vsel %vm696, %v693, 0.0
      %698 = vadd.xlane.f32.xlu0 %v697
      %v699 = vpop.xlane.xlu0 %698
      %v700 = vrcp.pop 64.0
      %v701 = vmul.f32 %v699, %v700
      %v702 = vsub.f32 %v693, %v701
      %v703 = vmul.f32 %v702, %v702
      %v704 = vsel %vm696, %v703, 0.0
      %705 = vadd.xlane.f32.xlu0 %v704
      %v706 = vpop.xlane.xlu0 %705
      %v707 = vmul.f32 %v706, %v700
      %v708 = vadd.f32 %v707, 1e-05
      %v709 = vrsqrt.pop %v708
      %v710 = vmul.f32 %v702, %v709
      %v712 = vlaneseq
      %v713 = vshrl.u32 %v712, 7
      %v714 = vsub.s32 0, %v713
      %v715 = vrot.slane %v694, %v714
      %v717 = vmul.f32 %v710, %v715
      %v719 = vlaneseq
      %v720 = vshrl.u32 %v719, 7
      %v721 = vsub.s32 0, %v720
      %v722 = vrot.slane %v695, %v721
      %v724 = vadd.f32 %v717, %v722
      %v725 = vld [vmem:[%s12] sm:$0x1]
      %v726 = vld [vmem:[%s5] sm:$0xff]
      %v727 = vld [vmem:[%s5 + $0x8] sm:$0xff]
      %v728 = vld [vmem:[%s5 + $0x10] sm:$0xff]
      %v729 = vld [vmem:[%s5 + $0x18] sm:$0xff]
      %v730 = vld [vmem:[%s5 + $0x20] sm:$0xff]
      %v731 = vld [vmem:[%s5 + $0x28] sm:$0xff]
      %v732 = vld [vmem:[%s5 + $0x30] sm:$0xff]
      %v733 = vld [vmem:[%s5 + $0x38] sm:$0xff]
      %v734 = vld [vmem:[%s6] sm:$0x1]
      %v736 = vlaneseq
      %v737 = vshrl.u32 %v736, 7
      %v738 = vsub.s32 0, %v737
      %v739 = vrot.slane %v734, %v738
      %v742 = vsel %vm696, %v724, 0
      %744 = vmatprep.subr.mxu0 0.0
      %745 = vmatpush1.msra.mxu0 %v726
      %746 = vmatprep.subr.mxu0 0.0
      %747 = vmatpush1.msra.mxu0 %v727
      %748 = vmatprep.subr.mxu0 0.0
      %749 = vmatpush1.msra.mxu0 %v728
      %750 = vmatprep.subr.mxu0 0.0
      %751 = vmatpush1.msra.mxu0 %v729
      %752 = vmatprep.subr.mxu0 0.0
      %753 = vmatpush1.msra.mxu0 %v730
      %754 = vmatprep.subr.mxu0 0.0
      %755 = vmatpush1.msra.mxu0 %v731
      %756 = vmatprep.subr.mxu0 0.0
      %757 = vmatpush1.msra.mxu0 %v732
      %758 = vmatprep.subr.mxu0 0.0
      %759 = vmatpush1.msra.mxu0 %v733
      %760 = vmatprep.subr.mxu0 0.0
      %761 = vmatpush1.msra.mxu0 0.0
      %762 = vmatprep.subr.mxu0 0.0
      %763 = vmatpush1.msra.mxu0 0.0
      %764 = vmatprep.subr.mxu0 0.0
      %765 = vmatpush1.msra.mxu0 0.0
      %766 = vmatprep.subr.mxu0 0.0
      %767 = vmatpush1.msra.mxu0 0.0
      %768 = vmatprep.subr.mxu0 0.0
      %769 = vmatpush1.msra.mxu0 0.0
      %770 = vmatprep.subr.mxu0 0.0
      %771 = vmatpush1.msra.mxu0 0.0
      %772 = vmatprep.subr.mxu0 0.0
      %773 = vmatpush1.msra.mxu0 0.0
      %774 = vmatprep.subr.mxu0 0.0
      %775 = vmatpush1.msra.mxu0 0.0
      %776 = vmatprep.subr.mxu0 0.0
      %777 = vmatpush1.msra.mxu0 0.0
      %778 = vmatprep.subr.mxu0 0.0
      %779 = vmatpush1.msra.mxu0 0.0
      %780 = vmatprep.subr.mxu0 0.0
      %781 = vmatpush1.msra.mxu0 0.0
      %782 = vmatprep.subr.mxu0 0.0
      %783 = vmatpush1.msra.mxu0 0.0
      %784 = vmatprep.subr.mxu0 0.0
      %785 = vmatpush1.msra.mxu0 0.0
      %786 = vmatprep.subr.mxu0 0.0
      %787 = vmatpush1.msra.mxu0 0.0
      %788 = vmatprep.subr.mxu0 0.0
      %789 = vmatpush1.msra.mxu0 0.0
      %790 = vmatprep.subr.mxu0 0.0
      %791 = vmatpush1.msra.mxu0 0.0
      %792 = vmatprep.subr.mxu0 0.0
      %793 = vmatpush1.msra.mxu0 0.0
      %794 = vmatprep.subr.mxu0 0.0
      %795 = vmatpush1.msra.mxu0 0.0
      %796 = vmatprep.subr.mxu0 0.0
      %797 = vmatpush1.msra.mxu0 0.0
      %798 = vmatprep.subr.mxu0 0.0
      %799 = vmatpush1.msra.mxu0 0.0
      %800 = vmatprep.subr.mxu0 0.0
      %801 = vmatpush1.msra.mxu0 0.0
      %802 = vmatprep.subr.mxu0 0.0
      %803 = vmatpush1.msra.mxu0 0.0
      %804 = vmatprep.subr.mxu0 0.0
      %805 = vmatpush1.msra.mxu0 0.0
      %806 = vmatprep.subr.mxu0 0.0
      %807 = vmatpush1.msra.mxu0 0.0
      %808 = vmatprep.mubr.f32.mxu0 0.0
      %809 = vmatmul.mubr.f32.gmra.mrb[0].mxu0 %v742
      %v810 = vpop.f32.mrb[0].mxu0
      %v811 = vadd.f32 %v739, %v810
      %v812 = vpop.f32.mrb[0].mxu0
      %813 = vdwg.mxu0
      %v814 = vld [vmem:[%s7] sm:$0xff]
      %v815 = vld [vmem:[%s7 + $0x8] sm:$0xff]
      %v816 = vld [vmem:[%s7 + $0x10] sm:$0xff]
      %v817 = vld [vmem:[%s7 + $0x18] sm:$0xff]
      %v818 = vld [vmem:[%s7 + $0x20] sm:$0xff]
      %v819 = vld [vmem:[%s7 + $0x28] sm:$0xff]
      %v820 = vld [vmem:[%s7 + $0x30] sm:$0xff]
      %v821 = vld [vmem:[%s7 + $0x38] sm:$0xff]
      %v822 = vld [vmem:[%s8] sm:$0x1]
      %v824 = vlaneseq
      %v825 = vshrl.u32 %v824, 7
      %v826 = vsub.s32 0, %v825
      %v827 = vrot.slane %v822, %v826
      %829 = vmatprep.subr.mxu0 0.0
      %830 = vmatpush1.msra.mxu0 %v814
      %831 = vmatprep.subr.mxu0 0.0
      %832 = vmatpush1.msra.mxu0 %v815
      %833 = vmatprep.subr.mxu0 0.0
      %834 = vmatpush1.msra.mxu0 %v816
      %835 = vmatprep.subr.mxu0 0.0
      %836 = vmatpush1.msra.mxu0 %v817
      %837 = vmatprep.subr.mxu0 0.0
      %838 = vmatpush1.msra.mxu0 %v818
      %839 = vmatprep.subr.mxu0 0.0
      %840 = vmatpush1.msra.mxu0 %v819
      %841 = vmatprep.subr.mxu0 0.0
      %842 = vmatpush1.msra.mxu0 %v820
      %843 = vmatprep.subr.mxu0 0.0
      %844 = vmatpush1.msra.mxu0 %v821
      %845 = vmatprep.subr.mxu0 0.0
      %846 = vmatpush1.msra.mxu0 0.0
      %847 = vmatprep.subr.mxu0 0.0
      %848 = vmatpush1.msra.mxu0 0.0
      %849 = vmatprep.subr.mxu0 0.0
      %850 = vmatpush1.msra.mxu0 0.0
      %851 = vmatprep.subr.mxu0 0.0
      %852 = vmatpush1.msra.mxu0 0.0
      %853 = vmatprep.subr.mxu0 0.0
      %854 = vmatpush1.msra.mxu0 0.0
      %855 = vmatprep.subr.mxu0 0.0
      %856 = vmatpush1.msra.mxu0 0.0
      %857 = vmatprep.subr.mxu0 0.0
      %858 = vmatpush1.msra.mxu0 0.0
      %859 = vmatprep.subr.mxu0 0.0
      %860 = vmatpush1.msra.mxu0 0.0
      %861 = vmatprep.subr.mxu0 0.0
      %862 = vmatpush1.msra.mxu0 0.0
      %863 = vmatprep.subr.mxu0 0.0
      %864 = vmatpush1.msra.mxu0 0.0
      %865 = vmatprep.subr.mxu0 0.0
      %866 = vmatpush1.msra.mxu0 0.0
      %867 = vmatprep.subr.mxu0 0.0
      %868 = vmatpush1.msra.mxu0 0.0
      %869 = vmatprep.subr.mxu0 0.0
      %870 = vmatpush1.msra.mxu0 0.0
      %871 = vmatprep.subr.mxu0 0.0
      %872 = vmatpush1.msra.mxu0 0.0
      %873 = vmatprep.subr.mxu0 0.0
      %874 = vmatpush1.msra.mxu0 0.0
      %875 = vmatprep.subr.mxu0 0.0
      %876 = vmatpush1.msra.mxu0 0.0
      %877 = vmatprep.subr.mxu0 0.0
      %878 = vmatpush1.msra.mxu0 0.0
      %879 = vmatprep.subr.mxu0 0.0
      %880 = vmatpush1.msra.mxu0 0.0
      %881 = vmatprep.subr.mxu0 0.0
      %882 = vmatpush1.msra.mxu0 0.0
      %883 = vmatprep.subr.mxu0 0.0
      %884 = vmatpush1.msra.mxu0 0.0
      %885 = vmatprep.subr.mxu0 0.0
      %886 = vmatpush1.msra.mxu0 0.0
      %887 = vmatprep.subr.mxu0 0.0
      %888 = vmatpush1.msra.mxu0 0.0
      %889 = vmatprep.subr.mxu0 0.0
      %890 = vmatpush1.msra.mxu0 0.0
      %891 = vmatprep.subr.mxu0 0.0
      %892 = vmatpush1.msra.mxu0 0.0
      %893 = vmatprep.mubr.f32.mxu0 0.0
      %894 = vmatmul.mubr.f32.gmra.mrb[0].mxu0 %v742
      %v895 = vpop.f32.mrb[0].mxu0
      %v896 = vadd.f32 %v827, %v895
      %v897 = vpop.f32.mrb[0].mxu0
      %898 = vdwg.mxu0
      %v899 = vld [vmem:[%s9] sm:$0xff]
      %v900 = vld [vmem:[%s9 + $0x8] sm:$0xff]
      %v901 = vld [vmem:[%s9 + $0x10] sm:$0xff]
      %v902 = vld [vmem:[%s9 + $0x18] sm:$0xff]
      %v903 = vld [vmem:[%s9 + $0x20] sm:$0xff]
      %v904 = vld [vmem:[%s9 + $0x28] sm:$0xff]
      %v905 = vld [vmem:[%s9 + $0x30] sm:$0xff]
      %v906 = vld [vmem:[%s9 + $0x38] sm:$0xff]
      %v907 = vld [vmem:[%s10] sm:$0x1]
      %v909 = vlaneseq
      %v910 = vshrl.u32 %v909, 7
      %v911 = vsub.s32 0, %v910
      %v912 = vrot.slane %v907, %v911
      %914 = vmatprep.subr.mxu0 0.0
      %915 = vmatpush1.msra.mxu0 %v899
      %916 = vmatprep.subr.mxu0 0.0
      %917 = vmatpush1.msra.mxu0 %v900
      %918 = vmatprep.subr.mxu0 0.0
      %919 = vmatpush1.msra.mxu0 %v901
      %920 = vmatprep.subr.mxu0 0.0
      %921 = vmatpush1.msra.mxu0 %v902
      %922 = vmatprep.subr.mxu0 0.0
      %923 = vmatpush1.msra.mxu0 %v903
      %924 = vmatprep.subr.mxu0 0.0
      %925 = vmatpush1.msra.mxu0 %v904
      %926 = vmatprep.subr.mxu0 0.0
      %927 = vmatpush1.msra.mxu0 %v905
      %928 = vmatprep.subr.mxu0 0.0
      %929 = vmatpush1.msra.mxu0 %v906
      %930 = vmatprep.subr.mxu0 0.0
      %931 = vmatpush1.msra.mxu0 0.0
      %932 = vmatprep.subr.mxu0 0.0
      %933 = vmatpush1.msra.mxu0 0.0
      %934 = vmatprep.subr.mxu0 0.0
      %935 = vmatpush1.msra.mxu0 0.0
      %936 = vmatprep.subr.mxu0 0.0
      %937 = vmatpush1.msra.mxu0 0.0
      %938 = vmatprep.subr.mxu0 0.0
      %939 = vmatpush1.msra.mxu0 0.0
      %940 = vmatprep.subr.mxu0 0.0
      %941 = vmatpush1.msra.mxu0 0.0
      %942 = vmatprep.subr.mxu0 0.0
      %943 = vmatpush1.msra.mxu0 0.0
      %944 = vmatprep.subr.mxu0 0.0
      %945 = vmatpush1.msra.mxu0 0.0
      %946 = vmatprep.subr.mxu0 0.0
      %947 = vmatpush1.msra.mxu0 0.0
      %948 = vmatprep.subr.mxu0 0.0
      %949 = vmatpush1.msra.mxu0 0.0
      %950 = vmatprep.subr.mxu0 0.0
      %951 = vmatpush1.msra.mxu0 0.0
      %952 = vmatprep.subr.mxu0 0.0
      %953 = vmatpush1.msra.mxu0 0.0
      %954 = vmatprep.subr.mxu0 0.0
      %955 = vmatpush1.msra.mxu0 0.0
      %956 = vmatprep.subr.mxu0 0.0
      %957 = vmatpush1.msra.mxu0 0.0
      %958 = vmatprep.subr.mxu0 0.0
      %959 = vmatpush1.msra.mxu0 0.0
      %960 = vmatprep.subr.mxu0 0.0
      %961 = vmatpush1.msra.mxu0 0.0
      %962 = vmatprep.subr.mxu0 0.0
      %963 = vmatpush1.msra.mxu0 0.0
      %964 = vmatprep.subr.mxu0 0.0
      %965 = vmatpush1.msra.mxu0 0.0
      %966 = vmatprep.subr.mxu0 0.0
      %967 = vmatpush1.msra.mxu0 0.0
      %968 = vmatprep.subr.mxu0 0.0
      %969 = vmatpush1.msra.mxu0 0.0
      %970 = vmatprep.subr.mxu0 0.0
      %971 = vmatpush1.msra.mxu0 0.0
      %972 = vmatprep.subr.mxu0 0.0
      %973 = vmatpush1.msra.mxu0 0.0
      %974 = vmatprep.subr.mxu0 0.0
      %975 = vmatpush1.msra.mxu0 0.0
      %976 = vmatprep.subr.mxu0 0.0
      %977 = vmatpush1.msra.mxu0 0.0
      %978 = vmatprep.mubr.f32.mxu0 0.0
      %979 = vmatmul.mubr.f32.gmra.mrb[0].mxu0 %v742
      %v980 = vpop.f32.mrb[0].mxu0
      %v981 = vadd.f32 %v912, %v980
      %v982 = vpop.f32.mrb[0].mxu0
      %983 = vdwg.mxu0
      %vm984 = vcmask 261120
      %v986 = vsel %vm984, %v811, 0
      %v989 = vsel %vm984, %v896, 0
      %991 = vmatprep.subr.mxu0 0.0
      %992 = vmatpush1.xpose.msra.mxu0 %v989
      %993 = vmatprep.subr.mxu0 0.0
      %994 = vmatpush1.xpose.msra.mxu0 0.0
      %995 = vmatprep.subr.mxu0 0.0
      %996 = vmatpush1.xpose.msra.mxu0 0.0
      %997 = vmatprep.subr.mxu0 0.0
      %998 = vmatpush1.xpose.msra.mxu0 0.0
      %999 = vmatprep.subr.mxu0 0.0
      %1000 = vmatpush1.xpose.msra.mxu0 0.0
      %1001 = vmatprep.subr.mxu0 0.0
      %1002 = vmatpush1.xpose.msra.mxu0 0.0
      %1003 = vmatprep.subr.mxu0 0.0
      %1004 = vmatpush1.xpose.msra.mxu0 0.0
      %1005 = vmatprep.subr.mxu0 0.0
      %1006 = vmatpush1.xpose.msra.mxu0 0.0
      %1007 = vmatprep.subr.mxu0 0.0
      %1008 = vmatpush1.xpose.msra.mxu0 0.0
      %1009 = vmatprep.subr.mxu0 0.0
      %1010 = vmatpush1.xpose.msra.mxu0 0.0
      %1011 = vmatprep.subr.mxu0 0.0
      %1012 = vmatpush1.xpose.msra.mxu0 0.0
      %1013 = vmatprep.subr.mxu0 0.0
      %1014 = vmatpush1.xpose.msra.mxu0 0.0
      %1015 = vmatprep.subr.mxu0 0.0
      %1016 = vmatpush1.xpose.msra.mxu0 0.0
      %1017 = vmatprep.subr.mxu0 0.0
      %1018 = vmatpush1.xpose.msra.mxu0 0.0
      %1019 = vmatprep.subr.mxu0 0.0
      %1020 = vmatpush1.xpose.msra.mxu0 0.0
      %1021 = vmatprep.subr.mxu0 0.0
      %1022 = vmatpush1.xpose.msra.mxu0 0.0
      %1023 = vmatprep.subr.mxu0 0.0
      %1024 = vmatpush1.xpose.msra.mxu0 0.0
      %1025 = vmatprep.subr.mxu0 0.0
      %1026 = vmatpush1.xpose.msra.mxu0 0.0
      %1027 = vmatprep.subr.mxu0 0.0
      %1028 = vmatpush1.xpose.msra.mxu0 0.0
      %1029 = vmatprep.subr.mxu0 0.0
      %1030 = vmatpush1.xpose.msra.mxu0 0.0
      %1031 = vmatprep.subr.mxu0 0.0
      %1032 = vmatpush1.xpose.msra.mxu0 0.0
      %1033 = vmatprep.subr.mxu0 0.0
      %1034 = vmatpush1.xpose.msra.mxu0 0.0
      %1035 = vmatprep.subr.mxu0 0.0
      %1036 = vmatpush1.xpose.msra.mxu0 0.0
      %1037 = vmatprep.subr.mxu0 0.0
      %1038 = vmatpush1.xpose.msra.mxu0 0.0
      %1039 = vmatprep.subr.mxu0 0.0
      %1040 = vmatpush1.xpose.msra.mxu0 0.0
      %1041 = vmatprep.subr.mxu0 0.0
      %1042 = vmatpush1.xpose.msra.mxu0 0.0
      %1043 = vmatprep.subr.mxu0 0.0
      %1044 = vmatpush1.xpose.msra.mxu0 0.0
      %1045 = vmatprep.subr.mxu0 0.0
      %1046 = vmatpush1.xpose.msra.mxu0 0.0
      %1047 = vmatprep.subr.mxu0 0.0
      %1048 = vmatpush1.xpose.msra.mxu0 0.0
      %1049 = vmatprep.subr.mxu0 0.0
      %1050 = vmatpush1.xpose.msra.mxu0 0.0
      %1051 = vmatprep.subr.mxu0 0.0
      %1052 = vmatpush1.xpose.msra.mxu0 0.0
      %1053 = vmatprep.subr.mxu0 0.0
      %1054 = vmatpush1.xpose.msra.mxu0 0.0
      %1055 = vmatprep.mubr.f32.mxu0 0.0
      %1056 = vmatmul.mubr.f32.gmra.mrb[0].mxu0 %v986
      %v1057 = vpop.f32.mrb[0].mxu0
      %v1058 = vadd.f32 0.0, %v1057
      %v1059 = vpop.f32.mrb[0].mxu0
      %1060 = vdwg.mxu0
      %v1061 = vmul.f32 %v1058, 0.17677669
      %v1062 = vlaneseq
      %v1063 = vshrl.u32 %v1062, 7
      %v1064 = vlaneseq
      %v1065 = vand.u32 %v1064, 127
      %vm1066 = vcmp.gt.s32.totalorder %v1065, %v1063
      %v1067 = vsel %vm1066, -1e+30, %v1061
      %vm1068 = vcmask 64512
      %v1069 = vsel %vm1068, %v1067, -inf
      %1070 = vmax.xlane.f32.xlu0 %v1069
      %v1071 = vpop.xlane.xlu0 %1070
      %v1072 = vsub.f32 %v1067, %v1071
      %v1073 = vmul.f32 %v1072, 1.442695
      %v1074 = vpow.pop %v1073
      %v1075 = vsel %vm1068, %v1074, 0.0
      %1076 = vadd.xlane.f32.xlu0 %v1075
      %v1077 = vpop.xlane.xlu0 %1076
      %v1078 = vrcp.pop %v1077
      %v1079 = vmul.f32 %v1074, %v1078
      %v1081 = vsel %vm1068, %v1079, 0
      %1083 = vmatprep.subr.mxu0 0.0
      %1084 = vmatpush1.msra.mxu0 %v981
      %1085 = vmatprep.subr.mxu0 0.0
      %1086 = vmatpush1.msra.mxu0 0.0
      %1087 = vmatprep.subr.mxu0 0.0
      %1088 = vmatpush1.msra.mxu0 0.0
      %1089 = vmatprep.subr.mxu0 0.0
      %1090 = vmatpush1.msra.mxu0 0.0
      %1091 = vmatprep.subr.mxu0 0.0
      %1092 = vmatpush1.msra.mxu0 0.0
      %1093 = vmatprep.subr.mxu0 0.0
      %1094 = vmatpush1.msra.mxu0 0.0
      %1095 = vmatprep.subr.mxu0 0.0
      %1096 = vmatpush1.msra.mxu0 0.0
      %1097 = vmatprep.subr.mxu0 0.0
      %1098 = vmatpush1.msra.mxu0 0.0
      %1099 = vmatprep.subr.mxu0 0.0
      %1100 = vmatpush1.msra.mxu0 0.0
      %1101 = vmatprep.subr.mxu0 0.0
      %1102 = vmatpush1.msra.mxu0 0.0
      %1103 = vmatprep.subr.mxu0 0.0
      %1104 = vmatpush1.msra.mxu0 0.0
      %1105 = vmatprep.subr.mxu0 0.0
      %1106 = vmatpush1.msra.mxu0 0.0
      %1107 = vmatprep.subr.mxu0 0.0
      %1108 = vmatpush1.msra.mxu0 0.0
      %1109 = vmatprep.subr.mxu0 0.0
      %1110 = vmatpush1.msra.mxu0 0.0
      %1111 = vmatprep.subr.mxu0 0.0
      %1112 = vmatpush1.msra.mxu0 0.0
      %1113 = vmatprep.subr.mxu0 0.0
      %1114 = vmatpush1.msra.mxu0 0.0
      %1115 = vmatprep.subr.mxu0 0.0
      %1116 = vmatpush1.msra.mxu0 0.0
      %1117 = vmatprep.subr.mxu0 0.0
      %1118 = vmatpush1.msra.mxu0 0.0
      %1119 = vmatprep.subr.mxu0 0.0
      %1120 = vmatpush1.msra.mxu0 0.0
      %1121 = vmatprep.subr.mxu0 0.0
      %1122 = vmatpush1.msra.mxu0 0.0
      %1123 = vmatprep.subr.mxu0 0.0
      %1124 = vmatpush1.msra.mxu0 0.0
      %1125 = vmatprep.subr.mxu0 0.0
      %1126 = vmatpush1.msra.mxu0 0.0
      %1127 = vmatprep.subr.mxu0 0.0
      %1128 = vmatpush1.msra.mxu0 0.0
      %1129 = vmatprep.subr.mxu0 0.0
      %1130 = vmatpush1.msra.mxu0 0.0
      %1131 = vmatprep.subr.mxu0 0.0
      %1132 = vmatpush1.msra.mxu0 0.0
      %1133 = vmatprep.subr.mxu0 0.0
      %1134 = vmatpush1.msra.mxu0 0.0
      %1135 = vmatprep.subr.mxu0 0.0
      %1136 = vmatpush1.msra.mxu0 0.0
      %1137 = vmatprep.subr.mxu0 0.0
      %1138 = vmatpush1.msra.mxu0 0.0
      %1139 = vmatprep.subr.mxu0 0.0
      %1140 = vmatpush1.msra.mxu0 0.0
      %1141 = vmatprep.subr.mxu0 0.0
      %1142 = vmatpush1.msra.mxu0 0.0
      %1143 = vmatprep.subr.mxu0 0.0
      %1144 = vmatpush1.msra.mxu0 0.0
      %1145 = vmatprep.subr.mxu0 0.0
      %1146 = vmatpush1.msra.mxu0 0.0
      %1147 = vmatprep.mubr.f32.mxu0 0.0
      %1148 = vmatmul.mubr.f32.gmra.mrb[0].mxu0 %v1081
      %v1149 = vpop.f32.mrb[0].mxu0
      %v1150 = vadd.f32 0.0, %v1149
      %v1151 = vpop.f32.mrb[0].mxu0
      %1152 = vdwg.mxu0
      %v1153 = vld [vmem:[%s11] sm:$0xff]
      %v1154 = vld [vmem:[%s11 + $0x8] sm:$0xff]
      %v1155 = vld [vmem:[%s11 + $0x10] sm:$0xff]
      %v1156 = vld [vmem:[%s11 + $0x18] sm:$0xff]
      %v1158 = vsel %vm984, %v1150, 0
      %1160 = vmatprep.subr.mxu0 0.0
      %1161 = vmatpush1.msra.mxu0 %v1153
      %1162 = vmatprep.subr.mxu0 0.0
      %1163 = vmatpush1.msra.mxu0 %v1154
      %1164 = vmatprep.subr.mxu0 0.0
      %1165 = vmatpush1.msra.mxu0 %v1155
      %1166 = vmatprep.subr.mxu0 0.0
      %1167 = vmatpush1.msra.mxu0 %v1156
      %1168 = vmatprep.subr.mxu0 0.0
      %1169 = vmatpush1.msra.mxu0 0.0
      %1170 = vmatprep.subr.mxu0 0.0
      %1171 = vmatpush1.msra.mxu0 0.0
      %1172 = vmatprep.subr.mxu0 0.0
      %1173 = vmatpush1.msra.mxu0 0.0
      %1174 = vmatprep.subr.mxu0 0.0
      %1175 = vmatpush1.msra.mxu0 0.0
      %1176 = vmatprep.subr.mxu0 0.0
      %1177 = vmatpush1.msra.mxu0 0.0
      %1178 = vmatprep.subr.mxu0 0.0
      %1179 = vmatpush1.msra.mxu0 0.0
      %1180 = vmatprep.subr.mxu0 0.0
      %1181 = vmatpush1.msra.mxu0 0.0
      %1182 = vmatprep.subr.mxu0 0.0
      %1183 = vmatpush1.msra.mxu0 0.0
      %1184 = vmatprep.subr.mxu0 0.0
      %1185 = vmatpush1.msra.mxu0 0.0
      %1186 = vmatprep.subr.mxu0 0.0
      %1187 = vmatpush1.msra.mxu0 0.0
      %1188 = vmatprep.subr.mxu0 0.0
      %1189 = vmatpush1.msra.mxu0 0.0
      %1190 = vmatprep.subr.mxu0 0.0
      %1191 = vmatpush1.msra.mxu0 0.0
      %1192 = vmatprep.subr.mxu0 0.0
      %1193 = vmatpush1.msra.mxu0 0.0
      %1194 = vmatprep.subr.mxu0 0.0
      %1195 = vmatpush1.msra.mxu0 0.0
      %1196 = vmatprep.subr.mxu0 0.0
      %1197 = vmatpush1.msra.mxu0 0.0
      %1198 = vmatprep.subr.mxu0 0.0
      %1199 = vmatpush1.msra.mxu0 0.0
      %1200 = vmatprep.subr.mxu0 0.0
      %1201 = vmatpush1.msra.mxu0 0.0
      %1202 = vmatprep.subr.mxu0 0.0
      %1203 = vmatpush1.msra.mxu0 0.0
      %1204 = vmatprep.subr.mxu0 0.0
      %1205 = vmatpush1.msra.mxu0 0.0
      %1206 = vmatprep.subr.mxu0 0.0
      %1207 = vmatpush1.msra.mxu0 0.0
      %1208 = vmatprep.subr.mxu0 0.0
      %1209 = vmatpush1.msra.mxu0 0.0
      %1210 = vmatprep.subr.mxu0 0.0
      %1211 = vmatpush1.msra.mxu0 0.0
      %1212 = vmatprep.subr.mxu0 0.0
      %1213 = vmatpush1.msra.mxu0 0.0
      %1214 = vmatprep.subr.mxu0 0.0
      %1215 = vmatpush1.msra.mxu0 0.0
      %1216 = vmatprep.subr.mxu0 0.0
      %1217 = vmatpush1.msra.mxu0 0.0
      %1218 = vmatprep.subr.mxu0 0.0
      %1219 = vmatpush1.msra.mxu0 0.0
      %1220 = vmatprep.subr.mxu0 0.0
      %1221 = vmatpush1.msra.mxu0 0.0
      %1222 = vmatprep.subr.mxu0 0.0
      %1223 = vmatpush1.msra.mxu0 0.0
      %1224 = vmatprep.mubr.f32.mxu0 0.0
      %1225 = vmatmul.mubr.f32.gmra.mrb[0].mxu0 %v1158
      %v1226 = vpop.f32.mrb[0].mxu0
      %v1227 = vadd.f32 0.0, %v1226
      %v1228 = vpop.f32.mrb[0].mxu0
      %1229 = vdwg.mxu0
      %v1231 = vlaneseq
      %v1232 = vshrl.u32 %v1231, 7
      %v1233 = vsub.s32 0, %v1232
      %v1234 = vrot.slane %v725, %v1233
      %v1236 = vadd.f32 %v1234, %v1227
      %s1237 = scalar_lea.vmem %s5, 64
      %v1238 = vld [vmem:[%s1237] sm:$0xff]
      %v1239 = vld [vmem:[%s1237 + $0x8] sm:$0xff]
      %v1240 = vld [vmem:[%s1237 + $0x10] sm:$0xff]
      %v1241 = vld [vmem:[%s1237 + $0x18] sm:$0xff]
      %v1242 = vld [vmem:[%s1237 + $0x20] sm:$0xff]
      %v1243 = vld [vmem:[%s1237 + $0x28] sm:$0xff]
      %v1244 = vld [vmem:[%s1237 + $0x30] sm:$0xff]
      %v1245 = vld [vmem:[%s1237 + $0x38] sm:$0xff]
      %s1246 = scalar_lea.vmem %s6, 1
      %v1247 = vld [vmem:[%s1246] sm:$0x1]
      %v1249 = vlaneseq
      %v1250 = vshrl.u32 %v1249, 7
      %v1251 = vsub.s32 0, %v1250
      %v1252 = vrot.slane %v1247, %v1251
      %1254 = vmatprep.subr.mxu0 0.0
      %1255 = vmatpush1.msra.mxu0 %v1238
      %1256 = vmatprep.subr.mxu0 0.0
      %1257 = vmatpush1.msra.mxu0 %v1239
      %1258 = vmatprep.subr.mxu0 0.0
      %1259 = vmatpush1.msra.mxu0 %v1240
      %1260 = vmatprep.subr.mxu0 0.0
      %1261 = vmatpush1.msra.mxu0 %v1241
      %1262 = vmatprep.subr.mxu0 0.0
      %1263 = vmatpush1.msra.mxu0 %v1242
      %1264 = vmatprep.subr.mxu0 0.0
      %1265 = vmatpush1.msra.mxu0 %v1243
      %1266 = vmatprep.subr.mxu0 0.0
      %1267 = vmatpush1.msra.mxu0 %v1244
      %1268 = vmatprep.subr.mxu0 0.0
      %1269 = vmatpush1.msra.mxu0 %v1245
      %1270 = vmatprep.subr.mxu0 0.0
      %1271 = vmatpush1.msra.mxu0 0.0
      %1272 = vmatprep.subr.mxu0 0.0
      %1273 = vmatpush1.msra.mxu0 0.0
      %1274 = vmatprep.subr.mxu0 0.0
      %1275 = vmatpush1.msra.mxu0 0.0
      %1276 = vmatprep.subr.mxu0 0.0
      %1277 = vmatpush1.msra.mxu0 0.0
      %1278 = vmatprep.subr.mxu0 0.0
      %1279 = vmatpush1.msra.mxu0 0.0
      %1280 = vmatprep.subr.mxu0 0.0
      %1281 = vmatpush1.msra.mxu0 0.0
      %1282 = vmatprep.subr.mxu0 0.0
      %1283 = vmatpush1.msra.mxu0 0.0
      %1284 = vmatprep.subr.mxu0 0.0
      %1285 = vmatpush1.msra.mxu0 0.0
      %1286 = vmatprep.subr.mxu0 0.0
      %1287 = vmatpush1.msra.mxu0 0.0
      %1288 = vmatprep.subr.mxu0 0.0
      %1289 = vmatpush1.msra.mxu0 0.0
      %1290 = vmatprep.subr.mxu0 0.0
      %1291 = vmatpush1.msra.mxu0 0.0
      %1292 = vmatprep.subr.mxu0 0.0
      %1293 = vmatpush1.msra.mxu0 0.0
      %1294 = vmatprep.subr.mxu0 0.0
      %1295 = vmatpush1.msra.mxu0 0.0
      %1296 = vmatprep.subr.mxu0 0.0
      %1297 = vmatpush1.msra.mxu0 0.0
      %1298 = vmatprep.subr.mxu0 0.0
      %1299 = vmatpush1.msra.mxu0 0.0
      %1300 = vmatprep.subr.mxu0 0.0
      %1301 = vmatpush1.msra.mxu0 0.0
      %1302 = vmatprep.subr.mxu0 0.0
      %1303 = vmatpush1.msra.mxu0 0.0
      %1304 = vmatprep.subr.mxu0 0.0
      %1305 = vmatpush1.msra.mxu0 0.0
      %1306 = vmatprep.subr.mxu0 0.0
      %1307 = vmatpush1.msra.mxu0 0.0
      %1308 = vmatprep.subr.mxu0 0.0
      %1309 = vmatpush1.msra.mxu0 0.0
      %1310 = vmatprep.subr.mxu0 0.0
      %1311 = vmatpush1.msra.mxu0 0.0
      %1312 = vmatprep.subr.mxu0 0.0
      %1313 = vmatpush1.msra.mxu0 0.0
      %1314 = vmatprep.subr.mxu0 0.0
      %1315 = vmatpush1.msra.mxu0 0.0
      %1316 = vmatprep.subr.mxu0 0.0
      %1317 = vmatpush1.msra.mxu0 0.0
      %1318 = vmatprep.mubr.f32.mxu0 0.0
      %1319 = vmatmul.mubr.f32.gmra.mrb[0].mxu0 %v742
      %v1320 = vpop.f32.mrb[0].mxu0
      %v1321 = vadd.f32 %v1252, %v1320
      %v1322 = vpop.f32.mrb[0].mxu0
      %1323 = vdwg.mxu0
      %s1324 = scalar_lea.vmem %s7, 64
      %v1325 = vld [vmem:[%s1324] sm:$0xff]
      %v1326 = vld [vmem:[%s1324 + $0x8] sm:$0xff]
      %v1327 = vld [vmem:[%s1324 + $0x10] sm:$0xff]
      %v1328 = vld [vmem:[%s1324 + $0x18] sm:$0xff]
      %v1329 = vld [vmem:[%s1324 + $0x20] sm:$0xff]
      %v1330 = vld [vmem:[%s1324 + $0x28] sm:$0xff]
      %v1331 = vld [vmem:[%s1324 + $0x30] sm:$0xff]
      %v1332 = vld [vmem:[%s1324 + $0x38] sm:$0xff]
      %s1333 = scalar_lea.vmem %s8, 1
      %v1334 = vld [vmem:[%s1333] sm:$0x1]
      %v1336 = vlaneseq
      %v1337 = vshrl.u32 %v1336, 7
      %v1338 = vsub.s32 0, %v1337
      %v1339 = vrot.slane %v1334, %v1338
      %1341 = vmatprep.subr.mxu0 0.0
      %1342 = vmatpush1.msra.mxu0 %v1325
      %1343 = vmatprep.subr.mxu0 0.0
      %1344 = vmatpush1.msra.mxu0 %v1326
      %1345 = vmatprep.subr.mxu0 0.0
      %1346 = vmatpush1.msra.mxu0 %v1327
      %1347 = vmatprep.subr.mxu0 0.0
      %1348 = vmatpush1.msra.mxu0 %v1328
      %1349 = vmatprep.subr.mxu0 0.0
      %1350 = vmatpush1.msra.mxu0 %v1329
      %1351 = vmatprep.subr.mxu0 0.0
      %1352 = vmatpush1.msra.mxu0 %v1330
      %1353 = vmatprep.subr.mxu0 0.0
      %1354 = vmatpush1.msra.mxu0 %v1331
      %1355 = vmatprep.subr.mxu0 0.0
      %1356 = vmatpush1.msra.mxu0 %v1332
      %1357 = vmatprep.subr.mxu0 0.0
      %1358 = vmatpush1.msra.mxu0 0.0
      %1359 = vmatprep.subr.mxu0 0.0
      %1360 = vmatpush1.msra.mxu0 0.0
      %1361 = vmatprep.subr.mxu0 0.0
      %1362 = vmatpush1.msra.mxu0 0.0
      %1363 = vmatprep.subr.mxu0 0.0
      %1364 = vmatpush1.msra.mxu0 0.0
      %1365 = vmatprep.subr.mxu0 0.0
      %1366 = vmatpush1.msra.mxu0 0.0
      %1367 = vmatprep.subr.mxu0 0.0
      %1368 = vmatpush1.msra.mxu0 0.0
      %1369 = vmatprep.subr.mxu0 0.0
      %1370 = vmatpush1.msra.mxu0 0.0
      %1371 = vmatprep.subr.mxu0 0.0
      %1372 = vmatpush1.msra.mxu0 0.0
      %1373 = vmatprep.subr.mxu0 0.0
      %1374 = vmatpush1.msra.mxu0 0.0
      %1375 = vmatprep.subr.mxu0 0.0
      %1376 = vmatpush1.msra.mxu0 0.0
      %1377 = vmatprep.subr.mxu0 0.0
      %1378 = vmatpush1.msra.mxu0 0.0
      %1379 = vmatprep.subr.mxu0 0.0
      %1380 = vmatpush1.msra.mxu0 0.0
      %1381 = vmatprep.subr.mxu0 0.0
      %1382 = vmatpush1.msra.mxu0 0.0
      %1383 = vmatprep.subr.mxu0 0.0
      %1384 = vmatpush1.msra.mxu0 0.0
      %1385 = vmatprep.subr.mxu0 0.0
      %1386 = vmatpush1.msra.mxu0 0.0
      %1387 = vmatprep.subr.mxu0 0.0
      %1388 = vmatpush1.msra.mxu0 0.0
      %1389 = vmatprep.subr.mxu0 0.0
      %1390 = vmatpush1.msra.mxu0 0.0
      %1391 = vmatprep.subr.mxu0 0.0
      %1392 = vmatpush1.msra.mxu0 0.0
      %1393 = vmatprep.subr.mxu0 0.0
      %1394 = vmatpush1.msra.mxu0 0.0
      %1395 = vmatprep.subr.mxu0 0.0
      %1396 = vmatpush1.msra.mxu0 0.0
      %1397 = vmatprep.subr.mxu0 0.0
      %1398 = vmatpush1.msra.mxu0 0.0
      %1399 = vmatprep.subr.mxu0 0.0
      %1400 = vmatpush1.msra.mxu0 0.0
      %1401 = vmatprep.subr.mxu0 0.0
      %1402 = vmatpush1.msra.mxu0 0.0
      %1403 = vmatprep.subr.mxu0 0.0
      %1404 = vmatpush1.msra.mxu0 0.0
      %1405 = vmatprep.mubr.f32.mxu0 0.0
      %1406 = vmatmul.mubr.f32.gmra.mrb[0].mxu0 %v742
      %v1407 = vpop.f32.mrb[0].mxu0
      %v1408 = vadd.f32 %v1339, %v1407
      %v1409 = vpop.f32.mrb[0].mxu0
      %1410 = vdwg.mxu0
      %s1411 = scalar_lea.vmem %s9, 64
      %v1412 = vld [vmem:[%s1411] sm:$0xff]
      %v1413 = vld [vmem:[%s1411 + $0x8] sm:$0xff]
      %v1414 = vld [vmem:[%s1411 + $0x10] sm:$0xff]
      %v1415 = vld [vmem:[%s1411 + $0x18] sm:$0xff]
      %v1416 = vld [vmem:[%s1411 + $0x20] sm:$0xff]
      %v1417 = vld [vmem:[%s1411 + $0x28] sm:$0xff]
      %v1418 = vld [vmem:[%s1411 + $0x30] sm:$0xff]
      %v1419 = vld [vmem:[%s1411 + $0x38] sm:$0xff]
      %s1420 = scalar_lea.vmem %s10, 1
      %v1421 = vld [vmem:[%s1420] sm:$0x1]
      %v1423 = vlaneseq
      %v1424 = vshrl.u32 %v1423, 7
      %v1425 = vsub.s32 0, %v1424
      %v1426 = vrot.slane %v1421, %v1425
      %1428 = vmatprep.subr.mxu0 0.0
      %1429 = vmatpush1.msra.mxu0 %v1412
      %1430 = vmatprep.subr.mxu0 0.0
      %1431 = vmatpush1.msra.mxu0 %v1413
      %1432 = vmatprep.subr.mxu0 0.0
      %1433 = vmatpush1.msra.mxu0 %v1414
      %1434 = vmatprep.subr.mxu0 0.0
      %1435 = vmatpush1.msra.mxu0 %v1415
      %1436 = vmatprep.subr.mxu0 0.0
      %1437 = vmatpush1.msra.mxu0 %v1416
      %1438 = vmatprep.subr.mxu0 0.0
      %1439 = vmatpush1.msra.mxu0 %v1417
      %1440 = vmatprep.subr.mxu0 0.0
      %1441 = vmatpush1.msra.mxu0 %v1418
      %1442 = vmatprep.subr.mxu0 0.0
      %1443 = vmatpush1.msra.mxu0 %v1419
      %1444 = vmatprep.subr.mxu0 0.0
      %1445 = vmatpush1.msra.mxu0 0.0
      %1446 = vmatprep.subr.mxu0 0.0
      %1447 = vmatpush1.msra.mxu0 0.0
      %1448 = vmatprep.subr.mxu0 0.0
      %1449 = vmatpush1.msra.mxu0 0.0
      %1450 = vmatprep.subr.mxu0 0.0
      %1451 = vmatpush1.msra.mxu0 0.0
      %1452 = vmatprep.subr.mxu0 0.0
      %1453 = vmatpush1.msra.mxu0 0.0
      %1454 = vmatprep.subr.mxu0 0.0
      %1455 = vmatpush1.msra.mxu0 0.0
      %1456 = vmatprep.subr.mxu0 0.0
      %1457 = vmatpush1.msra.mxu0 0.0
      %1458 = vmatprep.subr.mxu0 0.0
      %1459 = vmatpush1.msra.mxu0 0.0
      %1460 = vmatprep.subr.mxu0 0.0
      %1461 = vmatpush1.msra.mxu0 0.0
      %1462 = vmatprep.subr.mxu0 0.0
      %1463 = vmatpush1.msra.mxu0 0.0
      %1464 = vmatprep.subr.mxu0 0.0
      %1465 = vmatpush1.msra.mxu0 0.0
      %1466 = vmatprep.subr.mxu0 0.0
      %1467 = vmatpush1.msra.mxu0 0.0
      %1468 = vmatprep.subr.mxu0 0.0
      %1469 = vmatpush1.msra.mxu0 0.0
      %1470 = vmatprep.subr.mxu0 0.0
      %1471 = vmatpush1.msra.mxu0 0.0
      %1472 = vmatprep.subr.mxu0 0.0
      %1473 = vmatpush1.msra.mxu0 0.0
      %1474 = vmatprep.subr.mxu0 0.0
      %1475 = vmatpush1.msra.mxu0 0.0
      %1476 = vmatprep.subr.mxu0 0.0
      %1477 = vmatpush1.msra.mxu0 0.0
      %1478 = vmatprep.subr.mxu0 0.0
      %1479 = vmatpush1.msra.mxu0 0.0
      %1480 = vmatprep.subr.mxu0 0.0
      %1481 = vmatpush1.msra.mxu0 0.0
      %1482 = vmatprep.subr.mxu0 0.0
      %1483 = vmatpush1.msra.mxu0 0.0
      %1484 = vmatprep.subr.mxu0 0.0
      %1485 = vmatpush1.msra.mxu0 0.0
      %1486 = vmatprep.subr.mxu0 0.0
      %1487 = vmatpush1.msra.mxu0 0.0
      %1488 = vmatprep.subr.mxu0 0.0
      %1489 = vmatpush1.msra.mxu0 0.0
      %1490 = vmatprep.subr.mxu0 0.0
      %1491 = vmatpush1.msra.mxu0 0.0
      %1492 = vmatprep.mubr.f32.mxu0 0.0
      %1493 = vmatmul.mubr.f32.gmra.mrb[0].mxu0 %v742
      %v1494 = vpop.f32.mrb[0].mxu0
      %v1495 = vadd.f32 %v1426, %v1494
      %v1496 = vpop.f32.mrb[0].mxu0
      %1497 = vdwg.mxu0
      %v1499 = vsel %vm984, %v1321, 0
      %v1502 = vsel %vm984, %v1408, 0
      %1504 = vmatprep.subr.mxu0 0.0
      %1505 = vmatpush1.xpose.msra.mxu0 %v1502
      %1506 = vmatprep.subr.mxu0 0.0
      %1507 = vmatpush1.xpose.msra.mxu0 0.0
      %1508 = vmatprep.subr.mxu0 0.0
      %1509 = vmatpush1.xpose.msra.mxu0 0.0
      %1510 = vmatprep.subr.mxu0 0.0
      %1511 = vmatpush1.xpose.msra.mxu0 0.0
      %1512 = vmatprep.subr.mxu0 0.0
      %1513 = vmatpush1.xpose.msra.mxu0 0.0
      %1514 = vmatprep.subr.mxu0 0.0
      %1515 = vmatpush1.xpose.msra.mxu0 0.0
      %1516 = vmatprep.subr.mxu0 0.0
      %1517 = vmatpush1.xpose.msra.mxu0 0.0
      %1518 = vmatprep.subr.mxu0 0.0
      %1519 = vmatpush1.xpose.msra.mxu0 0.0
      %1520 = vmatprep.subr.mxu0 0.0
      %1521 = vmatpush1.xpose.msra.mxu0 0.0
      %1522 = vmatprep.subr.mxu0 0.0
      %1523 = vmatpush1.xpose.msra.mxu0 0.0
      %1524 = vmatprep.subr.mxu0 0.0
      %1525 = vmatpush1.xpose.msra.mxu0 0.0
      %1526 = vmatprep.subr.mxu0 0.0
      %1527 = vmatpush1.xpose.msra.mxu0 0.0
      %1528 = vmatprep.subr.mxu0 0.0
      %1529 = vmatpush1.xpose.msra.mxu0 0.0
      %1530 = vmatprep.subr.mxu0 0.0
      %1531 = vmatpush1.xpose.msra.mxu0 0.0
      %1532 = vmatprep.subr.mxu0 0.0
      %1533 = vmatpush1.xpose.msra.mxu0 0.0
      %1534 = vmatprep.subr.mxu0 0.0
      %1535 = vmatpush1.xpose.msra.mxu0 0.0
      %1536 = vmatprep.subr.mxu0 0.0
      %1537 = vmatpush1.xpose.msra.mxu0 0.0
      %1538 = vmatprep.subr.mxu0 0.0
      %1539 = vmatpush1.xpose.msra.mxu0 0.0
      %1540 = vmatprep.subr.mxu0 0.0
      %1541 = vmatpush1.xpose.msra.mxu0 0.0
      %1542 = vmatprep.subr.mxu0 0.0
      %1543 = vmatpush1.xpose.msra.mxu0 0.0
      %1544 = vmatprep.subr.mxu0 0.0
      %1545 = vmatpush1.xpose.msra.mxu0 0.0
      %1546 = vmatprep.subr.mxu0 0.0
      %1547 = vmatpush1.xpose.msra.mxu0 0.0
      %1548 = vmatprep.subr.mxu0 0.0
      %1549 = vmatpush1.xpose.msra.mxu0 0.0
      %1550 = vmatprep.subr.mxu0 0.0
      %1551 = vmatpush1.xpose.msra.mxu0 0.0
      %1552 = vmatprep.subr.mxu0 0.0
      %1553 = vmatpush1.xpose.msra.mxu0 0.0
      %1554 = vmatprep.subr.mxu0 0.0
      %1555 = vmatpush1.xpose.msra.mxu0 0.0
      %1556 = vmatprep.subr.mxu0 0.0
      %1557 = vmatpush1.xpose.msra.mxu0 0.0
      %1558 = vmatprep.subr.mxu0 0.0
      %1559 = vmatpush1.xpose.msra.mxu0 0.0
      %1560 = vmatprep.subr.mxu0 0.0
      %1561 = vmatpush1.xpose.msra.mxu0 0.0
      %1562 = vmatprep.subr.mxu0 0.0
      %1563 = vmatpush1.xpose.msra.mxu0 0.0
      %1564 = vmatprep.subr.mxu0 0.0
      %1565 = vmatpush1.xpose.msra.mxu0 0.0
      %1566 = vmatprep.subr.mxu0 0.0
      %1567 = vmatpush1.xpose.msra.mxu0 0.0
      %1568 = vmatprep.mubr.f32.mxu0 0.0
      %1569 = vmatmul.mubr.f32.gmra.mrb[0].mxu0 %v1499
      %v1570 = vpop.f32.mrb[0].mxu0
      %v1571 = vadd.f32 0.0, %v1570
      %v1572 = vpop.f32.mrb[0].mxu0
      %1573 = vdwg.mxu0
      %v1574 = vmul.f32 %v1571, 0.17677669
      %v1575 = vsel %vm1066, -1e+30, %v1574
      %v1576 = vsel %vm1068, %v1575, -inf
      %1577 = vmax.xlane.f32.xlu0 %v1576
      %v1578 = vpop.xlane.xlu0 %1577
      %v1579 = vsub.f32 %v1575, %v1578
      %v1580 = vmul.f32 %v1579, 1.442695
      %v1581 = vpow.pop %v1580
      %v1582 = vsel %vm1068, %v1581, 0.0
      %1583 = vadd.xlane.f32.xlu0 %v1582
      %v1584 = vpop.xlane.xlu0 %1583
      %v1585 = vrcp.pop %v1584
      %v1586 = vmul.f32 %v1581, %v1585
      %v1588 = vsel %vm1068, %v1586, 0
      %1590 = vmatprep.subr.mxu0 0.0
      %1591 = vmatpush1.msra.mxu0 %v1495
      %1592 = vmatprep.subr.mxu0 0.0
      %1593 = vmatpush1.msra.mxu0 0.0
      %1594 = vmatprep.subr.mxu0 0.0
      %1595 = vmatpush1.msra.mxu0 0.0
      %1596 = vmatprep.subr.mxu0 0.0
      %1597 = vmatpush1.msra.mxu0 0.0
      %1598 = vmatprep.subr.mxu0 0.0
      %1599 = vmatpush1.msra.mxu0 0.0
      %1600 = vmatprep.subr.mxu0 0.0
      %1601 = vmatpush1.msra.mxu0 0.0
      %1602 = vmatprep.subr.mxu0 0.0
      %1603 = vmatpush1.msra.mxu0 0.0
      %1604 = vmatprep.subr.mxu0 0.0
      %1605 = vmatpush1.msra.mxu0 0.0
      %1606 = vmatprep.subr.mxu0 0.0
      %1607 = vmatpush1.msra.mxu0 0.0
      %1608 = vmatprep.subr.mxu0 0.0
      %1609 = vmatpush1.msra.mxu0 0.0
      %1610 = vmatprep.subr.mxu0 0.0
      %1611 = vmatpush1.msra.mxu0 0.0
      %1612 = vmatprep.subr.mxu0 0.0
      %1613 = vmatpush1.msra.mxu0 0.0
      %1614 = vmatprep.subr.mxu0 0.0
      %1615 = vmatpush1.msra.mxu0 0.0
      %1616 = vmatprep.subr.mxu0 0.0
      %1617 = vmatpush1.msra.mxu0 0.0
      %1618 = vmatprep.subr.mxu0 0.0
      %1619 = vmatpush1.msra.mxu0 0.0
      %1620 = vmatprep.subr.mxu0 0.0
      %1621 = vmatpush1.msra.mxu0 0.0
      %1622 = vmatprep.subr.mxu0 0.0
      %1623 = vmatpush1.msra.mxu0 0.0
      %1624 = vmatprep.subr.mxu0 0.0
      %1625 = vmatpush1.msra.mxu0 0.0
      %1626 = vmatprep.subr.mxu0 0.0
      %1627 = vmatpush1.msra.mxu0 0.0
      %1628 = vmatprep.subr.mxu0 0.0
      %1629 = vmatpush1.msra.mxu0 0.0
      %1630 = vmatprep.subr.mxu0 0.0
      %1631 = vmatpush1.msra.mxu0 0.0
      %1632 = vmatprep.subr.mxu0 0.0
      %1633 = vmatpush1.msra.mxu0 0.0
      %1634 = vmatprep.subr.mxu0 0.0
      %1635 = vmatpush1.msra.mxu0 0.0
      %1636 = vmatprep.subr.mxu0 0.0
      %1637 = vmatpush1.msra.mxu0 0.0
      %1638 = vmatprep.subr.mxu0 0.0
      %1639 = vmatpush1.msra.mxu0 0.0
      %1640 = vmatprep.subr.mxu0 0.0
      %1641 = vmatpush1.msra.mxu0 0.0
      %1642 = vmatprep.subr.mxu0 0.0
      %1643 = vmatpush1.msra.mxu0 0.0
      %1644 = vmatprep.subr.mxu0 0.0
      %1645 = vmatpush1.msra.mxu0 0.0
      %1646 = vmatprep.subr.mxu0 0.0
      %1647 = vmatpush1.msra.mxu0 0.0
      %1648 = vmatprep.subr.mxu0 0.0
      %1649 = vmatpush1.msra.mxu0 0.0
      %1650 = vmatprep.subr.mxu0 0.0
      %1651 = vmatpush1.msra.mxu0 0.0
      %1652 = vmatprep.subr.mxu0 0.0
      %1653 = vmatpush1.msra.mxu0 0.0
      %1654 = vmatprep.mubr.f32.mxu0 0.0
      %1655 = vmatmul.mubr.f32.gmra.mrb[0].mxu0 %v1588
      %v1656 = vpop.f32.mrb[0].mxu0
      %v1657 = vadd.f32 0.0, %v1656
      %v1658 = vpop.f32.mrb[0].mxu0
      %1659 = vdwg.mxu0
      %s1660 = scalar_lea.vmem %s11, 32
      %v1661 = vld [vmem:[%s1660] sm:$0xff]
      %v1662 = vld [vmem:[%s1660 + $0x8] sm:$0xff]
      %v1663 = vld [vmem:[%s1660 + $0x10] sm:$0xff]
      %v1664 = vld [vmem:[%s1660 + $0x18] sm:$0xff]
      %v1666 = vsel %vm984, %v1657, 0
      %1668 = vmatprep.subr.mxu0 0.0
      %1669 = vmatpush1.msra.mxu0 %v1661
      %1670 = vmatprep.subr.mxu0 0.0
      %1671 = vmatpush1.msra.mxu0 %v1662
      %1672 = vmatprep.subr.mxu0 0.0
      %1673 = vmatpush1.msra.mxu0 %v1663
      %1674 = vmatprep.subr.mxu0 0.0
      %1675 = vmatpush1.msra.mxu0 %v1664
      %1676 = vmatprep.subr.mxu0 0.0
      %1677 = vmatpush1.msra.mxu0 0.0
      %1678 = vmatprep.subr.mxu0 0.0
      %1679 = vmatpush1.msra.mxu0 0.0
      %1680 = vmatprep.subr.mxu0 0.0
      %1681 = vmatpush1.msra.mxu0 0.0
      %1682 = vmatprep.subr.mxu0 0.0
      %1683 = vmatpush1.msra.mxu0 0.0
      %1684 = vmatprep.subr.mxu0 0.0
      %1685 = vmatpush1.msra.mxu0 0.0
      %1686 = vmatprep.subr.mxu0 0.0
      %1687 = vmatpush1.msra.mxu0 0.0
      %1688 = vmatprep.subr.mxu0 0.0
      %1689 = vmatpush1.msra.mxu0 0.0
      %1690 = vmatprep.subr.mxu0 0.0
      %1691 = vmatpush1.msra.mxu0 0.0
      %1692 = vmatprep.subr.mxu0 0.0
      %1693 = vmatpush1.msra.mxu0 0.0
      %1694 = vmatprep.subr.mxu0 0.0
      %1695 = vmatpush1.msra.mxu0 0.0
      %1696 = vmatprep.subr.mxu0 0.0
      %1697 = vmatpush1.msra.mxu0 0.0
      %1698 = vmatprep.subr.mxu0 0.0
      %1699 = vmatpush1.msra.mxu0 0.0
      %1700 = vmatprep.subr.mxu0 0.0
      %1701 = vmatpush1.msra.mxu0 0.0
      %1702 = vmatprep.subr.mxu0 0.0
      %1703 = vmatpush1.msra.mxu0 0.0
      %1704 = vmatprep.subr.mxu0 0.0
      %1705 = vmatpush1.msra.mxu0 0.0
      %1706 = vmatprep.subr.mxu0 0.0
      %1707 = vmatpush1.msra.mxu0 0.0
      %1708 = vmatprep.subr.mxu0 0.0
      %1709 = vmatpush1.msra.mxu0 0.0
      %1710 = vmatprep.subr.mxu0 0.0
      %1711 = vmatpush1.msra.mxu0 0.0
      %1712 = vmatprep.subr.mxu0 0.0
      %1713 = vmatpush1.msra.mxu0 0.0
      %1714 = vmatprep.subr.mxu0 0.0
      %1715 = vmatpush1.msra.mxu0 0.0
      %1716 = vmatprep.subr.mxu0 0.0
      %1717 = vmatpush1.msra.mxu0 0.0
      %1718 = vmatprep.subr.mxu0 0.0
      %1719 = vmatpush1.msra.mxu0 0.0
      %1720 = vmatprep.subr.mxu0 0.0
      %1721 = vmatpush1.msra.mxu0 0.0
      %1722 = vmatprep.subr.mxu0 0.0
      %1723 = vmatpush1.msra.mxu0 0.0
      %1724 = vmatprep.subr.mxu0 0.0
      %1725 = vmatpush1.msra.mxu0 0.0
      %1726 = vmatprep.subr.mxu0 0.0
      %1727 = vmatpush1.msra.mxu0 0.0
      %1728 = vmatprep.subr.mxu0 0.0
      %1729 = vmatpush1.msra.mxu0 0.0
      %1730 = vmatprep.subr.mxu0 0.0
      %1731 = vmatpush1.msra.mxu0 0.0
      %1732 = vmatprep.mubr.f32.mxu0 0.0
      %1733 = vmatmul.mubr.f32.gmra.mrb[0].mxu0 %v1666
      %v1734 = vpop.f32.mrb[0].mxu0
      %v1735 = vadd.f32 0.0, %v1734
      %v1736 = vpop.f32.mrb[0].mxu0
      %1737 = vdwg.mxu0
      %v1738 = vadd.f32 %v1236, %v1735
      %v1739 = vadd.f32 %v693, %v1738
      %v1740 = vld [vmem:[%s13] sm:$0x1]
      %v1741 = vld [vmem:[%s14] sm:$0x1]
      %v1742 = vsel %vm696, %v1739, 0.0
      %1743 = vadd.xlane.f32.xlu0 %v1742
      %v1744 = vpop.xlane.xlu0 %1743
      %v1745 = vmul.f32 %v1744, %v700
      %v1746 = vsub.f32 %v1739, %v1745
      %v1747 = vmul.f32 %v1746, %v1746
      %v1748 = vsel %vm696, %v1747, 0.0
      %1749 = vadd.xlane.f32.xlu0 %v1748
      %v1750 = vpop.xlane.xlu0 %1749
      %v1751 = vmul.f32 %v1750, %v700
      %v1752 = vadd.f32 %v1751, 1e-05
      %v1753 = vrsqrt.pop %v1752
      %v1754 = vmul.f32 %v1746, %v1753
      %v1756 = vlaneseq
      %v1757 = vshrl.u32 %v1756, 7
      %v1758 = vsub.s32 0, %v1757
      %v1759 = vrot.slane %v1740, %v1758
      %v1761 = vmul.f32 %v1754, %v1759
      %v1763 = vlaneseq
      %v1764 = vshrl.u32 %v1763, 7
      %v1765 = vsub.s32 0, %v1764
      %v1766 = vrot.slane %v1741, %v1765
      %v1768 = vadd.f32 %v1761, %v1766
      %v1769 = vld [vmem:[%s15] sm:$0xff]
      %v1770 = vld [vmem:[%s15 + $0x8] sm:$0xff]
      %v1771 = vld [vmem:[%s15 + $0x10] sm:$0xff]
      %v1772 = vld [vmem:[%s15 + $0x18] sm:$0xff]
      %v1773 = vld [vmem:[%s15 + $0x20] sm:$0xff]
      %v1774 = vld [vmem:[%s15 + $0x28] sm:$0xff]
      %v1775 = vld [vmem:[%s15 + $0x30] sm:$0xff]
      %v1776 = vld [vmem:[%s15 + $0x38] sm:$0xff]
      %v1777 = vld [vmem:[%s15 + $0x40] sm:$0xff]
      %v1778 = vld [vmem:[%s15 + $0x48] sm:$0xff]
      %v1779 = vld [vmem:[%s15 + $0x50] sm:$0xff]
      %v1780 = vld [vmem:[%s15 + $0x58] sm:$0xff]
      %v1781 = vld [vmem:[%s15 + $0x60] sm:$0xff]
      %v1782 = vld [vmem:[%s15 + $0x68] sm:$0xff]
      %v1783 = vld [vmem:[%s15 + $0x70] sm:$0xff]
      %v1784 = vld [vmem:[%s15 + $0x78] sm:$0xff]
      %v1785 = vld [vmem:[%s16] sm:$0x3]
      %v1787 = vlaneseq
      %v1788 = vshrl.u32 %v1787, 7
      %v1789 = vsub.s32 0, %v1788
      %v1790 = vrot.slane %v1785, %v1789
      %v1791 = vlaneseq
      %v1792 = vshrl.u32 %v1791, 7
      %v1793 = vsub.s32 1, %v1792
      %v1794 = vrot.slane %v1785, %v1793
      %v1798 = vsel %vm696, %v1768, 0
      %1800 = vmatprep.subr.mxu0 %v1770
      %1801 = vmatpush1.msra.mxu0 %v1769
      %1802 = vmatprep.subr.mxu0 %v1772
      %1803 = vmatpush1.msra.mxu0 %v1771
      %1804 = vmatprep.subr.mxu0 %v1774
      %1805 = vmatpush1.msra.mxu0 %v1773
      %1806 = vmatprep.subr.mxu0 %v1776
      %1807 = vmatpush1.msra.mxu0 %v1775
      %1808 = vmatprep.subr.mxu0 %v1778
      %1809 = vmatpush1.msra.mxu0 %v1777
      %1810 = vmatprep.subr.mxu0 %v1780
      %1811 = vmatpush1.msra.mxu0 %v1779
      %1812 = vmatprep.subr.mxu0 %v1782
      %1813 = vmatpush1.msra.mxu0 %v1781
      %1814 = vmatprep.subr.mxu0 %v1784
      %1815 = vmatpush1.msra.mxu0 %v1783
      %1816 = vmatprep.subr.mxu0 0.0
      %1817 = vmatpush1.msra.mxu0 0.0
      %1818 = vmatprep.subr.mxu0 0.0
      %1819 = vmatpush1.msra.mxu0 0.0
      %1820 = vmatprep.subr.mxu0 0.0
      %1821 = vmatpush1.msra.mxu0 0.0
      %1822 = vmatprep.subr.mxu0 0.0
      %1823 = vmatpush1.msra.mxu0 0.0
      %1824 = vmatprep.subr.mxu0 0.0
      %1825 = vmatpush1.msra.mxu0 0.0
      %1826 = vmatprep.subr.mxu0 0.0
      %1827 = vmatpush1.msra.mxu0 0.0
      %1828 = vmatprep.subr.mxu0 0.0
      %1829 = vmatpush1.msra.mxu0 0.0
      %1830 = vmatprep.subr.mxu0 0.0
      %1831 = vmatpush1.msra.mxu0 0.0
      %1832 = vmatprep.subr.mxu0 0.0
      %1833 = vmatpush1.msra.mxu0 0.0
      %1834 = vmatprep.subr.mxu0 0.0
      %1835 = vmatpush1.msra.mxu0 0.0
      %1836 = vmatprep.subr.mxu0 0.0
      %1837 = vmatpush1.msra.mxu0 0.0
      %1838 = vmatprep.subr.mxu0 0.0
      %1839 = vmatpush1.msra.mxu0 0.0
      %1840 = vmatprep.subr.mxu0 0.0
      %1841 = vmatpush1.msra.mxu0 0.0
      %1842 = vmatprep.subr.mxu0 0.0
      %1843 = vmatpush1.msra.mxu0 0.0
      %1844 = vmatprep.subr.mxu0 0.0
      %1845 = vmatpush1.msra.mxu0 0.0
      %1846 = vmatprep.subr.mxu0 0.0
      %1847 = vmatpush1.msra.mxu0 0.0
      %1848 = vmatprep.subr.mxu0 0.0
      %1849 = vmatpush1.msra.mxu0 0.0
      %1850 = vmatprep.subr.mxu0 0.0
      %1851 = vmatpush1.msra.mxu0 0.0
      %1852 = vmatprep.subr.mxu0 0.0
      %1853 = vmatpush1.msra.mxu0 0.0
      %1854 = vmatprep.subr.mxu0 0.0
      %1855 = vmatpush1.msra.mxu0 0.0
      %1856 = vmatprep.subr.mxu0 0.0
      %1857 = vmatpush1.msra.mxu0 0.0
      %1858 = vmatprep.subr.mxu0 0.0
      %1859 = vmatpush1.msra.mxu0 0.0
      %1860 = vmatprep.subr.mxu0 0.0
      %1861 = vmatpush1.msra.mxu0 0.0
      %1862 = vmatprep.subr.mxu0 0.0
      %1863 = vmatpush1.msra.mxu0 0.0
      %1864 = vmatprep.mubr.f32.mxu0 0.0
      %1865 = vmatmul.mubr.f32.gmra.mrb[0].mxu0 %v1798
      %v1866 = vpop.f32.mrb[0].mxu0
      %v1867 = vadd.f32 %v1790, %v1866
      %v1868 = vpop.f32.mrb[0].mxu0
      %v1869 = vadd.f32 %v1794, %v1868
      %1870 = vdwg.mxu0
      %v1871 = vmul.f32 %v1867, 1.702
      %v1872 = vmul.f32 %v1869, 1.702
      %v1873 = vxor.u32 %v1871, 2147483648
      %v1874 = vxor.u32 %v1872, 2147483648
      %v1875 = vmul.f32 %v1873, 1.442695
      %v1876 = vpow.pop %v1875
      %v1877 = vmul.f32 %v1874, 1.442695
      %v1878 = vpow.pop %v1877
      %v1879 = vadd.f32 %v1876, 1.0
      %v1880 = vadd.f32 %v1878, 1.0
      %v1881 = vrcp.pop %v1879
      %v1882 = vmul.f32 1.0, %v1881
      %v1883 = vrcp.pop %v1880
      %v1884 = vmul.f32 1.0, %v1883
      %v1885 = vmul.f32 %v1867, %v1882
      %v1886 = vmul.f32 %v1869, %v1884
      %v1887 = vld [vmem:[%s17] sm:$0xff]
      %v1888 = vld [vmem:[%s17 + $0x8] sm:$0xff]
      %v1889 = vld [vmem:[%s17 + $0x10] sm:$0xff]
      %v1890 = vld [vmem:[%s17 + $0x18] sm:$0xff]
      %v1891 = vld [vmem:[%s17 + $0x20] sm:$0xff]
      %v1892 = vld [vmem:[%s17 + $0x28] sm:$0xff]
      %v1893 = vld [vmem:[%s17 + $0x30] sm:$0xff]
      %v1894 = vld [vmem:[%s17 + $0x38] sm:$0xff]
      %v1895 = vld [vmem:[%s17 + $0x40] sm:$0xff]
      %v1896 = vld [vmem:[%s17 + $0x48] sm:$0xff]
      %v1897 = vld [vmem:[%s17 + $0x50] sm:$0xff]
      %v1898 = vld [vmem:[%s17 + $0x58] sm:$0xff]
      %v1899 = vld [vmem:[%s17 + $0x60] sm:$0xff]
      %v1900 = vld [vmem:[%s17 + $0x68] sm:$0xff]
      %v1901 = vld [vmem:[%s17 + $0x70] sm:$0xff]
      %v1902 = vld [vmem:[%s17 + $0x78] sm:$0xff]
      %v1903 = vld [vmem:[%s17 + $0x80] sm:$0xff]
      %v1904 = vld [vmem:[%s17 + $0x88] sm:$0xff]
      %v1905 = vld [vmem:[%s17 + $0x90] sm:$0xff]
      %v1906 = vld [vmem:[%s17 + $0x98] sm:$0xff]
      %v1907 = vld [vmem:[%s17 + $0xa0] sm:$0xff]
      %v1908 = vld [vmem:[%s17 + $0xa8] sm:$0xff]
      %v1909 = vld [vmem:[%s17 + $0xb0] sm:$0xff]
      %v1910 = vld [vmem:[%s17 + $0xb8] sm:$0xff]
      %v1911 = vld [vmem:[%s17 + $0xc0] sm:$0xff]
      %v1912 = vld [vmem:[%s17 + $0xc8] sm:$0xff]
      %v1913 = vld [vmem:[%s17 + $0xd0] sm:$0xff]
      %v1914 = vld [vmem:[%s17 + $0xd8] sm:$0xff]
      %v1915 = vld [vmem:[%s17 + $0xe0] sm:$0xff]
      %v1916 = vld [vmem:[%s17 + $0xe8] sm:$0xff]
      %v1917 = vld [vmem:[%s17 + $0xf0] sm:$0xff]
      %v1918 = vld [vmem:[%s17 + $0xf8] sm:$0xff]
      %v1919 = vld [vmem:[%s18] sm:$0x1]
      %v1921 = vlaneseq
      %v1922 = vshrl.u32 %v1921, 7
      %v1923 = vsub.s32 0, %v1922
      %v1924 = vrot.slane %v1919, %v1923
      %1926 = vmatprep.subr.mxu0 0.0
      %1927 = vmatpush1.msra.mxu0 %v1887
      %1928 = vmatprep.subr.mxu0 0.0
      %1929 = vmatpush1.msra.mxu0 %v1888
      %1930 = vmatprep.subr.mxu0 0.0
      %1931 = vmatpush1.msra.mxu0 %v1889
      %1932 = vmatprep.subr.mxu0 0.0
      %1933 = vmatpush1.msra.mxu0 %v1890
      %1934 = vmatprep.subr.mxu0 0.0
      %1935 = vmatpush1.msra.mxu0 %v1891
      %1936 = vmatprep.subr.mxu0 0.0
      %1937 = vmatpush1.msra.mxu0 %v1892
      %1938 = vmatprep.subr.mxu0 0.0
      %1939 = vmatpush1.msra.mxu0 %v1893
      %1940 = vmatprep.subr.mxu0 0.0
      %1941 = vmatpush1.msra.mxu0 %v1894
      %1942 = vmatprep.subr.mxu0 0.0
      %1943 = vmatpush1.msra.mxu0 %v1895
      %1944 = vmatprep.subr.mxu0 0.0
      %1945 = vmatpush1.msra.mxu0 %v1896
      %1946 = vmatprep.subr.mxu0 0.0
      %1947 = vmatpush1.msra.mxu0 %v1897
      %1948 = vmatprep.subr.mxu0 0.0
      %1949 = vmatpush1.msra.mxu0 %v1898
      %1950 = vmatprep.subr.mxu0 0.0
      %1951 = vmatpush1.msra.mxu0 %v1899
      %1952 = vmatprep.subr.mxu0 0.0
      %1953 = vmatpush1.msra.mxu0 %v1900
      %1954 = vmatprep.subr.mxu0 0.0
      %1955 = vmatpush1.msra.mxu0 %v1901
      %1956 = vmatprep.subr.mxu0 0.0
      %1957 = vmatpush1.msra.mxu0 %v1902
      %1958 = vmatprep.subr.mxu0 0.0
      %1959 = vmatpush1.msra.mxu0 %v1903
      %1960 = vmatprep.subr.mxu0 0.0
      %1961 = vmatpush1.msra.mxu0 %v1904
      %1962 = vmatprep.subr.mxu0 0.0
      %1963 = vmatpush1.msra.mxu0 %v1905
      %1964 = vmatprep.subr.mxu0 0.0
      %1965 = vmatpush1.msra.mxu0 %v1906
      %1966 = vmatprep.subr.mxu0 0.0
      %1967 = vmatpush1.msra.mxu0 %v1907
      %1968 = vmatprep.subr.mxu0 0.0
      %1969 = vmatpush1.msra.mxu0 %v1908
      %1970 = vmatprep.subr.mxu0 0.0
      %1971 = vmatpush1.msra.mxu0 %v1909
      %1972 = vmatprep.subr.mxu0 0.0
      %1973 = vmatpush1.msra.mxu0 %v1910
      %1974 = vmatprep.subr.mxu0 0.0
      %1975 = vmatpush1.msra.mxu0 %v1911
      %1976 = vmatprep.subr.mxu0 0.0
      %1977 = vmatpush1.msra.mxu0 %v1912
      %1978 = vmatprep.subr.mxu0 0.0
      %1979 = vmatpush1.msra.mxu0 %v1913
      %1980 = vmatprep.subr.mxu0 0.0
      %1981 = vmatpush1.msra.mxu0 %v1914
      %1982 = vmatprep.subr.mxu0 0.0
      %1983 = vmatpush1.msra.mxu0 %v1915
      %1984 = vmatprep.subr.mxu0 0.0
      %1985 = vmatpush1.msra.mxu0 %v1916
      %1986 = vmatprep.subr.mxu0 0.0
      %1987 = vmatpush1.msra.mxu0 %v1917
      %1988 = vmatprep.subr.mxu0 0.0
      %1989 = vmatpush1.msra.mxu0 %v1918
      %1990 = vmatprep.mubr.f32.mxu0 %v1886
      %1991 = vmatmul.mubr.f32.gmra.mrb[0].mxu0 %v1885
      %v1992 = vpop.f32.mrb[0].mxu0
      %v1993 = vadd.f32 %v1924, %v1992
      %v1994 = vpop.f32.mrb[0].mxu0
      %1995 = vdwg.mxu0
      %v1996 = vadd.f32 %v1739, %v1993
      %s1997 = scalar_lea.vmem %s3, 1
      %v1998 = vld [vmem:[%s1997] sm:$0x1]
      %s1999 = scalar_lea.vmem %s4, 1
      %v2000 = vld [vmem:[%s1999] sm:$0x1]
      %v2001 = vsel %vm696, %v1996, 0.0
      %2002 = vadd.xlane.f32.xlu0 %v2001
      %v2003 = vpop.xlane.xlu0 %2002
      %v2004 = vmul.f32 %v2003, %v700
      %v2005 = vsub.f32 %v1996, %v2004
      %v2006 = vmul.f32 %v2005, %v2005
      %v2007 = vsel %vm696, %v2006, 0.0
      %2008 = vadd.xlane.f32.xlu0 %v2007
      %v2009 = vpop.xlane.xlu0 %2008
      %v2010 = vmul.f32 %v2009, %v700
      %v2011 = vadd.f32 %v2010, 1e-05
      %v2012 = vrsqrt.pop %v2011
      %v2013 = vmul.f32 %v2005, %v2012
      %v2015 = vlaneseq
      %v2016 = vshrl.u32 %v2015, 7
      %v2017 = vsub.s32 0, %v2016
      %v2018 = vrot.slane %v1998, %v2017
      %v2020 = vmul.f32 %v2013, %v2018
      %v2022 = vlaneseq
      %v2023 = vshrl.u32 %v2022, 7
      %v2024 = vsub.s32 0, %v2023
      %v2025 = vrot.slane %v2000, %v2024
      %v2027 = vadd.f32 %v2020, %v2025
      %s2028 = scalar_lea.vmem %s12, 1
      %v2029 = vld [vmem:[%s2028] sm:$0x1]
      %s2030 = scalar_lea.vmem %s5, 128
      %v2031 = vld [vmem:[%s2030] sm:$0xff]
      %v2032 = vld [vmem:[%s2030 + $0x8] sm:$0xff]
      %v2033 = vld [vmem:[%s2030 + $0x10] sm:$0xff]
      %v2034 = vld [vmem:[%s2030 + $0x18] sm:$0xff]
      %v2035 = vld [vmem:[%s2030 + $0x20] sm:$0xff]
      %v2036 = vld [vmem:[%s2030 + $0x28] sm:$0xff]
      %v2037 = vld [vmem:[%s2030 + $0x30] sm:$0xff]
      %v2038 = vld [vmem:[%s2030 + $0x38] sm:$0xff]
      %s2039 = scalar_lea.vmem %s6, 2
      %v2040 = vld [vmem:[%s2039] sm:$0x1]
      %v2042 = vlaneseq
      %v2043 = vshrl.u32 %v2042, 7
      %v2044 = vsub.s32 0, %v2043
      %v2045 = vrot.slane %v2040, %v2044
      %v2048 = vsel %vm696, %v2027, 0
      %2050 = vmatprep.subr.mxu0 0.0
      %2051 = vmatpush1.msra.mxu0 %v2031
      %2052 = vmatprep.subr.mxu0 0.0
      %2053 = vmatpush1.msra.mxu0 %v2032
      %2054 = vmatprep.subr.mxu0 0.0
      %2055 = vmatpush1.msra.mxu0 %v2033
      %2056 = vmatprep.subr.mxu0 0.0
      %2057 = vmatpush1.msra.mxu0 %v2034
      %2058 = vmatprep.subr.mxu0 0.0
      %2059 = vmatpush1.msra.mxu0 %v2035
      %2060 = vmatprep.subr.mxu0 0.0
      %2061 = vmatpush1.msra.mxu0 %v2036
      %2062 = vmatprep.subr.mxu0 0.0
      %2063 = vmatpush1.msra.mxu0 %v2037
      %2064 = vmatprep.subr.mxu0 0.0
      %2065 = vmatpush1.msra.mxu0 %v2038
      %2066 = vmatprep.subr.mxu0 0.0
      %2067 = vmatpush1.msra.mxu0 0.0
      %2068 = vmatprep.subr.mxu0 0.0
      %2069 = vmatpush1.msra.mxu0 0.0
      %2070 = vmatprep.subr.mxu0 0.0
      %2071 = vmatpush1.msra.mxu0 0.0
      %2072 = vmatprep.subr.mxu0 0.0
      %2073 = vmatpush1.msra.mxu0 0.0
      %2074 = vmatprep.subr.mxu0 0.0
      %2075 = vmatpush1.msra.mxu0 0.0
      %2076 = vmatprep.subr.mxu0 0.0
      %2077 = vmatpush1.msra.mxu0 0.0
      %2078 = vmatprep.subr.mxu0 0.0
      %2079 = vmatpush1.msra.mxu0 0.0
      %2080 = vmatprep.subr.mxu0 0.0
      %2081 = vmatpush1.msra.mxu0 0.0
      %2082 = vmatprep.subr.mxu0 0.0
      %2083 = vmatpush1.msra.mxu0 0.0
      %2084 = vmatprep.subr.mxu0 0.0
      %2085 = vmatpush1.msra.mxu0 0.0
      %2086 = vmatprep.subr.mxu0 0.0
      %2087 = vmatpush1.msra.mxu0 0.0
      %2088 = vmatprep.subr.mxu0 0.0
      %2089 = vmatpush1.msra.mxu0 0.0
      %2090 = vmatprep.subr.mxu0 0.0
      %2091 = vmatpush1.msra.mxu0 0.0
      %2092 = vmatprep.subr.mxu0 0.0
      %2093 = vmatpush1.msra.mxu0 0.0
      %2094 = vmatprep.subr.mxu0 0.0
      %2095 = vmatpush1.msra.mxu0 0.0
      %2096 = vmatprep.subr.mxu0 0.0
      %2097 = vmatpush1.msra.mxu0 0.0
      %2098 = vmatprep.subr.mxu0 0.0
      %2099 = vmatpush1.msra.mxu0 0.0
      %2100 = vmatprep.subr.mxu0 0.0
      %2101 = vmatpush1.msra.mxu0 0.0
      %2102 = vmatprep.subr.mxu0 0.0
      %2103 = vmatpush1.msra.mxu0 0.0
      %2104 = vmatprep.subr.mxu0 0.0
      %2105 = vmatpush1.msra.mxu0 0.0
      %2106 = vmatprep.subr.mxu0 0.0
      %2107 = vmatpush1.msra.mxu0 0.0
      %2108 = vmatprep.subr.mxu0 0.0
      %2109 = vmatpush1.msra.mxu0 0.0
      %2110 = vmatprep.subr.mxu0 0.0
      %2111 = vmatpush1.msra.mxu0 0.0
      %2112 = vmatprep.subr.mxu0 0.0
      %2113 = vmatpush1.msra.mxu0 0.0
      %2114 = vmatprep.mubr.f32.mxu0 0.0
      %2115 = vmatmul.mubr.f32.gmra.mrb[0].mxu0 %v2048
      %v2116 = vpop.f32.mrb[0].mxu0
      %v2117 = vadd.f32 %v2045, %v2116
      %v2118 = vpop.f32.mrb[0].mxu0
      %2119 = vdwg.mxu0
      %s2120 = scalar_lea.vmem %s7, 128
      %v2121 = vld [vmem:[%s2120] sm:$0xff]
      %v2122 = vld [vmem:[%s2120 + $0x8] sm:$0xff]
      %v2123 = vld [vmem:[%s2120 + $0x10] sm:$0xff]
      %v2124 = vld [vmem:[%s2120 + $0x18] sm:$0xff]
      %v2125 = vld [vmem:[%s2120 + $0x20] sm:$0xff]
      %v2126 = vld [vmem:[%s2120 + $0x28] sm:$0xff]
      %v2127 = vld [vmem:[%s2120 + $0x30] sm:$0xff]
      %v2128 = vld [vmem:[%s2120 + $0x38] sm:$0xff]
      %s2129 = scalar_lea.vmem %s8, 2
      %v2130 = vld [vmem:[%s2129] sm:$0x1]
      %v2132 = vlaneseq
      %v2133 = vshrl.u32 %v2132, 7
      %v2134 = vsub.s32 0, %v2133
      %v2135 = vrot.slane %v2130, %v2134
      %2137 = vmatprep.subr.mxu0 0.0
      %2138 = vmatpush1.msra.mxu0 %v2121
      %2139 = vmatprep.subr.mxu0 0.0
      %2140 = vmatpush1.msra.mxu0 %v2122
      %2141 = vmatprep.subr.mxu0 0.0
      %2142 = vmatpush1.msra.mxu0 %v2123
      %2143 = vmatprep.subr.mxu0 0.0
      %2144 = vmatpush1.msra.mxu0 %v2124
      %2145 = vmatprep.subr.mxu0 0.0
      %2146 = vmatpush1.msra.mxu0 %v2125
      %2147 = vmatprep.subr.mxu0 0.0
      %2148 = vmatpush1.msra.mxu0 %v2126
      %2149 = vmatprep.subr.mxu0 0.0
      %2150 = vmatpush1.msra.mxu0 %v2127
      %2151 = vmatprep.subr.mxu0 0.0
      %2152 = vmatpush1.msra.mxu0 %v2128
      %2153 = vmatprep.subr.mxu0 0.0
      %2154 = vmatpush1.msra.mxu0 0.0
      %2155 = vmatprep.subr.mxu0 0.0
      %2156 = vmatpush1.msra.mxu0 0.0
      %2157 = vmatprep.subr.mxu0 0.0
      %2158 = vmatpush1.msra.mxu0 0.0
      %2159 = vmatprep.subr.mxu0 0.0
      %2160 = vmatpush1.msra.mxu0 0.0
      %2161 = vmatprep.subr.mxu0 0.0
      %2162 = vmatpush1.msra.mxu0 0.0
      %2163 = vmatprep.subr.mxu0 0.0
      %2164 = vmatpush1.msra.mxu0 0.0
      %2165 = vmatprep.subr.mxu0 0.0
      %2166 = vmatpush1.msra.mxu0 0.0
      %2167 = vmatprep.subr.mxu0 0.0
      %2168 = vmatpush1.msra.mxu0 0.0
      %2169 = vmatprep.subr.mxu0 0.0
      %2170 = vmatpush1.msra.mxu0 0.0
      %2171 = vmatprep.subr.mxu0 0.0
      %2172 = vmatpush1.msra.mxu0 0.0
      %2173 = vmatprep.subr.mxu0 0.0
      %2174 = vmatpush1.msra.mxu0 0.0
      %2175 = vmatprep.subr.mxu0 0.0
      %2176 = vmatpush1.msra.mxu0 0.0
      %2177 = vmatprep.subr.mxu0 0.0
      %2178 = vmatpush1.msra.mxu0 0.0
      %2179 = vmatprep.subr.mxu0 0.0
      %2180 = vmatpush1.msra.mxu0 0.0
      %2181 = vmatprep.subr.mxu0 0.0
      %2182 = vmatpush1.msra.mxu0 0.0
      %2183 = vmatprep.subr.mxu0 0.0
      %2184 = vmatpush1.msra.mxu0 0.0
      %2185 = vmatprep.subr.mxu0 0.0
      %2186 = vmatpush1.msra.mxu0 0.0
      %2187 = vmatprep.subr.mxu0 0.0
      %2188 = vmatpush1.msra.mxu0 0.0
      %2189 = vmatprep.subr.mxu0 0.0
      %2190 = vmatpush1.msra.mxu0 0.0
      %2191 = vmatprep.subr.mxu0 0.0
      %2192 = vmatpush1.msra.mxu0 0.0
      %2193 = vmatprep.subr.mxu0 0.0
      %2194 = vmatpush1.msra.mxu0 0.0
      %2195 = vmatprep.subr.mxu0 0.0
      %2196 = vmatpush1.msra.mxu0 0.0
      %2197 = vmatprep.subr.mxu0 0.0
      %2198 = vmatpush1.msra.mxu0 0.0
      %2199 = vmatprep.subr.mxu0 0.0
      %2200 = vmatpush1.msra.mxu0 0.0
      %2201 = vmatprep.mubr.f32.mxu0 0.0
      %2202 = vmatmul.mubr.f32.gmra.mrb[0].mxu0 %v2048
      %v2203 = vpop.f32.mrb[0].mxu0
      %v2204 = vadd.f32 %v2135, %v2203
      %v2205 = vpop.f32.mrb[0].mxu0
      %2206 = vdwg.mxu0
      %s2207 = scalar_lea.vmem %s9, 128
      %v2208 = vld [vmem:[%s2207] sm:$0xff]
      %v2209 = vld [vmem:[%s2207 + $0x8] sm:$0xff]
      %v2210 = vld [vmem:[%s2207 + $0x10] sm:$0xff]
      %v2211 = vld [vmem:[%s2207 + $0x18] sm:$0xff]
      %v2212 = vld [vmem:[%s2207 + $0x20] sm:$0xff]
      %v2213 = vld [vmem:[%s2207 + $0x28] sm:$0xff]
      %v2214 = vld [vmem:[%s2207 + $0x30] sm:$0xff]
      %v2215 = vld [vmem:[%s2207 + $0x38] sm:$0xff]
      %s2216 = scalar_lea.vmem %s10, 2
      %v2217 = vld [vmem:[%s2216] sm:$0x1]
      %v2219 = vlaneseq
      %v2220 = vshrl.u32 %v2219, 7
      %v2221 = vsub.s32 0, %v2220
      %v2222 = vrot.slane %v2217, %v2221
      %2224 = vmatprep.subr.mxu0 0.0
      %2225 = vmatpush1.msra.mxu0 %v2208
      %2226 = vmatprep.subr.mxu0 0.0
      %2227 = vmatpush1.msra.mxu0 %v2209
      %2228 = vmatprep.subr.mxu0 0.0
      %2229 = vmatpush1.msra.mxu0 %v2210
      %2230 = vmatprep.subr.mxu0 0.0
      %2231 = vmatpush1.msra.mxu0 %v2211
      %2232 = vmatprep.subr.mxu0 0.0
      %2233 = vmatpush1.msra.mxu0 %v2212
      %2234 = vmatprep.subr.mxu0 0.0
      %2235 = vmatpush1.msra.mxu0 %v2213
      %2236 = vmatprep.subr.mxu0 0.0
      %2237 = vmatpush1.msra.mxu0 %v2214
      %2238 = vmatprep.subr.mxu0 0.0
      %2239 = vmatpush1.msra.mxu0 %v2215
      %2240 = vmatprep.subr.mxu0 0.0
      %2241 = vmatpush1.msra.mxu0 0.0
      %2242 = vmatprep.subr.mxu0 0.0
      %2243 = vmatpush1.msra.mxu0 0.0
      %2244 = vmatprep.subr.mxu0 0.0
      %2245 = vmatpush1.msra.mxu0 0.0
      %2246 = vmatprep.subr.mxu0 0.0
      %2247 = vmatpush1.msra.mxu0 0.0
      %2248 = vmatprep.subr.mxu0 0.0
      %2249 = vmatpush1.msra.mxu0 0.0
      %2250 = vmatprep.subr.mxu0 0.0
      %2251 = vmatpush1.msra.mxu0 0.0
      %2252 = vmatprep.subr.mxu0 0.0
      %2253 = vmatpush1.msra.mxu0 0.0
      %2254 = vmatprep.subr.mxu0 0.0
      %2255 = vmatpush1.msra.mxu0 0.0
      %2256 = vmatprep.subr.mxu0 0.0
      %2257 = vmatpush1.msra.mxu0 0.0
      %2258 = vmatprep.subr.mxu0 0.0
      %2259 = vmatpush1.msra.mxu0 0.0
      %2260 = vmatprep.subr.mxu0 0.0
      %2261 = vmatpush1.msra.mxu0 0.0
      %2262 = vmatprep.subr.mxu0 0.0
      %2263 = vmatpush1.msra.mxu0 0.0
      %2264 = vmatprep.subr.mxu0 0.0
      %2265 = vmatpush1.msra.mxu0 0.0
      %2266 = vmatprep.subr.mxu0 0.0
      %2267 = vmatpush1.msra.mxu0 0.0
      %2268 = vmatprep.subr.mxu0 0.0
      %2269 = vmatpush1.msra.mxu0 0.0
      %2270 = vmatprep.subr.mxu0 0.0
      %2271 = vmatpush1.msra.mxu0 0.0
      %2272 = vmatprep.subr.mxu0 0.0
      %2273 = vmatpush1.msra.mxu0 0.0
      %2274 = vmatprep.subr.mxu0 0.0
      %2275 = vmatpush1.msra.mxu0 0.0
      %2276 = vmatprep.subr.mxu0 0.0
      %2277 = vmatpush1.msra.mxu0 0.0
      %2278 = vmatprep.subr.mxu0 0.0
      %2279 = vmatpush1.msra.mxu0 0.0
      %2280 = vmatprep.subr.mxu0 0.0
      %2281 = vmatpush1.msra.mxu0 0.0
      %2282 = vmatprep.subr.mxu0 0.0
      %2283 = vmatpush1.msra.mxu0 0.0
      %2284 = vmatprep.subr.mxu0 0.0
      %2285 = vmatpush1.msra.mxu0 0.0
      %2286 = vmatprep.subr.mxu0 0.0
      %2287 = vmatpush1.msra.mxu0 0.0
      %2288 = vmatprep.mubr.f32.mxu0 0.0
      %2289 = vmatmul.mubr.f32.gmra.mrb[0].mxu0 %v2048
      %v2290 = vpop.f32.mrb[0].mxu0
      %v2291 = vadd.f32 %v2222, %v2290
      %v2292 = vpop.f32.mrb[0].mxu0
      %2293 = vdwg.mxu0
      %v2295 = vsel %vm984, %v2117, 0
      %v2298 = vsel %vm984, %v2204, 0
      %2300 = vmatprep.subr.mxu0 0.0
      %2301 = vmatpush1.xpose.msra.mxu0 %v2298
      %2302 = vmatprep.subr.mxu0 0.0
      %2303 = vmatpush1.xpose.msra.mxu0 0.0
      %2304 = vmatprep.subr.mxu0 0.0
      %2305 = vmatpush1.xpose.msra.mxu0 0.0
      %2306 = vmatprep.subr.mxu0 0.0
      %2307 = vmatpush1.xpose.msra.mxu0 0.0
      %2308 = vmatprep.subr.mxu0 0.0
      %2309 = vmatpush1.xpose.msra.mxu0 0.0
      %2310 = vmatprep.subr.mxu0 0.0
      %2311 = vmatpush1.xpose.msra.mxu0 0.0
      %2312 = vmatprep.subr.mxu0 0.0
      %2313 = vmatpush1.xpose.msra.mxu0 0.0
      %2314 = vmatprep.subr.mxu0 0.0
      %2315 = vmatpush1.xpose.msra.mxu0 0.0
      %2316 = vmatprep.subr.mxu0 0.0
      %2317 = vmatpush1.xpose.msra.mxu0 0.0
      %2318 = vmatprep.subr.mxu0 0.0
      %2319 = vmatpush1.xpose.msra.mxu0 0.0
      %2320 = vmatprep.subr.mxu0 0.0
      %2321 = vmatpush1.xpose.msra.mxu0 0.0
      %2322 = vmatprep.subr.mxu0 0.0
      %2323 = vmatpush1.xpose.msra.mxu0 0.0
      %2324 = vmatprep.subr.mxu0 0.0
      %2325 = vmatpush1.xpose.msra.mxu0 0.0
      %2326 = vmatprep.subr.mxu0 0.0
      %2327 = vmatpush1.xpose.msra.mxu0 0.0
      %2328 = vmatprep.subr.mxu0 0.0
      %2329 = vmatpush1.xpose.msra.mxu0 0.0
      %2330 = vmatprep.subr.mxu0 0.0
      %2331 = vmatpush1.xpose.msra.mxu0 0.0
      %2332 = vmatprep.subr.mxu0 0.0
      %2333 = vmatpush1.xpose.msra.mxu0 0.0
      %2334 = vmatprep.subr.mxu0 0.0
      %2335 = vmatpush1.xpose.msra.mxu0 0.0
      %2336 = vmatprep.subr.mxu0 0.0
      %2337 = vmatpush1.xpose.msra.mxu0 0.0
      %2338 = vmatprep.subr.mxu0 0.0
      %2339 = vmatpush1.xpose.msra.mxu0 0.0
      %2340 = vmatprep.subr.mxu0 0.0
      %2341 = vmatpush1.xpose.msra.mxu0 0.0
      %2342 = vmatprep.subr.mxu0 0.0
      %2343 = vmatpush1.xpose.msra.mxu0 0.0
      %2344 = vmatprep.subr.mxu0 0.0
      %2345 = vmatpush1.xpose.msra.mxu0 0.0
      %2346 = vmatprep.subr.mxu0 0.0
      %2347 = vmatpush1.xpose.msra.mxu0 0.0
      %2348 = vmatprep.subr.mxu0 0.0
      %2349 = vmatpush1.xpose.msra.mxu0 0.0
      %2350 = vmatprep.subr.mxu0 0.0
      %2351 = vmatpush1.xpose.msra.mxu0 0.0
      %2352 = vmatprep.subr.mxu0 0.0
      %2353 = vmatpush1.xpose.msra.mxu0 0.0
      %2354 = vmatprep.subr.mxu0 0.0
      %2355 = vmatpush1.xpose.msra.mxu0 0.0
      %2356 = vmatprep.subr.mxu0 0.0
      %2357 = vmatpush1.xpose.msra.mxu0 0.0
      %2358 = vmatprep.subr.mxu0 0.0
      %2359 = vmatpush1.xpose.msra.mxu0 0.0
      %2360 = vmatprep.subr.mxu0 0.0
      %2361 = vmatpush1.xpose.msra.mxu0 0.0
      %2362 = vmatprep.subr.mxu0 0.0
      %2363 = vmatpush1.xpose.msra.mxu0 0.0
      %2364 = vmatprep.mubr.f32.mxu0 0.0
      %2365 = vmatmul.mubr.f32.gmra.mrb[0].mxu0 %v2295
      %v2366 = vpop.f32.mrb[0].mxu0
      %v2367 = vadd.f32 0.0, %v2366
      %v2368 = vpop.f32.mrb[0].mxu0
      %2369 = vdwg.mxu0
      %v2370 = vmul.f32 %v2367, 0.17677669
      %v2371 = vsel %vm1066, -1e+30, %v2370
      %v2372 = vsel %vm1068, %v2371, -inf
      %2373 = vmax.xlane.f32.xlu0 %v2372
      %v2374 = vpop.xlane.xlu0 %2373
      %v2375 = vsub.f32 %v2371, %v2374
      %v2376 = vmul.f32 %v2375, 1.442695
      %v2377 = vpow.pop %v2376
      %v2378 = vsel %vm1068, %v2377, 0.0
      %2379 = vadd.xlane.f32.xlu0 %v2378
      %v2380 = vpop.xlane.xlu0 %2379
      %v2381 = vrcp.pop %v2380
      %v2382 = vmul.f32 %v2377, %v2381
      %v2384 = vsel %vm1068, %v2382, 0
      %2386 = vmatprep.subr.mxu0 0.0
      %2387 = vmatpush1.msra.mxu0 %v2291
      %2388 = vmatprep.subr.mxu0 0.0
      %2389 = vmatpush1.msra.mxu0 0.0
      %2390 = vmatprep.subr.mxu0 0.0
      %2391 = vmatpush1.msra.mxu0 0.0
      %2392 = vmatprep.subr.mxu0 0.0
      %2393 = vmatpush1.msra.mxu0 0.0
      %2394 = vmatprep.subr.mxu0 0.0
      %2395 = vmatpush1.msra.mxu0 0.0
      %2396 = vmatprep.subr.mxu0 0.0
      %2397 = vmatpush1.msra.mxu0 0.0
      %2398 = vmatprep.subr.mxu0 0.0
      %2399 = vmatpush1.msra.mxu0 0.0
      %2400 = vmatprep.subr.mxu0 0.0
      %2401 = vmatpush1.msra.mxu0 0.0
      %2402 = vmatprep.subr.mxu0 0.0
      %2403 = vmatpush1.msra.mxu0 0.0
      %2404 = vmatprep.subr.mxu0 0.0
      %2405 = vmatpush1.msra.mxu0 0.0
      %2406 = vmatprep.subr.mxu0 0.0
      %2407 = vmatpush1.msra.mxu0 0.0
      %2408 = vmatprep.subr.mxu0 0.0
      %2409 = vmatpush1.msra.mxu0 0.0
      %2410 = vmatprep.subr.mxu0 0.0
      %2411 = vmatpush1.msra.mxu0 0.0
      %2412 = vmatprep.subr.mxu0 0.0
      %2413 = vmatpush1.msra.mxu0 0.0
      %2414 = vmatprep.subr.mxu0 0.0
      %2415 = vmatpush1.msra.mxu0 0.0
      %2416 = vmatprep.subr.mxu0 0.0
      %2417 = vmatpush1.msra.mxu0 0.0
      %2418 = vmatprep.subr.mxu0 0.0
      %2419 = vmatpush1.msra.mxu0 0.0
      %2420 = vmatprep.subr.mxu0 0.0
      %2421 = vmatpush1.msra.mxu0 0.0
      %2422 = vmatprep.subr.mxu0 0.0
      %2423 = vmatpush1.msra.mxu0 0.0
      %2424 = vmatprep.subr.mxu0 0.0
      %2425 = vmatpush1.msra.mxu0 0.0
      %2426 = vmatprep.subr.mxu0 0.0
      %2427 = vmatpush1.msra.mxu0 0.0
      %2428 = vmatprep.subr.mxu0 0.0
      %2429 = vmatpush1.msra.mxu0 0.0
      %2430 = vmatprep.subr.mxu0 0.0
      %2431 = vmatpush1.msra.mxu0 0.0
      %2432 = vmatprep.subr.mxu0 0.0
      %2433 = vmatpush1.msra.mxu0 0.0
      %2434 = vmatprep.subr.mxu0 0.0
      %2435 = vmatpush1.msra.mxu0 0.0
      %2436 = vmatprep.subr.mxu0 0.0
      %2437 = vmatpush1.msra.mxu0 0.0
      %2438 = vmatprep.subr.mxu0 0.0
      %2439 = vmatpush1.msra.mxu0 0.0
      %2440 = vmatprep.subr.mxu0 0.0
      %2441 = vmatpush1.msra.mxu0 0.0
      %2442 = vmatprep.subr.mxu0 0.0
      %2443 = vmatpush1.msra.mxu0 0.0
      %2444 = vmatprep.subr.mxu0 0.0
      %2445 = vmatpush1.msra.mxu0 0.0
      %2446 = vmatprep.subr.mxu0 0.0
      %2447 = vmatpush1.msra.mxu0 0.0
      %2448 = vmatprep.subr.mxu0 0.0
      %2449 = vmatpush1.msra.mxu0 0.0
      %2450 = vmatprep.mubr.f32.mxu0 0.0
      %2451 = vmatmul.mubr.f32.gmra.mrb[0].mxu0 %v2384
      %v2452 = vpop.f32.mrb[0].mxu0
      %v2453 = vadd.f32 0.0, %v2452
      %v2454 = vpop.f32.mrb[0].mxu0
      %2455 = vdwg.mxu0
      %s2456 = scalar_lea.vmem %s11, 64
      %v2457 = vld [vmem:[%s2456] sm:$0xff]
      %v2458 = vld [vmem:[%s2456 + $0x8] sm:$0xff]
      %v2459 = vld [vmem:[%s2456 + $0x10] sm:$0xff]
      %v2460 = vld [vmem:[%s2456 + $0x18] sm:$0xff]
      %v2462 = vsel %vm984, %v2453, 0
      %2464 = vmatprep.subr.mxu0 0.0
      %2465 = vmatpush1.msra.mxu0 %v2457
      %2466 = vmatprep.subr.mxu0 0.0
      %2467 = vmatpush1.msra.mxu0 %v2458
      %2468 = vmatprep.subr.mxu0 0.0
      %2469 = vmatpush1.msra.mxu0 %v2459
      %2470 = vmatprep.subr.mxu0 0.0
      %2471 = vmatpush1.msra.mxu0 %v2460
      %2472 = vmatprep.subr.mxu0 0.0
      %2473 = vmatpush1.msra.mxu0 0.0
      %2474 = vmatprep.subr.mxu0 0.0
      %2475 = vmatpush1.msra.mxu0 0.0
      %2476 = vmatprep.subr.mxu0 0.0
      %2477 = vmatpush1.msra.mxu0 0.0
      %2478 = vmatprep.subr.mxu0 0.0
      %2479 = vmatpush1.msra.mxu0 0.0
      %2480 = vmatprep.subr.mxu0 0.0
      %2481 = vmatpush1.msra.mxu0 0.0
      %2482 = vmatprep.subr.mxu0 0.0
      %2483 = vmatpush1.msra.mxu0 0.0
      %2484 = vmatprep.subr.mxu0 0.0
      %2485 = vmatpush1.msra.mxu0 0.0
      %2486 = vmatprep.subr.mxu0 0.0
      %2487 = vmatpush1.msra.mxu0 0.0
      %2488 = vmatprep.subr.mxu0 0.0
      %2489 = vmatpush1.msra.mxu0 0.0
      %2490 = vmatprep.subr.mxu0 0.0
      %2491 = vmatpush1.msra.mxu0 0.0
      %2492 = vmatprep.subr.mxu0 0.0
      %2493 = vmatpush1.msra.mxu0 0.0
      %2494 = vmatprep.subr.mxu0 0.0
      %2495 = vmatpush1.msra.mxu0 0.0
      %2496 = vmatprep.subr.mxu0 0.0
      %2497 = vmatpush1.msra.mxu0 0.0
      %2498 = vmatprep.subr.mxu0 0.0
      %2499 = vmatpush1.msra.mxu0 0.0
      %2500 = vmatprep.subr.mxu0 0.0
      %2501 = vmatpush1.msra.mxu0 0.0
      %2502 = vmatprep.subr.mxu0 0.0
      %2503 = vmatpush1.msra.mxu0 0.0
      %2504 = vmatprep.subr.mxu0 0.0
      %2505 = vmatpush1.msra.mxu0 0.0
      %2506 = vmatprep.subr.mxu0 0.0
      %2507 = vmatpush1.msra.mxu0 0.0
      %2508 = vmatprep.subr.mxu0 0.0
      %2509 = vmatpush1.msra.mxu0 0.0
      %2510 = vmatprep.subr.mxu0 0.0
      %2511 = vmatpush1.msra.mxu0 0.0
      %2512 = vmatprep.subr.mxu0 0.0
      %2513 = vmatpush1.msra.mxu0 0.0
      %2514 = vmatprep.subr.mxu0 0.0
      %2515 = vmatpush1.msra.mxu0 0.0
      %2516 = vmatprep.subr.mxu0 0.0
      %2517 = vmatpush1.msra.mxu0 0.0
      %2518 = vmatprep.subr.mxu0 0.0
      %2519 = vmatpush1.msra.mxu0 0.0
      %2520 = vmatprep.subr.mxu0 0.0
      %2521 = vmatpush1.msra.mxu0 0.0
      %2522 = vmatprep.subr.mxu0 0.0
      %2523 = vmatpush1.msra.mxu0 0.0
      %2524 = vmatprep.subr.mxu0 0.0
      %2525 = vmatpush1.msra.mxu0 0.0
      %2526 = vmatprep.subr.mxu0 0.0
      %2527 = vmatpush1.msra.mxu0 0.0
      %2528 = vmatprep.mubr.f32.mxu0 0.0
      %2529 = vmatmul.mubr.f32.gmra.mrb[0].mxu0 %v2462
      %v2530 = vpop.f32.mrb[0].mxu0
      %v2531 = vadd.f32 0.0, %v2530
      %v2532 = vpop.f32.mrb[0].mxu0
      %2533 = vdwg.mxu0
      %v2535 = vlaneseq
      %v2536 = vshrl.u32 %v2535, 7
      %v2537 = vsub.s32 0, %v2536
      %v2538 = vrot.slane %v2029, %v2537
      %v2540 = vadd.f32 %v2538, %v2531
      %s2541 = scalar_lea.vmem %s5, 192
      %v2542 = vld [vmem:[%s2541] sm:$0xff]
      %v2543 = vld [vmem:[%s2541 + $0x8] sm:$0xff]
      %v2544 = vld [vmem:[%s2541 + $0x10] sm:$0xff]
      %v2545 = vld [vmem:[%s2541 + $0x18] sm:$0xff]
      %v2546 = vld [vmem:[%s2541 + $0x20] sm:$0xff]
      %v2547 = vld [vmem:[%s2541 + $0x28] sm:$0xff]
      %v2548 = vld [vmem:[%s2541 + $0x30] sm:$0xff]
      %v2549 = vld [vmem:[%s2541 + $0x38] sm:$0xff]
      %s2550 = scalar_lea.vmem %s6, 3
      %v2551 = vld [vmem:[%s2550] sm:$0x1]
      %v2553 = vlaneseq
      %v2554 = vshrl.u32 %v2553, 7
      %v2555 = vsub.s32 0, %v2554
      %v2556 = vrot.slane %v2551, %v2555
      %2558 = vmatprep.subr.mxu0 0.0
      %2559 = vmatpush1.msra.mxu0 %v2542
      %2560 = vmatprep.subr.mxu0 0.0
      %2561 = vmatpush1.msra.mxu0 %v2543
      %2562 = vmatprep.subr.mxu0 0.0
      %2563 = vmatpush1.msra.mxu0 %v2544
      %2564 = vmatprep.subr.mxu0 0.0
      %2565 = vmatpush1.msra.mxu0 %v2545
      %2566 = vmatprep.subr.mxu0 0.0
      %2567 = vmatpush1.msra.mxu0 %v2546
      %2568 = vmatprep.subr.mxu0 0.0
      %2569 = vmatpush1.msra.mxu0 %v2547
      %2570 = vmatprep.subr.mxu0 0.0
      %2571 = vmatpush1.msra.mxu0 %v2548
      %2572 = vmatprep.subr.mxu0 0.0
      %2573 = vmatpush1.msra.mxu0 %v2549
      %2574 = vmatprep.subr.mxu0 0.0
      %2575 = vmatpush1.msra.mxu0 0.0
      %2576 = vmatprep.subr.mxu0 0.0
      %2577 = vmatpush1.msra.mxu0 0.0
      %2578 = vmatprep.subr.mxu0 0.0
      %2579 = vmatpush1.msra.mxu0 0.0
      %2580 = vmatprep.subr.mxu0 0.0
      %2581 = vmatpush1.msra.mxu0 0.0
      %2582 = vmatprep.subr.mxu0 0.0
      %2583 = vmatpush1.msra.mxu0 0.0
      %2584 = vmatprep.subr.mxu0 0.0
      %2585 = vmatpush1.msra.mxu0 0.0
      %2586 = vmatprep.subr.mxu0 0.0
      %2587 = vmatpush1.msra.mxu0 0.0
      %2588 = vmatprep.subr.mxu0 0.0
      %2589 = vmatpush1.msra.mxu0 0.0
      %2590 = vmatprep.subr.mxu0 0.0
      %2591 = vmatpush1.msra.mxu0 0.0
      %2592 = vmatprep.subr.mxu0 0.0
      %2593 = vmatpush1.msra.mxu0 0.0
      %2594 = vmatprep.subr.mxu0 0.0
      %2595 = vmatpush1.msra.mxu0 0.0
      %2596 = vmatprep.subr.mxu0 0.0
      %2597 = vmatpush1.msra.mxu0 0.0
      %2598 = vmatprep.subr.mxu0 0.0
      %2599 = vmatpush1.msra.mxu0 0.0
      %2600 = vmatprep.subr.mxu0 0.0
      %2601 = vmatpush1.msra.mxu0 0.0
      %2602 = vmatprep.subr.mxu0 0.0
      %2603 = vmatpush1.msra.mxu0 0.0
      %2604 = vmatprep.subr.mxu0 0.0
      %2605 = vmatpush1.msra.mxu0 0.0
      %2606 = vmatprep.subr.mxu0 0.0
      %2607 = vmatpush1.msra.mxu0 0.0
      %2608 = vmatprep.subr.mxu0 0.0
      %2609 = vmatpush1.msra.mxu0 0.0
      %2610 = vmatprep.subr.mxu0 0.0
      %2611 = vmatpush1.msra.mxu0 0.0
      %2612 = vmatprep.subr.mxu0 0.0
      %2613 = vmatpush1.msra.mxu0 0.0
      %2614 = vmatprep.subr.mxu0 0.0
      %2615 = vmatpush1.msra.mxu0 0.0
      %2616 = vmatprep.subr.mxu0 0.0
      %2617 = vmatpush1.msra.mxu0 0.0
      %2618 = vmatprep.subr.mxu0 0.0
      %2619 = vmatpush1.msra.mxu0 0.0
      %2620 = vmatprep.subr.mxu0 0.0
      %2621 = vmatpush1.msra.mxu0 0.0
      %2622 = vmatprep.mubr.f32.mxu0 0.0
      %2623 = vmatmul.mubr.f32.gmra.mrb[0].mxu0 %v2048
      %v2624 = vpop.f32.mrb[0].mxu0
      %v2625 = vadd.f32 %v2556, %v2624
      %v2626 = vpop.f32.mrb[0].mxu0
      %2627 = vdwg.mxu0
      %s2628 = scalar_lea.vmem %s7, 192
      %v2629 = vld [vmem:[%s2628] sm:$0xff]
      %v2630 = vld [vmem:[%s2628 + $0x8] sm:$0xff]
      %v2631 = vld [vmem:[%s2628 + $0x10] sm:$0xff]
      %v2632 = vld [vmem:[%s2628 + $0x18] sm:$0xff]
      %v2633 = vld [vmem:[%s2628 + $0x20] sm:$0xff]
      %v2634 = vld [vmem:[%s2628 + $0x28] sm:$0xff]
      %v2635 = vld [vmem:[%s2628 + $0x30] sm:$0xff]
      %v2636 = vld [vmem:[%s2628 + $0x38] sm:$0xff]
      %s2637 = scalar_lea.vmem %s8, 3
      %v2638 = vld [vmem:[%s2637] sm:$0x1]
      %v2640 = vlaneseq
      %v2641 = vshrl.u32 %v2640, 7
      %v2642 = vsub.s32 0, %v2641
      %v2643 = vrot.slane %v2638, %v2642
      %2645 = vmatprep.subr.mxu0 0.0
      %2646 = vmatpush1.msra.mxu0 %v2629
      %2647 = vmatprep.subr.mxu0 0.0
      %2648 = vmatpush1.msra.mxu0 %v2630
      %2649 = vmatprep.subr.mxu0 0.0
      %2650 = vmatpush1.msra.mxu0 %v2631
      %2651 = vmatprep.subr.mxu0 0.0
      %2652 = vmatpush1.msra.mxu0 %v2632
      %2653 = vmatprep.subr.mxu0 0.0
      %2654 = vmatpush1.msra.mxu0 %v2633
      %2655 = vmatprep.subr.mxu0 0.0
      %2656 = vmatpush1.msra.mxu0 %v2634
      %2657 = vmatprep.subr.mxu0 0.0
      %2658 = vmatpush1.msra.mxu0 %v2635
      %2659 = vmatprep.subr.mxu0 0.0
      %2660 = vmatpush1.msra.mxu0 %v2636
      %2661 = vmatprep.subr.mxu0 0.0
      %2662 = vmatpush1.msra.mxu0 0.0
      %2663 = vmatprep.subr.mxu0 0.0
      %2664 = vmatpush1.msra.mxu0 0.0
      %2665 = vmatprep.subr.mxu0 0.0
      %2666 = vmatpush1.msra.mxu0 0.0
      %2667 = vmatprep.subr.mxu0 0.0
      %2668 = vmatpush1.msra.mxu0 0.0
      %2669 = vmatprep.subr.mxu0 0.0
      %2670 = vmatpush1.msra.mxu0 0.0
      %2671 = vmatprep.subr.mxu0 0.0
      %2672 = vmatpush1.msra.mxu0 0.0
      %2673 = vmatprep.subr.mxu0 0.0
      %2674 = vmatpush1.msra.mxu0 0.0
      %2675 = vmatprep.subr.mxu0 0.0
      %2676 = vmatpush1.msra.mxu0 0.0
      %2677 = vmatprep.subr.mxu0 0.0
      %2678 = vmatpush1.msra.mxu0 0.0
      %2679 = vmatprep.subr.mxu0 0.0
      %2680 = vmatpush1.msra.mxu0 0.0
      %2681 = vmatprep.subr.mxu0 0.0
      %2682 = vmatpush1.msra.mxu0 0.0
      %2683 = vmatprep.subr.mxu0 0.0
      %2684 = vmatpush1.msra.mxu0 0.0
      %2685 = vmatprep.subr.mxu0 0.0
      %2686 = vmatpush1.msra.mxu0 0.0
      %2687 = vmatprep.subr.mxu0 0.0
      %2688 = vmatpush1.msra.mxu0 0.0
      %2689 = vmatprep.subr.mxu0 0.0
      %2690 = vmatpush1.msra.mxu0 0.0
      %2691 = vmatprep.subr.mxu0 0.0
      %2692 = vmatpush1.msra.mxu0 0.0
      %2693 = vmatprep.subr.mxu0 0.0
      %2694 = vmatpush1.msra.mxu0 0.0
      %2695 = vmatprep.subr.mxu0 0.0
      %2696 = vmatpush1.msra.mxu0 0.0
      %2697 = vmatprep.subr.mxu0 0.0
      %2698 = vmatpush1.msra.mxu0 0.0
      %2699 = vmatprep.subr.mxu0 0.0
      %2700 = vmatpush1.msra.mxu0 0.0
      %2701 = vmatprep.subr.mxu0 0.0
      %2702 = vmatpush1.msra.mxu0 0.0
      %2703 = vmatprep.subr.mxu0 0.0
      %2704 = vmatpush1.msra.mxu0 0.0
      %2705 = vmatprep.subr.mxu0 0.0
      %2706 = vmatpush1.msra.mxu0 0.0
      %2707 = vmatprep.subr.mxu0 0.0
      %2708 = vmatpush1.msra.mxu0 0.0
      %2709 = vmatprep.mubr.f32.mxu0 0.0
      %2710 = vmatmul.mubr.f32.gmra.mrb[0].mxu0 %v2048
      %v2711 = vpop.f32.mrb[0].mxu0
      %v2712 = vadd.f32 %v2643, %v2711
      %v2713 = vpop.f32.mrb[0].mxu0
      %2714 = vdwg.mxu0
      %s2715 = scalar_lea.vmem %s9, 192
      %v2716 = vld [vmem:[%s2715] sm:$0xff]
      %v2717 = vld [vmem:[%s2715 + $0x8] sm:$0xff]
      %v2718 = vld [vmem:[%s2715 + $0x10] sm:$0xff]
      %v2719 = vld [vmem:[%s2715 + $0x18] sm:$0xff]
      %v2720 = vld [vmem:[%s2715 + $0x20] sm:$0xff]
      %v2721 = vld [vmem:[%s2715 + $0x28] sm:$0xff]
      %v2722 = vld [vmem:[%s2715 + $0x30] sm:$0xff]
      %v2723 = vld [vmem:[%s2715 + $0x38] sm:$0xff]
      %s2724 = scalar_lea.vmem %s10, 3
      %v2725 = vld [vmem:[%s2724] sm:$0x1]
      %v2727 = vlaneseq
      %v2728 = vshrl.u32 %v2727, 7
      %v2729 = vsub.s32 0, %v2728
      %v2730 = vrot.slane %v2725, %v2729
      %2732 = vmatprep.subr.mxu0 0.0
      %2733 = vmatpush1.msra.mxu0 %v2716
      %2734 = vmatprep.subr.mxu0 0.0
      %2735 = vmatpush1.msra.mxu0 %v2717
      %2736 = vmatprep.subr.mxu0 0.0
      %2737 = vmatpush1.msra.mxu0 %v2718
      %2738 = vmatprep.subr.mxu0 0.0
      %2739 = vmatpush1.msra.mxu0 %v2719
      %2740 = vmatprep.subr.mxu0 0.0
      %2741 = vmatpush1.msra.mxu0 %v2720
      %2742 = vmatprep.subr.mxu0 0.0
      %2743 = vmatpush1.msra.mxu0 %v2721
      %2744 = vmatprep.subr.mxu0 0.0
      %2745 = vmatpush1.msra.mxu0 %v2722
      %2746 = vmatprep.subr.mxu0 0.0
      %2747 = vmatpush1.msra.mxu0 %v2723
      %2748 = vmatprep.subr.mxu0 0.0
      %2749 = vmatpush1.msra.mxu0 0.0
      %2750 = vmatprep.subr.mxu0 0.0
      %2751 = vmatpush1.msra.mxu0 0.0
      %2752 = vmatprep.subr.mxu0 0.0
      %2753 = vmatpush1.msra.mxu0 0.0
      %2754 = vmatprep.subr.mxu0 0.0
      %2755 = vmatpush1.msra.mxu0 0.0
      %2756 = vmatprep.subr.mxu0 0.0
      %2757 = vmatpush1.msra.mxu0 0.0
      %2758 = vmatprep.subr.mxu0 0.0
      %2759 = vmatpush1.msra.mxu0 0.0
      %2760 = vmatprep.subr.mxu0 0.0
      %2761 = vmatpush1.msra.mxu0 0.0
      %2762 = vmatprep.subr.mxu0 0.0
      %2763 = vmatpush1.msra.mxu0 0.0
      %2764 = vmatprep.subr.mxu0 0.0
      %2765 = vmatpush1.msra.mxu0 0.0
      %2766 = vmatprep.subr.mxu0 0.0
      %2767 = vmatpush1.msra.mxu0 0.0
      %2768 = vmatprep.subr.mxu0 0.0
      %2769 = vmatpush1.msra.mxu0 0.0
      %2770 = vmatprep.subr.mxu0 0.0
      %2771 = vmatpush1.msra.mxu0 0.0
      %2772 = vmatprep.subr.mxu0 0.0
      %2773 = vmatpush1.msra.mxu0 0.0
      %2774 = vmatprep.subr.mxu0 0.0
      %2775 = vmatpush1.msra.mxu0 0.0
      %2776 = vmatprep.subr.mxu0 0.0
      %2777 = vmatpush1.msra.mxu0 0.0
      %2778 = vmatprep.subr.mxu0 0.0
      %2779 = vmatpush1.msra.mxu0 0.0
      %2780 = vmatprep.subr.mxu0 0.0
      %2781 = vmatpush1.msra.mxu0 0.0
      %2782 = vmatprep.subr.mxu0 0.0
      %2783 = vmatpush1.msra.mxu0 0.0
      %2784 = vmatprep.subr.mxu0 0.0
      %2785 = vmatpush1.msra.mxu0 0.0
      %2786 = vmatprep.subr.mxu0 0.0
      %2787 = vmatpush1.msra.mxu0 0.0
      %2788 = vmatprep.subr.mxu0 0.0
      %2789 = vmatpush1.msra.mxu0 0.0
      %2790 = vmatprep.subr.mxu0 0.0
      %2791 = vmatpush1.msra.mxu0 0.0
      %2792 = vmatprep.subr.mxu0 0.0
      %2793 = vmatpush1.msra.mxu0 0.0
      %2794 = vmatprep.subr.mxu0 0.0
      %2795 = vmatpush1.msra.mxu0 0.0
      %2796 = vmatprep.mubr.f32.mxu0 0.0
      %2797 = vmatmul.mubr.f32.gmra.mrb[0].mxu0 %v2048
      %v2798 = vpop.f32.mrb[0].mxu0
      %v2799 = vadd.f32 %v2730, %v2798
      %v2800 = vpop.f32.mrb[0].mxu0
      %2801 = vdwg.mxu0
      %v2803 = vsel %vm984, %v2625, 0
      %v2806 = vsel %vm984, %v2712, 0
      %2808 = vmatprep.subr.mxu0 0.0
      %2809 = vmatpush1.xpose.msra.mxu0 %v2806
      %2810 = vmatprep.subr.mxu0 0.0
      %2811 = vmatpush1.xpose.msra.mxu0 0.0
      %2812 = vmatprep.subr.mxu0 0.0
      %2813 = vmatpush1.xpose.msra.mxu0 0.0
      %2814 = vmatprep.subr.mxu0 0.0
      %2815 = vmatpush1.xpose.msra.mxu0 0.0
      %2816 = vmatprep.subr.mxu0 0.0
      %2817 = vmatpush1.xpose.msra.mxu0 0.0
      %2818 = vmatprep.subr.mxu0 0.0
      %2819 = vmatpush1.xpose.msra.mxu0 0.0
      %2820 = vmatprep.subr.mxu0 0.0
      %2821 = vmatpush1.xpose.msra.mxu0 0.0
      %2822 = vmatprep.subr.mxu0 0.0
      %2823 = vmatpush1.xpose.msra.mxu0 0.0
      %2824 = vmatprep.subr.mxu0 0.0
      %2825 = vmatpush1.xpose.msra.mxu0 0.0
      %2826 = vmatprep.subr.mxu0 0.0
      %2827 = vmatpush1.xpose.msra.mxu0 0.0
      %2828 = vmatprep.subr.mxu0 0.0
      %2829 = vmatpush1.xpose.msra.mxu0 0.0
      %2830 = vmatprep.subr.mxu0 0.0
      %2831 = vmatpush1.xpose.msra.mxu0 0.0
      %2832 = vmatprep.subr.mxu0 0.0
      %2833 = vmatpush1.xpose.msra.mxu0 0.0
      %2834 = vmatprep.subr.mxu0 0.0
      %2835 = vmatpush1.xpose.msra.mxu0 0.0
      %2836 = vmatprep.subr.mxu0 0.0
      %2837 = vmatpush1.xpose.msra.mxu0 0.0
      %2838 = vmatprep.subr.mxu0 0.0
      %2839 = vmatpush1.xpose.msra.mxu0 0.0
      %2840 = vmatprep.subr.mxu0 0.0
      %2841 = vmatpush1.xpose.msra.mxu0 0.0
      %2842 = vmatprep.subr.mxu0 0.0
      %2843 = vmatpush1.xpose.msra.mxu0 0.0
      %2844 = vmatprep.subr.mxu0 0.0
      %2845 = vmatpush1.xpose.msra.mxu0 0.0
      %2846 = vmatprep.subr.mxu0 0.0
      %2847 = vmatpush1.xpose.msra.mxu0 0.0
      %2848 = vmatprep.subr.mxu0 0.0
      %2849 = vmatpush1.xpose.msra.mxu0 0.0
      %2850 = vmatprep.subr.mxu0 0.0
      %2851 = vmatpush1.xpose.msra.mxu0 0.0
      %2852 = vmatprep.subr.mxu0 0.0
      %2853 = vmatpush1.xpose.msra.mxu0 0.0
      %2854 = vmatprep.subr.mxu0 0.0
      %2855 = vmatpush1.xpose.msra.mxu0 0.0
      %2856 = vmatprep.subr.mxu0 0.0
      %2857 = vmatpush1.xpose.msra.mxu0 0.0
      %2858 = vmatprep.subr.mxu0 0.0
      %2859 = vmatpush1.xpose.msra.mxu0 0.0
      %2860 = vmatprep.subr.mxu0 0.0
      %2861 = vmatpush1.xpose.msra.mxu0 0.0
      %2862 = vmatprep.subr.mxu0 0.0
      %2863 = vmatpush1.xpose.msra.mxu0 0.0
      %2864 = vmatprep.subr.mxu0 0.0
      %2865 = vmatpush1.xpose.msra.mxu0 0.0
      %2866 = vmatprep.subr.mxu0 0.0
      %2867 = vmatpush1.xpose.msra.mxu0 0.0
      %2868 = vmatprep.subr.mxu0 0.0
      %2869 = vmatpush1.xpose.msra.mxu0 0.0
      %2870 = vmatprep.subr.mxu0 0.0
      %2871 = vmatpush1.xpose.msra.mxu0 0.0
      %2872 = vmatprep.mubr.f32.mxu0 0.0
      %2873 = vmatmul.mubr.f32.gmra.mrb[0].mxu0 %v2803
      %v2874 = vpop.f32.mrb[0].mxu0
      %v2875 = vadd.f32 0.0, %v2874
      %v2876 = vpop.f32.mrb[0].mxu0
      %2877 = vdwg.mxu0
      %v2878 = vmul.f32 %v2875, 0.17677669
      %v2879 = vsel %vm1066, -1e+30, %v2878
      %v2880 = vsel %vm1068, %v2879, -inf
      %2881 = vmax.xlane.f32.xlu0 %v2880
      %v2882 = vpop.xlane.xlu0 %2881
      %v2883 = vsub.f32 %v2879, %v2882
      %v2884 = vmul.f32 %v2883, 1.442695
      %v2885 = vpow.pop %v2884
      %v2886 = vsel %vm1068, %v2885, 0.0
      %2887 = vadd.xlane.f32.xlu0 %v2886
      %v2888 = vpop.xlane.xlu0 %2887
      %v2889 = vrcp.pop %v2888
      %v2890 = vmul.f32 %v2885, %v2889
      %v2892 = vsel %vm1068, %v2890, 0
      %2894 = vmatprep.subr.mxu0 0.0
      %2895 = vmatpush1.msra.mxu0 %v2799
      %2896 = vmatprep.subr.mxu0 0.0
      %2897 = vmatpush1.msra.mxu0 0.0
      %2898 = vmatprep.subr.mxu0 0.0
      %2899 = vmatpush1.msra.mxu0 0.0
      %2900 = vmatprep.subr.mxu0 0.0
      %2901 = vmatpush1.msra.mxu0 0.0
      %2902 = vmatprep.subr.mxu0 0.0
      %2903 = vmatpush1.msra.mxu0 0.0
      %2904 = vmatprep.subr.mxu0 0.0
      %2905 = vmatpush1.msra.mxu0 0.0
      %2906 = vmatprep.subr.mxu0 0.0
      %2907 = vmatpush1.msra.mxu0 0.0
      %2908 = vmatprep.subr.mxu0 0.0
      %2909 = vmatpush1.msra.mxu0 0.0
      %2910 = vmatprep.subr.mxu0 0.0
      %2911 = vmatpush1.msra.mxu0 0.0
      %2912 = vmatprep.subr.mxu0 0.0
      %2913 = vmatpush1.msra.mxu0 0.0
      %2914 = vmatprep.subr.mxu0 0.0
      %2915 = vmatpush1.msra.mxu0 0.0
      %2916 = vmatprep.subr.mxu0 0.0
      %2917 = vmatpush1.msra.mxu0 0.0
      %2918 = vmatprep.subr.mxu0 0.0
      %2919 = vmatpush1.msra.mxu0 0.0
      %2920 = vmatprep.subr.mxu0 0.0
      %2921 = vmatpush1.msra.mxu0 0.0
      %2922 = vmatprep.subr.mxu0 0.0
      %2923 = vmatpush1.msra.mxu0 0.0
      %2924 = vmatprep.subr.mxu0 0.0
      %2925 = vmatpush1.msra.mxu0 0.0
      %2926 = vmatprep.subr.mxu0 0.0
      %2927 = vmatpush1.msra.mxu0 0.0
      %2928 = vmatprep.subr.mxu0 0.0
      %2929 = vmatpush1.msra.mxu0 0.0
      %2930 = vmatprep.subr.mxu0 0.0
      %2931 = vmatpush1.msra.mxu0 0.0
      %2932 = vmatprep.subr.mxu0 0.0
      %2933 = vmatpush1.msra.mxu0 0.0
      %2934 = vmatprep.subr.mxu0 0.0
      %2935 = vmatpush1.msra.mxu0 0.0
      %2936 = vmatprep.subr.mxu0 0.0
      %2937 = vmatpush1.msra.mxu0 0.0
      %2938 = vmatprep.subr.mxu0 0.0
      %2939 = vmatpush1.msra.mxu0 0.0
      %2940 = vmatprep.subr.mxu0 0.0
      %2941 = vmatpush1.msra.mxu0 0.0
      %2942 = vmatprep.subr.mxu0 0.0
      %2943 = vmatpush1.msra.mxu0 0.0
      %2944 = vmatprep.subr.mxu0 0.0
      %2945 = vmatpush1.msra.mxu0 0.0
      %2946 = vmatprep.subr.mxu0 0.0
      %2947 = vmatpush1.msra.mxu0 0.0
      %2948 = vmatprep.subr.mxu0 0.0
      %2949 = vmatpush1.msra.mxu0 0.0
      %2950 = vmatprep.subr.mxu0 0.0
      %2951 = vmatpush1.msra.mxu0 0.0
      %2952 = vmatprep.subr.mxu0 0.0
      %2953 = vmatpush1.msra.mxu0 0.0
      %2954 = vmatprep.subr.mxu0 0.0
      %2955 = vmatpush1.msra.mxu0 0.0
      %2956 = vmatprep.subr.mxu0 0.0
      %2957 = vmatpush1.msra.mxu0 0.0
      %2958 = vmatprep.mubr.f32.mxu0 0.0
      %2959 = vmatmul.mubr.f32.gmra.mrb[0].mxu0 %v2892
      %v2960 = vpop.f32.mrb[0].mxu0
      %v2961 = vadd.f32 0.0, %v2960
      %v2962 = vpop.f32.mrb[0].mxu0
      %2963 = vdwg.mxu0
      %s2964 = scalar_lea.vmem %s11, 96
      %v2965 = vld [vmem:[%s2964] sm:$0xff]
      %v2966 = vld [vmem:[%s2964 + $0x8] sm:$0xff]
      %v2967 = vld [vmem:[%s2964 + $0x10] sm:$0xff]
      %v2968 = vld [vmem:[%s2964 + $0x18] sm:$0xff]
      %v2970 = vsel %vm984, %v2961, 0
      %2972 = vmatprep.subr.mxu0 0.0
      %2973 = vmatpush1.msra.mxu0 %v2965
      %2974 = vmatprep.subr.mxu0 0.0
      %2975 = vmatpush1.msra.mxu0 %v2966
      %2976 = vmatprep.subr.mxu0 0.0
      %2977 = vmatpush1.msra.mxu0 %v2967
      %2978 = vmatprep.subr.mxu0 0.0
      %2979 = vmatpush1.msra.mxu0 %v2968
      %2980 = vmatprep.subr.mxu0 0.0
      %2981 = vmatpush1.msra.mxu0 0.0
      %2982 = vmatprep.subr.mxu0 0.0
      %2983 = vmatpush1.msra.mxu0 0.0
      %2984 = vmatprep.subr.mxu0 0.0
      %2985 = vmatpush1.msra.mxu0 0.0
      %2986 = vmatprep.subr.mxu0 0.0
      %2987 = vmatpush1.msra.mxu0 0.0
      %2988 = vmatprep.subr.mxu0 0.0
      %2989 = vmatpush1.msra.mxu0 0.0
      %2990 = vmatprep.subr.mxu0 0.0
      %2991 = vmatpush1.msra.mxu0 0.0
      %2992 = vmatprep.subr.mxu0 0.0
      %2993 = vmatpush1.msra.mxu0 0.0
      %2994 = vmatprep.subr.mxu0 0.0
      %2995 = vmatpush1.msra.mxu0 0.0
      %2996 = vmatprep.subr.mxu0 0.0
      %2997 = vmatpush1.msra.mxu0 0.0
      %2998 = vmatprep.subr.mxu0 0.0
      %2999 = vmatpush1.msra.mxu0 0.0
      %3000 = vmatprep.subr.mxu0 0.0
      %3001 = vmatpush1.msra.mxu0 0.0
      %3002 = vmatprep.subr.mxu0 0.0
      %3003 = vmatpush1.msra.mxu0 0.0
      %3004 = vmatprep.subr.mxu0 0.0
      %3005 = vmatpush1.msra.mxu0 0.0
      %3006 = vmatprep.subr.mxu0 0.0
      %3007 = vmatpush1.msra.mxu0 0.0
      %3008 = vmatprep.subr.mxu0 0.0
      %3009 = vmatpush1.msra.mxu0 0.0
      %3010 = vmatprep.subr.mxu0 0.0
      %3011 = vmatpush1.msra.mxu0 0.0
      %3012 = vmatprep.subr.mxu0 0.0
      %3013 = vmatpush1.msra.mxu0 0.0
      %3014 = vmatprep.subr.mxu0 0.0
      %3015 = vmatpush1.msra.mxu0 0.0
      %3016 = vmatprep.subr.mxu0 0.0
      %3017 = vmatpush1.msra.mxu0 0.0
      %3018 = vmatprep.subr.mxu0 0.0
      %3019 = vmatpush1.msra.mxu0 0.0
      %3020 = vmatprep.subr.mxu0 0.0
      %3021 = vmatpush1.msra.mxu0 0.0
      %3022 = vmatprep.subr.mxu0 0.0
      %3023 = vmatpush1.msra.mxu0 0.0
      %3024 = vmatprep.subr.mxu0 0.0
      %3025 = vmatpush1.msra.mxu0 0.0
      %3026 = vmatprep.subr.mxu0 0.0
      %3027 = vmatpush1.msra.mxu0 0.0
      %3028 = vmatprep.subr.mxu0 0.0
      %3029 = vmatpush1.msra.mxu0 0.0
      %3030 = vmatprep.subr.mxu0 0.0
      %3031 = vmatpush1.msra.mxu0 0.0
      %3032 = vmatprep.subr.mxu0 0.0
      %3033 = vmatpush1.msra.mxu0 0.0
      %3034 = vmatprep.subr.mxu0 0.0
      %3035 = vmatpush1.msra.mxu0 0.0
      %3036 = vmatprep.mubr.f32.mxu0 0.0
      %3037 = vmatmul.mubr.f32.gmra.mrb[0].mxu0 %v2970
      %v3038 = vpop.f32.mrb[0].mxu0
      %v3039 = vadd.f32 0.0, %v3038
      %v3040 = vpop.f32.mrb[0].mxu0
      %3041 = vdwg.mxu0
      %v3042 = vadd.f32 %v2540, %v3039
      %v3043 = vadd.f32 %v1996, %v3042
      %s3044 = scalar_lea.vmem %s13, 1
      %v3045 = vld [vmem:[%s3044] sm:$0x1]
      %s3046 = scalar_lea.vmem %s14, 1
      %v3047 = vld [vmem:[%s3046] sm:$0x1]
      %v3048 = vsel %vm696, %v3043, 0.0
      %3049 = vadd.xlane.f32.xlu0 %v3048
      %v3050 = vpop.xlane.xlu0 %3049
      %v3051 = vmul.f32 %v3050, %v700
      %v3052 = vsub.f32 %v3043, %v3051
      %v3053 = vmul.f32 %v3052, %v3052
      %v3054 = vsel %vm696, %v3053, 0.0
      %3055 = vadd.xlane.f32.xlu0 %v3054
      %v3056 = vpop.xlane.xlu0 %3055
      %v3057 = vmul.f32 %v3056, %v700
      %v3058 = vadd.f32 %v3057, 1e-05
      %v3059 = vrsqrt.pop %v3058
      %v3060 = vmul.f32 %v3052, %v3059
      %v3062 = vlaneseq
      %v3063 = vshrl.u32 %v3062, 7
      %v3064 = vsub.s32 0, %v3063
      %v3065 = vrot.slane %v3045, %v3064
      %v3067 = vmul.f32 %v3060, %v3065
      %v3069 = vlaneseq
      %v3070 = vshrl.u32 %v3069, 7
      %v3071 = vsub.s32 0, %v3070
      %v3072 = vrot.slane %v3047, %v3071
      %v3074 = vadd.f32 %v3067, %v3072
      %s3075 = scalar_lea.vmem %s15, 128
      %v3076 = vld [vmem:[%s3075] sm:$0xff]
      %v3077 = vld [vmem:[%s3075 + $0x8] sm:$0xff]
      %v3078 = vld [vmem:[%s3075 + $0x10] sm:$0xff]
      %v3079 = vld [vmem:[%s3075 + $0x18] sm:$0xff]
      %v3080 = vld [vmem:[%s3075 + $0x20] sm:$0xff]
      %v3081 = vld [vmem:[%s3075 + $0x28] sm:$0xff]
      %v3082 = vld [vmem:[%s3075 + $0x30] sm:$0xff]
      %v3083 = vld [vmem:[%s3075 + $0x38] sm:$0xff]
      %v3084 = vld [vmem:[%s3075 + $0x40] sm:$0xff]
      %v3085 = vld [vmem:[%s3075 + $0x48] sm:$0xff]
      %v3086 = vld [vmem:[%s3075 + $0x50] sm:$0xff]
      %v3087 = vld [vmem:[%s3075 + $0x58] sm:$0xff]
      %v3088 = vld [vmem:[%s3075 + $0x60] sm:$0xff]
      %v3089 = vld [vmem:[%s3075 + $0x68] sm:$0xff]
      %v3090 = vld [vmem:[%s3075 + $0x70] sm:$0xff]
      %v3091 = vld [vmem:[%s3075 + $0x78] sm:$0xff]
      %s3092 = scalar_lea.vmem %s16, 2
      %v3093 = vld [vmem:[%s3092] sm:$0x3]
      %v3095 = vlaneseq
      %v3096 = vshrl.u32 %v3095, 7
      %v3097 = vsub.s32 0, %v3096
      %v3098 = vrot.slane %v3093, %v3097
      %v3099 = vlaneseq
      %v3100 = vshrl.u32 %v3099, 7
      %v3101 = vsub.s32 1, %v3100
      %v3102 = vrot.slane %v3093, %v3101
      %v3106 = vsel %vm696, %v3074, 0
      %3108 = vmatprep.subr.mxu0 %v3077
      %3109 = vmatpush1.msra.mxu0 %v3076
      %3110 = vmatprep.subr.mxu0 %v3079
      %3111 = vmatpush1.msra.mxu0 %v3078
      %3112 = vmatprep.subr.mxu0 %v3081
      %3113 = vmatpush1.msra.mxu0 %v3080
      %3114 = vmatprep.subr.mxu0 %v3083
      %3115 = vmatpush1.msra.mxu0 %v3082
      %3116 = vmatprep.subr.mxu0 %v3085
      %3117 = vmatpush1.msra.mxu0 %v3084
      %3118 = vmatprep.subr.mxu0 %v3087
      %3119 = vmatpush1.msra.mxu0 %v3086
      %3120 = vmatprep.subr.mxu0 %v3089
      %3121 = vmatpush1.msra.mxu0 %v3088
      %3122 = vmatprep.subr.mxu0 %v3091
      %3123 = vmatpush1.msra.mxu0 %v3090
      %3124 = vmatprep.subr.mxu0 0.0
      %3125 = vmatpush1.msra.mxu0 0.0
      %3126 = vmatprep.subr.mxu0 0.0
      %3127 = vmatpush1.msra.mxu0 0.0
      %3128 = vmatprep.subr.mxu0 0.0
      %3129 = vmatpush1.msra.mxu0 0.0
      %3130 = vmatprep.subr.mxu0 0.0
      %3131 = vmatpush1.msra.mxu0 0.0
      %3132 = vmatprep.subr.mxu0 0.0
      %3133 = vmatpush1.msra.mxu0 0.0
      %3134 = vmatprep.subr.mxu0 0.0
      %3135 = vmatpush1.msra.mxu0 0.0
      %3136 = vmatprep.subr.mxu0 0.0
      %3137 = vmatpush1.msra.mxu0 0.0
      %3138 = vmatprep.subr.mxu0 0.0
      %3139 = vmatpush1.msra.mxu0 0.0
      %3140 = vmatprep.subr.mxu0 0.0
      %3141 = vmatpush1.msra.mxu0 0.0
      %3142 = vmatprep.subr.mxu0 0.0
      %3143 = vmatpush1.msra.mxu0 0.0
      %3144 = vmatprep.subr.mxu0 0.0
      %3145 = vmatpush1.msra.mxu0 0.0
      %3146 = vmatprep.subr.mxu0 0.0
      %3147 = vmatpush1.msra.mxu0 0.0
      %3148 = vmatprep.subr.mxu0 0.0
      %3149 = vmatpush1.msra.mxu0 0.0
      %3150 = vmatprep.subr.mxu0 0.0
      %3151 = vmatpush1.msra.mxu0 0.0
      %3152 = vmatprep.subr.mxu0 0.0
      %3153 = vmatpush1.msra.mxu0 0.0
      %3154 = vmatprep.subr.mxu0 0.0
      %3155 = vmatpush1.msra.mxu0 0.0
      %3156 = vmatprep.subr.mxu0 0.0
      %3157 = vmatpush1.msra.mxu0 0.0
      %3158 = vmatprep.subr.mxu0 0.0
      %3159 = vmatpush1.msra.mxu0 0.0
      %3160 = vmatprep.subr.mxu0 0.0
      %3161 = vmatpush1.msra.mxu0 0.0
      %3162 = vmatprep.subr.mxu0 0.0
      %3163 = vmatpush1.msra.mxu0 0.0
      %3164 = vmatprep.subr.mxu0 0.0
      %3165 = vmatpush1.msra.mxu0 0.0
      %3166 = vmatprep.subr.mxu0 0.0
      %3167 = vmatpush1.msra.mxu0 0.0
      %3168 = vmatprep.subr.mxu0 0.0
      %3169 = vmatpush1.msra.mxu0 0.0
      %3170 = vmatprep.subr.mxu0 0.0
      %3171 = vmatpush1.msra.mxu0 0.0
      %3172 = vmatprep.mubr.f32.mxu0 0.0
      %3173 = vmatmul.mubr.f32.gmra.mrb[0].mxu0 %v3106
      %v3174 = vpop.f32.mrb[0].mxu0
      %v3175 = vadd.f32 %v3098, %v3174
      %v3176 = vpop.f32.mrb[0].mxu0
      %v3177 = vadd.f32 %v3102, %v3176
      %3178 = vdwg.mxu0
      %v3179 = vmul.f32 %v3175, 1.702
      %v3180 = vmul.f32 %v3177, 1.702
      %v3181 = vxor.u32 %v3179, 2147483648
      %v3182 = vxor.u32 %v3180, 2147483648
      %v3183 = vmul.f32 %v3181, 1.442695
      %v3184 = vpow.pop %v3183
      %v3185 = vmul.f32 %v3182, 1.442695
      %v3186 = vpow.pop %v3185
      %v3187 = vadd.f32 %v3184, 1.0
      %v3188 = vadd.f32 %v3186, 1.0
      %v3189 = vrcp.pop %v3187
      %v3190 = vmul.f32 1.0, %v3189
      %v3191 = vrcp.pop %v3188
      %v3192 = vmul.f32 1.0, %v3191
      %v3193 = vmul.f32 %v3175, %v3190
      %v3194 = vmul.f32 %v3177, %v3192
      %s3195 = scalar_lea.vmem %s17, 256
      %v3196 = vld [vmem:[%s3195] sm:$0xff]
      %v3197 = vld [vmem:[%s3195 + $0x8] sm:$0xff]
      %v3198 = vld [vmem:[%s3195 + $0x10] sm:$0xff]
      %v3199 = vld [vmem:[%s3195 + $0x18] sm:$0xff]
      %v3200 = vld [vmem:[%s3195 + $0x20] sm:$0xff]
      %v3201 = vld [vmem:[%s3195 + $0x28] sm:$0xff]
      %v3202 = vld [vmem:[%s3195 + $0x30] sm:$0xff]
      %v3203 = vld [vmem:[%s3195 + $0x38] sm:$0xff]
      %v3204 = vld [vmem:[%s3195 + $0x40] sm:$0xff]
      %v3205 = vld [vmem:[%s3195 + $0x48] sm:$0xff]
      %v3206 = vld [vmem:[%s3195 + $0x50] sm:$0xff]
      %v3207 = vld [vmem:[%s3195 + $0x58] sm:$0xff]
      %v3208 = vld [vmem:[%s3195 + $0x60] sm:$0xff]
      %v3209 = vld [vmem:[%s3195 + $0x68] sm:$0xff]
      %v3210 = vld [vmem:[%s3195 + $0x70] sm:$0xff]
      %v3211 = vld [vmem:[%s3195 + $0x78] sm:$0xff]
      %v3212 = vld [vmem:[%s3195 + $0x80] sm:$0xff]
      %v3213 = vld [vmem:[%s3195 + $0x88] sm:$0xff]
      %v3214 = vld [vmem:[%s3195 + $0x90] sm:$0xff]
      %v3215 = vld [vmem:[%s3195 + $0x98] sm:$0xff]
      %v3216 = vld [vmem:[%s3195 + $0xa0] sm:$0xff]
      %v3217 = vld [vmem:[%s3195 + $0xa8] sm:$0xff]
      %v3218 = vld [vmem:[%s3195 + $0xb0] sm:$0xff]
      %v3219 = vld [vmem:[%s3195 + $0xb8] sm:$0xff]
      %v3220 = vld [vmem:[%s3195 + $0xc0] sm:$0xff]
      %v3221 = vld [vmem:[%s3195 + $0xc8] sm:$0xff]
      %v3222 = vld [vmem:[%s3195 + $0xd0] sm:$0xff]
      %v3223 = vld [vmem:[%s3195 + $0xd8] sm:$0xff]
      %v3224 = vld [vmem:[%s3195 + $0xe0] sm:$0xff]
      %v3225 = vld [vmem:[%s3195 + $0xe8] sm:$0xff]
      %v3226 = vld [vmem:[%s3195 + $0xf0] sm:$0xff]
      %v3227 = vld [vmem:[%s3195 + $0xf8] sm:$0xff]
      %s3228 = scalar_lea.vmem %s18, 1
      %v3229 = vld [vmem:[%s3228] sm:$0x1]
      %v3231 = vlaneseq
      %v3232 = vshrl.u32 %v3231, 7
      %v3233 = vsub.s32 0, %v3232
      %v3234 = vrot.slane %v3229, %v3233
      %3236 = vmatprep.subr.mxu0 0.0
      %3237 = vmatpush1.msra.mxu0 %v3196
      %3238 = vmatprep.subr.mxu0 0.0
      %3239 = vmatpush1.msra.mxu0 %v3197
      %3240 = vmatprep.subr.mxu0 0.0
      %3241 = vmatpush1.msra.mxu0 %v3198
      %3242 = vmatprep.subr.mxu0 0.0
      %3243 = vmatpush1.msra.mxu0 %v3199
      %3244 = vmatprep.subr.mxu0 0.0
      %3245 = vmatpush1.msra.mxu0 %v3200
      %3246 = vmatprep.subr.mxu0 0.0
      %3247 = vmatpush1.msra.mxu0 %v3201
      %3248 = vmatprep.subr.mxu0 0.0
      %3249 = vmatpush1.msra.mxu0 %v3202
      %3250 = vmatprep.subr.mxu0 0.0
      %3251 = vmatpush1.msra.mxu0 %v3203
      %3252 = vmatprep.subr.mxu0 0.0
      %3253 = vmatpush1.msra.mxu0 %v3204
      %3254 = vmatprep.subr.mxu0 0.0
      %3255 = vmatpush1.msra.mxu0 %v3205
      %3256 = vmatprep.subr.mxu0 0.0
      %3257 = vmatpush1.msra.mxu0 %v3206
      %3258 = vmatprep.subr.mxu0 0.0
      %3259 = vmatpush1.msra.mxu0 %v3207
      %3260 = vmatprep.subr.mxu0 0.0
      %3261 = vmatpush1.msra.mxu0 %v3208
      %3262 = vmatprep.subr.mxu0 0.0
      %3263 = vmatpush1.msra.mxu0 %v3209
      %3264 = vmatprep.subr.mxu0 0.0
      %3265 = vmatpush1.msra.mxu0 %v3210
      %3266 = vmatprep.subr.mxu0 0.0
      %3267 = vmatpush1.msra.mxu0 %v3211
      %3268 = vmatprep.subr.mxu0 0.0
      %3269 = vmatpush1.msra.mxu0 %v3212
      %3270 = vmatprep.subr.mxu0 0.0
      %3271 = vmatpush1.msra.mxu0 %v3213
      %3272 = vmatprep.subr.mxu0 0.0
      %3273 = vmatpush1.msra.mxu0 %v3214
      %3274 = vmatprep.subr.mxu0 0.0
      %3275 = vmatpush1.msra.mxu0 %v3215
      %3276 = vmatprep.subr.mxu0 0.0
      %3277 = vmatpush1.msra.mxu0 %v3216
      %3278 = vmatprep.subr.mxu0 0.0
      %3279 = vmatpush1.msra.mxu0 %v3217
      %3280 = vmatprep.subr.mxu0 0.0
      %3281 = vmatpush1.msra.mxu0 %v3218
      %3282 = vmatprep.subr.mxu0 0.0
      %3283 = vmatpush1.msra.mxu0 %v3219
      %3284 = vmatprep.subr.mxu0 0.0
      %3285 = vmatpush1.msra.mxu0 %v3220
      %3286 = vmatprep.subr.mxu0 0.0
      %3287 = vmatpush1.msra.mxu0 %v3221
      %3288 = vmatprep.subr.mxu0 0.0
      %3289 = vmatpush1.msra.mxu0 %v3222
      %3290 = vmatprep.subr.mxu0 0.0
      %3291 = vmatpush1.msra.mxu0 %v3223
      %3292 = vmatprep.subr.mxu0 0.0
      %3293 = vmatpush1.msra.mxu0 %v3224
      %3294 = vmatprep.subr.mxu0 0.0
      %3295 = vmatpush1.msra.mxu0 %v3225
      %3296 = vmatprep.subr.mxu0 0.0
      %3297 = vmatpush1.msra.mxu0 %v3226
      %3298 = vmatprep.subr.mxu0 0.0
      %3299 = vmatpush1.msra.mxu0 %v3227
      %3300 = vmatprep.mubr.f32.mxu0 %v3194
      %3301 = vmatmul.mubr.f32.gmra.mrb[0].mxu0 %v3193
      %v3302 = vpop.f32.mrb[0].mxu0
      %v3303 = vadd.f32 %v3234, %v3302
      %v3304 = vpop.f32.mrb[0].mxu0
      %3305 = vdwg.mxu0
      %v3306 = vadd.f32 %v3043, %v3303
      %v3307 = vld [vmem:[%s687] sm:$0x1]
      %v3309 = vsel %vm1068, %v3307, 0
      %3311 = vmatprep.subr.mxu0 0.0
      %3312 = vmatpush1.msra.mxu0 %v3306
      %3313 = vmatprep.subr.mxu0 0.0
      %3314 = vmatpush1.msra.mxu0 0.0
      %3315 = vmatprep.subr.mxu0 0.0
      %3316 = vmatpush1.msra.mxu0 0.0
      %3317 = vmatprep.subr.mxu0 0.0
      %3318 = vmatpush1.msra.mxu0 0.0
      %3319 = vmatprep.subr.mxu0 0.0
      %3320 = vmatpush1.msra.mxu0 0.0
      %3321 = vmatprep.subr.mxu0 0.0
      %3322 = vmatpush1.msra.mxu0 0.0
      %3323 = vmatprep.subr.mxu0 0.0
      %3324 = vmatpush1.msra.mxu0 0.0
      %3325 = vmatprep.subr.mxu0 0.0
      %3326 = vmatpush1.msra.mxu0 0.0
      %3327 = vmatprep.subr.mxu0 0.0
      %3328 = vmatpush1.msra.mxu0 0.0
      %3329 = vmatprep.subr.mxu0 0.0
      %3330 = vmatpush1.msra.mxu0 0.0
      %3331 = vmatprep.subr.mxu0 0.0
      %3332 = vmatpush1.msra.mxu0 0.0
      %3333 = vmatprep.subr.mxu0 0.0
      %3334 = vmatpush1.msra.mxu0 0.0
      %3335 = vmatprep.subr.mxu0 0.0
      %3336 = vmatpush1.msra.mxu0 0.0
      %3337 = vmatprep.subr.mxu0 0.0
      %3338 = vmatpush1.msra.mxu0 0.0
      %3339 = vmatprep.subr.mxu0 0.0
      %3340 = vmatpush1.msra.mxu0 0.0
      %3341 = vmatprep.subr.mxu0 0.0
      %3342 = vmatpush1.msra.mxu0 0.0
      %3343 = vmatprep.subr.mxu0 0.0
      %3344 = vmatpush1.msra.mxu0 0.0
      %3345 = vmatprep.subr.mxu0 0.0
      %3346 = vmatpush1.msra.mxu0 0.0
      %3347 = vmatprep.subr.mxu0 0.0
      %3348 = vmatpush1.msra.mxu0 0.0
      %3349 = vmatprep.subr.mxu0 0.0
      %3350 = vmatpush1.msra.mxu0 0.0
      %3351 = vmatprep.subr.mxu0 0.0
      %3352 = vmatpush1.msra.mxu0 0.0
      %3353 = vmatprep.subr.mxu0 0.0
      %3354 = vmatpush1.msra.mxu0 0.0
      %3355 = vmatprep.subr.mxu0 0.0
      %3356 = vmatpush1.msra.mxu0 0.0
      %3357 = vmatprep.subr.mxu0 0.0
      %3358 = vmatpush1.msra.mxu0 0.0
      %3359 = vmatprep.subr.mxu0 0.0
      %3360 = vmatpush1.msra.mxu0 0.0
      %3361 = vmatprep.subr.mxu0 0.0
      %3362 = vmatpush1.msra.mxu0 0.0
      %3363 = vmatprep.subr.mxu0 0.0
      %3364 = vmatpush1.msra.mxu0 0.0
      %3365 = vmatprep.subr.mxu0 0.0
      %3366 = vmatpush1.msra.mxu0 0.0
      %3367 = vmatprep.subr.mxu0 0.0
      %3368 = vmatpush1.msra.mxu0 0.0
      %3369 = vmatprep.subr.mxu0 0.0
      %3370 = vmatpush1.msra.mxu0 0.0
      %3371 = vmatprep.subr.mxu0 0.0
      %3372 = vmatpush1.msra.mxu0 0.0
      %3373 = vmatprep.subr.mxu0 0.0
      %3374 = vmatpush1.msra.mxu0 0.0
      %3375 = vmatprep.mubr.f32.mxu0 0.0
      %3376 = vmatmul.mubr.f32.gmra.mrb[0].mxu0 %v3309
      %v3377 = vpop.f32.mrb[0].mxu0
      %v3378 = vadd.f32 0.0, %v3377
      %v3379 = vpop.f32.mrb[0].mxu0
      %3380 = vdwg.mxu0
      %v3381 = vld [vmem:[%s19] sm:$0x1]
      %v3382 = vld [vmem:[%s20] sm:$0x1]
      %vm3383 = vcmask 516096
      %v3384 = vsel %vm3383, %v3378, 0.0
      %3385 = vadd.xlane.f32.xlu0 %v3384
      %v3386 = vpop.xlane.xlu0 %3385
      %v3387 = vmul.f32 %v3386, %v700
      %v3388 = vsub.f32 %v3378, %v3387
      %v3389 = vmul.f32 %v3388, %v3388
      %v3390 = vsel %vm3383, %v3389, 0.0
      %3391 = vadd.xlane.f32.xlu0 %v3390
      %v3392 = vpop.xlane.xlu0 %3391
      %v3393 = vmul.f32 %v3392, %v700
      %v3394 = vadd.f32 %v3393, 1e-05
      %v3395 = vrsqrt.pop %v3394
      %v3396 = vmul.f32 %v3388, %v3395
      %v3397 = vmul.f32 %v3396, %v3381
      %v3398 = vadd.f32 %v3397, %v3382
      %v3399 = vld [vmem:[%s21] sm:$0xff]
      %v3400 = vld [vmem:[%s21 + $0x8] sm:$0xff]
      %v3401 = vld [vmem:[%s21 + $0x10] sm:$0xff]
      %v3402 = vld [vmem:[%s21 + $0x18] sm:$0xff]
      %v3403 = vld [vmem:[%s21 + $0x20] sm:$0xff]
      %v3404 = vld [vmem:[%s21 + $0x28] sm:$0xff]
      %v3405 = vld [vmem:[%s21 + $0x30] sm:$0xff]
      %v3406 = vld [vmem:[%s21 + $0x38] sm:$0xff]
      %v3408 = vsel %vm696, %v3398, 0
      %3410 = vmatprep.subr.mxu0 0.0
      %3411 = vmatpush1.msra.mxu0 %v3399
      %3412 = vmatprep.subr.mxu0 0.0
      %3413 = vmatpush1.msra.mxu0 %v3400
      %3414 = vmatprep.subr.mxu0 0.0
      %3415 = vmatpush1.msra.mxu0 %v3401
      %3416 = vmatprep.subr.mxu0 0.0
      %3417 = vmatpush1.msra.mxu0 %v3402
      %3418 = vmatprep.subr.mxu0 0.0
      %3419 = vmatpush1.msra.mxu0 %v3403
      %3420 = vmatprep.subr.mxu0 0.0
      %3421 = vmatpush1.msra.mxu0 %v3404
      %3422 = vmatprep.subr.mxu0 0.0
      %3423 = vmatpush1.msra.mxu0 %v3405
      %3424 = vmatprep.subr.mxu0 0.0
      %3425 = vmatpush1.msra.mxu0 %v3406
      %3426 = vmatprep.subr.mxu0 0.0
      %3427 = vmatpush1.msra.mxu0 0.0
      %3428 = vmatprep.subr.mxu0 0.0
      %3429 = vmatpush1.msra.mxu0 0.0
      %3430 = vmatprep.subr.mxu0 0.0
      %3431 = vmatpush1.msra.mxu0 0.0
      %3432 = vmatprep.subr.mxu0 0.0
      %3433 = vmatpush1.msra.mxu0 0.0
      %3434 = vmatprep.subr.mxu0 0.0
      %3435 = vmatpush1.msra.mxu0 0.0
      %3436 = vmatprep.subr.mxu0 0.0
      %3437 = vmatpush1.msra.mxu0 0.0
      %3438 = vmatprep.subr.mxu0 0.0
      %3439 = vmatpush1.msra.mxu0 0.0
      %3440 = vmatprep.subr.mxu0 0.0
      %3441 = vmatpush1.msra.mxu0 0.0
      %3442 = vmatprep.subr.mxu0 0.0
      %3443 = vmatpush1.msra.mxu0 0.0
      %3444 = vmatprep.subr.mxu0 0.0
      %3445 = vmatpush1.msra.mxu0 0.0
      %3446 = vmatprep.subr.mxu0 0.0
      %3447 = vmatpush1.msra.mxu0 0.0
      %3448 = vmatprep.subr.mxu0 0.0
      %3449 = vmatpush1.msra.mxu0 0.0
      %3450 = vmatprep.subr.mxu0 0.0
      %3451 = vmatpush1.msra.mxu0 0.0
      %3452 = vmatprep.subr.mxu0 0.0
      %3453 = vmatpush1.msra.mxu0 0.0
      %3454 = vmatprep.subr.mxu0 0.0
      %3455 = vmatpush1.msra.mxu0 0.0
      %3456 = vmatprep.subr.mxu0 0.0
      %3457 = vmatpush1.msra.mxu0 0.0
      %3458 = vmatprep.subr.mxu0 0.0
      %3459 = vmatpush1.msra.mxu0 0.0
      %3460 = vmatprep.subr.mxu0 0.0
      %3461 = vmatpush1.msra.mxu0 0.0
      %3462 = vmatprep.subr.mxu0 0.0
      %3463 = vmatpush1.msra.mxu0 0.0
      %3464 = vmatprep.subr.mxu0 0.0
      %3465 = vmatpush1.msra.mxu0 0.0
      %3466 = vmatprep.subr.mxu0 0.0
      %3467 = vmatpush1.msra.mxu0 0.0
      %3468 = vmatprep.subr.mxu0 0.0
      %3469 = vmatpush1.msra.mxu0 0.0
      %3470 = vmatprep.subr.mxu0 0.0
      %3471 = vmatpush1.msra.mxu0 0.0
      %3472 = vmatprep.subr.mxu0 0.0
      %3473 = vmatpush1.msra.mxu0 0.0
      %3474 = vmatprep.mubr.f32.mxu0 0.0
      %3475 = vmatmul.mubr.f32.gmra.mrb[0].mxu0 %v3408
      %v3476 = vpop.f32.mrb[0].mxu0
      %v3477 = vadd.f32 0.0, %v3476
      %v3478 = vpop.f32.mrb[0].mxu0
      %3479 = vdwg.mxu0
      %vm3480 = vcmask 253952
      %3481 = vst.msk [vmem:[%s690] sm:$0x1] %vm3480, %v3477
      %p3482 = scmp.lt.s32.totalorder %s33, 1
      %s3483 = scalar_select %p3482, %s33, 1
      %s3484 = scalar_lea.vmem %s22, %s3483
      // Predicated region
      $region109: #{clip_forward.4} parent=107 // pred_check
        %p3485 = pneg %p523
      $region110: #{clip_forward.4} parent=107 // pred_check_branch
        %3487 = sbr.rel (%p3485) target = $region112
      $region111: #{clip_forward.4} parent=107 // pred_region
        _
      $region112: #{clip_forward.4} parent=107 // pred_fallthru
        _
    $region108: #{clip_forward.4} parent=5 // pred_fallthru
      _
    %p3488 = scmp.le.s32.totalorder 2, %s28
    // Predicated region
    $region113: #{clip_forward.4} parent=5 // pred_check
      %p3489 = pneg %p3488
    $region114: #{clip_forward.4} parent=5 // pred_check_branch
      %3491 = sbr.rel (%p3489) target = $region116
    $region115: #{clip_forward.4} parent=5 // pred_region
      %s3492 = ssub.s32 %s28, 2
      // Predicated region
      $region117: #{clip_forward.4} parent=115 // pred_check
        %p3493 = pneg %p529
      $region118: #{clip_forward.4} parent=115 // pred_check_branch
        %3495 = sbr.rel (%p3493) target = $region120
      $region119: #{clip_forward.4} parent=115 // pred_region
        %p3496 = scmp.lt.s32.totalorder %s34, 1
        %s3497 = scalar_select %p3496, %s34, 1
        %s3498 = scalar_lea.vmem %s22, %s3497
      $region120: #{clip_forward.4} parent=115 // pred_fallthru
        _
    $region116: #{clip_forward.4} parent=5 // pred_fallthru
      _
  $region6: #{clip_forward.4} parent=0 // loop_footer
    %s32 = sadd.s32 1, %s28
  $region7: #{clip_forward.4} parent=0 // loop_footer_branch
    %27 = sbr.rel target = $region3
  $region8: #{clip_forward.4} parent=0 // loop_exit
    _

</llo_original>
